<compile_context>
chip_gen: v7x
topology: tpu7x:2x2x1
jax: 0.10.0
libtpu: 0.0.40
codegen_flags: <defaults>
</compile_context>

<pallas_src>
import math

import jax
import jax.numpy as jnp
from jax import lax
from jax.experimental import pallas as pl
from jax.experimental.pallas import tpu as pltpu


# ----------------------------------------------------------------------------
# Fused Pallas kernel: all LSTM layers (both directions) + final Linear
# ----------------------------------------------------------------------------
def _make_fused_kernel(n_layers, T, B, E, H, Dout):
    G = 4 * H  # gate dimension (lane-dense when H == 32)

    def kernel(*refs):
        # ---- unpack refs (inputs..., outputs..., scratch...) ----
        x_ref = refs[0]                                   # (T, B, E)
        len_ref = refs[1]                                 # (B, 1) int32
        w_refs = refs[2:2 + 6 * n_layers]                 # per layer: wih_f, whh_f, b_f, wih_b, whh_b, b_b
        fcw_ref = refs[2 + 6 * n_layers]                  # (2H, Dout)
        fcb_ref = refs[3 + 6 * n_layers]                  # (1, Dout)
        out_ref = refs[4 + 6 * n_layers]                  # (B, Dout)
        xp_sc = refs[5 + 6 * n_layers]                    # (T, B, 4H)   hoisted input projection
        seq_bufs = refs[6 + 6 * n_layers:10 + 6 * n_layers]  # 2 ping-pong pairs of (T, B, H)

        lengths = len_ref[...]                            # (B, 1) int32
        zeros_bh = jnp.zeros((B, H), jnp.float32)         # hoisted (also loop-carry init)

        def run_direction(whh_ref, reverse, out_seq_ref):
            """Serial recurrence over T steps; only h @ Whh + elementwise on the
            critical path. h/c live in the fori_loop carry (vregs)."""
            whh = whh_ref[...]                            # (H, 4H)

            def step(s, carry):
                h, c = carry
                t = (T - 1 - s) if reverse else s
                gates = xp_sc[t] + jnp.dot(h, whh,
                                           preferred_element_type=jnp.float32)  # (B, 4H)
                i_g = jax.nn.sigmoid(gates[:, 0:H])
                f_g = jax.nn.sigmoid(gates[:, H:2 * H])
                g_g = jnp.tanh(gates[:, 2 * H:3 * H])
                o_g = jax.nn.sigmoid(gates[:, 3 * H:4 * H])
                c_new = f_g * c + i_g * g_g
                h_new = o_g * jnp.tanh(c_new)
                mask = t < lengths                        # (B, 1) length masking (packed seq)
                h_next = jnp.where(mask, h_new, h)
                c_next = jnp.where(mask, c_new, c)
                if out_seq_ref is not None:               # last layer skips seq writes entirely
                    out_seq_ref[t] = jnp.where(mask, h_new, zeros_bh)
                return (h_next, c_next)

            h_fin, _ = lax.fori_loop(0, T, step, (zeros_bh, zeros_bh), unroll=True)
            return h_fin

        h_f = h_b = None
        for layer in range(n_layers):
            wih_f, whh_f, b_f, wih_b, whh_b, b_b = w_refs[6 * layer:6 * layer + 6]
            last = layer == n_layers - 1
            slot = layer % 2
            out_f = None if last else seq_bufs[2 * slot + 0]
            out_b = None if last else seq_bufs[2 * slot + 1]

            # Hoisted input projection (one big MXU matmul per direction).
            if layer == 0:
                x_flat = x_ref[...].reshape(T * B, E)

                def proj(wih_ref, b_ref, x_flat=x_flat):
                    return (jnp.dot(x_flat, wih_ref[...],
                                    preferred_element_type=jnp.float32)
                            + b_ref[...])
            else:
                prev = 1 - slot
                f_flat = seq_bufs[2 * prev + 0][...].reshape(T * B, H)
                bk_flat = seq_bufs[2 * prev + 1][...].reshape(T * B, H)

                def proj(wih_ref, b_ref, f_flat=f_flat, bk_flat=bk_flat):
                    wih = wih_ref[...]                    # (2H, 4H)
                    return (jnp.dot(f_flat, wih[0:H, :],
                                    preferred_element_type=jnp.float32)
                            + jnp.dot(bk_flat, wih[H:2 * H, :],
                                      preferred_element_type=jnp.float32)
                            + b_ref[...])

            # forward direction
            xp_sc[...] = proj(wih_f, b_f).reshape(T, B, G)
            h_f = run_direction(whh_f, reverse=False, out_seq_ref=out_f)
            # backward direction: reversed masked loop == packed bidirectional semantics
            xp_sc[...] = proj(wih_b, b_b).reshape(T, B, G)
            h_b = run_direction(whh_b, reverse=True, out_seq_ref=out_b)

        # Final Linear fused in: cat(hidden[-1]=backward, hidden[-2]=forward) @ W + b
        # done as a split matmul (avoids in-kernel lane concatenation).
        fcw = fcw_ref[...]                                # (2H, Dout)
        out = (jnp.dot(h_b, fcw[0:H, :], preferred_element_type=jnp.float32)
               + jnp.dot(h_f, fcw[H:2 * H, :], preferred_element_type=jnp.float32)
               + fcb_ref[...])
        out_ref[...] = out

    return kernel


# ----------------------------------------------------------------------------
# pallas_call wrapper
# ----------------------------------------------------------------------------
def fused_lstm_fc(x, lengths, lstm_params, fc_w_t, fc_b, hidden_dim, n_layers):
    """x: (T, B, E) embedded (B already padded to a sublane multiple).
    Returns (B, Dout)."""
    T, B, E = x.shape
    H = hidden_dim
    G = 4 * H
    Dout = fc_w_t.shape[1]

    kernel = _make_fused_kernel(n_layers, T, B, E, H, Dout)

    inputs = [x, lengths.reshape(B, 1).astype(jnp.int32)]
    in_specs = [
        pl.BlockSpec((T, B, E), lambda i: (0, 0, 0)),
        pl.BlockSpec((B, 1), lambda i: (0, 0)),
    ]
    for l in range(n_layers):
        p = lstm_params[l]
        in_dim = E if l == 0 else 2 * H
        inputs += [p["wih_f"], p["whh_f"], p["b_f"],
                   p["wih_b"], p["whh_b"], p["b_b"]]
        in_specs += [
            pl.BlockSpec((in_dim, G), lambda i: (0, 0)),
            pl.BlockSpec((H, G), lambda i: (0, 0)),
            pl.BlockSpec((1, G), lambda i: (0, 0)),
            pl.BlockSpec((in_dim, G), lambda i: (0, 0)),
            pl.BlockSpec((H, G), lambda i: (0, 0)),
            pl.BlockSpec((1, G), lambda i: (0, 0)),
        ]
    inputs += [fc_w_t, fc_b.reshape(1, Dout)]
    in_specs += [
        pl.BlockSpec((2 * H, Dout), lambda i: (0, 0)),
        pl.BlockSpec((1, Dout), lambda i: (0, 0)),
    ]

    return pl.pallas_call(
        kernel,
        grid=(1,),
        in_specs=in_specs,
        out_specs=pl.BlockSpec((B, Dout), lambda i: (0, 0)),
        out_shape=jax.ShapeDtypeStruct((B, Dout), jnp.float32),
        scratch_shapes=[
            pltpu.VMEM((T, B, G), jnp.float32),   # hoisted input projection (gate space)
            pltpu.VMEM((T, B, H), jnp.float32),   # layer seq, forward  (ping)
            pltpu.VMEM((T, B, H), jnp.float32),   # layer seq, backward (ping)
            pltpu.VMEM((T, B, H), jnp.float32),   # layer seq, forward  (pong)
            pltpu.VMEM((T, B, H), jnp.float32),   # layer seq, backward (pong)
        ],
        compiler_params=pltpu.CompilerParams(
            dimension_semantics=("arbitrary",)),
    )(*inputs)


# ----------------------------------------------------------------------------
# Model glue: embedding gather, batch padding to sublane multiple
# ----------------------------------------------------------------------------
def custom_model_forward(params, text, text_lengths):
    # embedding lookup (XLA gather, glue); dropout = identity (eval mode)
    x = params["embedding"][text]                         # (T, B, E)
    T, B, E = x.shape
    H = params["hidden_dim"]
    n_layers = params["n_layers"]

    # pad batch to a multiple of 8 sublanes (padded rows have length 0 -> stay zero)
    B_pad = ((B + 7) // 8) * 8
    lengths = text_lengths.astype(jnp.int32)
    if B_pad != B:
        x = jnp.pad(x, ((0, 0), (0, B_pad - B), (0, 0)))
        lengths = jnp.pad(lengths, (0, B_pad - B))

    out = fused_lstm_fc(x, lengths, params["lstm"],
                        params["fc_w_t"], params["fc_b"], H, n_layers)
    return out[:B]


# ----------------------------------------------------------------------------
# Deterministic parameter init (PyTorch-style U(-1/sqrt(H), 1/sqrt(H)),
# but with fused gate layout: (in, 4H) columns ordered [i|f|g|o])
# ----------------------------------------------------------------------------
def init_params(key, vocab_size, embedding_dim, hidden_dim, output_dim,
                n_layers, pad_idx):
    keys = jax.random.split(key, 2 + n_layers)

    emb = jax.random.normal(keys[0], (vocab_size, embedding_dim), jnp.float32)
    emb = emb.at[pad_idx].set(0.0)                        # padding_idx row = 0

    bound = 1.0 / math.sqrt(hidden_dim)
    G = 4 * hidden_dim

    def u(k, shape, b):
        return jax.random.uniform(k, shape, jnp.float32, -b, b)

    lstm = []
    for l in range(n_layers):
        in_dim = embedding_dim if l == 0 else 2 * hidden_dim
        kl = jax.random.split(keys[2 + l], 8)
        lstm.append(dict(
            wih_f=u(kl[0], (in_dim, G), bound),
            whh_f=u(kl[1], (hidden_dim, G), bound),
            b_f=u(kl[2], (1, G), bound) + u(kl[3], (1, G), bound),   # b_ih + b_hh
            wih_b=u(kl[4], (in_dim, G), bound),
            whh_b=u(kl[5], (hidden_dim, G), bound),
            b_b=u(kl[6], (1, G), bound) + u(kl[7], (1, G), bound),
        ))

    fc_bound = 1.0 / math.sqrt(2 * hidden_dim)
    kf1, kf2 = jax.random.split(keys[1])
    fc_w_t = u(kf1, (2 * hidden_dim, output_dim), fc_bound)
    fc_b = u(kf2, (output_dim,), fc_bound)

    return dict(embedding=emb, lstm=lstm, fc_w_t=fc_w_t, fc_b=fc_b,
                hidden_dim=hidden_dim, n_layers=n_layers)


# ----------------------------------------------------------------------------
if __name__ == "__main__":
    key = jax.random.PRNGKey(0)
    k_text, k_param = jax.random.split(key)

    vocab_size = 50
    embedding_dim = 16
    hidden_dim = 32           # 4H = 128 -> lane-dense gate matmuls
    output_dim = 3
    n_layers = 2
    pad_idx = 0
    T, B = 8, 4

    # lengths sorted descending (pack_padded_sequence, enforce_sorted=True)
    text_lengths = jnp.array([8, 7, 5, 3], dtype=jnp.int32)
    text = jax.random.randint(k_text, (T, B), 1, vocab_size, dtype=jnp.int32)
    t_idx = jnp.arange(T)[:, None]
    text = jnp.where(t_idx < text_lengths[None, :], text, pad_idx)  # pad tail

    params = init_params(k_param, vocab_size, embedding_dim, hidden_dim,
                         output_dim, n_layers, pad_idx)

    out = custom_model_forward(params, text, text_lengths)  # (B, output_dim)
    jax.block_until_ready(out)
    assert out.shape == (B, output_dim)
    # TODO(synk): dropout layers are identity (eval mode); training-mode dropout not implemented.
    print("KERNEL_OK")
</pallas_src>

<mosaic_0001>
module attributes {stable_mosaic.version = 11 : i64} {
  func.func @kernel(%arg0: i32, %arg1: memref<8x8x16xf32, #tpu.memory_space<vmem>>, %arg2: memref<8x1xi32, #tpu.memory_space<vmem>>, %arg3: memref<16x128xf32, #tpu.memory_space<vmem>>, %arg4: memref<32x128xf32, #tpu.memory_space<vmem>>, %arg5: memref<1x128xf32, #tpu.memory_space<vmem>>, %arg6: memref<16x128xf32, #tpu.memory_space<vmem>>, %arg7: memref<32x128xf32, #tpu.memory_space<vmem>>, %arg8: memref<1x128xf32, #tpu.memory_space<vmem>>, %arg9: memref<64x128xf32, #tpu.memory_space<vmem>>, %arg10: memref<32x128xf32, #tpu.memory_space<vmem>>, %arg11: memref<1x128xf32, #tpu.memory_space<vmem>>, %arg12: memref<64x128xf32, #tpu.memory_space<vmem>>, %arg13: memref<32x128xf32, #tpu.memory_space<vmem>>, %arg14: memref<1x128xf32, #tpu.memory_space<vmem>>, %arg15: memref<64x3xf32, #tpu.memory_space<vmem>>, %arg16: memref<1x3xf32, #tpu.memory_space<vmem>>, %arg17: memref<8x3xf32, #tpu.memory_space<vmem>>, %arg18: memref<8x8x128xf32, #tpu.memory_space<vmem>>, %arg19: memref<8x8x32xf32, #tpu.memory_space<vmem>>, %arg20: memref<8x8x32xf32, #tpu.memory_space<vmem>>, %arg21: memref<8x8x32xf32, #tpu.memory_space<vmem>>, %arg22: memref<8x8x32xf32, #tpu.memory_space<vmem>>) attributes {dimension_semantics = [#tpu.dimension_semantics<arbitrary>], iteration_bounds = array<i64: 1>, scalar_prefetch = 0 : i64, scratch_operands = 5 : i64, tpu.core_type = #tpu.core_type<tc>, window_params = [{pipeline_mode = #tpu.pipeline_mode<synchronous>, transform_indices = @transform_0, window_bounds = array<i64: 8, 8, 16>}, {pipeline_mode = #tpu.pipeline_mode<synchronous>, transform_indices = @transform_1, window_bounds = array<i64: 8, 1>}, {pipeline_mode = #tpu.pipeline_mode<synchronous>, transform_indices = @transform_2, window_bounds = array<i64: 16, 128>}, {pipeline_mode = #tpu.pipeline_mode<synchronous>, transform_indices = @transform_3, window_bounds = array<i64: 32, 128>}, {pipeline_mode = #tpu.pipeline_mode<synchronous>, transform_indices = @transform_4, window_bounds = array<i64: 1, 128>}, {pipeline_mode = #tpu.pipeline_mode<synchronous>, transform_indices = @transform_5, window_bounds = array<i64: 16, 128>}, {pipeline_mode = #tpu.pipeline_mode<synchronous>, transform_indices = @transform_6, window_bounds = array<i64: 32, 128>}, {pipeline_mode = #tpu.pipeline_mode<synchronous>, transform_indices = @transform_7, window_bounds = array<i64: 1, 128>}, {pipeline_mode = #tpu.pipeline_mode<synchronous>, transform_indices = @transform_8, window_bounds = array<i64: 64, 128>}, {pipeline_mode = #tpu.pipeline_mode<synchronous>, transform_indices = @transform_9, window_bounds = array<i64: 32, 128>}, {pipeline_mode = #tpu.pipeline_mode<synchronous>, transform_indices = @transform_10, window_bounds = array<i64: 1, 128>}, {pipeline_mode = #tpu.pipeline_mode<synchronous>, transform_indices = @transform_11, window_bounds = array<i64: 64, 128>}, {pipeline_mode = #tpu.pipeline_mode<synchronous>, transform_indices = @transform_12, window_bounds = array<i64: 32, 128>}, {pipeline_mode = #tpu.pipeline_mode<synchronous>, transform_indices = @transform_13, window_bounds = array<i64: 1, 128>}, {pipeline_mode = #tpu.pipeline_mode<synchronous>, transform_indices = @transform_14, window_bounds = array<i64: 64, 3>}, {pipeline_mode = #tpu.pipeline_mode<synchronous>, transform_indices = @transform_15, window_bounds = array<i64: 1, 3>}, {pipeline_mode = #tpu.pipeline_mode<synchronous>, transform_indices = @transform_16, window_bounds = array<i64: 8, 3>}]} {
    %c0 = arith.constant 0 : index
    %c0_0 = arith.constant 0 : index
    %0 = vector.load %arg2[%c0, %c0_0] : memref<8x1xi32, #tpu.memory_space<vmem>>, vector<8x1xi32>
    %cst = arith.constant 0.000000e+00 : f32
    %1 = vector.broadcast %cst : f32 to vector<8x32xf32>
    %c0_1 = arith.constant 0 : index
    %c0_2 = arith.constant 0 : index
    %c0_3 = arith.constant 0 : index
    %2 = vector.load %arg1[%c0_1, %c0_2, %c0_3] : memref<8x8x16xf32, #tpu.memory_space<vmem>>, vector<8x8x16xf32>
    %3 = vector.shape_cast %2 : vector<8x8x16xf32> to vector<64x16xf32>
    %c0_4 = arith.constant 0 : index
    %c0_5 = arith.constant 0 : index
    %4 = vector.load %arg3[%c0_4, %c0_5] : memref<16x128xf32, #tpu.memory_space<vmem>>, vector<16x128xf32>
    %cst_6 = arith.constant dense<0.000000e+00> : vector<64x128xf32>
    %5 = tpu.matmul %3, %4, %cst_6 {dimension_numbers = #tpu.dot_dimension_numbers<[1], [0], [0], [1], [0, 0, 1, 1], [], []>} : vector<64x16xf32>, vector<16x128xf32>, vector<64x128xf32> -> vector<64x128xf32>
    %c0_7 = arith.constant 0 : index
    %c0_8 = arith.constant 0 : index
    %6 = vector.load %arg5[%c0_7, %c0_8] : memref<1x128xf32, #tpu.memory_space<vmem>>, vector<1x128xf32>
    %7 = vector.broadcast %6 : vector<1x128xf32> to vector<64x128xf32>
    %8 = arith.addf %5, %7 : vector<64x128xf32>
    %9 = vector.shape_cast %8 : vector<64x128xf32> to vector<8x8x128xf32>
    %c0_9 = arith.constant 0 : index
    %c0_10 = arith.constant 0 : index
    %c0_11 = arith.constant 0 : index
    %10 = vector.load %arg18[%c0_9, %c0_10, %c0_11] : memref<8x8x128xf32, #tpu.memory_space<vmem>>, vector<8x8x128xf32>
    tpu.vector_store %arg18[%c0_9, %c0_10, %c0_11], %9 {strides = array<i32>} : memref<8x8x128xf32, #tpu.memory_space<vmem>>, vector<8x8x128xf32>,
    %c0_12 = arith.constant 0 : index
    %c0_13 = arith.constant 0 : index
    %11 = vector.load %arg4[%c0_12, %c0_13] : memref<32x128xf32, #tpu.memory_space<vmem>>, vector<32x128xf32>
    %c0_i32 = arith.constant 0 : i32
    %12 = arith.index_cast %c0_i32 : i32 to index
    %c0_14 = arith.constant 0 : index
    %c0_15 = arith.constant 0 : index
    %13 = vector.load %arg18[%12, %c0_14, %c0_15] : memref<8x8x128xf32, #tpu.memory_space<vmem>>, vector<1x8x128xf32>
    %14 = vector.shape_cast %13 : vector<1x8x128xf32> to vector<8x128xf32>
    %cst_16 = arith.constant dense<0.000000e+00> : vector<8x128xf32>
    %15 = tpu.matmul %1, %11, %cst_16 {dimension_numbers = #tpu.dot_dimension_numbers<[1], [0], [0], [1], [0, 0, 1, 1], [], []>} : vector<8x32xf32>, vector<32x128xf32>, vector<8x128xf32> -> vector<8x128xf32>
    %16 = arith.addf %14, %15 : vector<8x128xf32>
    %17 = vector.extract_strided_slice %16 {offsets = [0, 0], sizes = [8, 32], strides = [1, 1]} : vector<8x128xf32> to vector<8x32xf32>
    %18 = arith.negf %17 : vector<8x32xf32>
    %19 = math.exp %18 : vector<8x32xf32>
    %cst_17 = arith.constant 1.000000e+00 : f32
    %20 = vector.broadcast %cst_17 : f32 to vector<8x32xf32>
    %21 = arith.addf %20, %19 : vector<8x32xf32>
    %22 = arith.divf %20, %21 : vector<8x32xf32>
    %23 = vector.extract_strided_slice %16 {offsets = [0, 32], sizes = [8, 32], strides = [1, 1]} : vector<8x128xf32> to vector<8x32xf32>
    %24 = arith.negf %23 : vector<8x32xf32>
    %25 = math.exp %24 : vector<8x32xf32>
    %cst_18 = arith.constant 1.000000e+00 : f32
    %26 = vector.broadcast %cst_18 : f32 to vector<8x32xf32>
    %27 = arith.addf %26, %25 : vector<8x32xf32>
    %28 = arith.divf %26, %27 : vector<8x32xf32>
    %29 = vector.extract_strided_slice %16 {offsets = [0, 64], sizes = [8, 32], strides = [1, 1]} : vector<8x128xf32> to vector<8x32xf32>
    %30 = math.tanh %29 : vector<8x32xf32>
    %31 = vector.extract_strided_slice %16 {offsets = [0, 96], sizes = [8, 32], strides = [1, 1]} : vector<8x128xf32> to vector<8x32xf32>
    %32 = arith.negf %31 : vector<8x32xf32>
    %33 = math.exp %32 : vector<8x32xf32>
    %cst_19 = arith.constant 1.000000e+00 : f32
    %34 = vector.broadcast %cst_19 : f32 to vector<8x32xf32>
    %35 = arith.addf %34, %33 : vector<8x32xf32>
    %36 = arith.divf %34, %35 : vector<8x32xf32>
    %37 = arith.mulf %28, %1 : vector<8x32xf32>
    %38 = arith.mulf %22, %30 : vector<8x32xf32>
    %39 = arith.addf %37, %38 : vector<8x32xf32>
    %40 = math.tanh %39 : vector<8x32xf32>
    %41 = arith.mulf %36, %40 : vector<8x32xf32>
    %42 = vector.broadcast %c0_i32 : i32 to vector<8x1xi32>
    %43 = arith.cmpi slt, %42, %0 : vector<8x1xi32>
    %44 = vector.shape_cast %43 : vector<8x1xi1> to vector<8x1xi1>
    %45 = vector.broadcast %44 : vector<8x1xi1> to vector<8x32xi1>
    %46 = arith.select %45, %41, %1 : vector<8x32xi1>, vector<8x32xf32>
    %47 = vector.shape_cast %43 : vector<8x1xi1> to vector<8x1xi1>
    %48 = vector.broadcast %47 : vector<8x1xi1> to vector<8x32xi1>
    %49 = arith.select %48, %39, %1 : vector<8x32xi1>, vector<8x32xf32>
    %50 = vector.shape_cast %43 : vector<8x1xi1> to vector<8x1xi1>
    %51 = vector.broadcast %50 : vector<8x1xi1> to vector<8x32xi1>
    %52 = arith.select %51, %41, %1 : vector<8x32xi1>, vector<8x32xf32>
    %53 = arith.index_cast %c0_i32 : i32 to index
    %c0_20 = arith.constant 0 : index
    %c0_21 = arith.constant 0 : index
    %54 = vector.load %arg19[%53, %c0_20, %c0_21] : memref<8x8x32xf32, #tpu.memory_space<vmem>>, vector<1x8x32xf32>
    %55 = vector.shape_cast %54 : vector<1x8x32xf32> to vector<8x32xf32>
    %56 = vector.shape_cast %52 : vector<8x32xf32> to vector<1x8x32xf32>
    tpu.vector_store %arg19[%53, %c0_20, %c0_21], %56 {strides = array<i32>} : memref<8x8x32xf32, #tpu.memory_space<vmem>>, vector<1x8x32xf32>,
    %c1_i32 = arith.constant 1 : i32
    %57 = arith.index_cast %c1_i32 : i32 to index
    %c0_22 = arith.constant 0 : index
    %c0_23 = arith.constant 0 : index
    %58 = vector.load %arg18[%57, %c0_22, %c0_23] : memref<8x8x128xf32, #tpu.memory_space<vmem>>, vector<1x8x128xf32>
    %59 = vector.shape_cast %58 : vector<1x8x128xf32> to vector<8x128xf32>
    %cst_24 = arith.constant dense<0.000000e+00> : vector<8x128xf32>
    %60 = tpu.matmul %46, %11, %cst_24 {dimension_numbers = #tpu.dot_dimension_numbers<[1], [0], [0], [1], [0, 0, 1, 1], [], []>} : vector<8x32xf32>, vector<32x128xf32>, vector<8x128xf32> -> vector<8x128xf32>
    %61 = arith.addf %59, %60 : vector<8x128xf32>
    %62 = vector.extract_strided_slice %61 {offsets = [0, 0], sizes = [8, 32], strides = [1, 1]} : vector<8x128xf32> to vector<8x32xf32>
    %63 = arith.negf %62 : vector<8x32xf32>
    %64 = math.exp %63 : vector<8x32xf32>
    %cst_25 = arith.constant 1.000000e+00 : f32
    %65 = vector.broadcast %cst_25 : f32 to vector<8x32xf32>
    %66 = arith.addf %65, %64 : vector<8x32xf32>
    %67 = arith.divf %65, %66 : vector<8x32xf32>
    %68 = vector.extract_strided_slice %61 {offsets = [0, 32], sizes = [8, 32], strides = [1, 1]} : vector<8x128xf32> to vector<8x32xf32>
    %69 = arith.negf %68 : vector<8x32xf32>
    %70 = math.exp %69 : vector<8x32xf32>
    %cst_26 = arith.constant 1.000000e+00 : f32
    %71 = vector.broadcast %cst_26 : f32 to vector<8x32xf32>
    %72 = arith.addf %71, %70 : vector<8x32xf32>
    %73 = arith.divf %71, %72 : vector<8x32xf32>
    %74 = vector.extract_strided_slice %61 {offsets = [0, 64], sizes = [8, 32], strides = [1, 1]} : vector<8x128xf32> to vector<8x32xf32>
    %75 = math.tanh %74 : vector<8x32xf32>
    %76 = vector.extract_strided_slice %61 {offsets = [0, 96], sizes = [8, 32], strides = [1, 1]} : vector<8x128xf32> to vector<8x32xf32>
    %77 = arith.negf %76 : vector<8x32xf32>
    %78 = math.exp %77 : vector<8x32xf32>
    %cst_27 = arith.constant 1.000000e+00 : f32
    %79 = vector.broadcast %cst_27 : f32 to vector<8x32xf32>
    %80 = arith.addf %79, %78 : vector<8x32xf32>
    %81 = arith.divf %79, %80 : vector<8x32xf32>
    %82 = arith.mulf %73, %49 : vector<8x32xf32>
    %83 = arith.mulf %67, %75 : vector<8x32xf32>
    %84 = arith.addf %82, %83 : vector<8x32xf32>
    %85 = math.tanh %84 : vector<8x32xf32>
    %86 = arith.mulf %81, %85 : vector<8x32xf32>
    %87 = vector.broadcast %c1_i32 : i32 to vector<8x1xi32>
    %88 = arith.cmpi slt, %87, %0 : vector<8x1xi32>
    %89 = vector.shape_cast %88 : vector<8x1xi1> to vector<8x1xi1>
    %90 = vector.broadcast %89 : vector<8x1xi1> to vector<8x32xi1>
    %91 = arith.select %90, %86, %46 : vector<8x32xi1>, vector<8x32xf32>
    %92 = vector.shape_cast %88 : vector<8x1xi1> to vector<8x1xi1>
    %93 = vector.broadcast %92 : vector<8x1xi1> to vector<8x32xi1>
    %94 = arith.select %93, %84, %49 : vector<8x32xi1>, vector<8x32xf32>
    %95 = vector.shape_cast %88 : vector<8x1xi1> to vector<8x1xi1>
    %96 = vector.broadcast %95 : vector<8x1xi1> to vector<8x32xi1>
    %97 = arith.select %96, %86, %1 : vector<8x32xi1>, vector<8x32xf32>
    %98 = arith.index_cast %c1_i32 : i32 to index
    %c0_28 = arith.constant 0 : index
    %c0_29 = arith.constant 0 : index
    %99 = vector.load %arg19[%98, %c0_28, %c0_29] : memref<8x8x32xf32, #tpu.memory_space<vmem>>, vector<1x8x32xf32>
    %100 = vector.shape_cast %99 : vector<1x8x32xf32> to vector<8x32xf32>
    %101 = vector.shape_cast %97 : vector<8x32xf32> to vector<1x8x32xf32>
    tpu.vector_store %arg19[%98, %c0_28, %c0_29], %101 {strides = array<i32>} : memref<8x8x32xf32, #tpu.memory_space<vmem>>, vector<1x8x32xf32>,
    %c2_i32 = arith.constant 2 : i32
    %102 = arith.index_cast %c2_i32 : i32 to index
    %c0_30 = arith.constant 0 : index
    %c0_31 = arith.constant 0 : index
    %103 = vector.load %arg18[%102, %c0_30, %c0_31] : memref<8x8x128xf32, #tpu.memory_space<vmem>>, vector<1x8x128xf32>
    %104 = vector.shape_cast %103 : vector<1x8x128xf32> to vector<8x128xf32>
    %cst_32 = arith.constant dense<0.000000e+00> : vector<8x128xf32>
    %105 = tpu.matmul %91, %11, %cst_32 {dimension_numbers = #tpu.dot_dimension_numbers<[1], [0], [0], [1], [0, 0, 1, 1], [], []>} : vector<8x32xf32>, vector<32x128xf32>, vector<8x128xf32> -> vector<8x128xf32>
    %106 = arith.addf %104, %105 : vector<8x128xf32>
    %107 = vector.extract_strided_slice %106 {offsets = [0, 0], sizes = [8, 32], strides = [1, 1]} : vector<8x128xf32> to vector<8x32xf32>
    %108 = arith.negf %107 : vector<8x32xf32>
    %109 = math.exp %108 : vector<8x32xf32>
    %cst_33 = arith.constant 1.000000e+00 : f32
    %110 = vector.broadcast %cst_33 : f32 to vector<8x32xf32>
    %111 = arith.addf %110, %109 : vector<8x32xf32>
    %112 = arith.divf %110, %111 : vector<8x32xf32>
    %113 = vector.extract_strided_slice %106 {offsets = [0, 32], sizes = [8, 32], strides = [1, 1]} : vector<8x128xf32> to vector<8x32xf32>
    %114 = arith.negf %113 : vector<8x32xf32>
    %115 = math.exp %114 : vector<8x32xf32>
    %cst_34 = arith.constant 1.000000e+00 : f32
    %116 = vector.broadcast %cst_34 : f32 to vector<8x32xf32>
    %117 = arith.addf %116, %115 : vector<8x32xf32>
    %118 = arith.divf %116, %117 : vector<8x32xf32>
    %119 = vector.extract_strided_slice %106 {offsets = [0, 64], sizes = [8, 32], strides = [1, 1]} : vector<8x128xf32> to vector<8x32xf32>
    %120 = math.tanh %119 : vector<8x32xf32>
    %121 = vector.extract_strided_slice %106 {offsets = [0, 96], sizes = [8, 32], strides = [1, 1]} : vector<8x128xf32> to vector<8x32xf32>
    %122 = arith.negf %121 : vector<8x32xf32>
    %123 = math.exp %122 : vector<8x32xf32>
    %cst_35 = arith.constant 1.000000e+00 : f32
    %124 = vector.broadcast %cst_35 : f32 to vector<8x32xf32>
    %125 = arith.addf %124, %123 : vector<8x32xf32>
    %126 = arith.divf %124, %125 : vector<8x32xf32>
    %127 = arith.mulf %118, %94 : vector<8x32xf32>
    %128 = arith.mulf %112, %120 : vector<8x32xf32>
    %129 = arith.addf %127, %128 : vector<8x32xf32>
    %130 = math.tanh %129 : vector<8x32xf32>
    %131 = arith.mulf %126, %130 : vector<8x32xf32>
    %132 = vector.broadcast %c2_i32 : i32 to vector<8x1xi32>
    %133 = arith.cmpi slt, %132, %0 : vector<8x1xi32>
    %134 = vector.shape_cast %133 : vector<8x1xi1> to vector<8x1xi1>
    %135 = vector.broadcast %134 : vector<8x1xi1> to vector<8x32xi1>
    %136 = arith.select %135, %131, %91 : vector<8x32xi1>, vector<8x32xf32>
    %137 = vector.shape_cast %133 : vector<8x1xi1> to vector<8x1xi1>
    %138 = vector.broadcast %137 : vector<8x1xi1> to vector<8x32xi1>
    %139 = arith.select %138, %129, %94 : vector<8x32xi1>, vector<8x32xf32>
    %140 = vector.shape_cast %133 : vector<8x1xi1> to vector<8x1xi1>
    %141 = vector.broadcast %140 : vector<8x1xi1> to vector<8x32xi1>
    %142 = arith.select %141, %131, %1 : vector<8x32xi1>, vector<8x32xf32>
    %143 = arith.index_cast %c2_i32 : i32 to index
    %c0_36 = arith.constant 0 : index
    %c0_37 = arith.constant 0 : index
    %144 = vector.load %arg19[%143, %c0_36, %c0_37] : memref<8x8x32xf32, #tpu.memory_space<vmem>>, vector<1x8x32xf32>
    %145 = vector.shape_cast %144 : vector<1x8x32xf32> to vector<8x32xf32>
    %146 = vector.shape_cast %142 : vector<8x32xf32> to vector<1x8x32xf32>
    tpu.vector_store %arg19[%143, %c0_36, %c0_37], %146 {strides = array<i32>} : memref<8x8x32xf32, #tpu.memory_space<vmem>>, vector<1x8x32xf32>,
    %c3_i32 = arith.constant 3 : i32
    %147 = arith.index_cast %c3_i32 : i32 to index
    %c0_38 = arith.constant 0 : index
    %c0_39 = arith.constant 0 : index
    %148 = vector.load %arg18[%147, %c0_38, %c0_39] : memref<8x8x128xf32, #tpu.memory_space<vmem>>, vector<1x8x128xf32>
    %149 = vector.shape_cast %148 : vector<1x8x128xf32> to vector<8x128xf32>
    %cst_40 = arith.constant dense<0.000000e+00> : vector<8x128xf32>
    %150 = tpu.matmul %136, %11, %cst_40 {dimension_numbers = #tpu.dot_dimension_numbers<[1], [0], [0], [1], [0, 0, 1, 1], [], []>} : vector<8x32xf32>, vector<32x128xf32>, vector<8x128xf32> -> vector<8x128xf32>
    %151 = arith.addf %149, %150 : vector<8x128xf32>
    %152 = vector.extract_strided_slice %151 {offsets = [0, 0], sizes = [8, 32], strides = [1, 1]} : vector<8x128xf32> to vector<8x32xf32>
    %153 = arith.negf %152 : vector<8x32xf32>
    %154 = math.exp %153 : vector<8x32xf32>
    %cst_41 = arith.constant 1.000000e+00 : f32
    %155 = vector.broadcast %cst_41 : f32 to vector<8x32xf32>
    %156 = arith.addf %155, %154 : vector<8x32xf32>
    %157 = arith.divf %155, %156 : vector<8x32xf32>
    %158 = vector.extract_strided_slice %151 {offsets = [0, 32], sizes = [8, 32], strides = [1, 1]} : vector<8x128xf32> to vector<8x32xf32>
    %159 = arith.negf %158 : vector<8x32xf32>
    %160 = math.exp %159 : vector<8x32xf32>
    %cst_42 = arith.constant 1.000000e+00 : f32
    %161 = vector.broadcast %cst_42 : f32 to vector<8x32xf32>
    %162 = arith.addf %161, %160 : vector<8x32xf32>
    %163 = arith.divf %161, %162 : vector<8x32xf32>
    %164 = vector.extract_strided_slice %151 {offsets = [0, 64], sizes = [8, 32], strides = [1, 1]} : vector<8x128xf32> to vector<8x32xf32>
    %165 = math.tanh %164 : vector<8x32xf32>
    %166 = vector.extract_strided_slice %151 {offsets = [0, 96], sizes = [8, 32], strides = [1, 1]} : vector<8x128xf32> to vector<8x32xf32>
    %167 = arith.negf %166 : vector<8x32xf32>
    %168 = math.exp %167 : vector<8x32xf32>
    %cst_43 = arith.constant 1.000000e+00 : f32
    %169 = vector.broadcast %cst_43 : f32 to vector<8x32xf32>
    %170 = arith.addf %169, %168 : vector<8x32xf32>
    %171 = arith.divf %169, %170 : vector<8x32xf32>
    %172 = arith.mulf %163, %139 : vector<8x32xf32>
    %173 = arith.mulf %157, %165 : vector<8x32xf32>
    %174 = arith.addf %172, %173 : vector<8x32xf32>
    %175 = math.tanh %174 : vector<8x32xf32>
    %176 = arith.mulf %171, %175 : vector<8x32xf32>
    %177 = vector.broadcast %c3_i32 : i32 to vector<8x1xi32>
    %178 = arith.cmpi slt, %177, %0 : vector<8x1xi32>
    %179 = vector.shape_cast %178 : vector<8x1xi1> to vector<8x1xi1>
    %180 = vector.broadcast %179 : vector<8x1xi1> to vector<8x32xi1>
    %181 = arith.select %180, %176, %136 : vector<8x32xi1>, vector<8x32xf32>
    %182 = vector.shape_cast %178 : vector<8x1xi1> to vector<8x1xi1>
    %183 = vector.broadcast %182 : vector<8x1xi1> to vector<8x32xi1>
    %184 = arith.select %183, %174, %139 : vector<8x32xi1>, vector<8x32xf32>
    %185 = vector.shape_cast %178 : vector<8x1xi1> to vector<8x1xi1>
    %186 = vector.broadcast %185 : vector<8x1xi1> to vector<8x32xi1>
    %187 = arith.select %186, %176, %1 : vector<8x32xi1>, vector<8x32xf32>
    %188 = arith.index_cast %c3_i32 : i32 to index
    %c0_44 = arith.constant 0 : index
    %c0_45 = arith.constant 0 : index
    %189 = vector.load %arg19[%188, %c0_44, %c0_45] : memref<8x8x32xf32, #tpu.memory_space<vmem>>, vector<1x8x32xf32>
    %190 = vector.shape_cast %189 : vector<1x8x32xf32> to vector<8x32xf32>
    %191 = vector.shape_cast %187 : vector<8x32xf32> to vector<1x8x32xf32>
    tpu.vector_store %arg19[%188, %c0_44, %c0_45], %191 {strides = array<i32>} : memref<8x8x32xf32, #tpu.memory_space<vmem>>, vector<1x8x32xf32>,
    %c4_i32 = arith.constant 4 : i32
    %192 = arith.index_cast %c4_i32 : i32 to index
    %c0_46 = arith.constant 0 : index
    %c0_47 = arith.constant 0 : index
    %193 = vector.load %arg18[%192, %c0_46, %c0_47] : memref<8x8x128xf32, #tpu.memory_space<vmem>>, vector<1x8x128xf32>
    %194 = vector.shape_cast %193 : vector<1x8x128xf32> to vector<8x128xf32>
    %cst_48 = arith.constant dense<0.000000e+00> : vector<8x128xf32>
    %195 = tpu.matmul %181, %11, %cst_48 {dimension_numbers = #tpu.dot_dimension_numbers<[1], [0], [0], [1], [0, 0, 1, 1], [], []>} : vector<8x32xf32>, vector<32x128xf32>, vector<8x128xf32> -> vector<8x128xf32>
    %196 = arith.addf %194, %195 : vector<8x128xf32>
    %197 = vector.extract_strided_slice %196 {offsets = [0, 0], sizes = [8, 32], strides = [1, 1]} : vector<8x128xf32> to vector<8x32xf32>
    %198 = arith.negf %197 : vector<8x32xf32>
    %199 = math.exp %198 : vector<8x32xf32>
    %cst_49 = arith.constant 1.000000e+00 : f32
    %200 = vector.broadcast %cst_49 : f32 to vector<8x32xf32>
    %201 = arith.addf %200, %199 : vector<8x32xf32>
    %202 = arith.divf %200, %201 : vector<8x32xf32>
    %203 = vector.extract_strided_slice %196 {offsets = [0, 32], sizes = [8, 32], strides = [1, 1]} : vector<8x128xf32> to vector<8x32xf32>
    %204 = arith.negf %203 : vector<8x32xf32>
    %205 = math.exp %204 : vector<8x32xf32>
    %cst_50 = arith.constant 1.000000e+00 : f32
    %206 = vector.broadcast %cst_50 : f32 to vector<8x32xf32>
    %207 = arith.addf %206, %205 : vector<8x32xf32>
    %208 = arith.divf %206, %207 : vector<8x32xf32>
    %209 = vector.extract_strided_slice %196 {offsets = [0, 64], sizes = [8, 32], strides = [1, 1]} : vector<8x128xf32> to vector<8x32xf32>
    %210 = math.tanh %209 : vector<8x32xf32>
    %211 = vector.extract_strided_slice %196 {offsets = [0, 96], sizes = [8, 32], strides = [1, 1]} : vector<8x128xf32> to vector<8x32xf32>
    %212 = arith.negf %211 : vector<8x32xf32>
    %213 = math.exp %212 : vector<8x32xf32>
    %cst_51 = arith.constant 1.000000e+00 : f32
    %214 = vector.broadcast %cst_51 : f32 to vector<8x32xf32>
    %215 = arith.addf %214, %213 : vector<8x32xf32>
    %216 = arith.divf %214, %215 : vector<8x32xf32>
    %217 = arith.mulf %208, %184 : vector<8x32xf32>
    %218 = arith.mulf %202, %210 : vector<8x32xf32>
    %219 = arith.addf %217, %218 : vector<8x32xf32>
    %220 = math.tanh %219 : vector<8x32xf32>
    %221 = arith.mulf %216, %220 : vector<8x32xf32>
    %222 = vector.broadcast %c4_i32 : i32 to vector<8x1xi32>
    %223 = arith.cmpi slt, %222, %0 : vector<8x1xi32>
    %224 = vector.shape_cast %223 : vector<8x1xi1> to vector<8x1xi1>
    %225 = vector.broadcast %224 : vector<8x1xi1> to vector<8x32xi1>
    %226 = arith.select %225, %221, %181 : vector<8x32xi1>, vector<8x32xf32>
    %227 = vector.shape_cast %223 : vector<8x1xi1> to vector<8x1xi1>
    %228 = vector.broadcast %227 : vector<8x1xi1> to vector<8x32xi1>
    %229 = arith.select %228, %219, %184 : vector<8x32xi1>, vector<8x32xf32>
    %230 = vector.shape_cast %223 : vector<8x1xi1> to vector<8x1xi1>
    %231 = vector.broadcast %230 : vector<8x1xi1> to vector<8x32xi1>
    %232 = arith.select %231, %221, %1 : vector<8x32xi1>, vector<8x32xf32>
    %233 = arith.index_cast %c4_i32 : i32 to index
    %c0_52 = arith.constant 0 : index
    %c0_53 = arith.constant 0 : index
    %234 = vector.load %arg19[%233, %c0_52, %c0_53] : memref<8x8x32xf32, #tpu.memory_space<vmem>>, vector<1x8x32xf32>
    %235 = vector.shape_cast %234 : vector<1x8x32xf32> to vector<8x32xf32>
    %236 = vector.shape_cast %232 : vector<8x32xf32> to vector<1x8x32xf32>
    tpu.vector_store %arg19[%233, %c0_52, %c0_53], %236 {strides = array<i32>} : memref<8x8x32xf32, #tpu.memory_space<vmem>>, vector<1x8x32xf32>,
    %c5_i32 = arith.constant 5 : i32
    %237 = arith.index_cast %c5_i32 : i32 to index
    %c0_54 = arith.constant 0 : index
    %c0_55 = arith.constant 0 : index
    %238 = vector.load %arg18[%237, %c0_54, %c0_55] : memref<8x8x128xf32, #tpu.memory_space<vmem>>, vector<1x8x128xf32>
    %239 = vector.shape_cast %238 : vector<1x8x128xf32> to vector<8x128xf32>
    %cst_56 = arith.constant dense<0.000000e+00> : vector<8x128xf32>
    %240 = tpu.matmul %226, %11, %cst_56 {dimension_numbers = #tpu.dot_dimension_numbers<[1], [0], [0], [1], [0, 0, 1, 1], [], []>} : vector<8x32xf32>, vector<32x128xf32>, vector<8x128xf32> -> vector<8x128xf32>
    %241 = arith.addf %239, %240 : vector<8x128xf32>
    %242 = vector.extract_strided_slice %241 {offsets = [0, 0], sizes = [8, 32], strides = [1, 1]} : vector<8x128xf32> to vector<8x32xf32>
    %243 = arith.negf %242 : vector<8x32xf32>
    %244 = math.exp %243 : vector<8x32xf32>
    %cst_57 = arith.constant 1.000000e+00 : f32
    %245 = vector.broadcast %cst_57 : f32 to vector<8x32xf32>
    %246 = arith.addf %245, %244 : vector<8x32xf32>
    %247 = arith.divf %245, %246 : vector<8x32xf32>
    %248 = vector.extract_strided_slice %241 {offsets = [0, 32], sizes = [8, 32], strides = [1, 1]} : vector<8x128xf32> to vector<8x32xf32>
    %249 = arith.negf %248 : vector<8x32xf32>
    %250 = math.exp %249 : vector<8x32xf32>
    %cst_58 = arith.constant 1.000000e+00 : f32
    %251 = vector.broadcast %cst_58 : f32 to vector<8x32xf32>
    %252 = arith.addf %251, %250 : vector<8x32xf32>
    %253 = arith.divf %251, %252 : vector<8x32xf32>
    %254 = vector.extract_strided_slice %241 {offsets = [0, 64], sizes = [8, 32], strides = [1, 1]} : vector<8x128xf32> to vector<8x32xf32>
    %255 = math.tanh %254 : vector<8x32xf32>
    %256 = vector.extract_strided_slice %241 {offsets = [0, 96], sizes = [8, 32], strides = [1, 1]} : vector<8x128xf32> to vector<8x32xf32>
    %257 = arith.negf %256 : vector<8x32xf32>
    %258 = math.exp %257 : vector<8x32xf32>
    %cst_59 = arith.constant 1.000000e+00 : f32
    %259 = vector.broadcast %cst_59 : f32 to vector<8x32xf32>
    %260 = arith.addf %259, %258 : vector<8x32xf32>
    %261 = arith.divf %259, %260 : vector<8x32xf32>
    %262 = arith.mulf %253, %229 : vector<8x32xf32>
    %263 = arith.mulf %247, %255 : vector<8x32xf32>
    %264 = arith.addf %262, %263 : vector<8x32xf32>
    %265 = math.tanh %264 : vector<8x32xf32>
    %266 = arith.mulf %261, %265 : vector<8x32xf32>
    %267 = vector.broadcast %c5_i32 : i32 to vector<8x1xi32>
    %268 = arith.cmpi slt, %267, %0 : vector<8x1xi32>
    %269 = vector.shape_cast %268 : vector<8x1xi1> to vector<8x1xi1>
    %270 = vector.broadcast %269 : vector<8x1xi1> to vector<8x32xi1>
    %271 = arith.select %270, %266, %226 : vector<8x32xi1>, vector<8x32xf32>
    %272 = vector.shape_cast %268 : vector<8x1xi1> to vector<8x1xi1>
    %273 = vector.broadcast %272 : vector<8x1xi1> to vector<8x32xi1>
    %274 = arith.select %273, %264, %229 : vector<8x32xi1>, vector<8x32xf32>
    %275 = vector.shape_cast %268 : vector<8x1xi1> to vector<8x1xi1>
    %276 = vector.broadcast %275 : vector<8x1xi1> to vector<8x32xi1>
    %277 = arith.select %276, %266, %1 : vector<8x32xi1>, vector<8x32xf32>
    %278 = arith.index_cast %c5_i32 : i32 to index
    %c0_60 = arith.constant 0 : index
    %c0_61 = arith.constant 0 : index
    %279 = vector.load %arg19[%278, %c0_60, %c0_61] : memref<8x8x32xf32, #tpu.memory_space<vmem>>, vector<1x8x32xf32>
    %280 = vector.shape_cast %279 : vector<1x8x32xf32> to vector<8x32xf32>
    %281 = vector.shape_cast %277 : vector<8x32xf32> to vector<1x8x32xf32>
    tpu.vector_store %arg19[%278, %c0_60, %c0_61], %281 {strides = array<i32>} : memref<8x8x32xf32, #tpu.memory_space<vmem>>, vector<1x8x32xf32>,
    %c6_i32 = arith.constant 6 : i32
    %282 = arith.index_cast %c6_i32 : i32 to index
    %c0_62 = arith.constant 0 : index
    %c0_63 = arith.constant 0 : index
    %283 = vector.load %arg18[%282, %c0_62, %c0_63] : memref<8x8x128xf32, #tpu.memory_space<vmem>>, vector<1x8x128xf32>
    %284 = vector.shape_cast %283 : vector<1x8x128xf32> to vector<8x128xf32>
    %cst_64 = arith.constant dense<0.000000e+00> : vector<8x128xf32>
    %285 = tpu.matmul %271, %11, %cst_64 {dimension_numbers = #tpu.dot_dimension_numbers<[1], [0], [0], [1], [0, 0, 1, 1], [], []>} : vector<8x32xf32>, vector<32x128xf32>, vector<8x128xf32> -> vector<8x128xf32>
    %286 = arith.addf %284, %285 : vector<8x128xf32>
    %287 = vector.extract_strided_slice %286 {offsets = [0, 0], sizes = [8, 32], strides = [1, 1]} : vector<8x128xf32> to vector<8x32xf32>
    %288 = arith.negf %287 : vector<8x32xf32>
    %289 = math.exp %288 : vector<8x32xf32>
    %cst_65 = arith.constant 1.000000e+00 : f32
    %290 = vector.broadcast %cst_65 : f32 to vector<8x32xf32>
    %291 = arith.addf %290, %289 : vector<8x32xf32>
    %292 = arith.divf %290, %291 : vector<8x32xf32>
    %293 = vector.extract_strided_slice %286 {offsets = [0, 32], sizes = [8, 32], strides = [1, 1]} : vector<8x128xf32> to vector<8x32xf32>
    %294 = arith.negf %293 : vector<8x32xf32>
    %295 = math.exp %294 : vector<8x32xf32>
    %cst_66 = arith.constant 1.000000e+00 : f32
    %296 = vector.broadcast %cst_66 : f32 to vector<8x32xf32>
    %297 = arith.addf %296, %295 : vector<8x32xf32>
    %298 = arith.divf %296, %297 : vector<8x32xf32>
    %299 = vector.extract_strided_slice %286 {offsets = [0, 64], sizes = [8, 32], strides = [1, 1]} : vector<8x128xf32> to vector<8x32xf32>
    %300 = math.tanh %299 : vector<8x32xf32>
    %301 = vector.extract_strided_slice %286 {offsets = [0, 96], sizes = [8, 32], strides = [1, 1]} : vector<8x128xf32> to vector<8x32xf32>
    %302 = arith.negf %301 : vector<8x32xf32>
    %303 = math.exp %302 : vector<8x32xf32>
    %cst_67 = arith.constant 1.000000e+00 : f32
    %304 = vector.broadcast %cst_67 : f32 to vector<8x32xf32>
    %305 = arith.addf %304, %303 : vector<8x32xf32>
    %306 = arith.divf %304, %305 : vector<8x32xf32>
    %307 = arith.mulf %298, %274 : vector<8x32xf32>
    %308 = arith.mulf %292, %300 : vector<8x32xf32>
    %309 = arith.addf %307, %308 : vector<8x32xf32>
    %310 = math.tanh %309 : vector<8x32xf32>
    %311 = arith.mulf %306, %310 : vector<8x32xf32>
    %312 = vector.broadcast %c6_i32 : i32 to vector<8x1xi32>
    %313 = arith.cmpi slt, %312, %0 : vector<8x1xi32>
    %314 = vector.shape_cast %313 : vector<8x1xi1> to vector<8x1xi1>
    %315 = vector.broadcast %314 : vector<8x1xi1> to vector<8x32xi1>
    %316 = arith.select %315, %311, %271 : vector<8x32xi1>, vector<8x32xf32>
    %317 = vector.shape_cast %313 : vector<8x1xi1> to vector<8x1xi1>
    %318 = vector.broadcast %317 : vector<8x1xi1> to vector<8x32xi1>
    %319 = arith.select %318, %309, %274 : vector<8x32xi1>, vector<8x32xf32>
    %320 = vector.shape_cast %313 : vector<8x1xi1> to vector<8x1xi1>
    %321 = vector.broadcast %320 : vector<8x1xi1> to vector<8x32xi1>
    %322 = arith.select %321, %311, %1 : vector<8x32xi1>, vector<8x32xf32>
    %323 = arith.index_cast %c6_i32 : i32 to index
    %c0_68 = arith.constant 0 : index
    %c0_69 = arith.constant 0 : index
    %324 = vector.load %arg19[%323, %c0_68, %c0_69] : memref<8x8x32xf32, #tpu.memory_space<vmem>>, vector<1x8x32xf32>
    %325 = vector.shape_cast %324 : vector<1x8x32xf32> to vector<8x32xf32>
    %326 = vector.shape_cast %322 : vector<8x32xf32> to vector<1x8x32xf32>
    tpu.vector_store %arg19[%323, %c0_68, %c0_69], %326 {strides = array<i32>} : memref<8x8x32xf32, #tpu.memory_space<vmem>>, vector<1x8x32xf32>,
    %c7_i32 = arith.constant 7 : i32
    %327 = arith.index_cast %c7_i32 : i32 to index
    %c0_70 = arith.constant 0 : index
    %c0_71 = arith.constant 0 : index
    %328 = vector.load %arg18[%327, %c0_70, %c0_71] : memref<8x8x128xf32, #tpu.memory_space<vmem>>, vector<1x8x128xf32>
    %329 = vector.shape_cast %328 : vector<1x8x128xf32> to vector<8x128xf32>
    %cst_72 = arith.constant dense<0.000000e+00> : vector<8x128xf32>
    %330 = tpu.matmul %316, %11, %cst_72 {dimension_numbers = #tpu.dot_dimension_numbers<[1], [0], [0], [1], [0, 0, 1, 1], [], []>} : vector<8x32xf32>, vector<32x128xf32>, vector<8x128xf32> -> vector<8x128xf32>
    %331 = arith.addf %329, %330 : vector<8x128xf32>
    %332 = vector.extract_strided_slice %331 {offsets = [0, 0], sizes = [8, 32], strides = [1, 1]} : vector<8x128xf32> to vector<8x32xf32>
    %333 = arith.negf %332 : vector<8x32xf32>
    %334 = math.exp %333 : vector<8x32xf32>
    %cst_73 = arith.constant 1.000000e+00 : f32
    %335 = vector.broadcast %cst_73 : f32 to vector<8x32xf32>
    %336 = arith.addf %335, %334 : vector<8x32xf32>
    %337 = arith.divf %335, %336 : vector<8x32xf32>
    %338 = vector.extract_strided_slice %331 {offsets = [0, 32], sizes = [8, 32], strides = [1, 1]} : vector<8x128xf32> to vector<8x32xf32>
    %339 = arith.negf %338 : vector<8x32xf32>
    %340 = math.exp %339 : vector<8x32xf32>
    %cst_74 = arith.constant 1.000000e+00 : f32
    %341 = vector.broadcast %cst_74 : f32 to vector<8x32xf32>
    %342 = arith.addf %341, %340 : vector<8x32xf32>
    %343 = arith.divf %341, %342 : vector<8x32xf32>
    %344 = vector.extract_strided_slice %331 {offsets = [0, 64], sizes = [8, 32], strides = [1, 1]} : vector<8x128xf32> to vector<8x32xf32>
    %345 = math.tanh %344 : vector<8x32xf32>
    %346 = vector.extract_strided_slice %331 {offsets = [0, 96], sizes = [8, 32], strides = [1, 1]} : vector<8x128xf32> to vector<8x32xf32>
    %347 = arith.negf %346 : vector<8x32xf32>
    %348 = math.exp %347 : vector<8x32xf32>
    %cst_75 = arith.constant 1.000000e+00 : f32
    %349 = vector.broadcast %cst_75 : f32 to vector<8x32xf32>
    %350 = arith.addf %349, %348 : vector<8x32xf32>
    %351 = arith.divf %349, %350 : vector<8x32xf32>
    %352 = arith.mulf %343, %319 : vector<8x32xf32>
    %353 = arith.mulf %337, %345 : vector<8x32xf32>
    %354 = arith.addf %352, %353 : vector<8x32xf32>
    %355 = math.tanh %354 : vector<8x32xf32>
    %356 = arith.mulf %351, %355 : vector<8x32xf32>
    %357 = vector.broadcast %c7_i32 : i32 to vector<8x1xi32>
    %358 = arith.cmpi slt, %357, %0 : vector<8x1xi32>
    %359 = vector.shape_cast %358 : vector<8x1xi1> to vector<8x1xi1>
    %360 = vector.broadcast %359 : vector<8x1xi1> to vector<8x32xi1>
    %361 = arith.select %360, %356, %316 : vector<8x32xi1>, vector<8x32xf32>
    %362 = vector.shape_cast %358 : vector<8x1xi1> to vector<8x1xi1>
    %363 = vector.broadcast %362 : vector<8x1xi1> to vector<8x32xi1>
    %364 = arith.select %363, %354, %319 : vector<8x32xi1>, vector<8x32xf32>
    %365 = vector.shape_cast %358 : vector<8x1xi1> to vector<8x1xi1>
    %366 = vector.broadcast %365 : vector<8x1xi1> to vector<8x32xi1>
    %367 = arith.select %366, %356, %1 : vector<8x32xi1>, vector<8x32xf32>
    %368 = arith.index_cast %c7_i32 : i32 to index
    %c0_76 = arith.constant 0 : index
    %c0_77 = arith.constant 0 : index
    %369 = vector.load %arg19[%368, %c0_76, %c0_77] : memref<8x8x32xf32, #tpu.memory_space<vmem>>, vector<1x8x32xf32>
    %370 = vector.shape_cast %369 : vector<1x8x32xf32> to vector<8x32xf32>
    %371 = vector.shape_cast %367 : vector<8x32xf32> to vector<1x8x32xf32>
    tpu.vector_store %arg19[%368, %c0_76, %c0_77], %371 {strides = array<i32>} : memref<8x8x32xf32, #tpu.memory_space<vmem>>, vector<1x8x32xf32>,
    %c8_i32 = arith.constant 8 : i32
    %c0_78 = arith.constant 0 : index
    %c0_79 = arith.constant 0 : index
    %372 = vector.load %arg6[%c0_78, %c0_79] : memref<16x128xf32, #tpu.memory_space<vmem>>, vector<16x128xf32>
    %cst_80 = arith.constant dense<0.000000e+00> : vector<64x128xf32>
    %373 = tpu.matmul %3, %372, %cst_80 {dimension_numbers = #tpu.dot_dimension_numbers<[1], [0], [0], [1], [0, 0, 1, 1], [], []>} : vector<64x16xf32>, vector<16x128xf32>, vector<64x128xf32> -> vector<64x128xf32>
    %c0_81 = arith.constant 0 : index
    %c0_82 = arith.constant 0 : index
    %374 = vector.load %arg8[%c0_81, %c0_82] : memref<1x128xf32, #tpu.memory_space<vmem>>, vector<1x128xf32>
    %375 = vector.broadcast %374 : vector<1x128xf32> to vector<64x128xf32>
    %376 = arith.addf %373, %375 : vector<64x128xf32>
    %377 = vector.shape_cast %376 : vector<64x128xf32> to vector<8x8x128xf32>
    %c0_83 = arith.constant 0 : index
    %c0_84 = arith.constant 0 : index
    %c0_85 = arith.constant 0 : index
    %378 = vector.load %arg18[%c0_83, %c0_84, %c0_85] : memref<8x8x128xf32, #tpu.memory_space<vmem>>, vector<8x8x128xf32>
    tpu.vector_store %arg18[%c0_83, %c0_84, %c0_85], %377 {strides = array<i32>} : memref<8x8x128xf32, #tpu.memory_space<vmem>>, vector<8x8x128xf32>,
    %c0_86 = arith.constant 0 : index
    %c0_87 = arith.constant 0 : index
    %379 = vector.load %arg7[%c0_86, %c0_87] : memref<32x128xf32, #tpu.memory_space<vmem>>, vector<32x128xf32>
    %c0_i32_88 = arith.constant 0 : i32
    %c7_i32_89 = arith.constant 7 : i32
    %380 = arith.subi %c7_i32_89, %c0_i32_88 : i32
    %381 = arith.index_cast %380 : i32 to index
    %c0_90 = arith.constant 0 : index
    %c0_91 = arith.constant 0 : index
    %382 = vector.load %arg18[%381, %c0_90, %c0_91] : memref<8x8x128xf32, #tpu.memory_space<vmem>>, vector<1x8x128xf32>
    %383 = vector.shape_cast %382 : vector<1x8x128xf32> to vector<8x128xf32>
    %cst_92 = arith.constant dense<0.000000e+00> : vector<8x128xf32>
    %384 = tpu.matmul %1, %379, %cst_92 {dimension_numbers = #tpu.dot_dimension_numbers<[1], [0], [0], [1], [0, 0, 1, 1], [], []>} : vector<8x32xf32>, vector<32x128xf32>, vector<8x128xf32> -> vector<8x128xf32>
    %385 = arith.addf %383, %384 : vector<8x128xf32>
    %386 = vector.extract_strided_slice %385 {offsets = [0, 0], sizes = [8, 32], strides = [1, 1]} : vector<8x128xf32> to vector<8x32xf32>
    %387 = arith.negf %386 : vector<8x32xf32>
    %388 = math.exp %387 : vector<8x32xf32>
    %cst_93 = arith.constant 1.000000e+00 : f32
    %389 = vector.broadcast %cst_93 : f32 to vector<8x32xf32>
    %390 = arith.addf %389, %388 : vector<8x32xf32>
    %391 = arith.divf %389, %390 : vector<8x32xf32>
    %392 = vector.extract_strided_slice %385 {offsets = [0, 32], sizes = [8, 32], strides = [1, 1]} : vector<8x128xf32> to vector<8x32xf32>
    %393 = arith.negf %392 : vector<8x32xf32>
    %394 = math.exp %393 : vector<8x32xf32>
    %cst_94 = arith.constant 1.000000e+00 : f32
    %395 = vector.broadcast %cst_94 : f32 to vector<8x32xf32>
    %396 = arith.addf %395, %394 : vector<8x32xf32>
    %397 = arith.divf %395, %396 : vector<8x32xf32>
    %398 = vector.extract_strided_slice %385 {offsets = [0, 64], sizes = [8, 32], strides = [1, 1]} : vector<8x128xf32> to vector<8x32xf32>
    %399 = math.tanh %398 : vector<8x32xf32>
    %400 = vector.extract_strided_slice %385 {offsets = [0, 96], sizes = [8, 32], strides = [1, 1]} : vector<8x128xf32> to vector<8x32xf32>
    %401 = arith.negf %400 : vector<8x32xf32>
    %402 = math.exp %401 : vector<8x32xf32>
    %cst_95 = arith.constant 1.000000e+00 : f32
    %403 = vector.broadcast %cst_95 : f32 to vector<8x32xf32>
    %404 = arith.addf %403, %402 : vector<8x32xf32>
    %405 = arith.divf %403, %404 : vector<8x32xf32>
    %406 = arith.mulf %397, %1 : vector<8x32xf32>
    %407 = arith.mulf %391, %399 : vector<8x32xf32>
    %408 = arith.addf %406, %407 : vector<8x32xf32>
    %409 = math.tanh %408 : vector<8x32xf32>
    %410 = arith.mulf %405, %409 : vector<8x32xf32>
    %411 = vector.broadcast %380 : i32 to vector<8x1xi32>
    %412 = arith.cmpi slt, %411, %0 : vector<8x1xi32>
    %413 = vector.shape_cast %412 : vector<8x1xi1> to vector<8x1xi1>
    %414 = vector.broadcast %413 : vector<8x1xi1> to vector<8x32xi1>
    %415 = arith.select %414, %410, %1 : vector<8x32xi1>, vector<8x32xf32>
    %416 = vector.shape_cast %412 : vector<8x1xi1> to vector<8x1xi1>
    %417 = vector.broadcast %416 : vector<8x1xi1> to vector<8x32xi1>
    %418 = arith.select %417, %408, %1 : vector<8x32xi1>, vector<8x32xf32>
    %419 = vector.shape_cast %412 : vector<8x1xi1> to vector<8x1xi1>
    %420 = vector.broadcast %419 : vector<8x1xi1> to vector<8x32xi1>
    %421 = arith.select %420, %410, %1 : vector<8x32xi1>, vector<8x32xf32>
    %422 = arith.index_cast %380 : i32 to index
    %c0_96 = arith.constant 0 : index
    %c0_97 = arith.constant 0 : index
    %423 = vector.load %arg20[%422, %c0_96, %c0_97] : memref<8x8x32xf32, #tpu.memory_space<vmem>>, vector<1x8x32xf32>
    %424 = vector.shape_cast %423 : vector<1x8x32xf32> to vector<8x32xf32>
    %425 = vector.shape_cast %421 : vector<8x32xf32> to vector<1x8x32xf32>
    tpu.vector_store %arg20[%422, %c0_96, %c0_97], %425 {strides = array<i32>} : memref<8x8x32xf32, #tpu.memory_space<vmem>>, vector<1x8x32xf32>,
    %c1_i32_98 = arith.constant 1 : i32
    %c7_i32_99 = arith.constant 7 : i32
    %426 = arith.subi %c7_i32_99, %c1_i32_98 : i32
    %427 = arith.index_cast %426 : i32 to index
    %c0_100 = arith.constant 0 : index
    %c0_101 = arith.constant 0 : index
    %428 = vector.load %arg18[%427, %c0_100, %c0_101] : memref<8x8x128xf32, #tpu.memory_space<vmem>>, vector<1x8x128xf32>
    %429 = vector.shape_cast %428 : vector<1x8x128xf32> to vector<8x128xf32>
    %cst_102 = arith.constant dense<0.000000e+00> : vector<8x128xf32>
    %430 = tpu.matmul %415, %379, %cst_102 {dimension_numbers = #tpu.dot_dimension_numbers<[1], [0], [0], [1], [0, 0, 1, 1], [], []>} : vector<8x32xf32>, vector<32x128xf32>, vector<8x128xf32> -> vector<8x128xf32>
    %431 = arith.addf %429, %430 : vector<8x128xf32>
    %432 = vector.extract_strided_slice %431 {offsets = [0, 0], sizes = [8, 32], strides = [1, 1]} : vector<8x128xf32> to vector<8x32xf32>
    %433 = arith.negf %432 : vector<8x32xf32>
    %434 = math.exp %433 : vector<8x32xf32>
    %cst_103 = arith.constant 1.000000e+00 : f32
    %435 = vector.broadcast %cst_103 : f32 to vector<8x32xf32>
    %436 = arith.addf %435, %434 : vector<8x32xf32>
    %437 = arith.divf %435, %436 : vector<8x32xf32>
    %438 = vector.extract_strided_slice %431 {offsets = [0, 32], sizes = [8, 32], strides = [1, 1]} : vector<8x128xf32> to vector<8x32xf32>
    %439 = arith.negf %438 : vector<8x32xf32>
    %440 = math.exp %439 : vector<8x32xf32>
    %cst_104 = arith.constant 1.000000e+00 : f32
    %441 = vector.broadcast %cst_104 : f32 to vector<8x32xf32>
    %442 = arith.addf %441, %440 : vector<8x32xf32>
    %443 = arith.divf %441, %442 : vector<8x32xf32>
    %444 = vector.extract_strided_slice %431 {offsets = [0, 64], sizes = [8, 32], strides = [1, 1]} : vector<8x128xf32> to vector<8x32xf32>
    %445 = math.tanh %444 : vector<8x32xf32>
    %446 = vector.extract_strided_slice %431 {offsets = [0, 96], sizes = [8, 32], strides = [1, 1]} : vector<8x128xf32> to vector<8x32xf32>
    %447 = arith.negf %446 : vector<8x32xf32>
    %448 = math.exp %447 : vector<8x32xf32>
    %cst_105 = arith.constant 1.000000e+00 : f32
    %449 = vector.broadcast %cst_105 : f32 to vector<8x32xf32>
    %450 = arith.addf %449, %448 : vector<8x32xf32>
    %451 = arith.divf %449, %450 : vector<8x32xf32>
    %452 = arith.mulf %443, %418 : vector<8x32xf32>
    %453 = arith.mulf %437, %445 : vector<8x32xf32>
    %454 = arith.addf %452, %453 : vector<8x32xf32>
    %455 = math.tanh %454 : vector<8x32xf32>
    %456 = arith.mulf %451, %455 : vector<8x32xf32>
    %457 = vector.broadcast %426 : i32 to vector<8x1xi32>
    %458 = arith.cmpi slt, %457, %0 : vector<8x1xi32>
    %459 = vector.shape_cast %458 : vector<8x1xi1> to vector<8x1xi1>
    %460 = vector.broadcast %459 : vector<8x1xi1> to vector<8x32xi1>
    %461 = arith.select %460, %456, %415 : vector<8x32xi1>, vector<8x32xf32>
    %462 = vector.shape_cast %458 : vector<8x1xi1> to vector<8x1xi1>
    %463 = vector.broadcast %462 : vector<8x1xi1> to vector<8x32xi1>
    %464 = arith.select %463, %454, %418 : vector<8x32xi1>, vector<8x32xf32>
    %465 = vector.shape_cast %458 : vector<8x1xi1> to vector<8x1xi1>
    %466 = vector.broadcast %465 : vector<8x1xi1> to vector<8x32xi1>
    %467 = arith.select %466, %456, %1 : vector<8x32xi1>, vector<8x32xf32>
    %468 = arith.index_cast %426 : i32 to index
    %c0_106 = arith.constant 0 : index
    %c0_107 = arith.constant 0 : index
    %469 = vector.load %arg20[%468, %c0_106, %c0_107] : memref<8x8x32xf32, #tpu.memory_space<vmem>>, vector<1x8x32xf32>
    %470 = vector.shape_cast %469 : vector<1x8x32xf32> to vector<8x32xf32>
    %471 = vector.shape_cast %467 : vector<8x32xf32> to vector<1x8x32xf32>
    tpu.vector_store %arg20[%468, %c0_106, %c0_107], %471 {strides = array<i32>} : memref<8x8x32xf32, #tpu.memory_space<vmem>>, vector<1x8x32xf32>,
    %c2_i32_108 = arith.constant 2 : i32
    %c7_i32_109 = arith.constant 7 : i32
    %472 = arith.subi %c7_i32_109, %c2_i32_108 : i32
    %473 = arith.index_cast %472 : i32 to index
    %c0_110 = arith.constant 0 : index
    %c0_111 = arith.constant 0 : index
    %474 = vector.load %arg18[%473, %c0_110, %c0_111] : memref<8x8x128xf32, #tpu.memory_space<vmem>>, vector<1x8x128xf32>
    %475 = vector.shape_cast %474 : vector<1x8x128xf32> to vector<8x128xf32>
    %cst_112 = arith.constant dense<0.000000e+00> : vector<8x128xf32>
    %476 = tpu.matmul %461, %379, %cst_112 {dimension_numbers = #tpu.dot_dimension_numbers<[1], [0], [0], [1], [0, 0, 1, 1], [], []>} : vector<8x32xf32>, vector<32x128xf32>, vector<8x128xf32> -> vector<8x128xf32>
    %477 = arith.addf %475, %476 : vector<8x128xf32>
    %478 = vector.extract_strided_slice %477 {offsets = [0, 0], sizes = [8, 32], strides = [1, 1]} : vector<8x128xf32> to vector<8x32xf32>
    %479 = arith.negf %478 : vector<8x32xf32>
    %480 = math.exp %479 : vector<8x32xf32>
    %cst_113 = arith.constant 1.000000e+00 : f32
    %481 = vector.broadcast %cst_113 : f32 to vector<8x32xf32>
    %482 = arith.addf %481, %480 : vector<8x32xf32>
    %483 = arith.divf %481, %482 : vector<8x32xf32>
    %484 = vector.extract_strided_slice %477 {offsets = [0, 32], sizes = [8, 32], strides = [1, 1]} : vector<8x128xf32> to vector<8x32xf32>
    %485 = arith.negf %484 : vector<8x32xf32>
    %486 = math.exp %485 : vector<8x32xf32>
    %cst_114 = arith.constant 1.000000e+00 : f32
    %487 = vector.broadcast %cst_114 : f32 to vector<8x32xf32>
    %488 = arith.addf %487, %486 : vector<8x32xf32>
    %489 = arith.divf %487, %488 : vector<8x32xf32>
    %490 = vector.extract_strided_slice %477 {offsets = [0, 64], sizes = [8, 32], strides = [1, 1]} : vector<8x128xf32> to vector<8x32xf32>
    %491 = math.tanh %490 : vector<8x32xf32>
    %492 = vector.extract_strided_slice %477 {offsets = [0, 96], sizes = [8, 32], strides = [1, 1]} : vector<8x128xf32> to vector<8x32xf32>
    %493 = arith.negf %492 : vector<8x32xf32>
    %494 = math.exp %493 : vector<8x32xf32>
    %cst_115 = arith.constant 1.000000e+00 : f32
    %495 = vector.broadcast %cst_115 : f32 to vector<8x32xf32>
    %496 = arith.addf %495, %494 : vector<8x32xf32>
    %497 = arith.divf %495, %496 : vector<8x32xf32>
    %498 = arith.mulf %489, %464 : vector<8x32xf32>
    %499 = arith.mulf %483, %491 : vector<8x32xf32>
    %500 = arith.addf %498, %499 : vector<8x32xf32>
    %501 = math.tanh %500 : vector<8x32xf32>
    %502 = arith.mulf %497, %501 : vector<8x32xf32>
    %503 = vector.broadcast %472 : i32 to vector<8x1xi32>
    %504 = arith.cmpi slt, %503, %0 : vector<8x1xi32>
    %505 = vector.shape_cast %504 : vector<8x1xi1> to vector<8x1xi1>
    %506 = vector.broadcast %505 : vector<8x1xi1> to vector<8x32xi1>
    %507 = arith.select %506, %502, %461 : vector<8x32xi1>, vector<8x32xf32>
    %508 = vector.shape_cast %504 : vector<8x1xi1> to vector<8x1xi1>
    %509 = vector.broadcast %508 : vector<8x1xi1> to vector<8x32xi1>
    %510 = arith.select %509, %500, %464 : vector<8x32xi1>, vector<8x32xf32>
    %511 = vector.shape_cast %504 : vector<8x1xi1> to vector<8x1xi1>
    %512 = vector.broadcast %511 : vector<8x1xi1> to vector<8x32xi1>
    %513 = arith.select %512, %502, %1 : vector<8x32xi1>, vector<8x32xf32>
    %514 = arith.index_cast %472 : i32 to index
    %c0_116 = arith.constant 0 : index
    %c0_117 = arith.constant 0 : index
    %515 = vector.load %arg20[%514, %c0_116, %c0_117] : memref<8x8x32xf32, #tpu.memory_space<vmem>>, vector<1x8x32xf32>
    %516 = vector.shape_cast %515 : vector<1x8x32xf32> to vector<8x32xf32>
    %517 = vector.shape_cast %513 : vector<8x32xf32> to vector<1x8x32xf32>
    tpu.vector_store %arg20[%514, %c0_116, %c0_117], %517 {strides = array<i32>} : memref<8x8x32xf32, #tpu.memory_space<vmem>>, vector<1x8x32xf32>,
    %c3_i32_118 = arith.constant 3 : i32
    %c7_i32_119 = arith.constant 7 : i32
    %518 = arith.subi %c7_i32_119, %c3_i32_118 : i32
    %519 = arith.index_cast %518 : i32 to index
    %c0_120 = arith.constant 0 : index
    %c0_121 = arith.constant 0 : index
    %520 = vector.load %arg18[%519, %c0_120, %c0_121] : memref<8x8x128xf32, #tpu.memory_space<vmem>>, vector<1x8x128xf32>
    %521 = vector.shape_cast %520 : vector<1x8x128xf32> to vector<8x128xf32>
    %cst_122 = arith.constant dense<0.000000e+00> : vector<8x128xf32>
    %522 = tpu.matmul %507, %379, %cst_122 {dimension_numbers = #tpu.dot_dimension_numbers<[1], [0], [0], [1], [0, 0, 1, 1], [], []>} : vector<8x32xf32>, vector<32x128xf32>, vector<8x128xf32> -> vector<8x128xf32>
    %523 = arith.addf %521, %522 : vector<8x128xf32>
    %524 = vector.extract_strided_slice %523 {offsets = [0, 0], sizes = [8, 32], strides = [1, 1]} : vector<8x128xf32> to vector<8x32xf32>
    %525 = arith.negf %524 : vector<8x32xf32>
    %526 = math.exp %525 : vector<8x32xf32>
    %cst_123 = arith.constant 1.000000e+00 : f32
    %527 = vector.broadcast %cst_123 : f32 to vector<8x32xf32>
    %528 = arith.addf %527, %526 : vector<8x32xf32>
    %529 = arith.divf %527, %528 : vector<8x32xf32>
    %530 = vector.extract_strided_slice %523 {offsets = [0, 32], sizes = [8, 32], strides = [1, 1]} : vector<8x128xf32> to vector<8x32xf32>
    %531 = arith.negf %530 : vector<8x32xf32>
    %532 = math.exp %531 : vector<8x32xf32>
    %cst_124 = arith.constant 1.000000e+00 : f32
    %533 = vector.broadcast %cst_124 : f32 to vector<8x32xf32>
    %534 = arith.addf %533, %532 : vector<8x32xf32>
    %535 = arith.divf %533, %534 : vector<8x32xf32>
    %536 = vector.extract_strided_slice %523 {offsets = [0, 64], sizes = [8, 32], strides = [1, 1]} : vector<8x128xf32> to vector<8x32xf32>
    %537 = math.tanh %536 : vector<8x32xf32>
    %538 = vector.extract_strided_slice %523 {offsets = [0, 96], sizes = [8, 32], strides = [1, 1]} : vector<8x128xf32> to vector<8x32xf32>
    %539 = arith.negf %538 : vector<8x32xf32>
    %540 = math.exp %539 : vector<8x32xf32>
    %cst_125 = arith.constant 1.000000e+00 : f32
    %541 = vector.broadcast %cst_125 : f32 to vector<8x32xf32>
    %542 = arith.addf %541, %540 : vector<8x32xf32>
    %543 = arith.divf %541, %542 : vector<8x32xf32>
    %544 = arith.mulf %535, %510 : vector<8x32xf32>
    %545 = arith.mulf %529, %537 : vector<8x32xf32>
    %546 = arith.addf %544, %545 : vector<8x32xf32>
    %547 = math.tanh %546 : vector<8x32xf32>
    %548 = arith.mulf %543, %547 : vector<8x32xf32>
    %549 = vector.broadcast %518 : i32 to vector<8x1xi32>
    %550 = arith.cmpi slt, %549, %0 : vector<8x1xi32>
    %551 = vector.shape_cast %550 : vector<8x1xi1> to vector<8x1xi1>
    %552 = vector.broadcast %551 : vector<8x1xi1> to vector<8x32xi1>
    %553 = arith.select %552, %548, %507 : vector<8x32xi1>, vector<8x32xf32>
    %554 = vector.shape_cast %550 : vector<8x1xi1> to vector<8x1xi1>
    %555 = vector.broadcast %554 : vector<8x1xi1> to vector<8x32xi1>
    %556 = arith.select %555, %546, %510 : vector<8x32xi1>, vector<8x32xf32>
    %557 = vector.shape_cast %550 : vector<8x1xi1> to vector<8x1xi1>
    %558 = vector.broadcast %557 : vector<8x1xi1> to vector<8x32xi1>
    %559 = arith.select %558, %548, %1 : vector<8x32xi1>, vector<8x32xf32>
    %560 = arith.index_cast %518 : i32 to index
    %c0_126 = arith.constant 0 : index
    %c0_127 = arith.constant 0 : index
    %561 = vector.load %arg20[%560, %c0_126, %c0_127] : memref<8x8x32xf32, #tpu.memory_space<vmem>>, vector<1x8x32xf32>
    %562 = vector.shape_cast %561 : vector<1x8x32xf32> to vector<8x32xf32>
    %563 = vector.shape_cast %559 : vector<8x32xf32> to vector<1x8x32xf32>
    tpu.vector_store %arg20[%560, %c0_126, %c0_127], %563 {strides = array<i32>} : memref<8x8x32xf32, #tpu.memory_space<vmem>>, vector<1x8x32xf32>,
    %c4_i32_128 = arith.constant 4 : i32
    %c7_i32_129 = arith.constant 7 : i32
    %564 = arith.subi %c7_i32_129, %c4_i32_128 : i32
    %565 = arith.index_cast %564 : i32 to index
    %c0_130 = arith.constant 0 : index
    %c0_131 = arith.constant 0 : index
    %566 = vector.load %arg18[%565, %c0_130, %c0_131] : memref<8x8x128xf32, #tpu.memory_space<vmem>>, vector<1x8x128xf32>
    %567 = vector.shape_cast %566 : vector<1x8x128xf32> to vector<8x128xf32>
    %cst_132 = arith.constant dense<0.000000e+00> : vector<8x128xf32>
    %568 = tpu.matmul %553, %379, %cst_132 {dimension_numbers = #tpu.dot_dimension_numbers<[1], [0], [0], [1], [0, 0, 1, 1], [], []>} : vector<8x32xf32>, vector<32x128xf32>, vector<8x128xf32> -> vector<8x128xf32>
    %569 = arith.addf %567, %568 : vector<8x128xf32>
    %570 = vector.extract_strided_slice %569 {offsets = [0, 0], sizes = [8, 32], strides = [1, 1]} : vector<8x128xf32> to vector<8x32xf32>
    %571 = arith.negf %570 : vector<8x32xf32>
    %572 = math.exp %571 : vector<8x32xf32>
    %cst_133 = arith.constant 1.000000e+00 : f32
    %573 = vector.broadcast %cst_133 : f32 to vector<8x32xf32>
    %574 = arith.addf %573, %572 : vector<8x32xf32>
    %575 = arith.divf %573, %574 : vector<8x32xf32>
    %576 = vector.extract_strided_slice %569 {offsets = [0, 32], sizes = [8, 32], strides = [1, 1]} : vector<8x128xf32> to vector<8x32xf32>
    %577 = arith.negf %576 : vector<8x32xf32>
    %578 = math.exp %577 : vector<8x32xf32>
    %cst_134 = arith.constant 1.000000e+00 : f32
    %579 = vector.broadcast %cst_134 : f32 to vector<8x32xf32>
    %580 = arith.addf %579, %578 : vector<8x32xf32>
    %581 = arith.divf %579, %580 : vector<8x32xf32>
    %582 = vector.extract_strided_slice %569 {offsets = [0, 64], sizes = [8, 32], strides = [1, 1]} : vector<8x128xf32> to vector<8x32xf32>
    %583 = math.tanh %582 : vector<8x32xf32>
    %584 = vector.extract_strided_slice %569 {offsets = [0, 96], sizes = [8, 32], strides = [1, 1]} : vector<8x128xf32> to vector<8x32xf32>
    %585 = arith.negf %584 : vector<8x32xf32>
    %586 = math.exp %585 : vector<8x32xf32>
    %cst_135 = arith.constant 1.000000e+00 : f32
    %587 = vector.broadcast %cst_135 : f32 to vector<8x32xf32>
    %588 = arith.addf %587, %586 : vector<8x32xf32>
    %589 = arith.divf %587, %588 : vector<8x32xf32>
    %590 = arith.mulf %581, %556 : vector<8x32xf32>
    %591 = arith.mulf %575, %583 : vector<8x32xf32>
    %592 = arith.addf %590, %591 : vector<8x32xf32>
    %593 = math.tanh %592 : vector<8x32xf32>
    %594 = arith.mulf %589, %593 : vector<8x32xf32>
    %595 = vector.broadcast %564 : i32 to vector<8x1xi32>
    %596 = arith.cmpi slt, %595, %0 : vector<8x1xi32>
    %597 = vector.shape_cast %596 : vector<8x1xi1> to vector<8x1xi1>
    %598 = vector.broadcast %597 : vector<8x1xi1> to vector<8x32xi1>
    %599 = arith.select %598, %594, %553 : vector<8x32xi1>, vector<8x32xf32>
    %600 = vector.shape_cast %596 : vector<8x1xi1> to vector<8x1xi1>
    %601 = vector.broadcast %600 : vector<8x1xi1> to vector<8x32xi1>
    %602 = arith.select %601, %592, %556 : vector<8x32xi1>, vector<8x32xf32>
    %603 = vector.shape_cast %596 : vector<8x1xi1> to vector<8x1xi1>
    %604 = vector.broadcast %603 : vector<8x1xi1> to vector<8x32xi1>
    %605 = arith.select %604, %594, %1 : vector<8x32xi1>, vector<8x32xf32>
    %606 = arith.index_cast %564 : i32 to index
    %c0_136 = arith.constant 0 : index
    %c0_137 = arith.constant 0 : index
    %607 = vector.load %arg20[%606, %c0_136, %c0_137] : memref<8x8x32xf32, #tpu.memory_space<vmem>>, vector<1x8x32xf32>
    %608 = vector.shape_cast %607 : vector<1x8x32xf32> to vector<8x32xf32>
    %609 = vector.shape_cast %605 : vector<8x32xf32> to vector<1x8x32xf32>
    tpu.vector_store %arg20[%606, %c0_136, %c0_137], %609 {strides = array<i32>} : memref<8x8x32xf32, #tpu.memory_space<vmem>>, vector<1x8x32xf32>,
    %c5_i32_138 = arith.constant 5 : i32
    %c7_i32_139 = arith.constant 7 : i32
    %610 = arith.subi %c7_i32_139, %c5_i32_138 : i32
    %611 = arith.index_cast %610 : i32 to index
    %c0_140 = arith.constant 0 : index
    %c0_141 = arith.constant 0 : index
    %612 = vector.load %arg18[%611, %c0_140, %c0_141] : memref<8x8x128xf32, #tpu.memory_space<vmem>>, vector<1x8x128xf32>
    %613 = vector.shape_cast %612 : vector<1x8x128xf32> to vector<8x128xf32>
    %cst_142 = arith.constant dense<0.000000e+00> : vector<8x128xf32>
    %614 = tpu.matmul %599, %379, %cst_142 {dimension_numbers = #tpu.dot_dimension_numbers<[1], [0], [0], [1], [0, 0, 1, 1], [], []>} : vector<8x32xf32>, vector<32x128xf32>, vector<8x128xf32> -> vector<8x128xf32>
    %615 = arith.addf %613, %614 : vector<8x128xf32>
    %616 = vector.extract_strided_slice %615 {offsets = [0, 0], sizes = [8, 32], strides = [1, 1]} : vector<8x128xf32> to vector<8x32xf32>
    %617 = arith.negf %616 : vector<8x32xf32>
    %618 = math.exp %617 : vector<8x32xf32>
    %cst_143 = arith.constant 1.000000e+00 : f32
    %619 = vector.broadcast %cst_143 : f32 to vector<8x32xf32>
    %620 = arith.addf %619, %618 : vector<8x32xf32>
    %621 = arith.divf %619, %620 : vector<8x32xf32>
    %622 = vector.extract_strided_slice %615 {offsets = [0, 32], sizes = [8, 32], strides = [1, 1]} : vector<8x128xf32> to vector<8x32xf32>
    %623 = arith.negf %622 : vector<8x32xf32>
    %624 = math.exp %623 : vector<8x32xf32>
    %cst_144 = arith.constant 1.000000e+00 : f32
    %625 = vector.broadcast %cst_144 : f32 to vector<8x32xf32>
    %626 = arith.addf %625, %624 : vector<8x32xf32>
    %627 = arith.divf %625, %626 : vector<8x32xf32>
    %628 = vector.extract_strided_slice %615 {offsets = [0, 64], sizes = [8, 32], strides = [1, 1]} : vector<8x128xf32> to vector<8x32xf32>
    %629 = math.tanh %628 : vector<8x32xf32>
    %630 = vector.extract_strided_slice %615 {offsets = [0, 96], sizes = [8, 32], strides = [1, 1]} : vector<8x128xf32> to vector<8x32xf32>
    %631 = arith.negf %630 : vector<8x32xf32>
    %632 = math.exp %631 : vector<8x32xf32>
    %cst_145 = arith.constant 1.000000e+00 : f32
    %633 = vector.broadcast %cst_145 : f32 to vector<8x32xf32>
    %634 = arith.addf %633, %632 : vector<8x32xf32>
    %635 = arith.divf %633, %634 : vector<8x32xf32>
    %636 = arith.mulf %627, %602 : vector<8x32xf32>
    %637 = arith.mulf %621, %629 : vector<8x32xf32>
    %638 = arith.addf %636, %637 : vector<8x32xf32>
    %639 = math.tanh %638 : vector<8x32xf32>
    %640 = arith.mulf %635, %639 : vector<8x32xf32>
    %641 = vector.broadcast %610 : i32 to vector<8x1xi32>
    %642 = arith.cmpi slt, %641, %0 : vector<8x1xi32>
    %643 = vector.shape_cast %642 : vector<8x1xi1> to vector<8x1xi1>
    %644 = vector.broadcast %643 : vector<8x1xi1> to vector<8x32xi1>
    %645 = arith.select %644, %640, %599 : vector<8x32xi1>, vector<8x32xf32>
    %646 = vector.shape_cast %642 : vector<8x1xi1> to vector<8x1xi1>
    %647 = vector.broadcast %646 : vector<8x1xi1> to vector<8x32xi1>
    %648 = arith.select %647, %638, %602 : vector<8x32xi1>, vector<8x32xf32>
    %649 = vector.shape_cast %642 : vector<8x1xi1> to vector<8x1xi1>
    %650 = vector.broadcast %649 : vector<8x1xi1> to vector<8x32xi1>
    %651 = arith.select %650, %640, %1 : vector<8x32xi1>, vector<8x32xf32>
    %652 = arith.index_cast %610 : i32 to index
    %c0_146 = arith.constant 0 : index
    %c0_147 = arith.constant 0 : index
    %653 = vector.load %arg20[%652, %c0_146, %c0_147] : memref<8x8x32xf32, #tpu.memory_space<vmem>>, vector<1x8x32xf32>
    %654 = vector.shape_cast %653 : vector<1x8x32xf32> to vector<8x32xf32>
    %655 = vector.shape_cast %651 : vector<8x32xf32> to vector<1x8x32xf32>
    tpu.vector_store %arg20[%652, %c0_146, %c0_147], %655 {strides = array<i32>} : memref<8x8x32xf32, #tpu.memory_space<vmem>>, vector<1x8x32xf32>,
    %c6_i32_148 = arith.constant 6 : i32
    %c7_i32_149 = arith.constant 7 : i32
    %656 = arith.subi %c7_i32_149, %c6_i32_148 : i32
    %657 = arith.index_cast %656 : i32 to index
    %c0_150 = arith.constant 0 : index
    %c0_151 = arith.constant 0 : index
    %658 = vector.load %arg18[%657, %c0_150, %c0_151] : memref<8x8x128xf32, #tpu.memory_space<vmem>>, vector<1x8x128xf32>
    %659 = vector.shape_cast %658 : vector<1x8x128xf32> to vector<8x128xf32>
    %cst_152 = arith.constant dense<0.000000e+00> : vector<8x128xf32>
    %660 = tpu.matmul %645, %379, %cst_152 {dimension_numbers = #tpu.dot_dimension_numbers<[1], [0], [0], [1], [0, 0, 1, 1], [], []>} : vector<8x32xf32>, vector<32x128xf32>, vector<8x128xf32> -> vector<8x128xf32>
    %661 = arith.addf %659, %660 : vector<8x128xf32>
    %662 = vector.extract_strided_slice %661 {offsets = [0, 0], sizes = [8, 32], strides = [1, 1]} : vector<8x128xf32> to vector<8x32xf32>
    %663 = arith.negf %662 : vector<8x32xf32>
    %664 = math.exp %663 : vector<8x32xf32>
    %cst_153 = arith.constant 1.000000e+00 : f32
    %665 = vector.broadcast %cst_153 : f32 to vector<8x32xf32>
    %666 = arith.addf %665, %664 : vector<8x32xf32>
    %667 = arith.divf %665, %666 : vector<8x32xf32>
    %668 = vector.extract_strided_slice %661 {offsets = [0, 32], sizes = [8, 32], strides = [1, 1]} : vector<8x128xf32> to vector<8x32xf32>
    %669 = arith.negf %668 : vector<8x32xf32>
    %670 = math.exp %669 : vector<8x32xf32>
    %cst_154 = arith.constant 1.000000e+00 : f32
    %671 = vector.broadcast %cst_154 : f32 to vector<8x32xf32>
    %672 = arith.addf %671, %670 : vector<8x32xf32>
    %673 = arith.divf %671, %672 : vector<8x32xf32>
    %674 = vector.extract_strided_slice %661 {offsets = [0, 64], sizes = [8, 32], strides = [1, 1]} : vector<8x128xf32> to vector<8x32xf32>
    %675 = math.tanh %674 : vector<8x32xf32>
    %676 = vector.extract_strided_slice %661 {offsets = [0, 96], sizes = [8, 32], strides = [1, 1]} : vector<8x128xf32> to vector<8x32xf32>
    %677 = arith.negf %676 : vector<8x32xf32>
    %678 = math.exp %677 : vector<8x32xf32>
    %cst_155 = arith.constant 1.000000e+00 : f32
    %679 = vector.broadcast %cst_155 : f32 to vector<8x32xf32>
    %680 = arith.addf %679, %678 : vector<8x32xf32>
    %681 = arith.divf %679, %680 : vector<8x32xf32>
    %682 = arith.mulf %673, %648 : vector<8x32xf32>
    %683 = arith.mulf %667, %675 : vector<8x32xf32>
    %684 = arith.addf %682, %683 : vector<8x32xf32>
    %685 = math.tanh %684 : vector<8x32xf32>
    %686 = arith.mulf %681, %685 : vector<8x32xf32>
    %687 = vector.broadcast %656 : i32 to vector<8x1xi32>
    %688 = arith.cmpi slt, %687, %0 : vector<8x1xi32>
    %689 = vector.shape_cast %688 : vector<8x1xi1> to vector<8x1xi1>
    %690 = vector.broadcast %689 : vector<8x1xi1> to vector<8x32xi1>
    %691 = arith.select %690, %686, %645 : vector<8x32xi1>, vector<8x32xf32>
    %692 = vector.shape_cast %688 : vector<8x1xi1> to vector<8x1xi1>
    %693 = vector.broadcast %692 : vector<8x1xi1> to vector<8x32xi1>
    %694 = arith.select %693, %684, %648 : vector<8x32xi1>, vector<8x32xf32>
    %695 = vector.shape_cast %688 : vector<8x1xi1> to vector<8x1xi1>
    %696 = vector.broadcast %695 : vector<8x1xi1> to vector<8x32xi1>
    %697 = arith.select %696, %686, %1 : vector<8x32xi1>, vector<8x32xf32>
    %698 = arith.index_cast %656 : i32 to index
    %c0_156 = arith.constant 0 : index
    %c0_157 = arith.constant 0 : index
    %699 = vector.load %arg20[%698, %c0_156, %c0_157] : memref<8x8x32xf32, #tpu.memory_space<vmem>>, vector<1x8x32xf32>
    %700 = vector.shape_cast %699 : vector<1x8x32xf32> to vector<8x32xf32>
    %701 = vector.shape_cast %697 : vector<8x32xf32> to vector<1x8x32xf32>
    tpu.vector_store %arg20[%698, %c0_156, %c0_157], %701 {strides = array<i32>} : memref<8x8x32xf32, #tpu.memory_space<vmem>>, vector<1x8x32xf32>,
    %c7_i32_158 = arith.constant 7 : i32
    %c7_i32_159 = arith.constant 7 : i32
    %702 = arith.subi %c7_i32_159, %c7_i32_158 : i32
    %703 = arith.index_cast %702 : i32 to index
    %c0_160 = arith.constant 0 : index
    %c0_161 = arith.constant 0 : index
    %704 = vector.load %arg18[%703, %c0_160, %c0_161] : memref<8x8x128xf32, #tpu.memory_space<vmem>>, vector<1x8x128xf32>
    %705 = vector.shape_cast %704 : vector<1x8x128xf32> to vector<8x128xf32>
    %cst_162 = arith.constant dense<0.000000e+00> : vector<8x128xf32>
    %706 = tpu.matmul %691, %379, %cst_162 {dimension_numbers = #tpu.dot_dimension_numbers<[1], [0], [0], [1], [0, 0, 1, 1], [], []>} : vector<8x32xf32>, vector<32x128xf32>, vector<8x128xf32> -> vector<8x128xf32>
    %707 = arith.addf %705, %706 : vector<8x128xf32>
    %708 = vector.extract_strided_slice %707 {offsets = [0, 0], sizes = [8, 32], strides = [1, 1]} : vector<8x128xf32> to vector<8x32xf32>
    %709 = arith.negf %708 : vector<8x32xf32>
    %710 = math.exp %709 : vector<8x32xf32>
    %cst_163 = arith.constant 1.000000e+00 : f32
    %711 = vector.broadcast %cst_163 : f32 to vector<8x32xf32>
    %712 = arith.addf %711, %710 : vector<8x32xf32>
    %713 = arith.divf %711, %712 : vector<8x32xf32>
    %714 = vector.extract_strided_slice %707 {offsets = [0, 32], sizes = [8, 32], strides = [1, 1]} : vector<8x128xf32> to vector<8x32xf32>
    %715 = arith.negf %714 : vector<8x32xf32>
    %716 = math.exp %715 : vector<8x32xf32>
    %cst_164 = arith.constant 1.000000e+00 : f32
    %717 = vector.broadcast %cst_164 : f32 to vector<8x32xf32>
    %718 = arith.addf %717, %716 : vector<8x32xf32>
    %719 = arith.divf %717, %718 : vector<8x32xf32>
    %720 = vector.extract_strided_slice %707 {offsets = [0, 64], sizes = [8, 32], strides = [1, 1]} : vector<8x128xf32> to vector<8x32xf32>
    %721 = math.tanh %720 : vector<8x32xf32>
    %722 = vector.extract_strided_slice %707 {offsets = [0, 96], sizes = [8, 32], strides = [1, 1]} : vector<8x128xf32> to vector<8x32xf32>
    %723 = arith.negf %722 : vector<8x32xf32>
    %724 = math.exp %723 : vector<8x32xf32>
    %cst_165 = arith.constant 1.000000e+00 : f32
    %725 = vector.broadcast %cst_165 : f32 to vector<8x32xf32>
    %726 = arith.addf %725, %724 : vector<8x32xf32>
    %727 = arith.divf %725, %726 : vector<8x32xf32>
    %728 = arith.mulf %719, %694 : vector<8x32xf32>
    %729 = arith.mulf %713, %721 : vector<8x32xf32>
    %730 = arith.addf %728, %729 : vector<8x32xf32>
    %731 = math.tanh %730 : vector<8x32xf32>
    %732 = arith.mulf %727, %731 : vector<8x32xf32>
    %733 = vector.broadcast %702 : i32 to vector<8x1xi32>
    %734 = arith.cmpi slt, %733, %0 : vector<8x1xi32>
    %735 = vector.shape_cast %734 : vector<8x1xi1> to vector<8x1xi1>
    %736 = vector.broadcast %735 : vector<8x1xi1> to vector<8x32xi1>
    %737 = arith.select %736, %732, %691 : vector<8x32xi1>, vector<8x32xf32>
    %738 = vector.shape_cast %734 : vector<8x1xi1> to vector<8x1xi1>
    %739 = vector.broadcast %738 : vector<8x1xi1> to vector<8x32xi1>
    %740 = arith.select %739, %730, %694 : vector<8x32xi1>, vector<8x32xf32>
    %741 = vector.shape_cast %734 : vector<8x1xi1> to vector<8x1xi1>
    %742 = vector.broadcast %741 : vector<8x1xi1> to vector<8x32xi1>
    %743 = arith.select %742, %732, %1 : vector<8x32xi1>, vector<8x32xf32>
    %744 = arith.index_cast %702 : i32 to index
    %c0_166 = arith.constant 0 : index
    %c0_167 = arith.constant 0 : index
    %745 = vector.load %arg20[%744, %c0_166, %c0_167] : memref<8x8x32xf32, #tpu.memory_space<vmem>>, vector<1x8x32xf32>
    %746 = vector.shape_cast %745 : vector<1x8x32xf32> to vector<8x32xf32>
    %747 = vector.shape_cast %743 : vector<8x32xf32> to vector<1x8x32xf32>
    tpu.vector_store %arg20[%744, %c0_166, %c0_167], %747 {strides = array<i32>} : memref<8x8x32xf32, #tpu.memory_space<vmem>>, vector<1x8x32xf32>,
    %c8_i32_168 = arith.constant 8 : i32
    %c0_169 = arith.constant 0 : index
    %c0_170 = arith.constant 0 : index
    %c0_171 = arith.constant 0 : index
    %748 = vector.load %arg19[%c0_169, %c0_170, %c0_171] : memref<8x8x32xf32, #tpu.memory_space<vmem>>, vector<8x8x32xf32>
    %749 = vector.shape_cast %748 : vector<8x8x32xf32> to vector<64x32xf32>
    %c0_172 = arith.constant 0 : index
    %c0_173 = arith.constant 0 : index
    %c0_174 = arith.constant 0 : index
    %750 = vector.load %arg20[%c0_172, %c0_173, %c0_174] : memref<8x8x32xf32, #tpu.memory_space<vmem>>, vector<8x8x32xf32>
    %751 = vector.shape_cast %750 : vector<8x8x32xf32> to vector<64x32xf32>
    %c0_175 = arith.constant 0 : index
    %c0_176 = arith.constant 0 : index
    %752 = vector.load %arg9[%c0_175, %c0_176] : memref<64x128xf32, #tpu.memory_space<vmem>>, vector<64x128xf32>
    %753 = vector.extract_strided_slice %752 {offsets = [0, 0], sizes = [32, 128], strides = [1, 1]} : vector<64x128xf32> to vector<32x128xf32>
    %cst_177 = arith.constant dense<0.000000e+00> : vector<64x128xf32>
    %754 = tpu.matmul %749, %753, %cst_177 {dimension_numbers = #tpu.dot_dimension_numbers<[1], [0], [0], [1], [0, 0, 1, 1], [], []>} : vector<64x32xf32>, vector<32x128xf32>, vector<64x128xf32> -> vector<64x128xf32>
    %755 = vector.extract_strided_slice %752 {offsets = [32, 0], sizes = [32, 128], strides = [1, 1]} : vector<64x128xf32> to vector<32x128xf32>
    %cst_178 = arith.constant dense<0.000000e+00> : vector<64x128xf32>
    %756 = tpu.matmul %751, %755, %cst_178 {dimension_numbers = #tpu.dot_dimension_numbers<[1], [0], [0], [1], [0, 0, 1, 1], [], []>} : vector<64x32xf32>, vector<32x128xf32>, vector<64x128xf32> -> vector<64x128xf32>
    %757 = arith.addf %754, %756 : vector<64x128xf32>
    %c0_179 = arith.constant 0 : index
    %c0_180 = arith.constant 0 : index
    %758 = vector.load %arg11[%c0_179, %c0_180] : memref<1x128xf32, #tpu.memory_space<vmem>>, vector<1x128xf32>
    %759 = vector.broadcast %758 : vector<1x128xf32> to vector<64x128xf32>
    %760 = arith.addf %757, %759 : vector<64x128xf32>
    %761 = vector.shape_cast %760 : vector<64x128xf32> to vector<8x8x128xf32>
    %c0_181 = arith.constant 0 : index
    %c0_182 = arith.constant 0 : index
    %c0_183 = arith.constant 0 : index
    %762 = vector.load %arg18[%c0_181, %c0_182, %c0_183] : memref<8x8x128xf32, #tpu.memory_space<vmem>>, vector<8x8x128xf32>
    tpu.vector_store %arg18[%c0_181, %c0_182, %c0_183], %761 {strides = array<i32>} : memref<8x8x128xf32, #tpu.memory_space<vmem>>, vector<8x8x128xf32>,
    %c0_184 = arith.constant 0 : index
    %c0_185 = arith.constant 0 : index
    %763 = vector.load %arg10[%c0_184, %c0_185] : memref<32x128xf32, #tpu.memory_space<vmem>>, vector<32x128xf32>
    %c0_i32_186 = arith.constant 0 : i32
    %764 = arith.index_cast %c0_i32_186 : i32 to index
    %c0_187 = arith.constant 0 : index
    %c0_188 = arith.constant 0 : index
    %765 = vector.load %arg18[%764, %c0_187, %c0_188] : memref<8x8x128xf32, #tpu.memory_space<vmem>>, vector<1x8x128xf32>
    %766 = vector.shape_cast %765 : vector<1x8x128xf32> to vector<8x128xf32>
    %cst_189 = arith.constant dense<0.000000e+00> : vector<8x128xf32>
    %767 = tpu.matmul %1, %763, %cst_189 {dimension_numbers = #tpu.dot_dimension_numbers<[1], [0], [0], [1], [0, 0, 1, 1], [], []>} : vector<8x32xf32>, vector<32x128xf32>, vector<8x128xf32> -> vector<8x128xf32>
    %768 = arith.addf %766, %767 : vector<8x128xf32>
    %769 = vector.extract_strided_slice %768 {offsets = [0, 0], sizes = [8, 32], strides = [1, 1]} : vector<8x128xf32> to vector<8x32xf32>
    %770 = arith.negf %769 : vector<8x32xf32>
    %771 = math.exp %770 : vector<8x32xf32>
    %cst_190 = arith.constant 1.000000e+00 : f32
    %772 = vector.broadcast %cst_190 : f32 to vector<8x32xf32>
    %773 = arith.addf %772, %771 : vector<8x32xf32>
    %774 = arith.divf %772, %773 : vector<8x32xf32>
    %775 = vector.extract_strided_slice %768 {offsets = [0, 32], sizes = [8, 32], strides = [1, 1]} : vector<8x128xf32> to vector<8x32xf32>
    %776 = arith.negf %775 : vector<8x32xf32>
    %777 = math.exp %776 : vector<8x32xf32>
    %cst_191 = arith.constant 1.000000e+00 : f32
    %778 = vector.broadcast %cst_191 : f32 to vector<8x32xf32>
    %779 = arith.addf %778, %777 : vector<8x32xf32>
    %780 = arith.divf %778, %779 : vector<8x32xf32>
    %781 = vector.extract_strided_slice %768 {offsets = [0, 64], sizes = [8, 32], strides = [1, 1]} : vector<8x128xf32> to vector<8x32xf32>
    %782 = math.tanh %781 : vector<8x32xf32>
    %783 = vector.extract_strided_slice %768 {offsets = [0, 96], sizes = [8, 32], strides = [1, 1]} : vector<8x128xf32> to vector<8x32xf32>
    %784 = arith.negf %783 : vector<8x32xf32>
    %785 = math.exp %784 : vector<8x32xf32>
    %cst_192 = arith.constant 1.000000e+00 : f32
    %786 = vector.broadcast %cst_192 : f32 to vector<8x32xf32>
    %787 = arith.addf %786, %785 : vector<8x32xf32>
    %788 = arith.divf %786, %787 : vector<8x32xf32>
    %789 = arith.mulf %780, %1 : vector<8x32xf32>
    %790 = arith.mulf %774, %782 : vector<8x32xf32>
    %791 = arith.addf %789, %790 : vector<8x32xf32>
    %792 = math.tanh %791 : vector<8x32xf32>
    %793 = arith.mulf %788, %792 : vector<8x32xf32>
    %794 = vector.broadcast %c0_i32_186 : i32 to vector<8x1xi32>
    %795 = arith.cmpi slt, %794, %0 : vector<8x1xi32>
    %796 = vector.shape_cast %795 : vector<8x1xi1> to vector<8x1xi1>
    %797 = vector.broadcast %796 : vector<8x1xi1> to vector<8x32xi1>
    %798 = arith.select %797, %793, %1 : vector<8x32xi1>, vector<8x32xf32>
    %799 = vector.shape_cast %795 : vector<8x1xi1> to vector<8x1xi1>
    %800 = vector.broadcast %799 : vector<8x1xi1> to vector<8x32xi1>
    %801 = arith.select %800, %791, %1 : vector<8x32xi1>, vector<8x32xf32>
    %c1_i32_193 = arith.constant 1 : i32
    %802 = arith.index_cast %c1_i32_193 : i32 to index
    %c0_194 = arith.constant 0 : index
    %c0_195 = arith.constant 0 : index
    %803 = vector.load %arg18[%802, %c0_194, %c0_195] : memref<8x8x128xf32, #tpu.memory_space<vmem>>, vector<1x8x128xf32>
    %804 = vector.shape_cast %803 : vector<1x8x128xf32> to vector<8x128xf32>
    %cst_196 = arith.constant dense<0.000000e+00> : vector<8x128xf32>
    %805 = tpu.matmul %798, %763, %cst_196 {dimension_numbers = #tpu.dot_dimension_numbers<[1], [0], [0], [1], [0, 0, 1, 1], [], []>} : vector<8x32xf32>, vector<32x128xf32>, vector<8x128xf32> -> vector<8x128xf32>
    %806 = arith.addf %804, %805 : vector<8x128xf32>
    %807 = vector.extract_strided_slice %806 {offsets = [0, 0], sizes = [8, 32], strides = [1, 1]} : vector<8x128xf32> to vector<8x32xf32>
    %808 = arith.negf %807 : vector<8x32xf32>
    %809 = math.exp %808 : vector<8x32xf32>
    %cst_197 = arith.constant 1.000000e+00 : f32
    %810 = vector.broadcast %cst_197 : f32 to vector<8x32xf32>
    %811 = arith.addf %810, %809 : vector<8x32xf32>
    %812 = arith.divf %810, %811 : vector<8x32xf32>
    %813 = vector.extract_strided_slice %806 {offsets = [0, 32], sizes = [8, 32], strides = [1, 1]} : vector<8x128xf32> to vector<8x32xf32>
    %814 = arith.negf %813 : vector<8x32xf32>
    %815 = math.exp %814 : vector<8x32xf32>
    %cst_198 = arith.constant 1.000000e+00 : f32
    %816 = vector.broadcast %cst_198 : f32 to vector<8x32xf32>
    %817 = arith.addf %816, %815 : vector<8x32xf32>
    %818 = arith.divf %816, %817 : vector<8x32xf32>
    %819 = vector.extract_strided_slice %806 {offsets = [0, 64], sizes = [8, 32], strides = [1, 1]} : vector<8x128xf32> to vector<8x32xf32>
    %820 = math.tanh %819 : vector<8x32xf32>
    %821 = vector.extract_strided_slice %806 {offsets = [0, 96], sizes = [8, 32], strides = [1, 1]} : vector<8x128xf32> to vector<8x32xf32>
    %822 = arith.negf %821 : vector<8x32xf32>
    %823 = math.exp %822 : vector<8x32xf32>
    %cst_199 = arith.constant 1.000000e+00 : f32
    %824 = vector.broadcast %cst_199 : f32 to vector<8x32xf32>
    %825 = arith.addf %824, %823 : vector<8x32xf32>
    %826 = arith.divf %824, %825 : vector<8x32xf32>
    %827 = arith.mulf %818, %801 : vector<8x32xf32>
    %828 = arith.mulf %812, %820 : vector<8x32xf32>
    %829 = arith.addf %827, %828 : vector<8x32xf32>
    %830 = math.tanh %829 : vector<8x32xf32>
    %831 = arith.mulf %826, %830 : vector<8x32xf32>
    %832 = vector.broadcast %c1_i32_193 : i32 to vector<8x1xi32>
    %833 = arith.cmpi slt, %832, %0 : vector<8x1xi32>
    %834 = vector.shape_cast %833 : vector<8x1xi1> to vector<8x1xi1>
    %835 = vector.broadcast %834 : vector<8x1xi1> to vector<8x32xi1>
    %836 = arith.select %835, %831, %798 : vector<8x32xi1>, vector<8x32xf32>
    %837 = vector.shape_cast %833 : vector<8x1xi1> to vector<8x1xi1>
    %838 = vector.broadcast %837 : vector<8x1xi1> to vector<8x32xi1>
    %839 = arith.select %838, %829, %801 : vector<8x32xi1>, vector<8x32xf32>
    %c2_i32_200 = arith.constant 2 : i32
    %840 = arith.index_cast %c2_i32_200 : i32 to index
    %c0_201 = arith.constant 0 : index
    %c0_202 = arith.constant 0 : index
    %841 = vector.load %arg18[%840, %c0_201, %c0_202] : memref<8x8x128xf32, #tpu.memory_space<vmem>>, vector<1x8x128xf32>
    %842 = vector.shape_cast %841 : vector<1x8x128xf32> to vector<8x128xf32>
    %cst_203 = arith.constant dense<0.000000e+00> : vector<8x128xf32>
    %843 = tpu.matmul %836, %763, %cst_203 {dimension_numbers = #tpu.dot_dimension_numbers<[1], [0], [0], [1], [0, 0, 1, 1], [], []>} : vector<8x32xf32>, vector<32x128xf32>, vector<8x128xf32> -> vector<8x128xf32>
    %844 = arith.addf %842, %843 : vector<8x128xf32>
    %845 = vector.extract_strided_slice %844 {offsets = [0, 0], sizes = [8, 32], strides = [1, 1]} : vector<8x128xf32> to vector<8x32xf32>
    %846 = arith.negf %845 : vector<8x32xf32>
    %847 = math.exp %846 : vector<8x32xf32>
    %cst_204 = arith.constant 1.000000e+00 : f32
    %848 = vector.broadcast %cst_204 : f32 to vector<8x32xf32>
    %849 = arith.addf %848, %847 : vector<8x32xf32>
    %850 = arith.divf %848, %849 : vector<8x32xf32>
    %851 = vector.extract_strided_slice %844 {offsets = [0, 32], sizes = [8, 32], strides = [1, 1]} : vector<8x128xf32> to vector<8x32xf32>
    %852 = arith.negf %851 : vector<8x32xf32>
    %853 = math.exp %852 : vector<8x32xf32>
    %cst_205 = arith.constant 1.000000e+00 : f32
    %854 = vector.broadcast %cst_205 : f32 to vector<8x32xf32>
    %855 = arith.addf %854, %853 : vector<8x32xf32>
    %856 = arith.divf %854, %855 : vector<8x32xf32>
    %857 = vector.extract_strided_slice %844 {offsets = [0, 64], sizes = [8, 32], strides = [1, 1]} : vector<8x128xf32> to vector<8x32xf32>
    %858 = math.tanh %857 : vector<8x32xf32>
    %859 = vector.extract_strided_slice %844 {offsets = [0, 96], sizes = [8, 32], strides = [1, 1]} : vector<8x128xf32> to vector<8x32xf32>
    %860 = arith.negf %859 : vector<8x32xf32>
    %861 = math.exp %860 : vector<8x32xf32>
    %cst_206 = arith.constant 1.000000e+00 : f32
    %862 = vector.broadcast %cst_206 : f32 to vector<8x32xf32>
    %863 = arith.addf %862, %861 : vector<8x32xf32>
    %864 = arith.divf %862, %863 : vector<8x32xf32>
    %865 = arith.mulf %856, %839 : vector<8x32xf32>
    %866 = arith.mulf %850, %858 : vector<8x32xf32>
    %867 = arith.addf %865, %866 : vector<8x32xf32>
    %868 = math.tanh %867 : vector<8x32xf32>
    %869 = arith.mulf %864, %868 : vector<8x32xf32>
    %870 = vector.broadcast %c2_i32_200 : i32 to vector<8x1xi32>
    %871 = arith.cmpi slt, %870, %0 : vector<8x1xi32>
    %872 = vector.shape_cast %871 : vector<8x1xi1> to vector<8x1xi1>
    %873 = vector.broadcast %872 : vector<8x1xi1> to vector<8x32xi1>
    %874 = arith.select %873, %869, %836 : vector<8x32xi1>, vector<8x32xf32>
    %875 = vector.shape_cast %871 : vector<8x1xi1> to vector<8x1xi1>
    %876 = vector.broadcast %875 : vector<8x1xi1> to vector<8x32xi1>
    %877 = arith.select %876, %867, %839 : vector<8x32xi1>, vector<8x32xf32>
    %c3_i32_207 = arith.constant 3 : i32
    %878 = arith.index_cast %c3_i32_207 : i32 to index
    %c0_208 = arith.constant 0 : index
    %c0_209 = arith.constant 0 : index
    %879 = vector.load %arg18[%878, %c0_208, %c0_209] : memref<8x8x128xf32, #tpu.memory_space<vmem>>, vector<1x8x128xf32>
    %880 = vector.shape_cast %879 : vector<1x8x128xf32> to vector<8x128xf32>
    %cst_210 = arith.constant dense<0.000000e+00> : vector<8x128xf32>
    %881 = tpu.matmul %874, %763, %cst_210 {dimension_numbers = #tpu.dot_dimension_numbers<[1], [0], [0], [1], [0, 0, 1, 1], [], []>} : vector<8x32xf32>, vector<32x128xf32>, vector<8x128xf32> -> vector<8x128xf32>
    %882 = arith.addf %880, %881 : vector<8x128xf32>
    %883 = vector.extract_strided_slice %882 {offsets = [0, 0], sizes = [8, 32], strides = [1, 1]} : vector<8x128xf32> to vector<8x32xf32>
    %884 = arith.negf %883 : vector<8x32xf32>
    %885 = math.exp %884 : vector<8x32xf32>
    %cst_211 = arith.constant 1.000000e+00 : f32
    %886 = vector.broadcast %cst_211 : f32 to vector<8x32xf32>
    %887 = arith.addf %886, %885 : vector<8x32xf32>
    %888 = arith.divf %886, %887 : vector<8x32xf32>
    %889 = vector.extract_strided_slice %882 {offsets = [0, 32], sizes = [8, 32], strides = [1, 1]} : vector<8x128xf32> to vector<8x32xf32>
    %890 = arith.negf %889 : vector<8x32xf32>
    %891 = math.exp %890 : vector<8x32xf32>
    %cst_212 = arith.constant 1.000000e+00 : f32
    %892 = vector.broadcast %cst_212 : f32 to vector<8x32xf32>
    %893 = arith.addf %892, %891 : vector<8x32xf32>
    %894 = arith.divf %892, %893 : vector<8x32xf32>
    %895 = vector.extract_strided_slice %882 {offsets = [0, 64], sizes = [8, 32], strides = [1, 1]} : vector<8x128xf32> to vector<8x32xf32>
    %896 = math.tanh %895 : vector<8x32xf32>
    %897 = vector.extract_strided_slice %882 {offsets = [0, 96], sizes = [8, 32], strides = [1, 1]} : vector<8x128xf32> to vector<8x32xf32>
    %898 = arith.negf %897 : vector<8x32xf32>
    %899 = math.exp %898 : vector<8x32xf32>
    %cst_213 = arith.constant 1.000000e+00 : f32
    %900 = vector.broadcast %cst_213 : f32 to vector<8x32xf32>
    %901 = arith.addf %900, %899 : vector<8x32xf32>
    %902 = arith.divf %900, %901 : vector<8x32xf32>
    %903 = arith.mulf %894, %877 : vector<8x32xf32>
    %904 = arith.mulf %888, %896 : vector<8x32xf32>
    %905 = arith.addf %903, %904 : vector<8x32xf32>
    %906 = math.tanh %905 : vector<8x32xf32>
    %907 = arith.mulf %902, %906 : vector<8x32xf32>
    %908 = vector.broadcast %c3_i32_207 : i32 to vector<8x1xi32>
    %909 = arith.cmpi slt, %908, %0 : vector<8x1xi32>
    %910 = vector.shape_cast %909 : vector<8x1xi1> to vector<8x1xi1>
    %911 = vector.broadcast %910 : vector<8x1xi1> to vector<8x32xi1>
    %912 = arith.select %911, %907, %874 : vector<8x32xi1>, vector<8x32xf32>
    %913 = vector.shape_cast %909 : vector<8x1xi1> to vector<8x1xi1>
    %914 = vector.broadcast %913 : vector<8x1xi1> to vector<8x32xi1>
    %915 = arith.select %914, %905, %877 : vector<8x32xi1>, vector<8x32xf32>
    %c4_i32_214 = arith.constant 4 : i32
    %916 = arith.index_cast %c4_i32_214 : i32 to index
    %c0_215 = arith.constant 0 : index
    %c0_216 = arith.constant 0 : index
    %917 = vector.load %arg18[%916, %c0_215, %c0_216] : memref<8x8x128xf32, #tpu.memory_space<vmem>>, vector<1x8x128xf32>
    %918 = vector.shape_cast %917 : vector<1x8x128xf32> to vector<8x128xf32>
    %cst_217 = arith.constant dense<0.000000e+00> : vector<8x128xf32>
    %919 = tpu.matmul %912, %763, %cst_217 {dimension_numbers = #tpu.dot_dimension_numbers<[1], [0], [0], [1], [0, 0, 1, 1], [], []>} : vector<8x32xf32>, vector<32x128xf32>, vector<8x128xf32> -> vector<8x128xf32>
    %920 = arith.addf %918, %919 : vector<8x128xf32>
    %921 = vector.extract_strided_slice %920 {offsets = [0, 0], sizes = [8, 32], strides = [1, 1]} : vector<8x128xf32> to vector<8x32xf32>
    %922 = arith.negf %921 : vector<8x32xf32>
    %923 = math.exp %922 : vector<8x32xf32>
    %cst_218 = arith.constant 1.000000e+00 : f32
    %924 = vector.broadcast %cst_218 : f32 to vector<8x32xf32>
    %925 = arith.addf %924, %923 : vector<8x32xf32>
    %926 = arith.divf %924, %925 : vector<8x32xf32>
    %927 = vector.extract_strided_slice %920 {offsets = [0, 32], sizes = [8, 32], strides = [1, 1]} : vector<8x128xf32> to vector<8x32xf32>
    %928 = arith.negf %927 : vector<8x32xf32>
    %929 = math.exp %928 : vector<8x32xf32>
    %cst_219 = arith.constant 1.000000e+00 : f32
    %930 = vector.broadcast %cst_219 : f32 to vector<8x32xf32>
    %931 = arith.addf %930, %929 : vector<8x32xf32>
    %932 = arith.divf %930, %931 : vector<8x32xf32>
    %933 = vector.extract_strided_slice %920 {offsets = [0, 64], sizes = [8, 32], strides = [1, 1]} : vector<8x128xf32> to vector<8x32xf32>
    %934 = math.tanh %933 : vector<8x32xf32>
    %935 = vector.extract_strided_slice %920 {offsets = [0, 96], sizes = [8, 32], strides = [1, 1]} : vector<8x128xf32> to vector<8x32xf32>
    %936 = arith.negf %935 : vector<8x32xf32>
    %937 = math.exp %936 : vector<8x32xf32>
    %cst_220 = arith.constant 1.000000e+00 : f32
    %938 = vector.broadcast %cst_220 : f32 to vector<8x32xf32>
    %939 = arith.addf %938, %937 : vector<8x32xf32>
    %940 = arith.divf %938, %939 : vector<8x32xf32>
    %941 = arith.mulf %932, %915 : vector<8x32xf32>
    %942 = arith.mulf %926, %934 : vector<8x32xf32>
    %943 = arith.addf %941, %942 : vector<8x32xf32>
    %944 = math.tanh %943 : vector<8x32xf32>
    %945 = arith.mulf %940, %944 : vector<8x32xf32>
    %946 = vector.broadcast %c4_i32_214 : i32 to vector<8x1xi32>
    %947 = arith.cmpi slt, %946, %0 : vector<8x1xi32>
    %948 = vector.shape_cast %947 : vector<8x1xi1> to vector<8x1xi1>
    %949 = vector.broadcast %948 : vector<8x1xi1> to vector<8x32xi1>
    %950 = arith.select %949, %945, %912 : vector<8x32xi1>, vector<8x32xf32>
    %951 = vector.shape_cast %947 : vector<8x1xi1> to vector<8x1xi1>
    %952 = vector.broadcast %951 : vector<8x1xi1> to vector<8x32xi1>
    %953 = arith.select %952, %943, %915 : vector<8x32xi1>, vector<8x32xf32>
    %c5_i32_221 = arith.constant 5 : i32
    %954 = arith.index_cast %c5_i32_221 : i32 to index
    %c0_222 = arith.constant 0 : index
    %c0_223 = arith.constant 0 : index
    %955 = vector.load %arg18[%954, %c0_222, %c0_223] : memref<8x8x128xf32, #tpu.memory_space<vmem>>, vector<1x8x128xf32>
    %956 = vector.shape_cast %955 : vector<1x8x128xf32> to vector<8x128xf32>
    %cst_224 = arith.constant dense<0.000000e+00> : vector<8x128xf32>
    %957 = tpu.matmul %950, %763, %cst_224 {dimension_numbers = #tpu.dot_dimension_numbers<[1], [0], [0], [1], [0, 0, 1, 1], [], []>} : vector<8x32xf32>, vector<32x128xf32>, vector<8x128xf32> -> vector<8x128xf32>
    %958 = arith.addf %956, %957 : vector<8x128xf32>
    %959 = vector.extract_strided_slice %958 {offsets = [0, 0], sizes = [8, 32], strides = [1, 1]} : vector<8x128xf32> to vector<8x32xf32>
    %960 = arith.negf %959 : vector<8x32xf32>
    %961 = math.exp %960 : vector<8x32xf32>
    %cst_225 = arith.constant 1.000000e+00 : f32
    %962 = vector.broadcast %cst_225 : f32 to vector<8x32xf32>
    %963 = arith.addf %962, %961 : vector<8x32xf32>
    %964 = arith.divf %962, %963 : vector<8x32xf32>
    %965 = vector.extract_strided_slice %958 {offsets = [0, 32], sizes = [8, 32], strides = [1, 1]} : vector<8x128xf32> to vector<8x32xf32>
    %966 = arith.negf %965 : vector<8x32xf32>
    %967 = math.exp %966 : vector<8x32xf32>
    %cst_226 = arith.constant 1.000000e+00 : f32
    %968 = vector.broadcast %cst_226 : f32 to vector<8x32xf32>
    %969 = arith.addf %968, %967 : vector<8x32xf32>
    %970 = arith.divf %968, %969 : vector<8x32xf32>
    %971 = vector.extract_strided_slice %958 {offsets = [0, 64], sizes = [8, 32], strides = [1, 1]} : vector<8x128xf32> to vector<8x32xf32>
    %972 = math.tanh %971 : vector<8x32xf32>
    %973 = vector.extract_strided_slice %958 {offsets = [0, 96], sizes = [8, 32], strides = [1, 1]} : vector<8x128xf32> to vector<8x32xf32>
    %974 = arith.negf %973 : vector<8x32xf32>
    %975 = math.exp %974 : vector<8x32xf32>
    %cst_227 = arith.constant 1.000000e+00 : f32
    %976 = vector.broadcast %cst_227 : f32 to vector<8x32xf32>
    %977 = arith.addf %976, %975 : vector<8x32xf32>
    %978 = arith.divf %976, %977 : vector<8x32xf32>
    %979 = arith.mulf %970, %953 : vector<8x32xf32>
    %980 = arith.mulf %964, %972 : vector<8x32xf32>
    %981 = arith.addf %979, %980 : vector<8x32xf32>
    %982 = math.tanh %981 : vector<8x32xf32>
    %983 = arith.mulf %978, %982 : vector<8x32xf32>
    %984 = vector.broadcast %c5_i32_221 : i32 to vector<8x1xi32>
    %985 = arith.cmpi slt, %984, %0 : vector<8x1xi32>
    %986 = vector.shape_cast %985 : vector<8x1xi1> to vector<8x1xi1>
    %987 = vector.broadcast %986 : vector<8x1xi1> to vector<8x32xi1>
    %988 = arith.select %987, %983, %950 : vector<8x32xi1>, vector<8x32xf32>
    %989 = vector.shape_cast %985 : vector<8x1xi1> to vector<8x1xi1>
    %990 = vector.broadcast %989 : vector<8x1xi1> to vector<8x32xi1>
    %991 = arith.select %990, %981, %953 : vector<8x32xi1>, vector<8x32xf32>
    %c6_i32_228 = arith.constant 6 : i32
    %992 = arith.index_cast %c6_i32_228 : i32 to index
    %c0_229 = arith.constant 0 : index
    %c0_230 = arith.constant 0 : index
    %993 = vector.load %arg18[%992, %c0_229, %c0_230] : memref<8x8x128xf32, #tpu.memory_space<vmem>>, vector<1x8x128xf32>
    %994 = vector.shape_cast %993 : vector<1x8x128xf32> to vector<8x128xf32>
    %cst_231 = arith.constant dense<0.000000e+00> : vector<8x128xf32>
    %995 = tpu.matmul %988, %763, %cst_231 {dimension_numbers = #tpu.dot_dimension_numbers<[1], [0], [0], [1], [0, 0, 1, 1], [], []>} : vector<8x32xf32>, vector<32x128xf32>, vector<8x128xf32> -> vector<8x128xf32>
    %996 = arith.addf %994, %995 : vector<8x128xf32>
    %997 = vector.extract_strided_slice %996 {offsets = [0, 0], sizes = [8, 32], strides = [1, 1]} : vector<8x128xf32> to vector<8x32xf32>
    %998 = arith.negf %997 : vector<8x32xf32>
    %999 = math.exp %998 : vector<8x32xf32>
    %cst_232 = arith.constant 1.000000e+00 : f32
    %1000 = vector.broadcast %cst_232 : f32 to vector<8x32xf32>
    %1001 = arith.addf %1000, %999 : vector<8x32xf32>
    %1002 = arith.divf %1000, %1001 : vector<8x32xf32>
    %1003 = vector.extract_strided_slice %996 {offsets = [0, 32], sizes = [8, 32], strides = [1, 1]} : vector<8x128xf32> to vector<8x32xf32>
    %1004 = arith.negf %1003 : vector<8x32xf32>
    %1005 = math.exp %1004 : vector<8x32xf32>
    %cst_233 = arith.constant 1.000000e+00 : f32
    %1006 = vector.broadcast %cst_233 : f32 to vector<8x32xf32>
    %1007 = arith.addf %1006, %1005 : vector<8x32xf32>
    %1008 = arith.divf %1006, %1007 : vector<8x32xf32>
    %1009 = vector.extract_strided_slice %996 {offsets = [0, 64], sizes = [8, 32], strides = [1, 1]} : vector<8x128xf32> to vector<8x32xf32>
    %1010 = math.tanh %1009 : vector<8x32xf32>
    %1011 = vector.extract_strided_slice %996 {offsets = [0, 96], sizes = [8, 32], strides = [1, 1]} : vector<8x128xf32> to vector<8x32xf32>
    %1012 = arith.negf %1011 : vector<8x32xf32>
    %1013 = math.exp %1012 : vector<8x32xf32>
    %cst_234 = arith.constant 1.000000e+00 : f32
    %1014 = vector.broadcast %cst_234 : f32 to vector<8x32xf32>
    %1015 = arith.addf %1014, %1013 : vector<8x32xf32>
    %1016 = arith.divf %1014, %1015 : vector<8x32xf32>
    %1017 = arith.mulf %1008, %991 : vector<8x32xf32>
    %1018 = arith.mulf %1002, %1010 : vector<8x32xf32>
    %1019 = arith.addf %1017, %1018 : vector<8x32xf32>
    %1020 = math.tanh %1019 : vector<8x32xf32>
    %1021 = arith.mulf %1016, %1020 : vector<8x32xf32>
    %1022 = vector.broadcast %c6_i32_228 : i32 to vector<8x1xi32>
    %1023 = arith.cmpi slt, %1022, %0 : vector<8x1xi32>
    %1024 = vector.shape_cast %1023 : vector<8x1xi1> to vector<8x1xi1>
    %1025 = vector.broadcast %1024 : vector<8x1xi1> to vector<8x32xi1>
    %1026 = arith.select %1025, %1021, %988 : vector<8x32xi1>, vector<8x32xf32>
    %1027 = vector.shape_cast %1023 : vector<8x1xi1> to vector<8x1xi1>
    %1028 = vector.broadcast %1027 : vector<8x1xi1> to vector<8x32xi1>
    %1029 = arith.select %1028, %1019, %991 : vector<8x32xi1>, vector<8x32xf32>
    %c7_i32_235 = arith.constant 7 : i32
    %1030 = arith.index_cast %c7_i32_235 : i32 to index
    %c0_236 = arith.constant 0 : index
    %c0_237 = arith.constant 0 : index
    %1031 = vector.load %arg18[%1030, %c0_236, %c0_237] : memref<8x8x128xf32, #tpu.memory_space<vmem>>, vector<1x8x128xf32>
    %1032 = vector.shape_cast %1031 : vector<1x8x128xf32> to vector<8x128xf32>
    %cst_238 = arith.constant dense<0.000000e+00> : vector<8x128xf32>
    %1033 = tpu.matmul %1026, %763, %cst_238 {dimension_numbers = #tpu.dot_dimension_numbers<[1], [0], [0], [1], [0, 0, 1, 1], [], []>} : vector<8x32xf32>, vector<32x128xf32>, vector<8x128xf32> -> vector<8x128xf32>
    %1034 = arith.addf %1032, %1033 : vector<8x128xf32>
    %1035 = vector.extract_strided_slice %1034 {offsets = [0, 0], sizes = [8, 32], strides = [1, 1]} : vector<8x128xf32> to vector<8x32xf32>
    %1036 = arith.negf %1035 : vector<8x32xf32>
    %1037 = math.exp %1036 : vector<8x32xf32>
    %cst_239 = arith.constant 1.000000e+00 : f32
    %1038 = vector.broadcast %cst_239 : f32 to vector<8x32xf32>
    %1039 = arith.addf %1038, %1037 : vector<8x32xf32>
    %1040 = arith.divf %1038, %1039 : vector<8x32xf32>
    %1041 = vector.extract_strided_slice %1034 {offsets = [0, 32], sizes = [8, 32], strides = [1, 1]} : vector<8x128xf32> to vector<8x32xf32>
    %1042 = arith.negf %1041 : vector<8x32xf32>
    %1043 = math.exp %1042 : vector<8x32xf32>
    %cst_240 = arith.constant 1.000000e+00 : f32
    %1044 = vector.broadcast %cst_240 : f32 to vector<8x32xf32>
    %1045 = arith.addf %1044, %1043 : vector<8x32xf32>
    %1046 = arith.divf %1044, %1045 : vector<8x32xf32>
    %1047 = vector.extract_strided_slice %1034 {offsets = [0, 64], sizes = [8, 32], strides = [1, 1]} : vector<8x128xf32> to vector<8x32xf32>
    %1048 = math.tanh %1047 : vector<8x32xf32>
    %1049 = vector.extract_strided_slice %1034 {offsets = [0, 96], sizes = [8, 32], strides = [1, 1]} : vector<8x128xf32> to vector<8x32xf32>
    %1050 = arith.negf %1049 : vector<8x32xf32>
    %1051 = math.exp %1050 : vector<8x32xf32>
    %cst_241 = arith.constant 1.000000e+00 : f32
    %1052 = vector.broadcast %cst_241 : f32 to vector<8x32xf32>
    %1053 = arith.addf %1052, %1051 : vector<8x32xf32>
    %1054 = arith.divf %1052, %1053 : vector<8x32xf32>
    %1055 = arith.mulf %1046, %1029 : vector<8x32xf32>
    %1056 = arith.mulf %1040, %1048 : vector<8x32xf32>
    %1057 = arith.addf %1055, %1056 : vector<8x32xf32>
    %1058 = math.tanh %1057 : vector<8x32xf32>
    %1059 = arith.mulf %1054, %1058 : vector<8x32xf32>
    %1060 = vector.broadcast %c7_i32_235 : i32 to vector<8x1xi32>
    %1061 = arith.cmpi slt, %1060, %0 : vector<8x1xi32>
    %1062 = vector.shape_cast %1061 : vector<8x1xi1> to vector<8x1xi1>
    %1063 = vector.broadcast %1062 : vector<8x1xi1> to vector<8x32xi1>
    %1064 = arith.select %1063, %1059, %1026 : vector<8x32xi1>, vector<8x32xf32>
    %1065 = vector.shape_cast %1061 : vector<8x1xi1> to vector<8x1xi1>
    %1066 = vector.broadcast %1065 : vector<8x1xi1> to vector<8x32xi1>
    %1067 = arith.select %1066, %1057, %1029 : vector<8x32xi1>, vector<8x32xf32>
    %c8_i32_242 = arith.constant 8 : i32
    %c0_243 = arith.constant 0 : index
    %c0_244 = arith.constant 0 : index
    %1068 = vector.load %arg12[%c0_243, %c0_244] : memref<64x128xf32, #tpu.memory_space<vmem>>, vector<64x128xf32>
    %1069 = vector.extract_strided_slice %1068 {offsets = [0, 0], sizes = [32, 128], strides = [1, 1]} : vector<64x128xf32> to vector<32x128xf32>
    %cst_245 = arith.constant dense<0.000000e+00> : vector<64x128xf32>
    %1070 = tpu.matmul %749, %1069, %cst_245 {dimension_numbers = #tpu.dot_dimension_numbers<[1], [0], [0], [1], [0, 0, 1, 1], [], []>} : vector<64x32xf32>, vector<32x128xf32>, vector<64x128xf32> -> vector<64x128xf32>
    %1071 = vector.extract_strided_slice %1068 {offsets = [32, 0], sizes = [32, 128], strides = [1, 1]} : vector<64x128xf32> to vector<32x128xf32>
    %cst_246 = arith.constant dense<0.000000e+00> : vector<64x128xf32>
    %1072 = tpu.matmul %751, %1071, %cst_246 {dimension_numbers = #tpu.dot_dimension_numbers<[1], [0], [0], [1], [0, 0, 1, 1], [], []>} : vector<64x32xf32>, vector<32x128xf32>, vector<64x128xf32> -> vector<64x128xf32>
    %1073 = arith.addf %1070, %1072 : vector<64x128xf32>
    %c0_247 = arith.constant 0 : index
    %c0_248 = arith.constant 0 : index
    %1074 = vector.load %arg14[%c0_247, %c0_248] : memref<1x128xf32, #tpu.memory_space<vmem>>, vector<1x128xf32>
    %1075 = vector.broadcast %1074 : vector<1x128xf32> to vector<64x128xf32>
    %1076 = arith.addf %1073, %1075 : vector<64x128xf32>
    %1077 = vector.shape_cast %1076 : vector<64x128xf32> to vector<8x8x128xf32>
    %c0_249 = arith.constant 0 : index
    %c0_250 = arith.constant 0 : index
    %c0_251 = arith.constant 0 : index
    %1078 = vector.load %arg18[%c0_249, %c0_250, %c0_251] : memref<8x8x128xf32, #tpu.memory_space<vmem>>, vector<8x8x128xf32>
    tpu.vector_store %arg18[%c0_249, %c0_250, %c0_251], %1077 {strides = array<i32>} : memref<8x8x128xf32, #tpu.memory_space<vmem>>, vector<8x8x128xf32>,
    %c0_252 = arith.constant 0 : index
    %c0_253 = arith.constant 0 : index
    %1079 = vector.load %arg13[%c0_252, %c0_253] : memref<32x128xf32, #tpu.memory_space<vmem>>, vector<32x128xf32>
    %c0_i32_254 = arith.constant 0 : i32
    %c7_i32_255 = arith.constant 7 : i32
    %1080 = arith.subi %c7_i32_255, %c0_i32_254 : i32
    %1081 = arith.index_cast %1080 : i32 to index
    %c0_256 = arith.constant 0 : index
    %c0_257 = arith.constant 0 : index
    %1082 = vector.load %arg18[%1081, %c0_256, %c0_257] : memref<8x8x128xf32, #tpu.memory_space<vmem>>, vector<1x8x128xf32>
    %1083 = vector.shape_cast %1082 : vector<1x8x128xf32> to vector<8x128xf32>
    %cst_258 = arith.constant dense<0.000000e+00> : vector<8x128xf32>
    %1084 = tpu.matmul %1, %1079, %cst_258 {dimension_numbers = #tpu.dot_dimension_numbers<[1], [0], [0], [1], [0, 0, 1, 1], [], []>} : vector<8x32xf32>, vector<32x128xf32>, vector<8x128xf32> -> vector<8x128xf32>
    %1085 = arith.addf %1083, %1084 : vector<8x128xf32>
    %1086 = vector.extract_strided_slice %1085 {offsets = [0, 0], sizes = [8, 32], strides = [1, 1]} : vector<8x128xf32> to vector<8x32xf32>
    %1087 = arith.negf %1086 : vector<8x32xf32>
    %1088 = math.exp %1087 : vector<8x32xf32>
    %cst_259 = arith.constant 1.000000e+00 : f32
    %1089 = vector.broadcast %cst_259 : f32 to vector<8x32xf32>
    %1090 = arith.addf %1089, %1088 : vector<8x32xf32>
    %1091 = arith.divf %1089, %1090 : vector<8x32xf32>
    %1092 = vector.extract_strided_slice %1085 {offsets = [0, 32], sizes = [8, 32], strides = [1, 1]} : vector<8x128xf32> to vector<8x32xf32>
    %1093 = arith.negf %1092 : vector<8x32xf32>
    %1094 = math.exp %1093 : vector<8x32xf32>
    %cst_260 = arith.constant 1.000000e+00 : f32
    %1095 = vector.broadcast %cst_260 : f32 to vector<8x32xf32>
    %1096 = arith.addf %1095, %1094 : vector<8x32xf32>
    %1097 = arith.divf %1095, %1096 : vector<8x32xf32>
    %1098 = vector.extract_strided_slice %1085 {offsets = [0, 64], sizes = [8, 32], strides = [1, 1]} : vector<8x128xf32> to vector<8x32xf32>
    %1099 = math.tanh %1098 : vector<8x32xf32>
    %1100 = vector.extract_strided_slice %1085 {offsets = [0, 96], sizes = [8, 32], strides = [1, 1]} : vector<8x128xf32> to vector<8x32xf32>
    %1101 = arith.negf %1100 : vector<8x32xf32>
    %1102 = math.exp %1101 : vector<8x32xf32>
    %cst_261 = arith.constant 1.000000e+00 : f32
    %1103 = vector.broadcast %cst_261 : f32 to vector<8x32xf32>
    %1104 = arith.addf %1103, %1102 : vector<8x32xf32>
    %1105 = arith.divf %1103, %1104 : vector<8x32xf32>
    %1106 = arith.mulf %1097, %1 : vector<8x32xf32>
    %1107 = arith.mulf %1091, %1099 : vector<8x32xf32>
    %1108 = arith.addf %1106, %1107 : vector<8x32xf32>
    %1109 = math.tanh %1108 : vector<8x32xf32>
    %1110 = arith.mulf %1105, %1109 : vector<8x32xf32>
    %1111 = vector.broadcast %1080 : i32 to vector<8x1xi32>
    %1112 = arith.cmpi slt, %1111, %0 : vector<8x1xi32>
    %1113 = vector.shape_cast %1112 : vector<8x1xi1> to vector<8x1xi1>
    %1114 = vector.broadcast %1113 : vector<8x1xi1> to vector<8x32xi1>
    %1115 = arith.select %1114, %1110, %1 : vector<8x32xi1>, vector<8x32xf32>
    %1116 = vector.shape_cast %1112 : vector<8x1xi1> to vector<8x1xi1>
    %1117 = vector.broadcast %1116 : vector<8x1xi1> to vector<8x32xi1>
    %1118 = arith.select %1117, %1108, %1 : vector<8x32xi1>, vector<8x32xf32>
    %c1_i32_262 = arith.constant 1 : i32
    %c7_i32_263 = arith.constant 7 : i32
    %1119 = arith.subi %c7_i32_263, %c1_i32_262 : i32
    %1120 = arith.index_cast %1119 : i32 to index
    %c0_264 = arith.constant 0 : index
    %c0_265 = arith.constant 0 : index
    %1121 = vector.load %arg18[%1120, %c0_264, %c0_265] : memref<8x8x128xf32, #tpu.memory_space<vmem>>, vector<1x8x128xf32>
    %1122 = vector.shape_cast %1121 : vector<1x8x128xf32> to vector<8x128xf32>
    %cst_266 = arith.constant dense<0.000000e+00> : vector<8x128xf32>
    %1123 = tpu.matmul %1115, %1079, %cst_266 {dimension_numbers = #tpu.dot_dimension_numbers<[1], [0], [0], [1], [0, 0, 1, 1], [], []>} : vector<8x32xf32>, vector<32x128xf32>, vector<8x128xf32> -> vector<8x128xf32>
    %1124 = arith.addf %1122, %1123 : vector<8x128xf32>
    %1125 = vector.extract_strided_slice %1124 {offsets = [0, 0], sizes = [8, 32], strides = [1, 1]} : vector<8x128xf32> to vector<8x32xf32>
    %1126 = arith.negf %1125 : vector<8x32xf32>
    %1127 = math.exp %1126 : vector<8x32xf32>
    %cst_267 = arith.constant 1.000000e+00 : f32
    %1128 = vector.broadcast %cst_267 : f32 to vector<8x32xf32>
    %1129 = arith.addf %1128, %1127 : vector<8x32xf32>
    %1130 = arith.divf %1128, %1129 : vector<8x32xf32>
    %1131 = vector.extract_strided_slice %1124 {offsets = [0, 32], sizes = [8, 32], strides = [1, 1]} : vector<8x128xf32> to vector<8x32xf32>
    %1132 = arith.negf %1131 : vector<8x32xf32>
    %1133 = math.exp %1132 : vector<8x32xf32>
    %cst_268 = arith.constant 1.000000e+00 : f32
    %1134 = vector.broadcast %cst_268 : f32 to vector<8x32xf32>
    %1135 = arith.addf %1134, %1133 : vector<8x32xf32>
    %1136 = arith.divf %1134, %1135 : vector<8x32xf32>
    %1137 = vector.extract_strided_slice %1124 {offsets = [0, 64], sizes = [8, 32], strides = [1, 1]} : vector<8x128xf32> to vector<8x32xf32>
    %1138 = math.tanh %1137 : vector<8x32xf32>
    %1139 = vector.extract_strided_slice %1124 {offsets = [0, 96], sizes = [8, 32], strides = [1, 1]} : vector<8x128xf32> to vector<8x32xf32>
    %1140 = arith.negf %1139 : vector<8x32xf32>
    %1141 = math.exp %1140 : vector<8x32xf32>
    %cst_269 = arith.constant 1.000000e+00 : f32
    %1142 = vector.broadcast %cst_269 : f32 to vector<8x32xf32>
    %1143 = arith.addf %1142, %1141 : vector<8x32xf32>
    %1144 = arith.divf %1142, %1143 : vector<8x32xf32>
    %1145 = arith.mulf %1136, %1118 : vector<8x32xf32>
    %1146 = arith.mulf %1130, %1138 : vector<8x32xf32>
    %1147 = arith.addf %1145, %1146 : vector<8x32xf32>
    %1148 = math.tanh %1147 : vector<8x32xf32>
    %1149 = arith.mulf %1144, %1148 : vector<8x32xf32>
    %1150 = vector.broadcast %1119 : i32 to vector<8x1xi32>
    %1151 = arith.cmpi slt, %1150, %0 : vector<8x1xi32>
    %1152 = vector.shape_cast %1151 : vector<8x1xi1> to vector<8x1xi1>
    %1153 = vector.broadcast %1152 : vector<8x1xi1> to vector<8x32xi1>
    %1154 = arith.select %1153, %1149, %1115 : vector<8x32xi1>, vector<8x32xf32>
    %1155 = vector.shape_cast %1151 : vector<8x1xi1> to vector<8x1xi1>
    %1156 = vector.broadcast %1155 : vector<8x1xi1> to vector<8x32xi1>
    %1157 = arith.select %1156, %1147, %1118 : vector<8x32xi1>, vector<8x32xf32>
    %c2_i32_270 = arith.constant 2 : i32
    %c7_i32_271 = arith.constant 7 : i32
    %1158 = arith.subi %c7_i32_271, %c2_i32_270 : i32
    %1159 = arith.index_cast %1158 : i32 to index
    %c0_272 = arith.constant 0 : index
    %c0_273 = arith.constant 0 : index
    %1160 = vector.load %arg18[%1159, %c0_272, %c0_273] : memref<8x8x128xf32, #tpu.memory_space<vmem>>, vector<1x8x128xf32>
    %1161 = vector.shape_cast %1160 : vector<1x8x128xf32> to vector<8x128xf32>
    %cst_274 = arith.constant dense<0.000000e+00> : vector<8x128xf32>
    %1162 = tpu.matmul %1154, %1079, %cst_274 {dimension_numbers = #tpu.dot_dimension_numbers<[1], [0], [0], [1], [0, 0, 1, 1], [], []>} : vector<8x32xf32>, vector<32x128xf32>, vector<8x128xf32> -> vector<8x128xf32>
    %1163 = arith.addf %1161, %1162 : vector<8x128xf32>
    %1164 = vector.extract_strided_slice %1163 {offsets = [0, 0], sizes = [8, 32], strides = [1, 1]} : vector<8x128xf32> to vector<8x32xf32>
    %1165 = arith.negf %1164 : vector<8x32xf32>
    %1166 = math.exp %1165 : vector<8x32xf32>
    %cst_275 = arith.constant 1.000000e+00 : f32
    %1167 = vector.broadcast %cst_275 : f32 to vector<8x32xf32>
    %1168 = arith.addf %1167, %1166 : vector<8x32xf32>
    %1169 = arith.divf %1167, %1168 : vector<8x32xf32>
    %1170 = vector.extract_strided_slice %1163 {offsets = [0, 32], sizes = [8, 32], strides = [1, 1]} : vector<8x128xf32> to vector<8x32xf32>
    %1171 = arith.negf %1170 : vector<8x32xf32>
    %1172 = math.exp %1171 : vector<8x32xf32>
    %cst_276 = arith.constant 1.000000e+00 : f32
    %1173 = vector.broadcast %cst_276 : f32 to vector<8x32xf32>
    %1174 = arith.addf %1173, %1172 : vector<8x32xf32>
    %1175 = arith.divf %1173, %1174 : vector<8x32xf32>
    %1176 = vector.extract_strided_slice %1163 {offsets = [0, 64], sizes = [8, 32], strides = [1, 1]} : vector<8x128xf32> to vector<8x32xf32>
    %1177 = math.tanh %1176 : vector<8x32xf32>
    %1178 = vector.extract_strided_slice %1163 {offsets = [0, 96], sizes = [8, 32], strides = [1, 1]} : vector<8x128xf32> to vector<8x32xf32>
    %1179 = arith.negf %1178 : vector<8x32xf32>
    %1180 = math.exp %1179 : vector<8x32xf32>
    %cst_277 = arith.constant 1.000000e+00 : f32
    %1181 = vector.broadcast %cst_277 : f32 to vector<8x32xf32>
    %1182 = arith.addf %1181, %1180 : vector<8x32xf32>
    %1183 = arith.divf %1181, %1182 : vector<8x32xf32>
    %1184 = arith.mulf %1175, %1157 : vector<8x32xf32>
    %1185 = arith.mulf %1169, %1177 : vector<8x32xf32>
    %1186 = arith.addf %1184, %1185 : vector<8x32xf32>
    %1187 = math.tanh %1186 : vector<8x32xf32>
    %1188 = arith.mulf %1183, %1187 : vector<8x32xf32>
    %1189 = vector.broadcast %1158 : i32 to vector<8x1xi32>
    %1190 = arith.cmpi slt, %1189, %0 : vector<8x1xi32>
    %1191 = vector.shape_cast %1190 : vector<8x1xi1> to vector<8x1xi1>
    %1192 = vector.broadcast %1191 : vector<8x1xi1> to vector<8x32xi1>
    %1193 = arith.select %1192, %1188, %1154 : vector<8x32xi1>, vector<8x32xf32>
    %1194 = vector.shape_cast %1190 : vector<8x1xi1> to vector<8x1xi1>
    %1195 = vector.broadcast %1194 : vector<8x1xi1> to vector<8x32xi1>
    %1196 = arith.select %1195, %1186, %1157 : vector<8x32xi1>, vector<8x32xf32>
    %c3_i32_278 = arith.constant 3 : i32
    %c7_i32_279 = arith.constant 7 : i32
    %1197 = arith.subi %c7_i32_279, %c3_i32_278 : i32
    %1198 = arith.index_cast %1197 : i32 to index
    %c0_280 = arith.constant 0 : index
    %c0_281 = arith.constant 0 : index
    %1199 = vector.load %arg18[%1198, %c0_280, %c0_281] : memref<8x8x128xf32, #tpu.memory_space<vmem>>, vector<1x8x128xf32>
    %1200 = vector.shape_cast %1199 : vector<1x8x128xf32> to vector<8x128xf32>
    %cst_282 = arith.constant dense<0.000000e+00> : vector<8x128xf32>
    %1201 = tpu.matmul %1193, %1079, %cst_282 {dimension_numbers = #tpu.dot_dimension_numbers<[1], [0], [0], [1], [0, 0, 1, 1], [], []>} : vector<8x32xf32>, vector<32x128xf32>, vector<8x128xf32> -> vector<8x128xf32>
    %1202 = arith.addf %1200, %1201 : vector<8x128xf32>
    %1203 = vector.extract_strided_slice %1202 {offsets = [0, 0], sizes = [8, 32], strides = [1, 1]} : vector<8x128xf32> to vector<8x32xf32>
    %1204 = arith.negf %1203 : vector<8x32xf32>
    %1205 = math.exp %1204 : vector<8x32xf32>
    %cst_283 = arith.constant 1.000000e+00 : f32
    %1206 = vector.broadcast %cst_283 : f32 to vector<8x32xf32>
    %1207 = arith.addf %1206, %1205 : vector<8x32xf32>
    %1208 = arith.divf %1206, %1207 : vector<8x32xf32>
    %1209 = vector.extract_strided_slice %1202 {offsets = [0, 32], sizes = [8, 32], strides = [1, 1]} : vector<8x128xf32> to vector<8x32xf32>
    %1210 = arith.negf %1209 : vector<8x32xf32>
    %1211 = math.exp %1210 : vector<8x32xf32>
    %cst_284 = arith.constant 1.000000e+00 : f32
    %1212 = vector.broadcast %cst_284 : f32 to vector<8x32xf32>
    %1213 = arith.addf %1212, %1211 : vector<8x32xf32>
    %1214 = arith.divf %1212, %1213 : vector<8x32xf32>
    %1215 = vector.extract_strided_slice %1202 {offsets = [0, 64], sizes = [8, 32], strides = [1, 1]} : vector<8x128xf32> to vector<8x32xf32>
    %1216 = math.tanh %1215 : vector<8x32xf32>
    %1217 = vector.extract_strided_slice %1202 {offsets = [0, 96], sizes = [8, 32], strides = [1, 1]} : vector<8x128xf32> to vector<8x32xf32>
    %1218 = arith.negf %1217 : vector<8x32xf32>
    %1219 = math.exp %1218 : vector<8x32xf32>
    %cst_285 = arith.constant 1.000000e+00 : f32
    %1220 = vector.broadcast %cst_285 : f32 to vector<8x32xf32>
    %1221 = arith.addf %1220, %1219 : vector<8x32xf32>
    %1222 = arith.divf %1220, %1221 : vector<8x32xf32>
    %1223 = arith.mulf %1214, %1196 : vector<8x32xf32>
    %1224 = arith.mulf %1208, %1216 : vector<8x32xf32>
    %1225 = arith.addf %1223, %1224 : vector<8x32xf32>
    %1226 = math.tanh %1225 : vector<8x32xf32>
    %1227 = arith.mulf %1222, %1226 : vector<8x32xf32>
    %1228 = vector.broadcast %1197 : i32 to vector<8x1xi32>
    %1229 = arith.cmpi slt, %1228, %0 : vector<8x1xi32>
    %1230 = vector.shape_cast %1229 : vector<8x1xi1> to vector<8x1xi1>
    %1231 = vector.broadcast %1230 : vector<8x1xi1> to vector<8x32xi1>
    %1232 = arith.select %1231, %1227, %1193 : vector<8x32xi1>, vector<8x32xf32>
    %1233 = vector.shape_cast %1229 : vector<8x1xi1> to vector<8x1xi1>
    %1234 = vector.broadcast %1233 : vector<8x1xi1> to vector<8x32xi1>
    %1235 = arith.select %1234, %1225, %1196 : vector<8x32xi1>, vector<8x32xf32>
    %c4_i32_286 = arith.constant 4 : i32
    %c7_i32_287 = arith.constant 7 : i32
    %1236 = arith.subi %c7_i32_287, %c4_i32_286 : i32
    %1237 = arith.index_cast %1236 : i32 to index
    %c0_288 = arith.constant 0 : index
    %c0_289 = arith.constant 0 : index
    %1238 = vector.load %arg18[%1237, %c0_288, %c0_289] : memref<8x8x128xf32, #tpu.memory_space<vmem>>, vector<1x8x128xf32>
    %1239 = vector.shape_cast %1238 : vector<1x8x128xf32> to vector<8x128xf32>
    %cst_290 = arith.constant dense<0.000000e+00> : vector<8x128xf32>
    %1240 = tpu.matmul %1232, %1079, %cst_290 {dimension_numbers = #tpu.dot_dimension_numbers<[1], [0], [0], [1], [0, 0, 1, 1], [], []>} : vector<8x32xf32>, vector<32x128xf32>, vector<8x128xf32> -> vector<8x128xf32>
    %1241 = arith.addf %1239, %1240 : vector<8x128xf32>
    %1242 = vector.extract_strided_slice %1241 {offsets = [0, 0], sizes = [8, 32], strides = [1, 1]} : vector<8x128xf32> to vector<8x32xf32>
    %1243 = arith.negf %1242 : vector<8x32xf32>
    %1244 = math.exp %1243 : vector<8x32xf32>
    %cst_291 = arith.constant 1.000000e+00 : f32
    %1245 = vector.broadcast %cst_291 : f32 to vector<8x32xf32>
    %1246 = arith.addf %1245, %1244 : vector<8x32xf32>
    %1247 = arith.divf %1245, %1246 : vector<8x32xf32>
    %1248 = vector.extract_strided_slice %1241 {offsets = [0, 32], sizes = [8, 32], strides = [1, 1]} : vector<8x128xf32> to vector<8x32xf32>
    %1249 = arith.negf %1248 : vector<8x32xf32>
    %1250 = math.exp %1249 : vector<8x32xf32>
    %cst_292 = arith.constant 1.000000e+00 : f32
    %1251 = vector.broadcast %cst_292 : f32 to vector<8x32xf32>
    %1252 = arith.addf %1251, %1250 : vector<8x32xf32>
    %1253 = arith.divf %1251, %1252 : vector<8x32xf32>
    %1254 = vector.extract_strided_slice %1241 {offsets = [0, 64], sizes = [8, 32], strides = [1, 1]} : vector<8x128xf32> to vector<8x32xf32>
    %1255 = math.tanh %1254 : vector<8x32xf32>
    %1256 = vector.extract_strided_slice %1241 {offsets = [0, 96], sizes = [8, 32], strides = [1, 1]} : vector<8x128xf32> to vector<8x32xf32>
    %1257 = arith.negf %1256 : vector<8x32xf32>
    %1258 = math.exp %1257 : vector<8x32xf32>
    %cst_293 = arith.constant 1.000000e+00 : f32
    %1259 = vector.broadcast %cst_293 : f32 to vector<8x32xf32>
    %1260 = arith.addf %1259, %1258 : vector<8x32xf32>
    %1261 = arith.divf %1259, %1260 : vector<8x32xf32>
    %1262 = arith.mulf %1253, %1235 : vector<8x32xf32>
    %1263 = arith.mulf %1247, %1255 : vector<8x32xf32>
    %1264 = arith.addf %1262, %1263 : vector<8x32xf32>
    %1265 = math.tanh %1264 : vector<8x32xf32>
    %1266 = arith.mulf %1261, %1265 : vector<8x32xf32>
    %1267 = vector.broadcast %1236 : i32 to vector<8x1xi32>
    %1268 = arith.cmpi slt, %1267, %0 : vector<8x1xi32>
    %1269 = vector.shape_cast %1268 : vector<8x1xi1> to vector<8x1xi1>
    %1270 = vector.broadcast %1269 : vector<8x1xi1> to vector<8x32xi1>
    %1271 = arith.select %1270, %1266, %1232 : vector<8x32xi1>, vector<8x32xf32>
    %1272 = vector.shape_cast %1268 : vector<8x1xi1> to vector<8x1xi1>
    %1273 = vector.broadcast %1272 : vector<8x1xi1> to vector<8x32xi1>
    %1274 = arith.select %1273, %1264, %1235 : vector<8x32xi1>, vector<8x32xf32>
    %c5_i32_294 = arith.constant 5 : i32
    %c7_i32_295 = arith.constant 7 : i32
    %1275 = arith.subi %c7_i32_295, %c5_i32_294 : i32
    %1276 = arith.index_cast %1275 : i32 to index
    %c0_296 = arith.constant 0 : index
    %c0_297 = arith.constant 0 : index
    %1277 = vector.load %arg18[%1276, %c0_296, %c0_297] : memref<8x8x128xf32, #tpu.memory_space<vmem>>, vector<1x8x128xf32>
    %1278 = vector.shape_cast %1277 : vector<1x8x128xf32> to vector<8x128xf32>
    %cst_298 = arith.constant dense<0.000000e+00> : vector<8x128xf32>
    %1279 = tpu.matmul %1271, %1079, %cst_298 {dimension_numbers = #tpu.dot_dimension_numbers<[1], [0], [0], [1], [0, 0, 1, 1], [], []>} : vector<8x32xf32>, vector<32x128xf32>, vector<8x128xf32> -> vector<8x128xf32>
    %1280 = arith.addf %1278, %1279 : vector<8x128xf32>
    %1281 = vector.extract_strided_slice %1280 {offsets = [0, 0], sizes = [8, 32], strides = [1, 1]} : vector<8x128xf32> to vector<8x32xf32>
    %1282 = arith.negf %1281 : vector<8x32xf32>
    %1283 = math.exp %1282 : vector<8x32xf32>
    %cst_299 = arith.constant 1.000000e+00 : f32
    %1284 = vector.broadcast %cst_299 : f32 to vector<8x32xf32>
    %1285 = arith.addf %1284, %1283 : vector<8x32xf32>
    %1286 = arith.divf %1284, %1285 : vector<8x32xf32>
    %1287 = vector.extract_strided_slice %1280 {offsets = [0, 32], sizes = [8, 32], strides = [1, 1]} : vector<8x128xf32> to vector<8x32xf32>
    %1288 = arith.negf %1287 : vector<8x32xf32>
    %1289 = math.exp %1288 : vector<8x32xf32>
    %cst_300 = arith.constant 1.000000e+00 : f32
    %1290 = vector.broadcast %cst_300 : f32 to vector<8x32xf32>
    %1291 = arith.addf %1290, %1289 : vector<8x32xf32>
    %1292 = arith.divf %1290, %1291 : vector<8x32xf32>
    %1293 = vector.extract_strided_slice %1280 {offsets = [0, 64], sizes = [8, 32], strides = [1, 1]} : vector<8x128xf32> to vector<8x32xf32>
    %1294 = math.tanh %1293 : vector<8x32xf32>
    %1295 = vector.extract_strided_slice %1280 {offsets = [0, 96], sizes = [8, 32], strides = [1, 1]} : vector<8x128xf32> to vector<8x32xf32>
    %1296 = arith.negf %1295 : vector<8x32xf32>
    %1297 = math.exp %1296 : vector<8x32xf32>
    %cst_301 = arith.constant 1.000000e+00 : f32
    %1298 = vector.broadcast %cst_301 : f32 to vector<8x32xf32>
    %1299 = arith.addf %1298, %1297 : vector<8x32xf32>
    %1300 = arith.divf %1298, %1299 : vector<8x32xf32>
    %1301 = arith.mulf %1292, %1274 : vector<8x32xf32>
    %1302 = arith.mulf %1286, %1294 : vector<8x32xf32>
    %1303 = arith.addf %1301, %1302 : vector<8x32xf32>
    %1304 = math.tanh %1303 : vector<8x32xf32>
    %1305 = arith.mulf %1300, %1304 : vector<8x32xf32>
    %1306 = vector.broadcast %1275 : i32 to vector<8x1xi32>
    %1307 = arith.cmpi slt, %1306, %0 : vector<8x1xi32>
    %1308 = vector.shape_cast %1307 : vector<8x1xi1> to vector<8x1xi1>
    %1309 = vector.broadcast %1308 : vector<8x1xi1> to vector<8x32xi1>
    %1310 = arith.select %1309, %1305, %1271 : vector<8x32xi1>, vector<8x32xf32>
    %1311 = vector.shape_cast %1307 : vector<8x1xi1> to vector<8x1xi1>
    %1312 = vector.broadcast %1311 : vector<8x1xi1> to vector<8x32xi1>
    %1313 = arith.select %1312, %1303, %1274 : vector<8x32xi1>, vector<8x32xf32>
    %c6_i32_302 = arith.constant 6 : i32
    %c7_i32_303 = arith.constant 7 : i32
    %1314 = arith.subi %c7_i32_303, %c6_i32_302 : i32
    %1315 = arith.index_cast %1314 : i32 to index
    %c0_304 = arith.constant 0 : index
    %c0_305 = arith.constant 0 : index
    %1316 = vector.load %arg18[%1315, %c0_304, %c0_305] : memref<8x8x128xf32, #tpu.memory_space<vmem>>, vector<1x8x128xf32>
    %1317 = vector.shape_cast %1316 : vector<1x8x128xf32> to vector<8x128xf32>
    %cst_306 = arith.constant dense<0.000000e+00> : vector<8x128xf32>
    %1318 = tpu.matmul %1310, %1079, %cst_306 {dimension_numbers = #tpu.dot_dimension_numbers<[1], [0], [0], [1], [0, 0, 1, 1], [], []>} : vector<8x32xf32>, vector<32x128xf32>, vector<8x128xf32> -> vector<8x128xf32>
    %1319 = arith.addf %1317, %1318 : vector<8x128xf32>
    %1320 = vector.extract_strided_slice %1319 {offsets = [0, 0], sizes = [8, 32], strides = [1, 1]} : vector<8x128xf32> to vector<8x32xf32>
    %1321 = arith.negf %1320 : vector<8x32xf32>
    %1322 = math.exp %1321 : vector<8x32xf32>
    %cst_307 = arith.constant 1.000000e+00 : f32
    %1323 = vector.broadcast %cst_307 : f32 to vector<8x32xf32>
    %1324 = arith.addf %1323, %1322 : vector<8x32xf32>
    %1325 = arith.divf %1323, %1324 : vector<8x32xf32>
    %1326 = vector.extract_strided_slice %1319 {offsets = [0, 32], sizes = [8, 32], strides = [1, 1]} : vector<8x128xf32> to vector<8x32xf32>
    %1327 = arith.negf %1326 : vector<8x32xf32>
    %1328 = math.exp %1327 : vector<8x32xf32>
    %cst_308 = arith.constant 1.000000e+00 : f32
    %1329 = vector.broadcast %cst_308 : f32 to vector<8x32xf32>
    %1330 = arith.addf %1329, %1328 : vector<8x32xf32>
    %1331 = arith.divf %1329, %1330 : vector<8x32xf32>
    %1332 = vector.extract_strided_slice %1319 {offsets = [0, 64], sizes = [8, 32], strides = [1, 1]} : vector<8x128xf32> to vector<8x32xf32>
    %1333 = math.tanh %1332 : vector<8x32xf32>
    %1334 = vector.extract_strided_slice %1319 {offsets = [0, 96], sizes = [8, 32], strides = [1, 1]} : vector<8x128xf32> to vector<8x32xf32>
    %1335 = arith.negf %1334 : vector<8x32xf32>
    %1336 = math.exp %1335 : vector<8x32xf32>
    %cst_309 = arith.constant 1.000000e+00 : f32
    %1337 = vector.broadcast %cst_309 : f32 to vector<8x32xf32>
    %1338 = arith.addf %1337, %1336 : vector<8x32xf32>
    %1339 = arith.divf %1337, %1338 : vector<8x32xf32>
    %1340 = arith.mulf %1331, %1313 : vector<8x32xf32>
    %1341 = arith.mulf %1325, %1333 : vector<8x32xf32>
    %1342 = arith.addf %1340, %1341 : vector<8x32xf32>
    %1343 = math.tanh %1342 : vector<8x32xf32>
    %1344 = arith.mulf %1339, %1343 : vector<8x32xf32>
    %1345 = vector.broadcast %1314 : i32 to vector<8x1xi32>
    %1346 = arith.cmpi slt, %1345, %0 : vector<8x1xi32>
    %1347 = vector.shape_cast %1346 : vector<8x1xi1> to vector<8x1xi1>
    %1348 = vector.broadcast %1347 : vector<8x1xi1> to vector<8x32xi1>
    %1349 = arith.select %1348, %1344, %1310 : vector<8x32xi1>, vector<8x32xf32>
    %1350 = vector.shape_cast %1346 : vector<8x1xi1> to vector<8x1xi1>
    %1351 = vector.broadcast %1350 : vector<8x1xi1> to vector<8x32xi1>
    %1352 = arith.select %1351, %1342, %1313 : vector<8x32xi1>, vector<8x32xf32>
    %c7_i32_310 = arith.constant 7 : i32
    %c7_i32_311 = arith.constant 7 : i32
    %1353 = arith.subi %c7_i32_311, %c7_i32_310 : i32
    %1354 = arith.index_cast %1353 : i32 to index
    %c0_312 = arith.constant 0 : index
    %c0_313 = arith.constant 0 : index
    %1355 = vector.load %arg18[%1354, %c0_312, %c0_313] : memref<8x8x128xf32, #tpu.memory_space<vmem>>, vector<1x8x128xf32>
    %1356 = vector.shape_cast %1355 : vector<1x8x128xf32> to vector<8x128xf32>
    %cst_314 = arith.constant dense<0.000000e+00> : vector<8x128xf32>
    %1357 = tpu.matmul %1349, %1079, %cst_314 {dimension_numbers = #tpu.dot_dimension_numbers<[1], [0], [0], [1], [0, 0, 1, 1], [], []>} : vector<8x32xf32>, vector<32x128xf32>, vector<8x128xf32> -> vector<8x128xf32>
    %1358 = arith.addf %1356, %1357 : vector<8x128xf32>
    %1359 = vector.extract_strided_slice %1358 {offsets = [0, 0], sizes = [8, 32], strides = [1, 1]} : vector<8x128xf32> to vector<8x32xf32>
    %1360 = arith.negf %1359 : vector<8x32xf32>
    %1361 = math.exp %1360 : vector<8x32xf32>
    %cst_315 = arith.constant 1.000000e+00 : f32
    %1362 = vector.broadcast %cst_315 : f32 to vector<8x32xf32>
    %1363 = arith.addf %1362, %1361 : vector<8x32xf32>
    %1364 = arith.divf %1362, %1363 : vector<8x32xf32>
    %1365 = vector.extract_strided_slice %1358 {offsets = [0, 32], sizes = [8, 32], strides = [1, 1]} : vector<8x128xf32> to vector<8x32xf32>
    %1366 = arith.negf %1365 : vector<8x32xf32>
    %1367 = math.exp %1366 : vector<8x32xf32>
    %cst_316 = arith.constant 1.000000e+00 : f32
    %1368 = vector.broadcast %cst_316 : f32 to vector<8x32xf32>
    %1369 = arith.addf %1368, %1367 : vector<8x32xf32>
    %1370 = arith.divf %1368, %1369 : vector<8x32xf32>
    %1371 = vector.extract_strided_slice %1358 {offsets = [0, 64], sizes = [8, 32], strides = [1, 1]} : vector<8x128xf32> to vector<8x32xf32>
    %1372 = math.tanh %1371 : vector<8x32xf32>
    %1373 = vector.extract_strided_slice %1358 {offsets = [0, 96], sizes = [8, 32], strides = [1, 1]} : vector<8x128xf32> to vector<8x32xf32>
    %1374 = arith.negf %1373 : vector<8x32xf32>
    %1375 = math.exp %1374 : vector<8x32xf32>
    %cst_317 = arith.constant 1.000000e+00 : f32
    %1376 = vector.broadcast %cst_317 : f32 to vector<8x32xf32>
    %1377 = arith.addf %1376, %1375 : vector<8x32xf32>
    %1378 = arith.divf %1376, %1377 : vector<8x32xf32>
    %1379 = arith.mulf %1370, %1352 : vector<8x32xf32>
    %1380 = arith.mulf %1364, %1372 : vector<8x32xf32>
    %1381 = arith.addf %1379, %1380 : vector<8x32xf32>
    %1382 = math.tanh %1381 : vector<8x32xf32>
    %1383 = arith.mulf %1378, %1382 : vector<8x32xf32>
    %1384 = vector.broadcast %1353 : i32 to vector<8x1xi32>
    %1385 = arith.cmpi slt, %1384, %0 : vector<8x1xi32>
    %1386 = vector.shape_cast %1385 : vector<8x1xi1> to vector<8x1xi1>
    %1387 = vector.broadcast %1386 : vector<8x1xi1> to vector<8x32xi1>
    %1388 = arith.select %1387, %1383, %1349 : vector<8x32xi1>, vector<8x32xf32>
    %1389 = vector.shape_cast %1385 : vector<8x1xi1> to vector<8x1xi1>
    %1390 = vector.broadcast %1389 : vector<8x1xi1> to vector<8x32xi1>
    %1391 = arith.select %1390, %1381, %1352 : vector<8x32xi1>, vector<8x32xf32>
    %c8_i32_318 = arith.constant 8 : i32
    %c0_319 = arith.constant 0 : index
    %c0_320 = arith.constant 0 : index
    %1392 = vector.load %arg15[%c0_319, %c0_320] : memref<64x3xf32, #tpu.memory_space<vmem>>, vector<64x3xf32>
    %1393 = vector.extract_strided_slice %1392 {offsets = [0, 0], sizes = [32, 3], strides = [1, 1]} : vector<64x3xf32> to vector<32x3xf32>
    %cst_321 = arith.constant dense<0.000000e+00> : vector<8x3xf32>
    %1394 = tpu.matmul %1388, %1393, %cst_321 {dimension_numbers = #tpu.dot_dimension_numbers<[1], [0], [0], [1], [0, 0, 1, 1], [], []>} : vector<8x32xf32>, vector<32x3xf32>, vector<8x3xf32> -> vector<8x3xf32>
    %1395 = vector.extract_strided_slice %1392 {offsets = [32, 0], sizes = [32, 3], strides = [1, 1]} : vector<64x3xf32> to vector<32x3xf32>
    %cst_322 = arith.constant dense<0.000000e+00> : vector<8x3xf32>
    %1396 = tpu.matmul %1064, %1395, %cst_322 {dimension_numbers = #tpu.dot_dimension_numbers<[1], [0], [0], [1], [0, 0, 1, 1], [], []>} : vector<8x32xf32>, vector<32x3xf32>, vector<8x3xf32> -> vector<8x3xf32>
    %1397 = arith.addf %1394, %1396 : vector<8x3xf32>
    %c0_323 = arith.constant 0 : index
    %c0_324 = arith.constant 0 : index
    %1398 = vector.load %arg16[%c0_323, %c0_324] : memref<1x3xf32, #tpu.memory_space<vmem>>, vector<1x3xf32>
    %1399 = vector.broadcast %1398 : vector<1x3xf32> to vector<8x3xf32>
    %1400 = arith.addf %1397, %1399 : vector<8x3xf32>
    %c0_325 = arith.constant 0 : index
    %c0_326 = arith.constant 0 : index
    %1401 = vector.load %arg17[%c0_325, %c0_326] : memref<8x3xf32, #tpu.memory_space<vmem>>, vector<8x3xf32>
    tpu.vector_store %arg17[%c0_325, %c0_326], %1400 {strides = array<i32>} : memref<8x3xf32, #tpu.memory_space<vmem>>, vector<8x3xf32>,
    return
  }
  func.func @transform_0(%arg0: i32) -> (i32, i32, i32) {
    %c0_i32 = arith.constant 0 : i32
    %c0_i32_0 = arith.constant 0 : i32
    %c0_i32_1 = arith.constant 0 : i32
    %c0_i32_2 = arith.constant 0 : i32
    return %c0_i32, %c0_i32_0, %c0_i32_1 : i32, i32, i32
  }
  func.func @transform_1(%arg0: i32) -> (i32, i32) {
    %c0_i32 = arith.constant 0 : i32
    %c0_i32_0 = arith.constant 0 : i32
    %c0_i32_1 = arith.constant 0 : i32
    return %c0_i32, %c0_i32_0 : i32, i32
  }
  func.func @transform_2(%arg0: i32) -> (i32, i32) {
    %c0_i32 = arith.constant 0 : i32
    %c0_i32_0 = arith.constant 0 : i32
    %c0_i32_1 = arith.constant 0 : i32
    return %c0_i32, %c0_i32_0 : i32, i32
  }
  func.func @transform_3(%arg0: i32) -> (i32, i32) {
    %c0_i32 = arith.constant 0 : i32
    %c0_i32_0 = arith.constant 0 : i32
    %c0_i32_1 = arith.constant 0 : i32
    return %c0_i32, %c0_i32_0 : i32, i32
  }
  func.func @transform_4(%arg0: i32) -> (i32, i32) {
    %c0_i32 = arith.constant 0 : i32
    %c0_i32_0 = arith.constant 0 : i32
    %c0_i32_1 = arith.constant 0 : i32
    return %c0_i32, %c0_i32_0 : i32, i32
  }
  func.func @transform_5(%arg0: i32) -> (i32, i32) {
    %c0_i32 = arith.constant 0 : i32
    %c0_i32_0 = arith.constant 0 : i32
    %c0_i32_1 = arith.constant 0 : i32
    return %c0_i32, %c0_i32_0 : i32, i32
  }
  func.func @transform_6(%arg0: i32) -> (i32, i32) {
    %c0_i32 = arith.constant 0 : i32
    %c0_i32_0 = arith.constant 0 : i32
    %c0_i32_1 = arith.constant 0 : i32
    return %c0_i32, %c0_i32_0 : i32, i32
  }
  func.func @transform_7(%arg0: i32) -> (i32, i32) {
    %c0_i32 = arith.constant 0 : i32
    %c0_i32_0 = arith.constant 0 : i32
    %c0_i32_1 = arith.constant 0 : i32
    return %c0_i32, %c0_i32_0 : i32, i32
  }
  func.func @transform_8(%arg0: i32) -> (i32, i32) {
    %c0_i32 = arith.constant 0 : i32
    %c0_i32_0 = arith.constant 0 : i32
    %c0_i32_1 = arith.constant 0 : i32
    return %c0_i32, %c0_i32_0 : i32, i32
  }
  func.func @transform_9(%arg0: i32) -> (i32, i32) {
    %c0_i32 = arith.constant 0 : i32
    %c0_i32_0 = arith.constant 0 : i32
    %c0_i32_1 = arith.constant 0 : i32
    return %c0_i32, %c0_i32_0 : i32, i32
  }
  func.func @transform_10(%arg0: i32) -> (i32, i32) {
    %c0_i32 = arith.constant 0 : i32
    %c0_i32_0 = arith.constant 0 : i32
    %c0_i32_1 = arith.constant 0 : i32
    return %c0_i32, %c0_i32_0 : i32, i32
  }
  func.func @transform_11(%arg0: i32) -> (i32, i32) {
    %c0_i32 = arith.constant 0 : i32
    %c0_i32_0 = arith.constant 0 : i32
    %c0_i32_1 = arith.constant 0 : i32
    return %c0_i32, %c0_i32_0 : i32, i32
  }
  func.func @transform_12(%arg0: i32) -> (i32, i32) {
    %c0_i32 = arith.constant 0 : i32
    %c0_i32_0 = arith.constant 0 : i32
    %c0_i32_1 = arith.constant 0 : i32
    return %c0_i32, %c0_i32_0 : i32, i32
  }
  func.func @transform_13(%arg0: i32) -> (i32, i32) {
    %c0_i32 = arith.constant 0 : i32
    %c0_i32_0 = arith.constant 0 : i32
    %c0_i32_1 = arith.constant 0 : i32
    return %c0_i32, %c0_i32_0 : i32, i32
  }
  func.func @transform_14(%arg0: i32) -> (i32, i32) {
    %c0_i32 = arith.constant 0 : i32
    %c0_i32_0 = arith.constant 0 : i32
    %c0_i32_1 = arith.constant 0 : i32
    return %c0_i32, %c0_i32_0 : i32, i32
  }
  func.func @transform_15(%arg0: i32) -> (i32, i32) {
    %c0_i32 = arith.constant 0 : i32
    %c0_i32_0 = arith.constant 0 : i32
    %c0_i32_1 = arith.constant 0 : i32
    return %c0_i32, %c0_i32_0 : i32, i32
  }
  func.func @transform_16(%arg0: i32) -> (i32, i32) {
    %c0_i32 = arith.constant 0 : i32
    %c0_i32_0 = arith.constant 0 : i32
    %c0_i32_1 = arith.constant 0 : i32
    return %c0_i32, %c0_i32_0 : i32, i32
  }
}

</mosaic_0001>

<llo_original>
// kernel: tpu_custom_call.1
$region0: #{tpu_custom_call.1}
  #allocation0 [shape = 'u32[]', space=smem, size = 0x4, offset = 0x4, fixed_abs, tag = 'smem constant byte address 0x4 - core index']
  #allocation1 [shape = 'u32[144,128]{1,0:T(1,128)}', space=vmem, size = 0x12000, scoped, tag = 'internal scratch']
  #allocation2 [shape = 'f32[8,8,128]{2,1,0:T(8,128)}', space=vmem, size = 0x8000, scoped, tag = 'scratch operand']
  #allocation3 [shape = 'f32[8,8,32]{2,1,0:T(8,128)}', space=vmem, size = 0x8000, scoped, tag = 'scratch operand']
  #allocation4 [shape = 'f32[8,8,32]{2,1,0:T(8,128)}', space=vmem, size = 0x8000, scoped, tag = 'scratch operand']
  #allocation5 [shape = 'f32[8,8,32]{2,1,0:T(8,128)}', space=vmem, size = 0x8000, scoped, tag = 'scratch operand']
  #allocation6 [shape = 'f32[8,8,32]{2,1,0:T(8,128)}', space=vmem, size = 0x8000, scoped, tag = 'scratch operand']
  %s0 = inlined_call_operand.vmem [shape: f32[8,8,16], index: 0, kind: input, shape index: {}]
  %s1 = inlined_call_operand.vmem [shape: s32[8,1], index: 1, kind: input, shape index: {}]
  %s2 = inlined_call_operand.hbm [shape: f32[16,128], index: 2, kind: input, shape index: {}]
  %s3 = inlined_call_operand.hbm [shape: f32[32,128], index: 3, kind: input, shape index: {}]
  %s4 = inlined_call_operand.vmem [shape: f32[1,128], index: 4, kind: input, shape index: {}]
  %s5 = inlined_call_operand.hbm [shape: f32[16,128], index: 5, kind: input, shape index: {}]
  %s6 = inlined_call_operand.vmem [shape: f32[32,128], index: 6, kind: input, shape index: {}]
  %s7 = inlined_call_operand.vmem [shape: f32[1,128], index: 7, kind: input, shape index: {}]
  %s8 = inlined_call_operand.hbm [shape: f32[64,128], index: 8, kind: input, shape index: {}]
  %s9 = inlined_call_operand.hbm [shape: f32[32,128], index: 9, kind: input, shape index: {}]
  %s10 = inlined_call_operand.vmem [shape: f32[1,128], index: 10, kind: input, shape index: {}]
  %s11 = inlined_call_operand.hbm [shape: f32[64,128], index: 11, kind: input, shape index: {}]
  %s12 = inlined_call_operand.hbm [shape: f32[32,128], index: 12, kind: input, shape index: {}]
  %s13 = inlined_call_operand.vmem [shape: f32[1,128], index: 13, kind: input, shape index: {}]
  %s14 = inlined_call_operand.vmem [shape: f32[64,3], index: 14, kind: input, shape index: {}]
  %s15 = inlined_call_operand.vmem [shape: f32[1,3], index: 15, kind: input, shape index: {}]
  %s16 = inlined_call_operand.vmem [shape: f32[8,3], index: 16, kind: output, shape index: {}]
  %s17 = sld [smem:[#allocation0]]
  $region102: #{tpu_custom_call.1} parent=0
    _
  %s19 = ssub.s32 1, %s17
  %s20 = scalar_select 0, %s19, %s17
  $region1: #{tpu_custom_call.1} parent=0
    #allocation7 [shape = 'u8[8192]{0}', space=vmem, size = 0x2000, scoped, tag = 'input window, operand 2, single buffered']
    #allocation8 [shape = 's32[1]{0}', space=sflag, size = 0x4, scoped, tag = 'scoped memory for tpu_custom_call.1']
    #allocation9 [shape = 'u8[16384]{0}', space=vmem, size = 0x4000, scoped, tag = 'input window, operand 3, single buffered']
    #allocation10 [shape = 's32[1]{0}', space=sflag, size = 0x4, scoped, tag = 'scoped memory for tpu_custom_call.1']
    #allocation11 [shape = 'u8[8192]{0}', space=vmem, size = 0x2000, scoped, tag = 'input window, operand 5, single buffered']
    #allocation12 [shape = 'u8[32768]{0}', space=vmem, size = 0x8000, scoped, tag = 'input window, operand 8, single buffered']
    #allocation13 [shape = 's32[1]{0}', space=sflag, size = 0x4, scoped, tag = 'scoped memory for tpu_custom_call.1']
    #allocation14 [shape = 'u8[16384]{0}', space=vmem, size = 0x4000, scoped, tag = 'input window, operand 9, single buffered']
    #allocation15 [shape = 'u8[32768]{0}', space=vmem, size = 0x8000, scoped, tag = 'input window, operand 11, single buffered']
    #allocation16 [shape = 's32[1]{0}', space=sflag, size = 0x4, scoped, tag = 'scoped memory for tpu_custom_call.1']
    #allocation17 [shape = 'u8[16384]{0}', space=vmem, size = 0x4000, scoped, tag = 'input window, operand 12, single buffered']
    %21 = vsyncpa [#allocation8], 0
    %22 = vsyncpa [#allocation10], 0
    %23 = vsyncpa [#allocation13], 0
    %24 = vsyncpa [#allocation16], 0
    // Predicated region
    $region2: #{tpu_custom_call.1} parent=1 // pred_check
      _
    $region3: #{tpu_custom_call.1} parent=1 // pred_check_branch
      %26 = sbr.rel (0) target = $region5
    $region4: #{tpu_custom_call.1} parent=1 // pred_region
      _
    $region5: #{tpu_custom_call.1} parent=1 // pred_fallthru
      _
    // Predicated region
    $region6: #{tpu_custom_call.1} parent=1 // pred_check
      _
    $region7: #{tpu_custom_call.1} parent=1 // pred_check_branch
      %28 = sbr.rel (0) target = $region9
    $region8: #{tpu_custom_call.1} parent=1 // pred_region
      _
    $region9: #{tpu_custom_call.1} parent=1 // pred_fallthru
      _
    // Predicated region
    $region10: #{tpu_custom_call.1} parent=1 // pred_check
      _
    $region11: #{tpu_custom_call.1} parent=1 // pred_check_branch
      %30 = sbr.rel (0) target = $region13
    $region12: #{tpu_custom_call.1} parent=1 // pred_region
      %s32 = ssub.s32 256, 256
      %33 = vsyncadd [#allocation8], %s32
      %s34 = sshll.u32 [#allocation7], 4
      %s35 = int_to_ptr.vmem [resolvable:$true] %s34
      %40 = dma.hbm_to_vmem [thread:$0]  %s2, 256, %s35, [#allocation8], 128, 128, 8
    $region13: #{tpu_custom_call.1} parent=1 // pred_fallthru
      _
    // Predicated region
    $region14: #{tpu_custom_call.1} parent=1 // pred_check
      _
    $region15: #{tpu_custom_call.1} parent=1 // pred_check_branch
      %42 = sbr.rel (0) target = $region17
    $region16: #{tpu_custom_call.1} parent=1 // pred_region
      %s44 = ssub.s32 512, 512
      %45 = vsyncadd [#allocation10], %s44
      %s46 = sshll.u32 [#allocation9], 4
      %s47 = int_to_ptr.vmem [resolvable:$true] %s46
      %52 = dma.hbm_to_vmem [thread:$0]  %s3, 512, %s47, [#allocation10], 128, 128, 8
    $region17: #{tpu_custom_call.1} parent=1 // pred_fallthru
      _
    // Predicated region
    $region18: #{tpu_custom_call.1} parent=1 // pred_check
      _
    $region19: #{tpu_custom_call.1} parent=1 // pred_check_branch
      %54 = sbr.rel (0) target = $region21
    $region20: #{tpu_custom_call.1} parent=1 // pred_region
      _
    $region21: #{tpu_custom_call.1} parent=1 // pred_fallthru
      _
    // Predicated region
    $region22: #{tpu_custom_call.1} parent=1 // pred_check
      _
    $region23: #{tpu_custom_call.1} parent=1 // pred_check_branch
      %56 = sbr.rel (0) target = $region25
    $region24: #{tpu_custom_call.1} parent=1 // pred_region
      %s58 = ssub.s32 256, 256
      %59 = vsyncadd [#allocation10], %s58
      %s60 = sshll.u32 [#allocation11], 4
      %s61 = int_to_ptr.vmem [resolvable:$true] %s60
      %66 = dma.hbm_to_vmem [thread:$0]  %s5, 256, %s61, [#allocation10], 128, 128, 8
    $region25: #{tpu_custom_call.1} parent=1 // pred_fallthru
      _
    // Predicated region
    $region26: #{tpu_custom_call.1} parent=1 // pred_check
      _
    $region27: #{tpu_custom_call.1} parent=1 // pred_check_branch
      %68 = sbr.rel (0) target = $region29
    $region28: #{tpu_custom_call.1} parent=1 // pred_region
      _
    $region29: #{tpu_custom_call.1} parent=1 // pred_fallthru
      _
    // Predicated region
    $region30: #{tpu_custom_call.1} parent=1 // pred_check
      _
    $region31: #{tpu_custom_call.1} parent=1 // pred_check_branch
      %70 = sbr.rel (0) target = $region33
    $region32: #{tpu_custom_call.1} parent=1 // pred_region
      _
    $region33: #{tpu_custom_call.1} parent=1 // pred_fallthru
      _
    // Predicated region
    $region34: #{tpu_custom_call.1} parent=1 // pred_check
      _
    $region35: #{tpu_custom_call.1} parent=1 // pred_check_branch
      %72 = sbr.rel (0) target = $region37
    $region36: #{tpu_custom_call.1} parent=1 // pred_region
      %s74 = ssub.s32 1024, 1024
      %75 = vsyncadd [#allocation13], %s74
      %s76 = sshll.u32 [#allocation12], 4
      %s77 = int_to_ptr.vmem [resolvable:$true] %s76
      %82 = dma.hbm_to_vmem [thread:$0]  %s8, 1024, %s77, [#allocation13], 128, 128, 8
    $region37: #{tpu_custom_call.1} parent=1 // pred_fallthru
      _
    // Predicated region
    $region38: #{tpu_custom_call.1} parent=1 // pred_check
      _
    $region39: #{tpu_custom_call.1} parent=1 // pred_check_branch
      %84 = sbr.rel (0) target = $region41
    $region40: #{tpu_custom_call.1} parent=1 // pred_region
      %s86 = ssub.s32 512, 512
      %87 = vsyncadd [#allocation13], %s86
      %s88 = sshll.u32 [#allocation14], 4
      %s89 = int_to_ptr.vmem [resolvable:$true] %s88
      %94 = dma.hbm_to_vmem [thread:$0]  %s9, 512, %s89, [#allocation13], 128, 128, 8
    $region41: #{tpu_custom_call.1} parent=1 // pred_fallthru
      _
    // Predicated region
    $region42: #{tpu_custom_call.1} parent=1 // pred_check
      _
    $region43: #{tpu_custom_call.1} parent=1 // pred_check_branch
      %96 = sbr.rel (0) target = $region45
    $region44: #{tpu_custom_call.1} parent=1 // pred_region
      _
    $region45: #{tpu_custom_call.1} parent=1 // pred_fallthru
      _
    // Predicated region
    $region46: #{tpu_custom_call.1} parent=1 // pred_check
      _
    $region47: #{tpu_custom_call.1} parent=1 // pred_check_branch
      %98 = sbr.rel (0) target = $region49
    $region48: #{tpu_custom_call.1} parent=1 // pred_region
      %s100 = ssub.s32 1024, 1024
      %101 = vsyncadd [#allocation16], %s100
      %s102 = sshll.u32 [#allocation15], 4
      %s103 = int_to_ptr.vmem [resolvable:$true] %s102
      %108 = dma.hbm_to_vmem [thread:$0]  %s11, 1024, %s103, [#allocation16], 128, 128, 8
    $region49: #{tpu_custom_call.1} parent=1 // pred_fallthru
      _
    // Predicated region
    $region50: #{tpu_custom_call.1} parent=1 // pred_check
      _
    $region51: #{tpu_custom_call.1} parent=1 // pred_check_branch
      %110 = sbr.rel (0) target = $region53
    $region52: #{tpu_custom_call.1} parent=1 // pred_region
      %s112 = ssub.s32 512, 512
      %113 = vsyncadd [#allocation16], %s112
      %s114 = sshll.u32 [#allocation17], 4
      %s115 = int_to_ptr.vmem [resolvable:$true] %s114
      %120 = dma.hbm_to_vmem [thread:$0]  %s12, 512, %s115, [#allocation16], 128, 128, 8
    $region53: #{tpu_custom_call.1} parent=1 // pred_fallthru
      _
    // Predicated region
    $region54: #{tpu_custom_call.1} parent=1 // pred_check
      _
    $region55: #{tpu_custom_call.1} parent=1 // pred_check_branch
      %122 = sbr.rel (0) target = $region57
    $region56: #{tpu_custom_call.1} parent=1 // pred_region
      _
    $region57: #{tpu_custom_call.1} parent=1 // pred_fallthru
      _
    // Predicated region
    $region58: #{tpu_custom_call.1} parent=1 // pred_check
      _
    $region59: #{tpu_custom_call.1} parent=1 // pred_check_branch
      %124 = sbr.rel (0) target = $region61
    $region60: #{tpu_custom_call.1} parent=1 // pred_region
      _
    $region61: #{tpu_custom_call.1} parent=1 // pred_fallthru
      _
    // Predicated region
    $region62: #{tpu_custom_call.1} parent=1 // pred_check
      _
    $region63: #{tpu_custom_call.1} parent=1 // pred_check_branch
      %126 = sbr.rel (0) target = $region65
    $region64: #{tpu_custom_call.1} parent=1 // pred_region
      _
    $region65: #{tpu_custom_call.1} parent=1 // pred_fallthru
      _
    // Predicated region
    $region66: #{tpu_custom_call.1} parent=1 // pred_check
      _
    $region67: #{tpu_custom_call.1} parent=1 // pred_check_branch
      %128 = sbr.rel (0) target = $region69
    $region68: #{tpu_custom_call.1} parent=1 // pred_region
      %129 = dma.done [#allocation8], 256
    $region69: #{tpu_custom_call.1} parent=1 // pred_fallthru
      _
    // Predicated region
    $region70: #{tpu_custom_call.1} parent=1 // pred_check
      _
    $region71: #{tpu_custom_call.1} parent=1 // pred_check_branch
      %131 = sbr.rel (0) target = $region73
    $region72: #{tpu_custom_call.1} parent=1 // pred_region
      %132 = dma.done [#allocation10], 512
    $region73: #{tpu_custom_call.1} parent=1 // pred_fallthru
      _
    // Predicated region
    $region74: #{tpu_custom_call.1} parent=1 // pred_check
      _
    $region75: #{tpu_custom_call.1} parent=1 // pred_check_branch
      %134 = sbr.rel (0) target = $region77
    $region76: #{tpu_custom_call.1} parent=1 // pred_region
      %135 = dma.done [#allocation10], 256
    $region77: #{tpu_custom_call.1} parent=1 // pred_fallthru
      _
    // Predicated region
    $region78: #{tpu_custom_call.1} parent=1 // pred_check
      _
    $region79: #{tpu_custom_call.1} parent=1 // pred_check_branch
      %137 = sbr.rel (0) target = $region81
    $region80: #{tpu_custom_call.1} parent=1 // pred_region
      %138 = dma.done [#allocation13], 1024
    $region81: #{tpu_custom_call.1} parent=1 // pred_fallthru
      _
    // Predicated region
    $region82: #{tpu_custom_call.1} parent=1 // pred_check
      _
    $region83: #{tpu_custom_call.1} parent=1 // pred_check_branch
      %140 = sbr.rel (0) target = $region85
    $region84: #{tpu_custom_call.1} parent=1 // pred_region
      %141 = dma.done [#allocation13], 512
    $region85: #{tpu_custom_call.1} parent=1 // pred_fallthru
      _
    // Predicated region
    $region86: #{tpu_custom_call.1} parent=1 // pred_check
      _
    $region87: #{tpu_custom_call.1} parent=1 // pred_check_branch
      %143 = sbr.rel (0) target = $region89
    $region88: #{tpu_custom_call.1} parent=1 // pred_region
      %144 = dma.done [#allocation16], 1024
    $region89: #{tpu_custom_call.1} parent=1 // pred_fallthru
      _
    // Predicated region
    $region90: #{tpu_custom_call.1} parent=1 // pred_check
      _
    $region91: #{tpu_custom_call.1} parent=1 // pred_check_branch
      %146 = sbr.rel (0) target = $region93
    $region92: #{tpu_custom_call.1} parent=1 // pred_region
      %147 = dma.done [#allocation16], 512
    $region93: #{tpu_custom_call.1} parent=1 // pred_fallthru
      _
    %v148 = vld [vmem:[%s1] sm:$0xff]
    %v149 = vld [vmem:[%s0] sm:$0xff]
    %v150 = vld [vmem:[%s0 + $0x8] sm:$0xff]
    %v151 = vld [vmem:[%s0 + $0x10] sm:$0xff]
    %v152 = vld [vmem:[%s0 + $0x18] sm:$0xff]
    %v153 = vld [vmem:[%s0 + $0x20] sm:$0xff]
    %v154 = vld [vmem:[%s0 + $0x28] sm:$0xff]
    %v155 = vld [vmem:[%s0 + $0x30] sm:$0xff]
    %v156 = vld [vmem:[%s0 + $0x38] sm:$0xff]
    %v157 = vld [vmem:[#allocation7] sm:$0xff]
    %v158 = vld [vmem:[#allocation7 + $0x8] sm:$0xff]
    %v159 = vld [vmem:[%s4] sm:$0x1]
    %v161 = vlaneseq
    %v162 = vshrl.u32 %v161, 7
    %v163 = vsub.s32 0, %v162
    %v164 = vrot.slane %v159, %v163
    %vm166 = vcmask 130048
    %v168 = vsel %vm166, %v149, 0
    %v171 = vsel %vm166, %v150, 0
    %v174 = vsel %vm166, %v151, 0
    %v177 = vsel %vm166, %v152, 0
    %v180 = vsel %vm166, %v153, 0
    %v183 = vsel %vm166, %v154, 0
    %v186 = vsel %vm166, %v155, 0
    %v189 = vsel %vm166, %v156, 0
    %191 = vmatprep.subr.mxu0 0.0
    %192 = vmatpush1.msra.mxu0 %v157
    %193 = vmatprep.subr.mxu0 0.0
    %194 = vmatpush1.msra.mxu0 %v158
    %195 = vmatprep.subr.mxu0 0.0
    %196 = vmatpush1.msra.mxu0 0.0
    %197 = vmatprep.subr.mxu0 0.0
    %198 = vmatpush1.msra.mxu0 0.0
    %199 = vmatprep.subr.mxu0 0.0
    %200 = vmatpush1.msra.mxu0 0.0
    %201 = vmatprep.subr.mxu0 0.0
    %202 = vmatpush1.msra.mxu0 0.0
    %203 = vmatprep.subr.mxu0 0.0
    %204 = vmatpush1.msra.mxu0 0.0
    %205 = vmatprep.subr.mxu0 0.0
    %206 = vmatpush1.msra.mxu0 0.0
    %207 = vmatprep.subr.mxu0 0.0
    %208 = vmatpush1.msra.mxu0 0.0
    %209 = vmatprep.subr.mxu0 0.0
    %210 = vmatpush1.msra.mxu0 0.0
    %211 = vmatprep.subr.mxu0 0.0
    %212 = vmatpush1.msra.mxu0 0.0
    %213 = vmatprep.subr.mxu0 0.0
    %214 = vmatpush1.msra.mxu0 0.0
    %215 = vmatprep.subr.mxu0 0.0
    %216 = vmatpush1.msra.mxu0 0.0
    %217 = vmatprep.subr.mxu0 0.0
    %218 = vmatpush1.msra.mxu0 0.0
    %219 = vmatprep.subr.mxu0 0.0
    %220 = vmatpush1.msra.mxu0 0.0
    %221 = vmatprep.subr.mxu0 0.0
    %222 = vmatpush1.msra.mxu0 0.0
    %223 = vmatprep.subr.mxu0 0.0
    %224 = vmatpush1.msra.mxu0 0.0
    %225 = vmatprep.subr.mxu0 0.0
    %226 = vmatpush1.msra.mxu0 0.0
    %227 = vmatprep.subr.mxu0 0.0
    %228 = vmatpush1.msra.mxu0 0.0
    %229 = vmatprep.subr.mxu0 0.0
    %230 = vmatpush1.msra.mxu0 0.0
    %231 = vmatprep.subr.mxu0 0.0
    %232 = vmatpush1.msra.mxu0 0.0
    %233 = vmatprep.subr.mxu0 0.0
    %234 = vmatpush1.msra.mxu0 0.0
    %235 = vmatprep.subr.mxu0 0.0
    %236 = vmatpush1.msra.mxu0 0.0
    %237 = vmatprep.subr.mxu0 0.0
    %238 = vmatpush1.msra.mxu0 0.0
    %239 = vmatprep.subr.mxu0 0.0
    %240 = vmatpush1.msra.mxu0 0.0
    %241 = vmatprep.subr.mxu0 0.0
    %242 = vmatpush1.msra.mxu0 0.0
    %243 = vmatprep.subr.mxu0 0.0
    %244 = vmatpush1.msra.mxu0 0.0
    %245 = vmatprep.subr.mxu0 0.0
    %246 = vmatpush1.msra.mxu0 0.0
    %247 = vmatprep.subr.mxu0 0.0
    %248 = vmatpush1.msra.mxu0 0.0
    %249 = vmatprep.subr.mxu0 0.0
    %250 = vmatpush1.msra.mxu0 0.0
    %251 = vmatprep.subr.mxu0 0.0
    %252 = vmatpush1.msra.mxu0 0.0
    %253 = vmatprep.subr.mxu0 0.0
    %254 = vmatpush1.msra.mxu0 0.0
    %255 = vmatprep.mubr.f32.mxu0 0.0
    %256 = vmatmul.mubr.f32.gmra.mrb[0].mxu0 %v168
    %v257 = vpop.f32.mrb[0].mxu0
    %v258 = vadd.f32 %v164, %v257
    %v259 = vpop.f32.mrb[0].mxu0
    %260 = vmatprep.mubr.f32.mxu0 0.0
    %261 = vmatmul.mubr.f32.gmra.mrb[0].mxu0 %v171
    %v262 = vpop.f32.mrb[0].mxu0
    %v263 = vadd.f32 %v164, %v262
    %v264 = vpop.f32.mrb[0].mxu0
    %265 = vmatprep.mubr.f32.mxu0 0.0
    %266 = vmatmul.mubr.f32.gmra.mrb[0].mxu0 %v174
    %v267 = vpop.f32.mrb[0].mxu0
    %v268 = vadd.f32 %v164, %v267
    %v269 = vpop.f32.mrb[0].mxu0
    %270 = vmatprep.mubr.f32.mxu0 0.0
    %271 = vmatmul.mubr.f32.gmra.mrb[0].mxu0 %v177
    %v272 = vpop.f32.mrb[0].mxu0
    %v273 = vadd.f32 %v164, %v272
    %v274 = vpop.f32.mrb[0].mxu0
    %275 = vmatprep.mubr.f32.mxu0 0.0
    %276 = vmatmul.mubr.f32.gmra.mrb[0].mxu0 %v180
    %v277 = vpop.f32.mrb[0].mxu0
    %v278 = vadd.f32 %v164, %v277
    %v279 = vpop.f32.mrb[0].mxu0
    %280 = vmatprep.mubr.f32.mxu0 0.0
    %281 = vmatmul.mubr.f32.gmra.mrb[0].mxu0 %v183
    %v282 = vpop.f32.mrb[0].mxu0
    %v283 = vadd.f32 %v164, %v282
    %v284 = vpop.f32.mrb[0].mxu0
    %285 = vmatprep.mubr.f32.mxu0 0.0
    %286 = vmatmul.mubr.f32.gmra.mrb[0].mxu0 %v186
    %v287 = vpop.f32.mrb[0].mxu0
    %v288 = vadd.f32 %v164, %v287
    %v289 = vpop.f32.mrb[0].mxu0
    %290 = vmatprep.mubr.f32.mxu0 0.0
    %291 = vmatmul.mubr.f32.gmra.mrb[0].mxu0 %v189
    %v292 = vpop.f32.mrb[0].mxu0
    %v293 = vadd.f32 %v164, %v292
    %v294 = vpop.f32.mrb[0].mxu0
    %295 = vdwg.mxu0
    %296 = vst [vmem:[#allocation2] sm:$0xff] %v258
    %297 = vst [vmem:[#allocation2 + $0x8] sm:$0xff] %v263
    %298 = vst [vmem:[#allocation2 + $0x10] sm:$0xff] %v268
    %299 = vst [vmem:[#allocation2 + $0x18] sm:$0xff] %v273
    %300 = vst [vmem:[#allocation2 + $0x20] sm:$0xff] %v278
    %301 = vst [vmem:[#allocation2 + $0x28] sm:$0xff] %v283
    %302 = vst [vmem:[#allocation2 + $0x30] sm:$0xff] %v288
    %303 = vst [vmem:[#allocation2 + $0x38] sm:$0xff] %v293
    %v304 = vld [vmem:[#allocation9] sm:$0xff]
    %v305 = vld [vmem:[#allocation9 + $0x8] sm:$0xff]
    %v306 = vld [vmem:[#allocation9 + $0x10] sm:$0xff]
    %v307 = vld [vmem:[#allocation9 + $0x18] sm:$0xff]
    %v308 = vld [vmem:[#allocation2] sm:$0xff]
    %vm309 = vcmask 261120
    %v311 = vsel %vm309, 0.0, 0
    %313 = vmatprep.subr.mxu0 0.0
    %314 = vmatpush1.msra.mxu0 %v304
    %315 = vmatprep.subr.mxu0 0.0
    %316 = vmatpush1.msra.mxu0 %v305
    %317 = vmatprep.subr.mxu0 0.0
    %318 = vmatpush1.msra.mxu0 %v306
    %319 = vmatprep.subr.mxu0 0.0
    %320 = vmatpush1.msra.mxu0 %v307
    %321 = vmatprep.subr.mxu0 0.0
    %322 = vmatpush1.msra.mxu0 0.0
    %323 = vmatprep.subr.mxu0 0.0
    %324 = vmatpush1.msra.mxu0 0.0
    %325 = vmatprep.subr.mxu0 0.0
    %326 = vmatpush1.msra.mxu0 0.0
    %327 = vmatprep.subr.mxu0 0.0
    %328 = vmatpush1.msra.mxu0 0.0
    %329 = vmatprep.subr.mxu0 0.0
    %330 = vmatpush1.msra.mxu0 0.0
    %331 = vmatprep.subr.mxu0 0.0
    %332 = vmatpush1.msra.mxu0 0.0
    %333 = vmatprep.subr.mxu0 0.0
    %334 = vmatpush1.msra.mxu0 0.0
    %335 = vmatprep.subr.mxu0 0.0
    %336 = vmatpush1.msra.mxu0 0.0
    %337 = vmatprep.subr.mxu0 0.0
    %338 = vmatpush1.msra.mxu0 0.0
    %339 = vmatprep.subr.mxu0 0.0
    %340 = vmatpush1.msra.mxu0 0.0
    %341 = vmatprep.subr.mxu0 0.0
    %342 = vmatpush1.msra.mxu0 0.0
    %343 = vmatprep.subr.mxu0 0.0
    %344 = vmatpush1.msra.mxu0 0.0
    %345 = vmatprep.subr.mxu0 0.0
    %346 = vmatpush1.msra.mxu0 0.0
    %347 = vmatprep.subr.mxu0 0.0
    %348 = vmatpush1.msra.mxu0 0.0
    %349 = vmatprep.subr.mxu0 0.0
    %350 = vmatpush1.msra.mxu0 0.0
    %351 = vmatprep.subr.mxu0 0.0
    %352 = vmatpush1.msra.mxu0 0.0
    %353 = vmatprep.subr.mxu0 0.0
    %354 = vmatpush1.msra.mxu0 0.0
    %355 = vmatprep.subr.mxu0 0.0
    %356 = vmatpush1.msra.mxu0 0.0
    %357 = vmatprep.subr.mxu0 0.0
    %358 = vmatpush1.msra.mxu0 0.0
    %359 = vmatprep.subr.mxu0 0.0
    %360 = vmatpush1.msra.mxu0 0.0
    %361 = vmatprep.subr.mxu0 0.0
    %362 = vmatpush1.msra.mxu0 0.0
    %363 = vmatprep.subr.mxu0 0.0
    %364 = vmatpush1.msra.mxu0 0.0
    %365 = vmatprep.subr.mxu0 0.0
    %366 = vmatpush1.msra.mxu0 0.0
    %367 = vmatprep.subr.mxu0 0.0
    %368 = vmatpush1.msra.mxu0 0.0
    %369 = vmatprep.subr.mxu0 0.0
    %370 = vmatpush1.msra.mxu0 0.0
    %371 = vmatprep.subr.mxu0 0.0
    %372 = vmatpush1.msra.mxu0 0.0
    %373 = vmatprep.subr.mxu0 0.0
    %374 = vmatpush1.msra.mxu0 0.0
    %375 = vmatprep.subr.mxu0 0.0
    %376 = vmatpush1.msra.mxu0 0.0
    %377 = vmatprep.mubr.f32.mxu0 0.0
    %378 = vmatmul.mubr.f32.gmra.mrb[0].mxu0 %v311
    %v379 = vpop.f32.mrb[0].mxu0
    %v380 = vadd.f32 0.0, %v379
    %v381 = vpop.f32.mrb[0].mxu0
    %382 = vdwg.mxu0
    %v383 = vadd.f32 %v308, %v380
    %v384 = vxor.u32 %v383, 2147483648
    %v385 = vmul.f32 %v384, 1.442695
    %v386 = vpow.pop %v385
    %v387 = vadd.f32 %v386, 1.0
    %v388 = vrcp.pop %v387
    %v389 = vmul.f32 1.0, %v388
    %v390 = vtanh.pop %v383
    %v391 = vmul.f32 %v389, 0.0
    %393 = vrot.lane.b32.xlu0 %v390, 64
    %v394 = vpop.permute.xlu0 %393
    %v396 = vmul.f32 %v389, %v394
    %398 = vrot.lane.b32.xlu0 %v396, 32
    %v399 = vpop.permute.xlu0 %398
    %v401 = vadd.f32 %v391, %v399
    %v402 = vtanh.pop %v401
    %404 = vrot.lane.b32.xlu0 %v402, 64
    %v405 = vpop.permute.xlu0 %404
    %v407 = vmul.f32 %v389, %v405
    %vm408 = vcmp.gt.s32.totalorder %v148, 0
    %v409 = vsel %vm408, 1, 0
    %410 = vset.pattern.permute.xlu0 0
    %411 = vperm.xlu0 %410, %v409
    %v412 = vpop.permute.xlu0 %411
    %vm413 = vcmp.eq.s32.totalorder %v412, 1
    %v414 = vsel %vm413, %v407, 0.0
    %v415 = vsel %vm413, %v401, 0.0
    %417 = vrot.lane.b32.xlu0 %v414, 32
    %v418 = vpop.permute.xlu0 %417
    %420 = vst.msk [vmem:[#allocation3] sm:$0xff] %vm309, %v418
    %s421 = scalar_lea.vmem [#allocation2], 8
    %v422 = vld [vmem:[%s421] sm:$0xff]
    %v423 = vsel %vm309, %v418, 0
    %425 = vmatprep.subr.mxu0 0.0
    %426 = vmatpush1.msra.mxu0 %v304
    %427 = vmatprep.subr.mxu0 0.0
    %428 = vmatpush1.msra.mxu0 %v305
    %429 = vmatprep.subr.mxu0 0.0
    %430 = vmatpush1.msra.mxu0 %v306
    %431 = vmatprep.subr.mxu0 0.0
    %432 = vmatpush1.msra.mxu0 %v307
    %433 = vmatprep.subr.mxu0 0.0
    %434 = vmatpush1.msra.mxu0 0.0
    %435 = vmatprep.subr.mxu0 0.0
    %436 = vmatpush1.msra.mxu0 0.0
    %437 = vmatprep.subr.mxu0 0.0
    %438 = vmatpush1.msra.mxu0 0.0
    %439 = vmatprep.subr.mxu0 0.0
    %440 = vmatpush1.msra.mxu0 0.0
    %441 = vmatprep.subr.mxu0 0.0
    %442 = vmatpush1.msra.mxu0 0.0
    %443 = vmatprep.subr.mxu0 0.0
    %444 = vmatpush1.msra.mxu0 0.0
    %445 = vmatprep.subr.mxu0 0.0
    %446 = vmatpush1.msra.mxu0 0.0
    %447 = vmatprep.subr.mxu0 0.0
    %448 = vmatpush1.msra.mxu0 0.0
    %449 = vmatprep.subr.mxu0 0.0
    %450 = vmatpush1.msra.mxu0 0.0
    %451 = vmatprep.subr.mxu0 0.0
    %452 = vmatpush1.msra.mxu0 0.0
    %453 = vmatprep.subr.mxu0 0.0
    %454 = vmatpush1.msra.mxu0 0.0
    %455 = vmatprep.subr.mxu0 0.0
    %456 = vmatpush1.msra.mxu0 0.0
    %457 = vmatprep.subr.mxu0 0.0
    %458 = vmatpush1.msra.mxu0 0.0
    %459 = vmatprep.subr.mxu0 0.0
    %460 = vmatpush1.msra.mxu0 0.0
    %461 = vmatprep.subr.mxu0 0.0
    %462 = vmatpush1.msra.mxu0 0.0
    %463 = vmatprep.subr.mxu0 0.0
    %464 = vmatpush1.msra.mxu0 0.0
    %465 = vmatprep.subr.mxu0 0.0
    %466 = vmatpush1.msra.mxu0 0.0
    %467 = vmatprep.subr.mxu0 0.0
    %468 = vmatpush1.msra.mxu0 0.0
    %469 = vmatprep.subr.mxu0 0.0
    %470 = vmatpush1.msra.mxu0 0.0
    %471 = vmatprep.subr.mxu0 0.0
    %472 = vmatpush1.msra.mxu0 0.0
    %473 = vmatprep.subr.mxu0 0.0
    %474 = vmatpush1.msra.mxu0 0.0
    %475 = vmatprep.subr.mxu0 0.0
    %476 = vmatpush1.msra.mxu0 0.0
    %477 = vmatprep.subr.mxu0 0.0
    %478 = vmatpush1.msra.mxu0 0.0
    %479 = vmatprep.subr.mxu0 0.0
    %480 = vmatpush1.msra.mxu0 0.0
    %481 = vmatprep.subr.mxu0 0.0
    %482 = vmatpush1.msra.mxu0 0.0
    %483 = vmatprep.subr.mxu0 0.0
    %484 = vmatpush1.msra.mxu0 0.0
    %485 = vmatprep.subr.mxu0 0.0
    %486 = vmatpush1.msra.mxu0 0.0
    %487 = vmatprep.subr.mxu0 0.0
    %488 = vmatpush1.msra.mxu0 0.0
    %489 = vmatprep.mubr.f32.mxu0 0.0
    %490 = vmatmul.mubr.f32.gmra.mrb[0].mxu0 %v423
    %v491 = vpop.f32.mrb[0].mxu0
    %v492 = vadd.f32 0.0, %v491
    %v493 = vpop.f32.mrb[0].mxu0
    %494 = vdwg.mxu0
    %v495 = vadd.f32 %v422, %v492
    %v496 = vxor.u32 %v495, 2147483648
    %v497 = vmul.f32 %v496, 1.442695
    %v498 = vpow.pop %v497
    %v499 = vadd.f32 %v498, 1.0
    %v500 = vrcp.pop %v499
    %v501 = vmul.f32 1.0, %v500
    %v502 = vtanh.pop %v495
    %v503 = vmul.f32 %v501, %v415
    %505 = vrot.lane.b32.xlu0 %v502, 64
    %v506 = vpop.permute.xlu0 %505
    %v508 = vmul.f32 %v501, %v506
    %510 = vrot.lane.b32.xlu0 %v508, 32
    %v511 = vpop.permute.xlu0 %510
    %v513 = vadd.f32 %v503, %v511
    %v514 = vtanh.pop %v513
    %516 = vrot.lane.b32.xlu0 %v514, 64
    %v517 = vpop.permute.xlu0 %516
    %v519 = vmul.f32 %v501, %v517
    %vm520 = vcmp.gt.s32.totalorder %v148, 1
    %v521 = vsel %vm520, 1, 0
    %522 = vset.pattern.permute.xlu0 0
    %523 = vperm.xlu0 %522, %v521
    %v524 = vpop.permute.xlu0 %523
    %vm525 = vcmp.eq.s32.totalorder %v524, 1
    %v526 = vsel %vm525, %v519, %v414
    %v527 = vsel %vm525, %v513, %v415
    %v528 = vsel %vm525, %v519, 0.0
    %530 = vrot.lane.b32.xlu0 %v528, 32
    %v531 = vpop.permute.xlu0 %530
    %s533 = scalar_lea.vmem [#allocation3], 8
    %534 = vst.msk [vmem:[%s533] sm:$0xff] %vm309, %v531
    %s535 = scalar_lea.vmem [#allocation2], 16
    %v536 = vld [vmem:[%s535] sm:$0xff]
    %538 = vrot.lane.b32.xlu0 %v526, 32
    %v539 = vpop.permute.xlu0 %538
    %v540 = vsel %vm309, %v539, 0
    %542 = vmatprep.subr.mxu0 0.0
    %543 = vmatpush1.msra.mxu0 %v304
    %544 = vmatprep.subr.mxu0 0.0
    %545 = vmatpush1.msra.mxu0 %v305
    %546 = vmatprep.subr.mxu0 0.0
    %547 = vmatpush1.msra.mxu0 %v306
    %548 = vmatprep.subr.mxu0 0.0
    %549 = vmatpush1.msra.mxu0 %v307
    %550 = vmatprep.subr.mxu0 0.0
    %551 = vmatpush1.msra.mxu0 0.0
    %552 = vmatprep.subr.mxu0 0.0
    %553 = vmatpush1.msra.mxu0 0.0
    %554 = vmatprep.subr.mxu0 0.0
    %555 = vmatpush1.msra.mxu0 0.0
    %556 = vmatprep.subr.mxu0 0.0
    %557 = vmatpush1.msra.mxu0 0.0
    %558 = vmatprep.subr.mxu0 0.0
    %559 = vmatpush1.msra.mxu0 0.0
    %560 = vmatprep.subr.mxu0 0.0
    %561 = vmatpush1.msra.mxu0 0.0
    %562 = vmatprep.subr.mxu0 0.0
    %563 = vmatpush1.msra.mxu0 0.0
    %564 = vmatprep.subr.mxu0 0.0
    %565 = vmatpush1.msra.mxu0 0.0
    %566 = vmatprep.subr.mxu0 0.0
    %567 = vmatpush1.msra.mxu0 0.0
    %568 = vmatprep.subr.mxu0 0.0
    %569 = vmatpush1.msra.mxu0 0.0
    %570 = vmatprep.subr.mxu0 0.0
    %571 = vmatpush1.msra.mxu0 0.0
    %572 = vmatprep.subr.mxu0 0.0
    %573 = vmatpush1.msra.mxu0 0.0
    %574 = vmatprep.subr.mxu0 0.0
    %575 = vmatpush1.msra.mxu0 0.0
    %576 = vmatprep.subr.mxu0 0.0
    %577 = vmatpush1.msra.mxu0 0.0
    %578 = vmatprep.subr.mxu0 0.0
    %579 = vmatpush1.msra.mxu0 0.0
    %580 = vmatprep.subr.mxu0 0.0
    %581 = vmatpush1.msra.mxu0 0.0
    %582 = vmatprep.subr.mxu0 0.0
    %583 = vmatpush1.msra.mxu0 0.0
    %584 = vmatprep.subr.mxu0 0.0
    %585 = vmatpush1.msra.mxu0 0.0
    %586 = vmatprep.subr.mxu0 0.0
    %587 = vmatpush1.msra.mxu0 0.0
    %588 = vmatprep.subr.mxu0 0.0
    %589 = vmatpush1.msra.mxu0 0.0
    %590 = vmatprep.subr.mxu0 0.0
    %591 = vmatpush1.msra.mxu0 0.0
    %592 = vmatprep.subr.mxu0 0.0
    %593 = vmatpush1.msra.mxu0 0.0
    %594 = vmatprep.subr.mxu0 0.0
    %595 = vmatpush1.msra.mxu0 0.0
    %596 = vmatprep.subr.mxu0 0.0
    %597 = vmatpush1.msra.mxu0 0.0
    %598 = vmatprep.subr.mxu0 0.0
    %599 = vmatpush1.msra.mxu0 0.0
    %600 = vmatprep.subr.mxu0 0.0
    %601 = vmatpush1.msra.mxu0 0.0
    %602 = vmatprep.subr.mxu0 0.0
    %603 = vmatpush1.msra.mxu0 0.0
    %604 = vmatprep.subr.mxu0 0.0
    %605 = vmatpush1.msra.mxu0 0.0
    %606 = vmatprep.mubr.f32.mxu0 0.0
    %607 = vmatmul.mubr.f32.gmra.mrb[0].mxu0 %v540
    %v608 = vpop.f32.mrb[0].mxu0
    %v609 = vadd.f32 0.0, %v608
    %v610 = vpop.f32.mrb[0].mxu0
    %611 = vdwg.mxu0
    %v612 = vadd.f32 %v536, %v609
    %v613 = vxor.u32 %v612, 2147483648
    %v614 = vmul.f32 %v613, 1.442695
    %v615 = vpow.pop %v614
    %v616 = vadd.f32 %v615, 1.0
    %v617 = vrcp.pop %v616
    %v618 = vmul.f32 1.0, %v617
    %v619 = vtanh.pop %v612
    %v620 = vmul.f32 %v618, %v527
    %622 = vrot.lane.b32.xlu0 %v619, 64
    %v623 = vpop.permute.xlu0 %622
    %v625 = vmul.f32 %v618, %v623
    %627 = vrot.lane.b32.xlu0 %v625, 32
    %v628 = vpop.permute.xlu0 %627
    %v630 = vadd.f32 %v620, %v628
    %v631 = vtanh.pop %v630
    %633 = vrot.lane.b32.xlu0 %v631, 64
    %v634 = vpop.permute.xlu0 %633
    %v636 = vmul.f32 %v618, %v634
    %vm637 = vcmp.gt.s32.totalorder %v148, 2
    %v638 = vsel %vm637, 1, 0
    %639 = vset.pattern.permute.xlu0 0
    %640 = vperm.xlu0 %639, %v638
    %v641 = vpop.permute.xlu0 %640
    %vm642 = vcmp.eq.s32.totalorder %v641, 1
    %v643 = vsel %vm642, %v636, %v526
    %v644 = vsel %vm642, %v630, %v527
    %v645 = vsel %vm642, %v636, 0.0
    %647 = vrot.lane.b32.xlu0 %v645, 32
    %v648 = vpop.permute.xlu0 %647
    %s650 = scalar_lea.vmem [#allocation3], 16
    %651 = vst.msk [vmem:[%s650] sm:$0xff] %vm309, %v648
    %s652 = scalar_lea.vmem [#allocation2], 24
    %v653 = vld [vmem:[%s652] sm:$0xff]
    %655 = vrot.lane.b32.xlu0 %v643, 32
    %v656 = vpop.permute.xlu0 %655
    %v657 = vsel %vm309, %v656, 0
    %659 = vmatprep.subr.mxu0 0.0
    %660 = vmatpush1.msra.mxu0 %v304
    %661 = vmatprep.subr.mxu0 0.0
    %662 = vmatpush1.msra.mxu0 %v305
    %663 = vmatprep.subr.mxu0 0.0
    %664 = vmatpush1.msra.mxu0 %v306
    %665 = vmatprep.subr.mxu0 0.0
    %666 = vmatpush1.msra.mxu0 %v307
    %667 = vmatprep.subr.mxu0 0.0
    %668 = vmatpush1.msra.mxu0 0.0
    %669 = vmatprep.subr.mxu0 0.0
    %670 = vmatpush1.msra.mxu0 0.0
    %671 = vmatprep.subr.mxu0 0.0
    %672 = vmatpush1.msra.mxu0 0.0
    %673 = vmatprep.subr.mxu0 0.0
    %674 = vmatpush1.msra.mxu0 0.0
    %675 = vmatprep.subr.mxu0 0.0
    %676 = vmatpush1.msra.mxu0 0.0
    %677 = vmatprep.subr.mxu0 0.0
    %678 = vmatpush1.msra.mxu0 0.0
    %679 = vmatprep.subr.mxu0 0.0
    %680 = vmatpush1.msra.mxu0 0.0
    %681 = vmatprep.subr.mxu0 0.0
    %682 = vmatpush1.msra.mxu0 0.0
    %683 = vmatprep.subr.mxu0 0.0
    %684 = vmatpush1.msra.mxu0 0.0
    %685 = vmatprep.subr.mxu0 0.0
    %686 = vmatpush1.msra.mxu0 0.0
    %687 = vmatprep.subr.mxu0 0.0
    %688 = vmatpush1.msra.mxu0 0.0
    %689 = vmatprep.subr.mxu0 0.0
    %690 = vmatpush1.msra.mxu0 0.0
    %691 = vmatprep.subr.mxu0 0.0
    %692 = vmatpush1.msra.mxu0 0.0
    %693 = vmatprep.subr.mxu0 0.0
    %694 = vmatpush1.msra.mxu0 0.0
    %695 = vmatprep.subr.mxu0 0.0
    %696 = vmatpush1.msra.mxu0 0.0
    %697 = vmatprep.subr.mxu0 0.0
    %698 = vmatpush1.msra.mxu0 0.0
    %699 = vmatprep.subr.mxu0 0.0
    %700 = vmatpush1.msra.mxu0 0.0
    %701 = vmatprep.subr.mxu0 0.0
    %702 = vmatpush1.msra.mxu0 0.0
    %703 = vmatprep.subr.mxu0 0.0
    %704 = vmatpush1.msra.mxu0 0.0
    %705 = vmatprep.subr.mxu0 0.0
    %706 = vmatpush1.msra.mxu0 0.0
    %707 = vmatprep.subr.mxu0 0.0
    %708 = vmatpush1.msra.mxu0 0.0
    %709 = vmatprep.subr.mxu0 0.0
    %710 = vmatpush1.msra.mxu0 0.0
    %711 = vmatprep.subr.mxu0 0.0
    %712 = vmatpush1.msra.mxu0 0.0
    %713 = vmatprep.subr.mxu0 0.0
    %714 = vmatpush1.msra.mxu0 0.0
    %715 = vmatprep.subr.mxu0 0.0
    %716 = vmatpush1.msra.mxu0 0.0
    %717 = vmatprep.subr.mxu0 0.0
    %718 = vmatpush1.msra.mxu0 0.0
    %719 = vmatprep.subr.mxu0 0.0
    %720 = vmatpush1.msra.mxu0 0.0
    %721 = vmatprep.subr.mxu0 0.0
    %722 = vmatpush1.msra.mxu0 0.0
    %723 = vmatprep.mubr.f32.mxu0 0.0
    %724 = vmatmul.mubr.f32.gmra.mrb[0].mxu0 %v657
    %v725 = vpop.f32.mrb[0].mxu0
    %v726 = vadd.f32 0.0, %v725
    %v727 = vpop.f32.mrb[0].mxu0
    %728 = vdwg.mxu0
    %v729 = vadd.f32 %v653, %v726
    %v730 = vxor.u32 %v729, 2147483648
    %v731 = vmul.f32 %v730, 1.442695
    %v732 = vpow.pop %v731
    %v733 = vadd.f32 %v732, 1.0
    %v734 = vrcp.pop %v733
    %v735 = vmul.f32 1.0, %v734
    %v736 = vtanh.pop %v729
    %v737 = vmul.f32 %v735, %v644
    %739 = vrot.lane.b32.xlu0 %v736, 64
    %v740 = vpop.permute.xlu0 %739
    %v742 = vmul.f32 %v735, %v740
    %744 = vrot.lane.b32.xlu0 %v742, 32
    %v745 = vpop.permute.xlu0 %744
    %v747 = vadd.f32 %v737, %v745
    %v748 = vtanh.pop %v747
    %750 = vrot.lane.b32.xlu0 %v748, 64
    %v751 = vpop.permute.xlu0 %750
    %v753 = vmul.f32 %v735, %v751
    %vm754 = vcmp.gt.s32.totalorder %v148, 3
    %v755 = vsel %vm754, 1, 0
    %756 = vset.pattern.permute.xlu0 0
    %757 = vperm.xlu0 %756, %v755
    %v758 = vpop.permute.xlu0 %757
    %vm759 = vcmp.eq.s32.totalorder %v758, 1
    %v760 = vsel %vm759, %v753, %v643
    %v761 = vsel %vm759, %v747, %v644
    %v762 = vsel %vm759, %v753, 0.0
    %764 = vrot.lane.b32.xlu0 %v762, 32
    %v765 = vpop.permute.xlu0 %764
    %s767 = scalar_lea.vmem [#allocation3], 24
    %768 = vst.msk [vmem:[%s767] sm:$0xff] %vm309, %v765
    %s769 = scalar_lea.vmem [#allocation2], 32
    %v770 = vld [vmem:[%s769] sm:$0xff]
    %772 = vrot.lane.b32.xlu0 %v760, 32
    %v773 = vpop.permute.xlu0 %772
    %v774 = vsel %vm309, %v773, 0
    %776 = vmatprep.subr.mxu0 0.0
    %777 = vmatpush1.msra.mxu0 %v304
    %778 = vmatprep.subr.mxu0 0.0
    %779 = vmatpush1.msra.mxu0 %v305
    %780 = vmatprep.subr.mxu0 0.0
    %781 = vmatpush1.msra.mxu0 %v306
    %782 = vmatprep.subr.mxu0 0.0
    %783 = vmatpush1.msra.mxu0 %v307
    %784 = vmatprep.subr.mxu0 0.0
    %785 = vmatpush1.msra.mxu0 0.0
    %786 = vmatprep.subr.mxu0 0.0
    %787 = vmatpush1.msra.mxu0 0.0
    %788 = vmatprep.subr.mxu0 0.0
    %789 = vmatpush1.msra.mxu0 0.0
    %790 = vmatprep.subr.mxu0 0.0
    %791 = vmatpush1.msra.mxu0 0.0
    %792 = vmatprep.subr.mxu0 0.0
    %793 = vmatpush1.msra.mxu0 0.0
    %794 = vmatprep.subr.mxu0 0.0
    %795 = vmatpush1.msra.mxu0 0.0
    %796 = vmatprep.subr.mxu0 0.0
    %797 = vmatpush1.msra.mxu0 0.0
    %798 = vmatprep.subr.mxu0 0.0
    %799 = vmatpush1.msra.mxu0 0.0
    %800 = vmatprep.subr.mxu0 0.0
    %801 = vmatpush1.msra.mxu0 0.0
    %802 = vmatprep.subr.mxu0 0.0
    %803 = vmatpush1.msra.mxu0 0.0
    %804 = vmatprep.subr.mxu0 0.0
    %805 = vmatpush1.msra.mxu0 0.0
    %806 = vmatprep.subr.mxu0 0.0
    %807 = vmatpush1.msra.mxu0 0.0
    %808 = vmatprep.subr.mxu0 0.0
    %809 = vmatpush1.msra.mxu0 0.0
    %810 = vmatprep.subr.mxu0 0.0
    %811 = vmatpush1.msra.mxu0 0.0
    %812 = vmatprep.subr.mxu0 0.0
    %813 = vmatpush1.msra.mxu0 0.0
    %814 = vmatprep.subr.mxu0 0.0
    %815 = vmatpush1.msra.mxu0 0.0
    %816 = vmatprep.subr.mxu0 0.0
    %817 = vmatpush1.msra.mxu0 0.0
    %818 = vmatprep.subr.mxu0 0.0
    %819 = vmatpush1.msra.mxu0 0.0
    %820 = vmatprep.subr.mxu0 0.0
    %821 = vmatpush1.msra.mxu0 0.0
    %822 = vmatprep.subr.mxu0 0.0
    %823 = vmatpush1.msra.mxu0 0.0
    %824 = vmatprep.subr.mxu0 0.0
    %825 = vmatpush1.msra.mxu0 0.0
    %826 = vmatprep.subr.mxu0 0.0
    %827 = vmatpush1.msra.mxu0 0.0
    %828 = vmatprep.subr.mxu0 0.0
    %829 = vmatpush1.msra.mxu0 0.0
    %830 = vmatprep.subr.mxu0 0.0
    %831 = vmatpush1.msra.mxu0 0.0
    %832 = vmatprep.subr.mxu0 0.0
    %833 = vmatpush1.msra.mxu0 0.0
    %834 = vmatprep.subr.mxu0 0.0
    %835 = vmatpush1.msra.mxu0 0.0
    %836 = vmatprep.subr.mxu0 0.0
    %837 = vmatpush1.msra.mxu0 0.0
    %838 = vmatprep.subr.mxu0 0.0
    %839 = vmatpush1.msra.mxu0 0.0
    %840 = vmatprep.mubr.f32.mxu0 0.0
    %841 = vmatmul.mubr.f32.gmra.mrb[0].mxu0 %v774
    %v842 = vpop.f32.mrb[0].mxu0
    %v843 = vadd.f32 0.0, %v842
    %v844 = vpop.f32.mrb[0].mxu0
    %845 = vdwg.mxu0
    %v846 = vadd.f32 %v770, %v843
    %v847 = vxor.u32 %v846, 2147483648
    %v848 = vmul.f32 %v847, 1.442695
    %v849 = vpow.pop %v848
    %v850 = vadd.f32 %v849, 1.0
    %v851 = vrcp.pop %v850
    %v852 = vmul.f32 1.0, %v851
    %v853 = vtanh.pop %v846
    %v854 = vmul.f32 %v852, %v761
    %856 = vrot.lane.b32.xlu0 %v853, 64
    %v857 = vpop.permute.xlu0 %856
    %v859 = vmul.f32 %v852, %v857
    %861 = vrot.lane.b32.xlu0 %v859, 32
    %v862 = vpop.permute.xlu0 %861
    %v864 = vadd.f32 %v854, %v862
    %v865 = vtanh.pop %v864
    %867 = vrot.lane.b32.xlu0 %v865, 64
    %v868 = vpop.permute.xlu0 %867
    %v870 = vmul.f32 %v852, %v868
    %vm871 = vcmp.gt.s32.totalorder %v148, 4
    %v872 = vsel %vm871, 1, 0
    %873 = vset.pattern.permute.xlu0 0
    %874 = vperm.xlu0 %873, %v872
    %v875 = vpop.permute.xlu0 %874
    %vm876 = vcmp.eq.s32.totalorder %v875, 1
    %v877 = vsel %vm876, %v870, %v760
    %v878 = vsel %vm876, %v864, %v761
    %v879 = vsel %vm876, %v870, 0.0
    %881 = vrot.lane.b32.xlu0 %v879, 32
    %v882 = vpop.permute.xlu0 %881
    %s884 = scalar_lea.vmem [#allocation3], 32
    %885 = vst.msk [vmem:[%s884] sm:$0xff] %vm309, %v882
    %s886 = scalar_lea.vmem [#allocation2], 40
    %v887 = vld [vmem:[%s886] sm:$0xff]
    %889 = vrot.lane.b32.xlu0 %v877, 32
    %v890 = vpop.permute.xlu0 %889
    %v891 = vsel %vm309, %v890, 0
    %893 = vmatprep.subr.mxu0 0.0
    %894 = vmatpush1.msra.mxu0 %v304
    %895 = vmatprep.subr.mxu0 0.0
    %896 = vmatpush1.msra.mxu0 %v305
    %897 = vmatprep.subr.mxu0 0.0
    %898 = vmatpush1.msra.mxu0 %v306
    %899 = vmatprep.subr.mxu0 0.0
    %900 = vmatpush1.msra.mxu0 %v307
    %901 = vmatprep.subr.mxu0 0.0
    %902 = vmatpush1.msra.mxu0 0.0
    %903 = vmatprep.subr.mxu0 0.0
    %904 = vmatpush1.msra.mxu0 0.0
    %905 = vmatprep.subr.mxu0 0.0
    %906 = vmatpush1.msra.mxu0 0.0
    %907 = vmatprep.subr.mxu0 0.0
    %908 = vmatpush1.msra.mxu0 0.0
    %909 = vmatprep.subr.mxu0 0.0
    %910 = vmatpush1.msra.mxu0 0.0
    %911 = vmatprep.subr.mxu0 0.0
    %912 = vmatpush1.msra.mxu0 0.0
    %913 = vmatprep.subr.mxu0 0.0
    %914 = vmatpush1.msra.mxu0 0.0
    %915 = vmatprep.subr.mxu0 0.0
    %916 = vmatpush1.msra.mxu0 0.0
    %917 = vmatprep.subr.mxu0 0.0
    %918 = vmatpush1.msra.mxu0 0.0
    %919 = vmatprep.subr.mxu0 0.0
    %920 = vmatpush1.msra.mxu0 0.0
    %921 = vmatprep.subr.mxu0 0.0
    %922 = vmatpush1.msra.mxu0 0.0
    %923 = vmatprep.subr.mxu0 0.0
    %924 = vmatpush1.msra.mxu0 0.0
    %925 = vmatprep.subr.mxu0 0.0
    %926 = vmatpush1.msra.mxu0 0.0
    %927 = vmatprep.subr.mxu0 0.0
    %928 = vmatpush1.msra.mxu0 0.0
    %929 = vmatprep.subr.mxu0 0.0
    %930 = vmatpush1.msra.mxu0 0.0
    %931 = vmatprep.subr.mxu0 0.0
    %932 = vmatpush1.msra.mxu0 0.0
    %933 = vmatprep.subr.mxu0 0.0
    %934 = vmatpush1.msra.mxu0 0.0
    %935 = vmatprep.subr.mxu0 0.0
    %936 = vmatpush1.msra.mxu0 0.0
    %937 = vmatprep.subr.mxu0 0.0
    %938 = vmatpush1.msra.mxu0 0.0
    %939 = vmatprep.subr.mxu0 0.0
    %940 = vmatpush1.msra.mxu0 0.0
    %941 = vmatprep.subr.mxu0 0.0
    %942 = vmatpush1.msra.mxu0 0.0
    %943 = vmatprep.subr.mxu0 0.0
    %944 = vmatpush1.msra.mxu0 0.0
    %945 = vmatprep.subr.mxu0 0.0
    %946 = vmatpush1.msra.mxu0 0.0
    %947 = vmatprep.subr.mxu0 0.0
    %948 = vmatpush1.msra.mxu0 0.0
    %949 = vmatprep.subr.mxu0 0.0
    %950 = vmatpush1.msra.mxu0 0.0
    %951 = vmatprep.subr.mxu0 0.0
    %952 = vmatpush1.msra.mxu0 0.0
    %953 = vmatprep.subr.mxu0 0.0
    %954 = vmatpush1.msra.mxu0 0.0
    %955 = vmatprep.subr.mxu0 0.0
    %956 = vmatpush1.msra.mxu0 0.0
    %957 = vmatprep.mubr.f32.mxu0 0.0
    %958 = vmatmul.mubr.f32.gmra.mrb[0].mxu0 %v891
    %v959 = vpop.f32.mrb[0].mxu0
    %v960 = vadd.f32 0.0, %v959
    %v961 = vpop.f32.mrb[0].mxu0
    %962 = vdwg.mxu0
    %v963 = vadd.f32 %v887, %v960
    %v964 = vxor.u32 %v963, 2147483648
    %v965 = vmul.f32 %v964, 1.442695
    %v966 = vpow.pop %v965
    %v967 = vadd.f32 %v966, 1.0
    %v968 = vrcp.pop %v967
    %v969 = vmul.f32 1.0, %v968
    %v970 = vtanh.pop %v963
    %v971 = vmul.f32 %v969, %v878
    %973 = vrot.lane.b32.xlu0 %v970, 64
    %v974 = vpop.permute.xlu0 %973
    %v976 = vmul.f32 %v969, %v974
    %978 = vrot.lane.b32.xlu0 %v976, 32
    %v979 = vpop.permute.xlu0 %978
    %v981 = vadd.f32 %v971, %v979
    %v982 = vtanh.pop %v981
    %984 = vrot.lane.b32.xlu0 %v982, 64
    %v985 = vpop.permute.xlu0 %984
    %v987 = vmul.f32 %v969, %v985
    %vm988 = vcmp.gt.s32.totalorder %v148, 5
    %v989 = vsel %vm988, 1, 0
    %990 = vset.pattern.permute.xlu0 0
    %991 = vperm.xlu0 %990, %v989
    %v992 = vpop.permute.xlu0 %991
    %vm993 = vcmp.eq.s32.totalorder %v992, 1
    %v994 = vsel %vm993, %v987, %v877
    %v995 = vsel %vm993, %v981, %v878
    %v996 = vsel %vm993, %v987, 0.0
    %998 = vrot.lane.b32.xlu0 %v996, 32
    %v999 = vpop.permute.xlu0 %998
    %s1001 = scalar_lea.vmem [#allocation3], 40
    %1002 = vst.msk [vmem:[%s1001] sm:$0xff] %vm309, %v999
    %s1003 = scalar_lea.vmem [#allocation2], 48
    %v1004 = vld [vmem:[%s1003] sm:$0xff]
    %1006 = vrot.lane.b32.xlu0 %v994, 32
    %v1007 = vpop.permute.xlu0 %1006
    %v1008 = vsel %vm309, %v1007, 0
    %1010 = vmatprep.subr.mxu0 0.0
    %1011 = vmatpush1.msra.mxu0 %v304
    %1012 = vmatprep.subr.mxu0 0.0
    %1013 = vmatpush1.msra.mxu0 %v305
    %1014 = vmatprep.subr.mxu0 0.0
    %1015 = vmatpush1.msra.mxu0 %v306
    %1016 = vmatprep.subr.mxu0 0.0
    %1017 = vmatpush1.msra.mxu0 %v307
    %1018 = vmatprep.subr.mxu0 0.0
    %1019 = vmatpush1.msra.mxu0 0.0
    %1020 = vmatprep.subr.mxu0 0.0
    %1021 = vmatpush1.msra.mxu0 0.0
    %1022 = vmatprep.subr.mxu0 0.0
    %1023 = vmatpush1.msra.mxu0 0.0
    %1024 = vmatprep.subr.mxu0 0.0
    %1025 = vmatpush1.msra.mxu0 0.0
    %1026 = vmatprep.subr.mxu0 0.0
    %1027 = vmatpush1.msra.mxu0 0.0
    %1028 = vmatprep.subr.mxu0 0.0
    %1029 = vmatpush1.msra.mxu0 0.0
    %1030 = vmatprep.subr.mxu0 0.0
    %1031 = vmatpush1.msra.mxu0 0.0
    %1032 = vmatprep.subr.mxu0 0.0
    %1033 = vmatpush1.msra.mxu0 0.0
    %1034 = vmatprep.subr.mxu0 0.0
    %1035 = vmatpush1.msra.mxu0 0.0
    %1036 = vmatprep.subr.mxu0 0.0
    %1037 = vmatpush1.msra.mxu0 0.0
    %1038 = vmatprep.subr.mxu0 0.0
    %1039 = vmatpush1.msra.mxu0 0.0
    %1040 = vmatprep.subr.mxu0 0.0
    %1041 = vmatpush1.msra.mxu0 0.0
    %1042 = vmatprep.subr.mxu0 0.0
    %1043 = vmatpush1.msra.mxu0 0.0
    %1044 = vmatprep.subr.mxu0 0.0
    %1045 = vmatpush1.msra.mxu0 0.0
    %1046 = vmatprep.subr.mxu0 0.0
    %1047 = vmatpush1.msra.mxu0 0.0
    %1048 = vmatprep.subr.mxu0 0.0
    %1049 = vmatpush1.msra.mxu0 0.0
    %1050 = vmatprep.subr.mxu0 0.0
    %1051 = vmatpush1.msra.mxu0 0.0
    %1052 = vmatprep.subr.mxu0 0.0
    %1053 = vmatpush1.msra.mxu0 0.0
    %1054 = vmatprep.subr.mxu0 0.0
    %1055 = vmatpush1.msra.mxu0 0.0
    %1056 = vmatprep.subr.mxu0 0.0
    %1057 = vmatpush1.msra.mxu0 0.0
    %1058 = vmatprep.subr.mxu0 0.0
    %1059 = vmatpush1.msra.mxu0 0.0
    %1060 = vmatprep.subr.mxu0 0.0
    %1061 = vmatpush1.msra.mxu0 0.0
    %1062 = vmatprep.subr.mxu0 0.0
    %1063 = vmatpush1.msra.mxu0 0.0
    %1064 = vmatprep.subr.mxu0 0.0
    %1065 = vmatpush1.msra.mxu0 0.0
    %1066 = vmatprep.subr.mxu0 0.0
    %1067 = vmatpush1.msra.mxu0 0.0
    %1068 = vmatprep.subr.mxu0 0.0
    %1069 = vmatpush1.msra.mxu0 0.0
    %1070 = vmatprep.subr.mxu0 0.0
    %1071 = vmatpush1.msra.mxu0 0.0
    %1072 = vmatprep.subr.mxu0 0.0
    %1073 = vmatpush1.msra.mxu0 0.0
    %1074 = vmatprep.mubr.f32.mxu0 0.0
    %1075 = vmatmul.mubr.f32.gmra.mrb[0].mxu0 %v1008
    %v1076 = vpop.f32.mrb[0].mxu0
    %v1077 = vadd.f32 0.0, %v1076
    %v1078 = vpop.f32.mrb[0].mxu0
    %1079 = vdwg.mxu0
    %v1080 = vadd.f32 %v1004, %v1077
    %v1081 = vxor.u32 %v1080, 2147483648
    %v1082 = vmul.f32 %v1081, 1.442695
    %v1083 = vpow.pop %v1082
    %v1084 = vadd.f32 %v1083, 1.0
    %v1085 = vrcp.pop %v1084
    %v1086 = vmul.f32 1.0, %v1085
    %v1087 = vtanh.pop %v1080
    %v1088 = vmul.f32 %v1086, %v995
    %1090 = vrot.lane.b32.xlu0 %v1087, 64
    %v1091 = vpop.permute.xlu0 %1090
    %v1093 = vmul.f32 %v1086, %v1091
    %1095 = vrot.lane.b32.xlu0 %v1093, 32
    %v1096 = vpop.permute.xlu0 %1095
    %v1098 = vadd.f32 %v1088, %v1096
    %v1099 = vtanh.pop %v1098
    %1101 = vrot.lane.b32.xlu0 %v1099, 64
    %v1102 = vpop.permute.xlu0 %1101
    %v1104 = vmul.f32 %v1086, %v1102
    %vm1105 = vcmp.gt.s32.totalorder %v148, 6
    %v1106 = vsel %vm1105, 1, 0
    %1107 = vset.pattern.permute.xlu0 0
    %1108 = vperm.xlu0 %1107, %v1106
    %v1109 = vpop.permute.xlu0 %1108
    %vm1110 = vcmp.eq.s32.totalorder %v1109, 1
    %v1111 = vsel %vm1110, %v1104, %v994
    %v1112 = vsel %vm1110, %v1098, %v995
    %v1113 = vsel %vm1110, %v1104, 0.0
    %1115 = vrot.lane.b32.xlu0 %v1113, 32
    %v1116 = vpop.permute.xlu0 %1115
    %s1118 = scalar_lea.vmem [#allocation3], 48
    %1119 = vst.msk [vmem:[%s1118] sm:$0xff] %vm309, %v1116
    %s1120 = scalar_lea.vmem [#allocation2], 56
    %v1121 = vld [vmem:[%s1120] sm:$0xff]
    %1123 = vrot.lane.b32.xlu0 %v1111, 32
    %v1124 = vpop.permute.xlu0 %1123
    %v1125 = vsel %vm309, %v1124, 0
    %1127 = vmatprep.subr.mxu0 0.0
    %1128 = vmatpush1.msra.mxu0 %v304
    %1129 = vmatprep.subr.mxu0 0.0
    %1130 = vmatpush1.msra.mxu0 %v305
    %1131 = vmatprep.subr.mxu0 0.0
    %1132 = vmatpush1.msra.mxu0 %v306
    %1133 = vmatprep.subr.mxu0 0.0
    %1134 = vmatpush1.msra.mxu0 %v307
    %1135 = vmatprep.subr.mxu0 0.0
    %1136 = vmatpush1.msra.mxu0 0.0
    %1137 = vmatprep.subr.mxu0 0.0
    %1138 = vmatpush1.msra.mxu0 0.0
    %1139 = vmatprep.subr.mxu0 0.0
    %1140 = vmatpush1.msra.mxu0 0.0
    %1141 = vmatprep.subr.mxu0 0.0
    %1142 = vmatpush1.msra.mxu0 0.0
    %1143 = vmatprep.subr.mxu0 0.0
    %1144 = vmatpush1.msra.mxu0 0.0
    %1145 = vmatprep.subr.mxu0 0.0
    %1146 = vmatpush1.msra.mxu0 0.0
    %1147 = vmatprep.subr.mxu0 0.0
    %1148 = vmatpush1.msra.mxu0 0.0
    %1149 = vmatprep.subr.mxu0 0.0
    %1150 = vmatpush1.msra.mxu0 0.0
    %1151 = vmatprep.subr.mxu0 0.0
    %1152 = vmatpush1.msra.mxu0 0.0
    %1153 = vmatprep.subr.mxu0 0.0
    %1154 = vmatpush1.msra.mxu0 0.0
    %1155 = vmatprep.subr.mxu0 0.0
    %1156 = vmatpush1.msra.mxu0 0.0
    %1157 = vmatprep.subr.mxu0 0.0
    %1158 = vmatpush1.msra.mxu0 0.0
    %1159 = vmatprep.subr.mxu0 0.0
    %1160 = vmatpush1.msra.mxu0 0.0
    %1161 = vmatprep.subr.mxu0 0.0
    %1162 = vmatpush1.msra.mxu0 0.0
    %1163 = vmatprep.subr.mxu0 0.0
    %1164 = vmatpush1.msra.mxu0 0.0
    %1165 = vmatprep.subr.mxu0 0.0
    %1166 = vmatpush1.msra.mxu0 0.0
    %1167 = vmatprep.subr.mxu0 0.0
    %1168 = vmatpush1.msra.mxu0 0.0
    %1169 = vmatprep.subr.mxu0 0.0
    %1170 = vmatpush1.msra.mxu0 0.0
    %1171 = vmatprep.subr.mxu0 0.0
    %1172 = vmatpush1.msra.mxu0 0.0
    %1173 = vmatprep.subr.mxu0 0.0
    %1174 = vmatpush1.msra.mxu0 0.0
    %1175 = vmatprep.subr.mxu0 0.0
    %1176 = vmatpush1.msra.mxu0 0.0
    %1177 = vmatprep.subr.mxu0 0.0
    %1178 = vmatpush1.msra.mxu0 0.0
    %1179 = vmatprep.subr.mxu0 0.0
    %1180 = vmatpush1.msra.mxu0 0.0
    %1181 = vmatprep.subr.mxu0 0.0
    %1182 = vmatpush1.msra.mxu0 0.0
    %1183 = vmatprep.subr.mxu0 0.0
    %1184 = vmatpush1.msra.mxu0 0.0
    %1185 = vmatprep.subr.mxu0 0.0
    %1186 = vmatpush1.msra.mxu0 0.0
    %1187 = vmatprep.subr.mxu0 0.0
    %1188 = vmatpush1.msra.mxu0 0.0
    %1189 = vmatprep.subr.mxu0 0.0
    %1190 = vmatpush1.msra.mxu0 0.0
    %1191 = vmatprep.mubr.f32.mxu0 0.0
    %1192 = vmatmul.mubr.f32.gmra.mrb[0].mxu0 %v1125
    %v1193 = vpop.f32.mrb[0].mxu0
    %v1194 = vadd.f32 0.0, %v1193
    %v1195 = vpop.f32.mrb[0].mxu0
    %1196 = vdwg.mxu0
    %v1197 = vadd.f32 %v1121, %v1194
    %v1198 = vxor.u32 %v1197, 2147483648
    %v1199 = vmul.f32 %v1198, 1.442695
    %v1200 = vpow.pop %v1199
    %v1201 = vadd.f32 %v1200, 1.0
    %v1202 = vrcp.pop %v1201
    %v1203 = vmul.f32 1.0, %v1202
    %v1204 = vtanh.pop %v1197
    %v1205 = vmul.f32 %v1203, %v1112
    %1207 = vrot.lane.b32.xlu0 %v1204, 64
    %v1208 = vpop.permute.xlu0 %1207
    %v1210 = vmul.f32 %v1203, %v1208
    %1212 = vrot.lane.b32.xlu0 %v1210, 32
    %v1213 = vpop.permute.xlu0 %1212
    %v1215 = vadd.f32 %v1205, %v1213
    %v1216 = vtanh.pop %v1215
    %1218 = vrot.lane.b32.xlu0 %v1216, 64
    %v1219 = vpop.permute.xlu0 %1218
    %v1221 = vmul.f32 %v1203, %v1219
    %vm1222 = vcmp.gt.s32.totalorder %v148, 7
    %v1223 = vsel %vm1222, 1, 0
    %1224 = vset.pattern.permute.xlu0 0
    %1225 = vperm.xlu0 %1224, %v1223
    %v1226 = vpop.permute.xlu0 %1225
    %vm1227 = vcmp.eq.s32.totalorder %v1226, 1
    %v1228 = vsel %vm1227, %v1221, 0.0
    %1230 = vrot.lane.b32.xlu0 %v1228, 32
    %v1231 = vpop.permute.xlu0 %1230
    %s1233 = scalar_lea.vmem [#allocation3], 56
    %1234 = vst.msk [vmem:[%s1233] sm:$0xff] %vm309, %v1231
    %v1235 = vld [vmem:[#allocation11] sm:$0xff]
    %v1236 = vld [vmem:[#allocation11 + $0x8] sm:$0xff]
    %v1237 = vld [vmem:[%s7] sm:$0x1]
    %v1239 = vlaneseq
    %v1240 = vshrl.u32 %v1239, 7
    %v1241 = vsub.s32 0, %v1240
    %v1242 = vrot.slane %v1237, %v1241
    %1244 = vmatprep.subr.mxu0 0.0
    %1245 = vmatpush1.msra.mxu0 %v1235
    %1246 = vmatprep.subr.mxu0 0.0
    %1247 = vmatpush1.msra.mxu0 %v1236
    %1248 = vmatprep.subr.mxu0 0.0
    %1249 = vmatpush1.msra.mxu0 0.0
    %1250 = vmatprep.subr.mxu0 0.0
    %1251 = vmatpush1.msra.mxu0 0.0
    %1252 = vmatprep.subr.mxu0 0.0
    %1253 = vmatpush1.msra.mxu0 0.0
    %1254 = vmatprep.subr.mxu0 0.0
    %1255 = vmatpush1.msra.mxu0 0.0
    %1256 = vmatprep.subr.mxu0 0.0
    %1257 = vmatpush1.msra.mxu0 0.0
    %1258 = vmatprep.subr.mxu0 0.0
    %1259 = vmatpush1.msra.mxu0 0.0
    %1260 = vmatprep.subr.mxu0 0.0
    %1261 = vmatpush1.msra.mxu0 0.0
    %1262 = vmatprep.subr.mxu0 0.0
    %1263 = vmatpush1.msra.mxu0 0.0
    %1264 = vmatprep.subr.mxu0 0.0
    %1265 = vmatpush1.msra.mxu0 0.0
    %1266 = vmatprep.subr.mxu0 0.0
    %1267 = vmatpush1.msra.mxu0 0.0
    %1268 = vmatprep.subr.mxu0 0.0
    %1269 = vmatpush1.msra.mxu0 0.0
    %1270 = vmatprep.subr.mxu0 0.0
    %1271 = vmatpush1.msra.mxu0 0.0
    %1272 = vmatprep.subr.mxu0 0.0
    %1273 = vmatpush1.msra.mxu0 0.0
    %1274 = vmatprep.subr.mxu0 0.0
    %1275 = vmatpush1.msra.mxu0 0.0
    %1276 = vmatprep.subr.mxu0 0.0
    %1277 = vmatpush1.msra.mxu0 0.0
    %1278 = vmatprep.subr.mxu0 0.0
    %1279 = vmatpush1.msra.mxu0 0.0
    %1280 = vmatprep.subr.mxu0 0.0
    %1281 = vmatpush1.msra.mxu0 0.0
    %1282 = vmatprep.subr.mxu0 0.0
    %1283 = vmatpush1.msra.mxu0 0.0
    %1284 = vmatprep.subr.mxu0 0.0
    %1285 = vmatpush1.msra.mxu0 0.0
    %1286 = vmatprep.subr.mxu0 0.0
    %1287 = vmatpush1.msra.mxu0 0.0
    %1288 = vmatprep.subr.mxu0 0.0
    %1289 = vmatpush1.msra.mxu0 0.0
    %1290 = vmatprep.subr.mxu0 0.0
    %1291 = vmatpush1.msra.mxu0 0.0
    %1292 = vmatprep.subr.mxu0 0.0
    %1293 = vmatpush1.msra.mxu0 0.0
    %1294 = vmatprep.subr.mxu0 0.0
    %1295 = vmatpush1.msra.mxu0 0.0
    %1296 = vmatprep.subr.mxu0 0.0
    %1297 = vmatpush1.msra.mxu0 0.0
    %1298 = vmatprep.subr.mxu0 0.0
    %1299 = vmatpush1.msra.mxu0 0.0
    %1300 = vmatprep.subr.mxu0 0.0
    %1301 = vmatpush1.msra.mxu0 0.0
    %1302 = vmatprep.subr.mxu0 0.0
    %1303 = vmatpush1.msra.mxu0 0.0
    %1304 = vmatprep.subr.mxu0 0.0
    %1305 = vmatpush1.msra.mxu0 0.0
    %1306 = vmatprep.subr.mxu0 0.0
    %1307 = vmatpush1.msra.mxu0 0.0
    %1308 = vmatprep.mubr.f32.mxu0 0.0
    %1309 = vmatmul.mubr.f32.gmra.mrb[0].mxu0 %v168
    %v1310 = vpop.f32.mrb[0].mxu0
    %v1311 = vadd.f32 %v1242, %v1310
    %v1312 = vpop.f32.mrb[0].mxu0
    %1313 = vmatprep.mubr.f32.mxu0 0.0
    %1314 = vmatmul.mubr.f32.gmra.mrb[0].mxu0 %v171
    %v1315 = vpop.f32.mrb[0].mxu0
    %v1316 = vadd.f32 %v1242, %v1315
    %v1317 = vpop.f32.mrb[0].mxu0
    %1318 = vmatprep.mubr.f32.mxu0 0.0
    %1319 = vmatmul.mubr.f32.gmra.mrb[0].mxu0 %v174
    %v1320 = vpop.f32.mrb[0].mxu0
    %v1321 = vadd.f32 %v1242, %v1320
    %v1322 = vpop.f32.mrb[0].mxu0
    %1323 = vmatprep.mubr.f32.mxu0 0.0
    %1324 = vmatmul.mubr.f32.gmra.mrb[0].mxu0 %v177
    %v1325 = vpop.f32.mrb[0].mxu0
    %v1326 = vadd.f32 %v1242, %v1325
    %v1327 = vpop.f32.mrb[0].mxu0
    %1328 = vmatprep.mubr.f32.mxu0 0.0
    %1329 = vmatmul.mubr.f32.gmra.mrb[0].mxu0 %v180
    %v1330 = vpop.f32.mrb[0].mxu0
    %v1331 = vadd.f32 %v1242, %v1330
    %v1332 = vpop.f32.mrb[0].mxu0
    %1333 = vmatprep.mubr.f32.mxu0 0.0
    %1334 = vmatmul.mubr.f32.gmra.mrb[0].mxu0 %v183
    %v1335 = vpop.f32.mrb[0].mxu0
    %v1336 = vadd.f32 %v1242, %v1335
    %v1337 = vpop.f32.mrb[0].mxu0
    %1338 = vmatprep.mubr.f32.mxu0 0.0
    %1339 = vmatmul.mubr.f32.gmra.mrb[0].mxu0 %v186
    %v1340 = vpop.f32.mrb[0].mxu0
    %v1341 = vadd.f32 %v1242, %v1340
    %v1342 = vpop.f32.mrb[0].mxu0
    %1343 = vmatprep.mubr.f32.mxu0 0.0
    %1344 = vmatmul.mubr.f32.gmra.mrb[0].mxu0 %v189
    %v1345 = vpop.f32.mrb[0].mxu0
    %v1346 = vadd.f32 %v1242, %v1345
    %v1347 = vpop.f32.mrb[0].mxu0
    %1348 = vdwg.mxu0
    %1349 = vst [vmem:[#allocation2] sm:$0xff] %v1311
    %1350 = vst [vmem:[#allocation2 + $0x8] sm:$0xff] %v1316
    %1351 = vst [vmem:[#allocation2 + $0x10] sm:$0xff] %v1321
    %1352 = vst [vmem:[#allocation2 + $0x18] sm:$0xff] %v1326
    %1353 = vst [vmem:[#allocation2 + $0x20] sm:$0xff] %v1331
    %1354 = vst [vmem:[#allocation2 + $0x28] sm:$0xff] %v1336
    %1355 = vst [vmem:[#allocation2 + $0x30] sm:$0xff] %v1341
    %1356 = vst [vmem:[#allocation2 + $0x38] sm:$0xff] %v1346
    %v1357 = vld [vmem:[%s6] sm:$0xff]
    %v1358 = vld [vmem:[%s6 + $0x8] sm:$0xff]
    %v1359 = vld [vmem:[%s6 + $0x10] sm:$0xff]
    %v1360 = vld [vmem:[%s6 + $0x18] sm:$0xff]
    %v1361 = vld [vmem:[%s1120] sm:$0xff]
    %1362 = vmatprep.subr.mxu0 0.0
    %1363 = vmatpush1.msra.mxu0 %v1357
    %1364 = vmatprep.subr.mxu0 0.0
    %1365 = vmatpush1.msra.mxu0 %v1358
    %1366 = vmatprep.subr.mxu0 0.0
    %1367 = vmatpush1.msra.mxu0 %v1359
    %1368 = vmatprep.subr.mxu0 0.0
    %1369 = vmatpush1.msra.mxu0 %v1360
    %1370 = vmatprep.subr.mxu0 0.0
    %1371 = vmatpush1.msra.mxu0 0.0
    %1372 = vmatprep.subr.mxu0 0.0
    %1373 = vmatpush1.msra.mxu0 0.0
    %1374 = vmatprep.subr.mxu0 0.0
    %1375 = vmatpush1.msra.mxu0 0.0
    %1376 = vmatprep.subr.mxu0 0.0
    %1377 = vmatpush1.msra.mxu0 0.0
    %1378 = vmatprep.subr.mxu0 0.0
    %1379 = vmatpush1.msra.mxu0 0.0
    %1380 = vmatprep.subr.mxu0 0.0
    %1381 = vmatpush1.msra.mxu0 0.0
    %1382 = vmatprep.subr.mxu0 0.0
    %1383 = vmatpush1.msra.mxu0 0.0
    %1384 = vmatprep.subr.mxu0 0.0
    %1385 = vmatpush1.msra.mxu0 0.0
    %1386 = vmatprep.subr.mxu0 0.0
    %1387 = vmatpush1.msra.mxu0 0.0
    %1388 = vmatprep.subr.mxu0 0.0
    %1389 = vmatpush1.msra.mxu0 0.0
    %1390 = vmatprep.subr.mxu0 0.0
    %1391 = vmatpush1.msra.mxu0 0.0
    %1392 = vmatprep.subr.mxu0 0.0
    %1393 = vmatpush1.msra.mxu0 0.0
    %1394 = vmatprep.subr.mxu0 0.0
    %1395 = vmatpush1.msra.mxu0 0.0
    %1396 = vmatprep.subr.mxu0 0.0
    %1397 = vmatpush1.msra.mxu0 0.0
    %1398 = vmatprep.subr.mxu0 0.0
    %1399 = vmatpush1.msra.mxu0 0.0
    %1400 = vmatprep.subr.mxu0 0.0
    %1401 = vmatpush1.msra.mxu0 0.0
    %1402 = vmatprep.subr.mxu0 0.0
    %1403 = vmatpush1.msra.mxu0 0.0
    %1404 = vmatprep.subr.mxu0 0.0
    %1405 = vmatpush1.msra.mxu0 0.0
    %1406 = vmatprep.subr.mxu0 0.0
    %1407 = vmatpush1.msra.mxu0 0.0
    %1408 = vmatprep.subr.mxu0 0.0
    %1409 = vmatpush1.msra.mxu0 0.0
    %1410 = vmatprep.subr.mxu0 0.0
    %1411 = vmatpush1.msra.mxu0 0.0
    %1412 = vmatprep.subr.mxu0 0.0
    %1413 = vmatpush1.msra.mxu0 0.0
    %1414 = vmatprep.subr.mxu0 0.0
    %1415 = vmatpush1.msra.mxu0 0.0
    %1416 = vmatprep.subr.mxu0 0.0
    %1417 = vmatpush1.msra.mxu0 0.0
    %1418 = vmatprep.subr.mxu0 0.0
    %1419 = vmatpush1.msra.mxu0 0.0
    %1420 = vmatprep.subr.mxu0 0.0
    %1421 = vmatpush1.msra.mxu0 0.0
    %1422 = vmatprep.subr.mxu0 0.0
    %1423 = vmatpush1.msra.mxu0 0.0
    %1424 = vmatprep.subr.mxu0 0.0
    %1425 = vmatpush1.msra.mxu0 0.0
    %1426 = vmatprep.mubr.f32.mxu0 0.0
    %1427 = vmatmul.mubr.f32.gmra.mrb[0].mxu0 %v311
    %v1428 = vpop.f32.mrb[0].mxu0
    %v1429 = vadd.f32 0.0, %v1428
    %v1430 = vpop.f32.mrb[0].mxu0
    %1431 = vdwg.mxu0
    %v1432 = vadd.f32 %v1361, %v1429
    %v1433 = vxor.u32 %v1432, 2147483648
    %v1434 = vmul.f32 %v1433, 1.442695
    %v1435 = vpow.pop %v1434
    %v1436 = vadd.f32 %v1435, 1.0
    %v1437 = vrcp.pop %v1436
    %v1438 = vmul.f32 1.0, %v1437
    %v1439 = vtanh.pop %v1432
    %v1440 = vmul.f32 %v1438, 0.0
    %1442 = vrot.lane.b32.xlu0 %v1439, 64
    %v1443 = vpop.permute.xlu0 %1442
    %v1445 = vmul.f32 %v1438, %v1443
    %1447 = vrot.lane.b32.xlu0 %v1445, 32
    %v1448 = vpop.permute.xlu0 %1447
    %v1450 = vadd.f32 %v1440, %v1448
    %v1451 = vtanh.pop %v1450
    %1453 = vrot.lane.b32.xlu0 %v1451, 64
    %v1454 = vpop.permute.xlu0 %1453
    %v1456 = vmul.f32 %v1438, %v1454
    %v1457 = vsel %vm1227, %v1456, 0.0
    %v1458 = vsel %vm1227, %v1450, 0.0
    %1460 = vrot.lane.b32.xlu0 %v1457, 32
    %v1461 = vpop.permute.xlu0 %1460
    %s1463 = scalar_lea.vmem [#allocation4], 56
    %1464 = vst.msk [vmem:[%s1463] sm:$0xff] %vm309, %v1461
    %v1465 = vld [vmem:[%s1003] sm:$0xff]
    %v1466 = vsel %vm309, %v1461, 0
    %1468 = vmatprep.subr.mxu0 0.0
    %1469 = vmatpush1.msra.mxu0 %v1357
    %1470 = vmatprep.subr.mxu0 0.0
    %1471 = vmatpush1.msra.mxu0 %v1358
    %1472 = vmatprep.subr.mxu0 0.0
    %1473 = vmatpush1.msra.mxu0 %v1359
    %1474 = vmatprep.subr.mxu0 0.0
    %1475 = vmatpush1.msra.mxu0 %v1360
    %1476 = vmatprep.subr.mxu0 0.0
    %1477 = vmatpush1.msra.mxu0 0.0
    %1478 = vmatprep.subr.mxu0 0.0
    %1479 = vmatpush1.msra.mxu0 0.0
    %1480 = vmatprep.subr.mxu0 0.0
    %1481 = vmatpush1.msra.mxu0 0.0
    %1482 = vmatprep.subr.mxu0 0.0
    %1483 = vmatpush1.msra.mxu0 0.0
    %1484 = vmatprep.subr.mxu0 0.0
    %1485 = vmatpush1.msra.mxu0 0.0
    %1486 = vmatprep.subr.mxu0 0.0
    %1487 = vmatpush1.msra.mxu0 0.0
    %1488 = vmatprep.subr.mxu0 0.0
    %1489 = vmatpush1.msra.mxu0 0.0
    %1490 = vmatprep.subr.mxu0 0.0
    %1491 = vmatpush1.msra.mxu0 0.0
    %1492 = vmatprep.subr.mxu0 0.0
    %1493 = vmatpush1.msra.mxu0 0.0
    %1494 = vmatprep.subr.mxu0 0.0
    %1495 = vmatpush1.msra.mxu0 0.0
    %1496 = vmatprep.subr.mxu0 0.0
    %1497 = vmatpush1.msra.mxu0 0.0
    %1498 = vmatprep.subr.mxu0 0.0
    %1499 = vmatpush1.msra.mxu0 0.0
    %1500 = vmatprep.subr.mxu0 0.0
    %1501 = vmatpush1.msra.mxu0 0.0
    %1502 = vmatprep.subr.mxu0 0.0
    %1503 = vmatpush1.msra.mxu0 0.0
    %1504 = vmatprep.subr.mxu0 0.0
    %1505 = vmatpush1.msra.mxu0 0.0
    %1506 = vmatprep.subr.mxu0 0.0
    %1507 = vmatpush1.msra.mxu0 0.0
    %1508 = vmatprep.subr.mxu0 0.0
    %1509 = vmatpush1.msra.mxu0 0.0
    %1510 = vmatprep.subr.mxu0 0.0
    %1511 = vmatpush1.msra.mxu0 0.0
    %1512 = vmatprep.subr.mxu0 0.0
    %1513 = vmatpush1.msra.mxu0 0.0
    %1514 = vmatprep.subr.mxu0 0.0
    %1515 = vmatpush1.msra.mxu0 0.0
    %1516 = vmatprep.subr.mxu0 0.0
    %1517 = vmatpush1.msra.mxu0 0.0
    %1518 = vmatprep.subr.mxu0 0.0
    %1519 = vmatpush1.msra.mxu0 0.0
    %1520 = vmatprep.subr.mxu0 0.0
    %1521 = vmatpush1.msra.mxu0 0.0
    %1522 = vmatprep.subr.mxu0 0.0
    %1523 = vmatpush1.msra.mxu0 0.0
    %1524 = vmatprep.subr.mxu0 0.0
    %1525 = vmatpush1.msra.mxu0 0.0
    %1526 = vmatprep.subr.mxu0 0.0
    %1527 = vmatpush1.msra.mxu0 0.0
    %1528 = vmatprep.subr.mxu0 0.0
    %1529 = vmatpush1.msra.mxu0 0.0
    %1530 = vmatprep.subr.mxu0 0.0
    %1531 = vmatpush1.msra.mxu0 0.0
    %1532 = vmatprep.mubr.f32.mxu0 0.0
    %1533 = vmatmul.mubr.f32.gmra.mrb[0].mxu0 %v1466
    %v1534 = vpop.f32.mrb[0].mxu0
    %v1535 = vadd.f32 0.0, %v1534
    %v1536 = vpop.f32.mrb[0].mxu0
    %1537 = vdwg.mxu0
    %v1538 = vadd.f32 %v1465, %v1535
    %v1539 = vxor.u32 %v1538, 2147483648
    %v1540 = vmul.f32 %v1539, 1.442695
    %v1541 = vpow.pop %v1540
    %v1542 = vadd.f32 %v1541, 1.0
    %v1543 = vrcp.pop %v1542
    %v1544 = vmul.f32 1.0, %v1543
    %v1545 = vtanh.pop %v1538
    %v1546 = vmul.f32 %v1544, %v1458
    %1548 = vrot.lane.b32.xlu0 %v1545, 64
    %v1549 = vpop.permute.xlu0 %1548
    %v1551 = vmul.f32 %v1544, %v1549
    %1553 = vrot.lane.b32.xlu0 %v1551, 32
    %v1554 = vpop.permute.xlu0 %1553
    %v1556 = vadd.f32 %v1546, %v1554
    %v1557 = vtanh.pop %v1556
    %1559 = vrot.lane.b32.xlu0 %v1557, 64
    %v1560 = vpop.permute.xlu0 %1559
    %v1562 = vmul.f32 %v1544, %v1560
    %v1563 = vsel %vm1110, %v1562, %v1457
    %v1564 = vsel %vm1110, %v1556, %v1458
    %v1565 = vsel %vm1110, %v1562, 0.0
    %1567 = vrot.lane.b32.xlu0 %v1565, 32
    %v1568 = vpop.permute.xlu0 %1567
    %s1570 = scalar_lea.vmem [#allocation4], 48
    %1571 = vst.msk [vmem:[%s1570] sm:$0xff] %vm309, %v1568
    %v1572 = vld [vmem:[%s886] sm:$0xff]
    %1574 = vrot.lane.b32.xlu0 %v1563, 32
    %v1575 = vpop.permute.xlu0 %1574
    %v1576 = vsel %vm309, %v1575, 0
    %1578 = vmatprep.subr.mxu0 0.0
    %1579 = vmatpush1.msra.mxu0 %v1357
    %1580 = vmatprep.subr.mxu0 0.0
    %1581 = vmatpush1.msra.mxu0 %v1358
    %1582 = vmatprep.subr.mxu0 0.0
    %1583 = vmatpush1.msra.mxu0 %v1359
    %1584 = vmatprep.subr.mxu0 0.0
    %1585 = vmatpush1.msra.mxu0 %v1360
    %1586 = vmatprep.subr.mxu0 0.0
    %1587 = vmatpush1.msra.mxu0 0.0
    %1588 = vmatprep.subr.mxu0 0.0
    %1589 = vmatpush1.msra.mxu0 0.0
    %1590 = vmatprep.subr.mxu0 0.0
    %1591 = vmatpush1.msra.mxu0 0.0
    %1592 = vmatprep.subr.mxu0 0.0
    %1593 = vmatpush1.msra.mxu0 0.0
    %1594 = vmatprep.subr.mxu0 0.0
    %1595 = vmatpush1.msra.mxu0 0.0
    %1596 = vmatprep.subr.mxu0 0.0
    %1597 = vmatpush1.msra.mxu0 0.0
    %1598 = vmatprep.subr.mxu0 0.0
    %1599 = vmatpush1.msra.mxu0 0.0
    %1600 = vmatprep.subr.mxu0 0.0
    %1601 = vmatpush1.msra.mxu0 0.0
    %1602 = vmatprep.subr.mxu0 0.0
    %1603 = vmatpush1.msra.mxu0 0.0
    %1604 = vmatprep.subr.mxu0 0.0
    %1605 = vmatpush1.msra.mxu0 0.0
    %1606 = vmatprep.subr.mxu0 0.0
    %1607 = vmatpush1.msra.mxu0 0.0
    %1608 = vmatprep.subr.mxu0 0.0
    %1609 = vmatpush1.msra.mxu0 0.0
    %1610 = vmatprep.subr.mxu0 0.0
    %1611 = vmatpush1.msra.mxu0 0.0
    %1612 = vmatprep.subr.mxu0 0.0
    %1613 = vmatpush1.msra.mxu0 0.0
    %1614 = vmatprep.subr.mxu0 0.0
    %1615 = vmatpush1.msra.mxu0 0.0
    %1616 = vmatprep.subr.mxu0 0.0
    %1617 = vmatpush1.msra.mxu0 0.0
    %1618 = vmatprep.subr.mxu0 0.0
    %1619 = vmatpush1.msra.mxu0 0.0
    %1620 = vmatprep.subr.mxu0 0.0
    %1621 = vmatpush1.msra.mxu0 0.0
    %1622 = vmatprep.subr.mxu0 0.0
    %1623 = vmatpush1.msra.mxu0 0.0
    %1624 = vmatprep.subr.mxu0 0.0
    %1625 = vmatpush1.msra.mxu0 0.0
    %1626 = vmatprep.subr.mxu0 0.0
    %1627 = vmatpush1.msra.mxu0 0.0
    %1628 = vmatprep.subr.mxu0 0.0
    %1629 = vmatpush1.msra.mxu0 0.0
    %1630 = vmatprep.subr.mxu0 0.0
    %1631 = vmatpush1.msra.mxu0 0.0
    %1632 = vmatprep.subr.mxu0 0.0
    %1633 = vmatpush1.msra.mxu0 0.0
    %1634 = vmatprep.subr.mxu0 0.0
    %1635 = vmatpush1.msra.mxu0 0.0
    %1636 = vmatprep.subr.mxu0 0.0
    %1637 = vmatpush1.msra.mxu0 0.0
    %1638 = vmatprep.subr.mxu0 0.0
    %1639 = vmatpush1.msra.mxu0 0.0
    %1640 = vmatprep.subr.mxu0 0.0
    %1641 = vmatpush1.msra.mxu0 0.0
    %1642 = vmatprep.mubr.f32.mxu0 0.0
    %1643 = vmatmul.mubr.f32.gmra.mrb[0].mxu0 %v1576
    %v1644 = vpop.f32.mrb[0].mxu0
    %v1645 = vadd.f32 0.0, %v1644
    %v1646 = vpop.f32.mrb[0].mxu0
    %1647 = vdwg.mxu0
    %v1648 = vadd.f32 %v1572, %v1645
    %v1649 = vxor.u32 %v1648, 2147483648
    %v1650 = vmul.f32 %v1649, 1.442695
    %v1651 = vpow.pop %v1650
    %v1652 = vadd.f32 %v1651, 1.0
    %v1653 = vrcp.pop %v1652
    %v1654 = vmul.f32 1.0, %v1653
    %v1655 = vtanh.pop %v1648
    %v1656 = vmul.f32 %v1654, %v1564
    %1658 = vrot.lane.b32.xlu0 %v1655, 64
    %v1659 = vpop.permute.xlu0 %1658
    %v1661 = vmul.f32 %v1654, %v1659
    %1663 = vrot.lane.b32.xlu0 %v1661, 32
    %v1664 = vpop.permute.xlu0 %1663
    %v1666 = vadd.f32 %v1656, %v1664
    %v1667 = vtanh.pop %v1666
    %1669 = vrot.lane.b32.xlu0 %v1667, 64
    %v1670 = vpop.permute.xlu0 %1669
    %v1672 = vmul.f32 %v1654, %v1670
    %v1673 = vsel %vm993, %v1672, %v1563
    %v1674 = vsel %vm993, %v1666, %v1564
    %v1675 = vsel %vm993, %v1672, 0.0
    %1677 = vrot.lane.b32.xlu0 %v1675, 32
    %v1678 = vpop.permute.xlu0 %1677
    %s1680 = scalar_lea.vmem [#allocation4], 40
    %1681 = vst.msk [vmem:[%s1680] sm:$0xff] %vm309, %v1678
    %v1682 = vld [vmem:[%s769] sm:$0xff]
    %1684 = vrot.lane.b32.xlu0 %v1673, 32
    %v1685 = vpop.permute.xlu0 %1684
    %v1686 = vsel %vm309, %v1685, 0
    %1688 = vmatprep.subr.mxu0 0.0
    %1689 = vmatpush1.msra.mxu0 %v1357
    %1690 = vmatprep.subr.mxu0 0.0
    %1691 = vmatpush1.msra.mxu0 %v1358
    %1692 = vmatprep.subr.mxu0 0.0
    %1693 = vmatpush1.msra.mxu0 %v1359
    %1694 = vmatprep.subr.mxu0 0.0
    %1695 = vmatpush1.msra.mxu0 %v1360
    %1696 = vmatprep.subr.mxu0 0.0
    %1697 = vmatpush1.msra.mxu0 0.0
    %1698 = vmatprep.subr.mxu0 0.0
    %1699 = vmatpush1.msra.mxu0 0.0
    %1700 = vmatprep.subr.mxu0 0.0
    %1701 = vmatpush1.msra.mxu0 0.0
    %1702 = vmatprep.subr.mxu0 0.0
    %1703 = vmatpush1.msra.mxu0 0.0
    %1704 = vmatprep.subr.mxu0 0.0
    %1705 = vmatpush1.msra.mxu0 0.0
    %1706 = vmatprep.subr.mxu0 0.0
    %1707 = vmatpush1.msra.mxu0 0.0
    %1708 = vmatprep.subr.mxu0 0.0
    %1709 = vmatpush1.msra.mxu0 0.0
    %1710 = vmatprep.subr.mxu0 0.0
    %1711 = vmatpush1.msra.mxu0 0.0
    %1712 = vmatprep.subr.mxu0 0.0
    %1713 = vmatpush1.msra.mxu0 0.0
    %1714 = vmatprep.subr.mxu0 0.0
    %1715 = vmatpush1.msra.mxu0 0.0
    %1716 = vmatprep.subr.mxu0 0.0
    %1717 = vmatpush1.msra.mxu0 0.0
    %1718 = vmatprep.subr.mxu0 0.0
    %1719 = vmatpush1.msra.mxu0 0.0
    %1720 = vmatprep.subr.mxu0 0.0
    %1721 = vmatpush1.msra.mxu0 0.0
    %1722 = vmatprep.subr.mxu0 0.0
    %1723 = vmatpush1.msra.mxu0 0.0
    %1724 = vmatprep.subr.mxu0 0.0
    %1725 = vmatpush1.msra.mxu0 0.0
    %1726 = vmatprep.subr.mxu0 0.0
    %1727 = vmatpush1.msra.mxu0 0.0
    %1728 = vmatprep.subr.mxu0 0.0
    %1729 = vmatpush1.msra.mxu0 0.0
    %1730 = vmatprep.subr.mxu0 0.0
    %1731 = vmatpush1.msra.mxu0 0.0
    %1732 = vmatprep.subr.mxu0 0.0
    %1733 = vmatpush1.msra.mxu0 0.0
    %1734 = vmatprep.subr.mxu0 0.0
    %1735 = vmatpush1.msra.mxu0 0.0
    %1736 = vmatprep.subr.mxu0 0.0
    %1737 = vmatpush1.msra.mxu0 0.0
    %1738 = vmatprep.subr.mxu0 0.0
    %1739 = vmatpush1.msra.mxu0 0.0
    %1740 = vmatprep.subr.mxu0 0.0
    %1741 = vmatpush1.msra.mxu0 0.0
    %1742 = vmatprep.subr.mxu0 0.0
    %1743 = vmatpush1.msra.mxu0 0.0
    %1744 = vmatprep.subr.mxu0 0.0
    %1745 = vmatpush1.msra.mxu0 0.0
    %1746 = vmatprep.subr.mxu0 0.0
    %1747 = vmatpush1.msra.mxu0 0.0
    %1748 = vmatprep.subr.mxu0 0.0
    %1749 = vmatpush1.msra.mxu0 0.0
    %1750 = vmatprep.subr.mxu0 0.0
    %1751 = vmatpush1.msra.mxu0 0.0
    %1752 = vmatprep.mubr.f32.mxu0 0.0
    %1753 = vmatmul.mubr.f32.gmra.mrb[0].mxu0 %v1686
    %v1754 = vpop.f32.mrb[0].mxu0
    %v1755 = vadd.f32 0.0, %v1754
    %v1756 = vpop.f32.mrb[0].mxu0
    %1757 = vdwg.mxu0
    %v1758 = vadd.f32 %v1682, %v1755
    %v1759 = vxor.u32 %v1758, 2147483648
    %v1760 = vmul.f32 %v1759, 1.442695
    %v1761 = vpow.pop %v1760
    %v1762 = vadd.f32 %v1761, 1.0
    %v1763 = vrcp.pop %v1762
    %v1764 = vmul.f32 1.0, %v1763
    %v1765 = vtanh.pop %v1758
    %v1766 = vmul.f32 %v1764, %v1674
    %1768 = vrot.lane.b32.xlu0 %v1765, 64
    %v1769 = vpop.permute.xlu0 %1768
    %v1771 = vmul.f32 %v1764, %v1769
    %1773 = vrot.lane.b32.xlu0 %v1771, 32
    %v1774 = vpop.permute.xlu0 %1773
    %v1776 = vadd.f32 %v1766, %v1774
    %v1777 = vtanh.pop %v1776
    %1779 = vrot.lane.b32.xlu0 %v1777, 64
    %v1780 = vpop.permute.xlu0 %1779
    %v1782 = vmul.f32 %v1764, %v1780
    %v1783 = vsel %vm876, %v1782, %v1673
    %v1784 = vsel %vm876, %v1776, %v1674
    %v1785 = vsel %vm876, %v1782, 0.0
    %1787 = vrot.lane.b32.xlu0 %v1785, 32
    %v1788 = vpop.permute.xlu0 %1787
    %s1790 = scalar_lea.vmem [#allocation4], 32
    %1791 = vst.msk [vmem:[%s1790] sm:$0xff] %vm309, %v1788
    %v1792 = vld [vmem:[%s652] sm:$0xff]
    %1794 = vrot.lane.b32.xlu0 %v1783, 32
    %v1795 = vpop.permute.xlu0 %1794
    %v1796 = vsel %vm309, %v1795, 0
    %1798 = vmatprep.subr.mxu0 0.0
    %1799 = vmatpush1.msra.mxu0 %v1357
    %1800 = vmatprep.subr.mxu0 0.0
    %1801 = vmatpush1.msra.mxu0 %v1358
    %1802 = vmatprep.subr.mxu0 0.0
    %1803 = vmatpush1.msra.mxu0 %v1359
    %1804 = vmatprep.subr.mxu0 0.0
    %1805 = vmatpush1.msra.mxu0 %v1360
    %1806 = vmatprep.subr.mxu0 0.0
    %1807 = vmatpush1.msra.mxu0 0.0
    %1808 = vmatprep.subr.mxu0 0.0
    %1809 = vmatpush1.msra.mxu0 0.0
    %1810 = vmatprep.subr.mxu0 0.0
    %1811 = vmatpush1.msra.mxu0 0.0
    %1812 = vmatprep.subr.mxu0 0.0
    %1813 = vmatpush1.msra.mxu0 0.0
    %1814 = vmatprep.subr.mxu0 0.0
    %1815 = vmatpush1.msra.mxu0 0.0
    %1816 = vmatprep.subr.mxu0 0.0
    %1817 = vmatpush1.msra.mxu0 0.0
    %1818 = vmatprep.subr.mxu0 0.0
    %1819 = vmatpush1.msra.mxu0 0.0
    %1820 = vmatprep.subr.mxu0 0.0
    %1821 = vmatpush1.msra.mxu0 0.0
    %1822 = vmatprep.subr.mxu0 0.0
    %1823 = vmatpush1.msra.mxu0 0.0
    %1824 = vmatprep.subr.mxu0 0.0
    %1825 = vmatpush1.msra.mxu0 0.0
    %1826 = vmatprep.subr.mxu0 0.0
    %1827 = vmatpush1.msra.mxu0 0.0
    %1828 = vmatprep.subr.mxu0 0.0
    %1829 = vmatpush1.msra.mxu0 0.0
    %1830 = vmatprep.subr.mxu0 0.0
    %1831 = vmatpush1.msra.mxu0 0.0
    %1832 = vmatprep.subr.mxu0 0.0
    %1833 = vmatpush1.msra.mxu0 0.0
    %1834 = vmatprep.subr.mxu0 0.0
    %1835 = vmatpush1.msra.mxu0 0.0
    %1836 = vmatprep.subr.mxu0 0.0
    %1837 = vmatpush1.msra.mxu0 0.0
    %1838 = vmatprep.subr.mxu0 0.0
    %1839 = vmatpush1.msra.mxu0 0.0
    %1840 = vmatprep.subr.mxu0 0.0
    %1841 = vmatpush1.msra.mxu0 0.0
    %1842 = vmatprep.subr.mxu0 0.0
    %1843 = vmatpush1.msra.mxu0 0.0
    %1844 = vmatprep.subr.mxu0 0.0
    %1845 = vmatpush1.msra.mxu0 0.0
    %1846 = vmatprep.subr.mxu0 0.0
    %1847 = vmatpush1.msra.mxu0 0.0
    %1848 = vmatprep.subr.mxu0 0.0
    %1849 = vmatpush1.msra.mxu0 0.0
    %1850 = vmatprep.subr.mxu0 0.0
    %1851 = vmatpush1.msra.mxu0 0.0
    %1852 = vmatprep.subr.mxu0 0.0
    %1853 = vmatpush1.msra.mxu0 0.0
    %1854 = vmatprep.subr.mxu0 0.0
    %1855 = vmatpush1.msra.mxu0 0.0
    %1856 = vmatprep.subr.mxu0 0.0
    %1857 = vmatpush1.msra.mxu0 0.0
    %1858 = vmatprep.subr.mxu0 0.0
    %1859 = vmatpush1.msra.mxu0 0.0
    %1860 = vmatprep.subr.mxu0 0.0
    %1861 = vmatpush1.msra.mxu0 0.0
    %1862 = vmatprep.mubr.f32.mxu0 0.0
    %1863 = vmatmul.mubr.f32.gmra.mrb[0].mxu0 %v1796
    %v1864 = vpop.f32.mrb[0].mxu0
    %v1865 = vadd.f32 0.0, %v1864
    %v1866 = vpop.f32.mrb[0].mxu0
    %1867 = vdwg.mxu0
    %v1868 = vadd.f32 %v1792, %v1865
    %v1869 = vxor.u32 %v1868, 2147483648
    %v1870 = vmul.f32 %v1869, 1.442695
    %v1871 = vpow.pop %v1870
    %v1872 = vadd.f32 %v1871, 1.0
    %v1873 = vrcp.pop %v1872
    %v1874 = vmul.f32 1.0, %v1873
    %v1875 = vtanh.pop %v1868
    %v1876 = vmul.f32 %v1874, %v1784
    %1878 = vrot.lane.b32.xlu0 %v1875, 64
    %v1879 = vpop.permute.xlu0 %1878
    %v1881 = vmul.f32 %v1874, %v1879
    %1883 = vrot.lane.b32.xlu0 %v1881, 32
    %v1884 = vpop.permute.xlu0 %1883
    %v1886 = vadd.f32 %v1876, %v1884
    %v1887 = vtanh.pop %v1886
    %1889 = vrot.lane.b32.xlu0 %v1887, 64
    %v1890 = vpop.permute.xlu0 %1889
    %v1892 = vmul.f32 %v1874, %v1890
    %v1893 = vsel %vm759, %v1892, %v1783
    %v1894 = vsel %vm759, %v1886, %v1784
    %v1895 = vsel %vm759, %v1892, 0.0
    %1897 = vrot.lane.b32.xlu0 %v1895, 32
    %v1898 = vpop.permute.xlu0 %1897
    %s1900 = scalar_lea.vmem [#allocation4], 24
    %1901 = vst.msk [vmem:[%s1900] sm:$0xff] %vm309, %v1898
    %v1902 = vld [vmem:[%s535] sm:$0xff]
    %1904 = vrot.lane.b32.xlu0 %v1893, 32
    %v1905 = vpop.permute.xlu0 %1904
    %v1906 = vsel %vm309, %v1905, 0
    %1908 = vmatprep.subr.mxu0 0.0
    %1909 = vmatpush1.msra.mxu0 %v1357
    %1910 = vmatprep.subr.mxu0 0.0
    %1911 = vmatpush1.msra.mxu0 %v1358
    %1912 = vmatprep.subr.mxu0 0.0
    %1913 = vmatpush1.msra.mxu0 %v1359
    %1914 = vmatprep.subr.mxu0 0.0
    %1915 = vmatpush1.msra.mxu0 %v1360
    %1916 = vmatprep.subr.mxu0 0.0
    %1917 = vmatpush1.msra.mxu0 0.0
    %1918 = vmatprep.subr.mxu0 0.0
    %1919 = vmatpush1.msra.mxu0 0.0
    %1920 = vmatprep.subr.mxu0 0.0
    %1921 = vmatpush1.msra.mxu0 0.0
    %1922 = vmatprep.subr.mxu0 0.0
    %1923 = vmatpush1.msra.mxu0 0.0
    %1924 = vmatprep.subr.mxu0 0.0
    %1925 = vmatpush1.msra.mxu0 0.0
    %1926 = vmatprep.subr.mxu0 0.0
    %1927 = vmatpush1.msra.mxu0 0.0
    %1928 = vmatprep.subr.mxu0 0.0
    %1929 = vmatpush1.msra.mxu0 0.0
    %1930 = vmatprep.subr.mxu0 0.0
    %1931 = vmatpush1.msra.mxu0 0.0
    %1932 = vmatprep.subr.mxu0 0.0
    %1933 = vmatpush1.msra.mxu0 0.0
    %1934 = vmatprep.subr.mxu0 0.0
    %1935 = vmatpush1.msra.mxu0 0.0
    %1936 = vmatprep.subr.mxu0 0.0
    %1937 = vmatpush1.msra.mxu0 0.0
    %1938 = vmatprep.subr.mxu0 0.0
    %1939 = vmatpush1.msra.mxu0 0.0
    %1940 = vmatprep.subr.mxu0 0.0
    %1941 = vmatpush1.msra.mxu0 0.0
    %1942 = vmatprep.subr.mxu0 0.0
    %1943 = vmatpush1.msra.mxu0 0.0
    %1944 = vmatprep.subr.mxu0 0.0
    %1945 = vmatpush1.msra.mxu0 0.0
    %1946 = vmatprep.subr.mxu0 0.0
    %1947 = vmatpush1.msra.mxu0 0.0
    %1948 = vmatprep.subr.mxu0 0.0
    %1949 = vmatpush1.msra.mxu0 0.0
    %1950 = vmatprep.subr.mxu0 0.0
    %1951 = vmatpush1.msra.mxu0 0.0
    %1952 = vmatprep.subr.mxu0 0.0
    %1953 = vmatpush1.msra.mxu0 0.0
    %1954 = vmatprep.subr.mxu0 0.0
    %1955 = vmatpush1.msra.mxu0 0.0
    %1956 = vmatprep.subr.mxu0 0.0
    %1957 = vmatpush1.msra.mxu0 0.0
    %1958 = vmatprep.subr.mxu0 0.0
    %1959 = vmatpush1.msra.mxu0 0.0
    %1960 = vmatprep.subr.mxu0 0.0
    %1961 = vmatpush1.msra.mxu0 0.0
    %1962 = vmatprep.subr.mxu0 0.0
    %1963 = vmatpush1.msra.mxu0 0.0
    %1964 = vmatprep.subr.mxu0 0.0
    %1965 = vmatpush1.msra.mxu0 0.0
    %1966 = vmatprep.subr.mxu0 0.0
    %1967 = vmatpush1.msra.mxu0 0.0
    %1968 = vmatprep.subr.mxu0 0.0
    %1969 = vmatpush1.msra.mxu0 0.0
    %1970 = vmatprep.subr.mxu0 0.0
    %1971 = vmatpush1.msra.mxu0 0.0
    %1972 = vmatprep.mubr.f32.mxu0 0.0
    %1973 = vmatmul.mubr.f32.gmra.mrb[0].mxu0 %v1906
    %v1974 = vpop.f32.mrb[0].mxu0
    %v1975 = vadd.f32 0.0, %v1974
    %v1976 = vpop.f32.mrb[0].mxu0
    %1977 = vdwg.mxu0
    %v1978 = vadd.f32 %v1902, %v1975
    %v1979 = vxor.u32 %v1978, 2147483648
    %v1980 = vmul.f32 %v1979, 1.442695
    %v1981 = vpow.pop %v1980
    %v1982 = vadd.f32 %v1981, 1.0
    %v1983 = vrcp.pop %v1982
    %v1984 = vmul.f32 1.0, %v1983
    %v1985 = vtanh.pop %v1978
    %v1986 = vmul.f32 %v1984, %v1894
    %1988 = vrot.lane.b32.xlu0 %v1985, 64
    %v1989 = vpop.permute.xlu0 %1988
    %v1991 = vmul.f32 %v1984, %v1989
    %1993 = vrot.lane.b32.xlu0 %v1991, 32
    %v1994 = vpop.permute.xlu0 %1993
    %v1996 = vadd.f32 %v1986, %v1994
    %v1997 = vtanh.pop %v1996
    %1999 = vrot.lane.b32.xlu0 %v1997, 64
    %v2000 = vpop.permute.xlu0 %1999
    %v2002 = vmul.f32 %v1984, %v2000
    %v2003 = vsel %vm642, %v2002, %v1893
    %v2004 = vsel %vm642, %v1996, %v1894
    %v2005 = vsel %vm642, %v2002, 0.0
    %2007 = vrot.lane.b32.xlu0 %v2005, 32
    %v2008 = vpop.permute.xlu0 %2007
    %s2010 = scalar_lea.vmem [#allocation4], 16
    %2011 = vst.msk [vmem:[%s2010] sm:$0xff] %vm309, %v2008
    %v2012 = vld [vmem:[%s421] sm:$0xff]
    %2014 = vrot.lane.b32.xlu0 %v2003, 32
    %v2015 = vpop.permute.xlu0 %2014
    %v2016 = vsel %vm309, %v2015, 0
    %2018 = vmatprep.subr.mxu0 0.0
    %2019 = vmatpush1.msra.mxu0 %v1357
    %2020 = vmatprep.subr.mxu0 0.0
    %2021 = vmatpush1.msra.mxu0 %v1358
    %2022 = vmatprep.subr.mxu0 0.0
    %2023 = vmatpush1.msra.mxu0 %v1359
    %2024 = vmatprep.subr.mxu0 0.0
    %2025 = vmatpush1.msra.mxu0 %v1360
    %2026 = vmatprep.subr.mxu0 0.0
    %2027 = vmatpush1.msra.mxu0 0.0
    %2028 = vmatprep.subr.mxu0 0.0
    %2029 = vmatpush1.msra.mxu0 0.0
    %2030 = vmatprep.subr.mxu0 0.0
    %2031 = vmatpush1.msra.mxu0 0.0
    %2032 = vmatprep.subr.mxu0 0.0
    %2033 = vmatpush1.msra.mxu0 0.0
    %2034 = vmatprep.subr.mxu0 0.0
    %2035 = vmatpush1.msra.mxu0 0.0
    %2036 = vmatprep.subr.mxu0 0.0
    %2037 = vmatpush1.msra.mxu0 0.0
    %2038 = vmatprep.subr.mxu0 0.0
    %2039 = vmatpush1.msra.mxu0 0.0
    %2040 = vmatprep.subr.mxu0 0.0
    %2041 = vmatpush1.msra.mxu0 0.0
    %2042 = vmatprep.subr.mxu0 0.0
    %2043 = vmatpush1.msra.mxu0 0.0
    %2044 = vmatprep.subr.mxu0 0.0
    %2045 = vmatpush1.msra.mxu0 0.0
    %2046 = vmatprep.subr.mxu0 0.0
    %2047 = vmatpush1.msra.mxu0 0.0
    %2048 = vmatprep.subr.mxu0 0.0
    %2049 = vmatpush1.msra.mxu0 0.0
    %2050 = vmatprep.subr.mxu0 0.0
    %2051 = vmatpush1.msra.mxu0 0.0
    %2052 = vmatprep.subr.mxu0 0.0
    %2053 = vmatpush1.msra.mxu0 0.0
    %2054 = vmatprep.subr.mxu0 0.0
    %2055 = vmatpush1.msra.mxu0 0.0
    %2056 = vmatprep.subr.mxu0 0.0
    %2057 = vmatpush1.msra.mxu0 0.0
    %2058 = vmatprep.subr.mxu0 0.0
    %2059 = vmatpush1.msra.mxu0 0.0
    %2060 = vmatprep.subr.mxu0 0.0
    %2061 = vmatpush1.msra.mxu0 0.0
    %2062 = vmatprep.subr.mxu0 0.0
    %2063 = vmatpush1.msra.mxu0 0.0
    %2064 = vmatprep.subr.mxu0 0.0
    %2065 = vmatpush1.msra.mxu0 0.0
    %2066 = vmatprep.subr.mxu0 0.0
    %2067 = vmatpush1.msra.mxu0 0.0
    %2068 = vmatprep.subr.mxu0 0.0
    %2069 = vmatpush1.msra.mxu0 0.0
    %2070 = vmatprep.subr.mxu0 0.0
    %2071 = vmatpush1.msra.mxu0 0.0
    %2072 = vmatprep.subr.mxu0 0.0
    %2073 = vmatpush1.msra.mxu0 0.0
    %2074 = vmatprep.subr.mxu0 0.0
    %2075 = vmatpush1.msra.mxu0 0.0
    %2076 = vmatprep.subr.mxu0 0.0
    %2077 = vmatpush1.msra.mxu0 0.0
    %2078 = vmatprep.subr.mxu0 0.0
    %2079 = vmatpush1.msra.mxu0 0.0
    %2080 = vmatprep.subr.mxu0 0.0
    %2081 = vmatpush1.msra.mxu0 0.0
    %2082 = vmatprep.mubr.f32.mxu0 0.0
    %2083 = vmatmul.mubr.f32.gmra.mrb[0].mxu0 %v2016
    %v2084 = vpop.f32.mrb[0].mxu0
    %v2085 = vadd.f32 0.0, %v2084
    %v2086 = vpop.f32.mrb[0].mxu0
    %2087 = vdwg.mxu0
    %v2088 = vadd.f32 %v2012, %v2085
    %v2089 = vxor.u32 %v2088, 2147483648
    %v2090 = vmul.f32 %v2089, 1.442695
    %v2091 = vpow.pop %v2090
    %v2092 = vadd.f32 %v2091, 1.0
    %v2093 = vrcp.pop %v2092
    %v2094 = vmul.f32 1.0, %v2093
    %v2095 = vtanh.pop %v2088
    %v2096 = vmul.f32 %v2094, %v2004
    %2098 = vrot.lane.b32.xlu0 %v2095, 64
    %v2099 = vpop.permute.xlu0 %2098
    %v2101 = vmul.f32 %v2094, %v2099
    %2103 = vrot.lane.b32.xlu0 %v2101, 32
    %v2104 = vpop.permute.xlu0 %2103
    %v2106 = vadd.f32 %v2096, %v2104
    %v2107 = vtanh.pop %v2106
    %2109 = vrot.lane.b32.xlu0 %v2107, 64
    %v2110 = vpop.permute.xlu0 %2109
    %v2112 = vmul.f32 %v2094, %v2110
    %v2113 = vsel %vm525, %v2112, %v2003
    %v2114 = vsel %vm525, %v2106, %v2004
    %v2115 = vsel %vm525, %v2112, 0.0
    %2117 = vrot.lane.b32.xlu0 %v2115, 32
    %v2118 = vpop.permute.xlu0 %2117
    %s2120 = scalar_lea.vmem [#allocation4], 8
    %2121 = vst.msk [vmem:[%s2120] sm:$0xff] %vm309, %v2118
    %v2122 = vld [vmem:[#allocation2] sm:$0xff]
    %2124 = vrot.lane.b32.xlu0 %v2113, 32
    %v2125 = vpop.permute.xlu0 %2124
    %v2126 = vsel %vm309, %v2125, 0
    %2128 = vmatprep.subr.mxu0 0.0
    %2129 = vmatpush1.msra.mxu0 %v1357
    %2130 = vmatprep.subr.mxu0 0.0
    %2131 = vmatpush1.msra.mxu0 %v1358
    %2132 = vmatprep.subr.mxu0 0.0
    %2133 = vmatpush1.msra.mxu0 %v1359
    %2134 = vmatprep.subr.mxu0 0.0
    %2135 = vmatpush1.msra.mxu0 %v1360
    %2136 = vmatprep.subr.mxu0 0.0
    %2137 = vmatpush1.msra.mxu0 0.0
    %2138 = vmatprep.subr.mxu0 0.0
    %2139 = vmatpush1.msra.mxu0 0.0
    %2140 = vmatprep.subr.mxu0 0.0
    %2141 = vmatpush1.msra.mxu0 0.0
    %2142 = vmatprep.subr.mxu0 0.0
    %2143 = vmatpush1.msra.mxu0 0.0
    %2144 = vmatprep.subr.mxu0 0.0
    %2145 = vmatpush1.msra.mxu0 0.0
    %2146 = vmatprep.subr.mxu0 0.0
    %2147 = vmatpush1.msra.mxu0 0.0
    %2148 = vmatprep.subr.mxu0 0.0
    %2149 = vmatpush1.msra.mxu0 0.0
    %2150 = vmatprep.subr.mxu0 0.0
    %2151 = vmatpush1.msra.mxu0 0.0
    %2152 = vmatprep.subr.mxu0 0.0
    %2153 = vmatpush1.msra.mxu0 0.0
    %2154 = vmatprep.subr.mxu0 0.0
    %2155 = vmatpush1.msra.mxu0 0.0
    %2156 = vmatprep.subr.mxu0 0.0
    %2157 = vmatpush1.msra.mxu0 0.0
    %2158 = vmatprep.subr.mxu0 0.0
    %2159 = vmatpush1.msra.mxu0 0.0
    %2160 = vmatprep.subr.mxu0 0.0
    %2161 = vmatpush1.msra.mxu0 0.0
    %2162 = vmatprep.subr.mxu0 0.0
    %2163 = vmatpush1.msra.mxu0 0.0
    %2164 = vmatprep.subr.mxu0 0.0
    %2165 = vmatpush1.msra.mxu0 0.0
    %2166 = vmatprep.subr.mxu0 0.0
    %2167 = vmatpush1.msra.mxu0 0.0
    %2168 = vmatprep.subr.mxu0 0.0
    %2169 = vmatpush1.msra.mxu0 0.0
    %2170 = vmatprep.subr.mxu0 0.0
    %2171 = vmatpush1.msra.mxu0 0.0
    %2172 = vmatprep.subr.mxu0 0.0
    %2173 = vmatpush1.msra.mxu0 0.0
    %2174 = vmatprep.subr.mxu0 0.0
    %2175 = vmatpush1.msra.mxu0 0.0
    %2176 = vmatprep.subr.mxu0 0.0
    %2177 = vmatpush1.msra.mxu0 0.0
    %2178 = vmatprep.subr.mxu0 0.0
    %2179 = vmatpush1.msra.mxu0 0.0
    %2180 = vmatprep.subr.mxu0 0.0
    %2181 = vmatpush1.msra.mxu0 0.0
    %2182 = vmatprep.subr.mxu0 0.0
    %2183 = vmatpush1.msra.mxu0 0.0
    %2184 = vmatprep.subr.mxu0 0.0
    %2185 = vmatpush1.msra.mxu0 0.0
    %2186 = vmatprep.subr.mxu0 0.0
    %2187 = vmatpush1.msra.mxu0 0.0
    %2188 = vmatprep.subr.mxu0 0.0
    %2189 = vmatpush1.msra.mxu0 0.0
    %2190 = vmatprep.subr.mxu0 0.0
    %2191 = vmatpush1.msra.mxu0 0.0
    %2192 = vmatprep.mubr.f32.mxu0 0.0
    %2193 = vmatmul.mubr.f32.gmra.mrb[0].mxu0 %v2126
    %v2194 = vpop.f32.mrb[0].mxu0
    %v2195 = vadd.f32 0.0, %v2194
    %v2196 = vpop.f32.mrb[0].mxu0
    %2197 = vdwg.mxu0
    %v2198 = vadd.f32 %v2122, %v2195
    %v2199 = vxor.u32 %v2198, 2147483648
    %v2200 = vmul.f32 %v2199, 1.442695
    %v2201 = vpow.pop %v2200
    %v2202 = vadd.f32 %v2201, 1.0
    %v2203 = vrcp.pop %v2202
    %v2204 = vmul.f32 1.0, %v2203
    %v2205 = vtanh.pop %v2198
    %v2206 = vmul.f32 %v2204, %v2114
    %2208 = vrot.lane.b32.xlu0 %v2205, 64
    %v2209 = vpop.permute.xlu0 %2208
    %v2211 = vmul.f32 %v2204, %v2209
    %2213 = vrot.lane.b32.xlu0 %v2211, 32
    %v2214 = vpop.permute.xlu0 %2213
    %v2216 = vadd.f32 %v2206, %v2214
    %v2217 = vtanh.pop %v2216
    %2219 = vrot.lane.b32.xlu0 %v2217, 64
    %v2220 = vpop.permute.xlu0 %2219
    %v2222 = vmul.f32 %v2204, %v2220
    %v2223 = vsel %vm413, %v2222, 0.0
    %2225 = vrot.lane.b32.xlu0 %v2223, 32
    %v2226 = vpop.permute.xlu0 %2225
    %2228 = vst.msk [vmem:[#allocation4] sm:$0xff] %vm309, %v2226
    %v2229 = vld [vmem:[#allocation3] sm:$0xff]
    %v2230 = vld [vmem:[#allocation3 + $0x8] sm:$0xff]
    %v2231 = vld [vmem:[#allocation3 + $0x10] sm:$0xff]
    %v2232 = vld [vmem:[#allocation3 + $0x18] sm:$0xff]
    %v2233 = vld [vmem:[#allocation3 + $0x20] sm:$0xff]
    %v2234 = vld [vmem:[#allocation3 + $0x28] sm:$0xff]
    %v2235 = vld [vmem:[#allocation3 + $0x30] sm:$0xff]
    %v2236 = vld [vmem:[#allocation3 + $0x38] sm:$0xff]
    %v2237 = vld [vmem:[#allocation4] sm:$0xff]
    %v2238 = vld [vmem:[#allocation4 + $0x8] sm:$0xff]
    %v2239 = vld [vmem:[#allocation4 + $0x10] sm:$0xff]
    %v2240 = vld [vmem:[#allocation4 + $0x18] sm:$0xff]
    %v2241 = vld [vmem:[#allocation4 + $0x20] sm:$0xff]
    %v2242 = vld [vmem:[#allocation4 + $0x28] sm:$0xff]
    %v2243 = vld [vmem:[#allocation4 + $0x30] sm:$0xff]
    %v2244 = vld [vmem:[#allocation4 + $0x38] sm:$0xff]
    %v2245 = vld [vmem:[#allocation12] sm:$0xff]
    %v2246 = vld [vmem:[#allocation12 + $0x8] sm:$0xff]
    %v2247 = vld [vmem:[#allocation12 + $0x10] sm:$0xff]
    %v2248 = vld [vmem:[#allocation12 + $0x18] sm:$0xff]
    %v2249 = vld [vmem:[#allocation12 + $0x20] sm:$0xff]
    %v2250 = vld [vmem:[#allocation12 + $0x28] sm:$0xff]
    %v2251 = vld [vmem:[#allocation12 + $0x30] sm:$0xff]
    %v2252 = vld [vmem:[#allocation12 + $0x38] sm:$0xff]
    %v2254 = vsel %vm309, %v2237, 0
    %v2257 = vsel %vm309, %v2238, 0
    %v2260 = vsel %vm309, %v2239, 0
    %v2263 = vsel %vm309, %v2240, 0
    %v2266 = vsel %vm309, %v2241, 0
    %v2269 = vsel %vm309, %v2242, 0
    %v2272 = vsel %vm309, %v2243, 0
    %v2275 = vsel %vm309, %v2244, 0
    %2277 = vmatprep.subr.mxu0 0.0
    %2278 = vmatpush1.msra.mxu0 %v2249
    %2279 = vmatprep.subr.mxu0 0.0
    %2280 = vmatpush1.msra.mxu0 %v2250
    %2281 = vmatprep.subr.mxu0 0.0
    %2282 = vmatpush1.msra.mxu0 %v2251
    %2283 = vmatprep.subr.mxu0 0.0
    %2284 = vmatpush1.msra.mxu0 %v2252
    %2285 = vmatprep.subr.mxu0 0.0
    %2286 = vmatpush1.msra.mxu0 0.0
    %2287 = vmatprep.subr.mxu0 0.0
    %2288 = vmatpush1.msra.mxu0 0.0
    %2289 = vmatprep.subr.mxu0 0.0
    %2290 = vmatpush1.msra.mxu0 0.0
    %2291 = vmatprep.subr.mxu0 0.0
    %2292 = vmatpush1.msra.mxu0 0.0
    %2293 = vmatprep.subr.mxu0 0.0
    %2294 = vmatpush1.msra.mxu0 0.0
    %2295 = vmatprep.subr.mxu0 0.0
    %2296 = vmatpush1.msra.mxu0 0.0
    %2297 = vmatprep.subr.mxu0 0.0
    %2298 = vmatpush1.msra.mxu0 0.0
    %2299 = vmatprep.subr.mxu0 0.0
    %2300 = vmatpush1.msra.mxu0 0.0
    %2301 = vmatprep.subr.mxu0 0.0
    %2302 = vmatpush1.msra.mxu0 0.0
    %2303 = vmatprep.subr.mxu0 0.0
    %2304 = vmatpush1.msra.mxu0 0.0
    %2305 = vmatprep.subr.mxu0 0.0
    %2306 = vmatpush1.msra.mxu0 0.0
    %2307 = vmatprep.subr.mxu0 0.0
    %2308 = vmatpush1.msra.mxu0 0.0
    %2309 = vmatprep.subr.mxu0 0.0
    %2310 = vmatpush1.msra.mxu0 0.0
    %2311 = vmatprep.subr.mxu0 0.0
    %2312 = vmatpush1.msra.mxu0 0.0
    %2313 = vmatprep.subr.mxu0 0.0
    %2314 = vmatpush1.msra.mxu0 0.0
    %2315 = vmatprep.subr.mxu0 0.0
    %2316 = vmatpush1.msra.mxu0 0.0
    %2317 = vmatprep.subr.mxu0 0.0
    %2318 = vmatpush1.msra.mxu0 0.0
    %2319 = vmatprep.subr.mxu0 0.0
    %2320 = vmatpush1.msra.mxu0 0.0
    %2321 = vmatprep.subr.mxu0 0.0
    %2322 = vmatpush1.msra.mxu0 0.0
    %2323 = vmatprep.subr.mxu0 0.0
    %2324 = vmatpush1.msra.mxu0 0.0
    %2325 = vmatprep.subr.mxu0 0.0
    %2326 = vmatpush1.msra.mxu0 0.0
    %2327 = vmatprep.subr.mxu0 0.0
    %2328 = vmatpush1.msra.mxu0 0.0
    %2329 = vmatprep.subr.mxu0 0.0
    %2330 = vmatpush1.msra.mxu0 0.0
    %2331 = vmatprep.subr.mxu0 0.0
    %2332 = vmatpush1.msra.mxu0 0.0
    %2333 = vmatprep.subr.mxu0 0.0
    %2334 = vmatpush1.msra.mxu0 0.0
    %2335 = vmatprep.subr.mxu0 0.0
    %2336 = vmatpush1.msra.mxu0 0.0
    %2337 = vmatprep.subr.mxu0 0.0
    %2338 = vmatpush1.msra.mxu0 0.0
    %2339 = vmatprep.subr.mxu0 0.0
    %2340 = vmatpush1.msra.mxu0 0.0
    %2341 = vmatprep.mubr.f32.mxu0 0.0
    %2342 = vmatmul.mubr.f32.gmra.mrb[0].mxu0 %v2254
    %v2343 = vpop.f32.mrb[0].mxu0
    %v2344 = vadd.f32 0.0, %v2343
    %v2345 = vpop.f32.mrb[0].mxu0
    %2346 = vmatprep.mubr.f32.mxu0 0.0
    %2347 = vmatmul.mubr.f32.gmra.mrb[0].mxu0 %v2257
    %v2348 = vpop.f32.mrb[0].mxu0
    %v2349 = vadd.f32 0.0, %v2348
    %v2350 = vpop.f32.mrb[0].mxu0
    %2351 = vmatprep.mubr.f32.mxu0 0.0
    %2352 = vmatmul.mubr.f32.gmra.mrb[0].mxu0 %v2260
    %v2353 = vpop.f32.mrb[0].mxu0
    %v2354 = vadd.f32 0.0, %v2353
    %v2355 = vpop.f32.mrb[0].mxu0
    %2356 = vmatprep.mubr.f32.mxu0 0.0
    %2357 = vmatmul.mubr.f32.gmra.mrb[0].mxu0 %v2263
    %v2358 = vpop.f32.mrb[0].mxu0
    %v2359 = vadd.f32 0.0, %v2358
    %v2360 = vpop.f32.mrb[0].mxu0
    %2361 = vmatprep.mubr.f32.mxu0 0.0
    %2362 = vmatmul.mubr.f32.gmra.mrb[0].mxu0 %v2266
    %v2363 = vpop.f32.mrb[0].mxu0
    %v2364 = vadd.f32 0.0, %v2363
    %v2365 = vpop.f32.mrb[0].mxu0
    %2366 = vmatprep.mubr.f32.mxu0 0.0
    %2367 = vmatmul.mubr.f32.gmra.mrb[0].mxu0 %v2269
    %v2368 = vpop.f32.mrb[0].mxu0
    %v2369 = vadd.f32 0.0, %v2368
    %v2370 = vpop.f32.mrb[0].mxu0
    %2371 = vmatprep.mubr.f32.mxu0 0.0
    %2372 = vmatmul.mubr.f32.gmra.mrb[0].mxu0 %v2272
    %v2373 = vpop.f32.mrb[0].mxu0
    %v2374 = vadd.f32 0.0, %v2373
    %v2375 = vpop.f32.mrb[0].mxu0
    %2376 = vmatprep.mubr.f32.mxu0 0.0
    %2377 = vmatmul.mubr.f32.gmra.mrb[0].mxu0 %v2275
    %v2378 = vpop.f32.mrb[0].mxu0
    %v2379 = vadd.f32 0.0, %v2378
    %v2380 = vpop.f32.mrb[0].mxu0
    %2381 = vdwg.mxu0
    %v2383 = vsel %vm309, %v2229, 0
    %v2386 = vsel %vm309, %v2230, 0
    %v2389 = vsel %vm309, %v2231, 0
    %v2392 = vsel %vm309, %v2232, 0
    %v2395 = vsel %vm309, %v2233, 0
    %v2398 = vsel %vm309, %v2234, 0
    %v2401 = vsel %vm309, %v2235, 0
    %v2404 = vsel %vm309, %v2236, 0
    %2406 = vmatprep.subr.mxu0 0.0
    %2407 = vmatpush1.msra.mxu0 %v2245
    %2408 = vmatprep.subr.mxu0 0.0
    %2409 = vmatpush1.msra.mxu0 %v2246
    %2410 = vmatprep.subr.mxu0 0.0
    %2411 = vmatpush1.msra.mxu0 %v2247
    %2412 = vmatprep.subr.mxu0 0.0
    %2413 = vmatpush1.msra.mxu0 %v2248
    %2414 = vmatprep.subr.mxu0 0.0
    %2415 = vmatpush1.msra.mxu0 0.0
    %2416 = vmatprep.subr.mxu0 0.0
    %2417 = vmatpush1.msra.mxu0 0.0
    %2418 = vmatprep.subr.mxu0 0.0
    %2419 = vmatpush1.msra.mxu0 0.0
    %2420 = vmatprep.subr.mxu0 0.0
    %2421 = vmatpush1.msra.mxu0 0.0
    %2422 = vmatprep.subr.mxu0 0.0
    %2423 = vmatpush1.msra.mxu0 0.0
    %2424 = vmatprep.subr.mxu0 0.0
    %2425 = vmatpush1.msra.mxu0 0.0
    %2426 = vmatprep.subr.mxu0 0.0
    %2427 = vmatpush1.msra.mxu0 0.0
    %2428 = vmatprep.subr.mxu0 0.0
    %2429 = vmatpush1.msra.mxu0 0.0
    %2430 = vmatprep.subr.mxu0 0.0
    %2431 = vmatpush1.msra.mxu0 0.0
    %2432 = vmatprep.subr.mxu0 0.0
    %2433 = vmatpush1.msra.mxu0 0.0
    %2434 = vmatprep.subr.mxu0 0.0
    %2435 = vmatpush1.msra.mxu0 0.0
    %2436 = vmatprep.subr.mxu0 0.0
    %2437 = vmatpush1.msra.mxu0 0.0
    %2438 = vmatprep.subr.mxu0 0.0
    %2439 = vmatpush1.msra.mxu0 0.0
    %2440 = vmatprep.subr.mxu0 0.0
    %2441 = vmatpush1.msra.mxu0 0.0
    %2442 = vmatprep.subr.mxu0 0.0
    %2443 = vmatpush1.msra.mxu0 0.0
    %2444 = vmatprep.subr.mxu0 0.0
    %2445 = vmatpush1.msra.mxu0 0.0
    %2446 = vmatprep.subr.mxu0 0.0
    %2447 = vmatpush1.msra.mxu0 0.0
    %2448 = vmatprep.subr.mxu0 0.0
    %2449 = vmatpush1.msra.mxu0 0.0
    %2450 = vmatprep.subr.mxu0 0.0
    %2451 = vmatpush1.msra.mxu0 0.0
    %2452 = vmatprep.subr.mxu0 0.0
    %2453 = vmatpush1.msra.mxu0 0.0
    %2454 = vmatprep.subr.mxu0 0.0
    %2455 = vmatpush1.msra.mxu0 0.0
    %2456 = vmatprep.subr.mxu0 0.0
    %2457 = vmatpush1.msra.mxu0 0.0
    %2458 = vmatprep.subr.mxu0 0.0
    %2459 = vmatpush1.msra.mxu0 0.0
    %2460 = vmatprep.subr.mxu0 0.0
    %2461 = vmatpush1.msra.mxu0 0.0
    %2462 = vmatprep.subr.mxu0 0.0
    %2463 = vmatpush1.msra.mxu0 0.0
    %2464 = vmatprep.subr.mxu0 0.0
    %2465 = vmatpush1.msra.mxu0 0.0
    %2466 = vmatprep.subr.mxu0 0.0
    %2467 = vmatpush1.msra.mxu0 0.0
    %2468 = vmatprep.subr.mxu0 0.0
    %2469 = vmatpush1.msra.mxu0 0.0
    %2470 = vmatprep.mubr.f32.mxu0 0.0
    %2471 = vmatmul.mubr.f32.gmra.mrb[0].mxu0 %v2383
    %v2472 = vpop.f32.mrb[0].mxu0
    %v2473 = vadd.f32 %v2344, %v2472
    %v2474 = vpop.f32.mrb[0].mxu0
    %2475 = vmatprep.mubr.f32.mxu0 0.0
    %2476 = vmatmul.mubr.f32.gmra.mrb[0].mxu0 %v2386
    %v2477 = vpop.f32.mrb[0].mxu0
    %v2478 = vadd.f32 %v2349, %v2477
    %v2479 = vpop.f32.mrb[0].mxu0
    %2480 = vmatprep.mubr.f32.mxu0 0.0
    %2481 = vmatmul.mubr.f32.gmra.mrb[0].mxu0 %v2389
    %v2482 = vpop.f32.mrb[0].mxu0
    %v2483 = vadd.f32 %v2354, %v2482
    %v2484 = vpop.f32.mrb[0].mxu0
    %2485 = vmatprep.mubr.f32.mxu0 0.0
    %2486 = vmatmul.mubr.f32.gmra.mrb[0].mxu0 %v2392
    %v2487 = vpop.f32.mrb[0].mxu0
    %v2488 = vadd.f32 %v2359, %v2487
    %v2489 = vpop.f32.mrb[0].mxu0
    %2490 = vmatprep.mubr.f32.mxu0 0.0
    %2491 = vmatmul.mubr.f32.gmra.mrb[0].mxu0 %v2395
    %v2492 = vpop.f32.mrb[0].mxu0
    %v2493 = vadd.f32 %v2364, %v2492
    %v2494 = vpop.f32.mrb[0].mxu0
    %2495 = vmatprep.mubr.f32.mxu0 0.0
    %2496 = vmatmul.mubr.f32.gmra.mrb[0].mxu0 %v2398
    %v2497 = vpop.f32.mrb[0].mxu0
    %v2498 = vadd.f32 %v2369, %v2497
    %v2499 = vpop.f32.mrb[0].mxu0
    %2500 = vmatprep.mubr.f32.mxu0 0.0
    %2501 = vmatmul.mubr.f32.gmra.mrb[0].mxu0 %v2401
    %v2502 = vpop.f32.mrb[0].mxu0
    %v2503 = vadd.f32 %v2374, %v2502
    %v2504 = vpop.f32.mrb[0].mxu0
    %2505 = vmatprep.mubr.f32.mxu0 0.0
    %2506 = vmatmul.mubr.f32.gmra.mrb[0].mxu0 %v2404
    %v2507 = vpop.f32.mrb[0].mxu0
    %v2508 = vadd.f32 %v2379, %v2507
    %v2509 = vpop.f32.mrb[0].mxu0
    %2510 = vdwg.mxu0
    %v2511 = vld [vmem:[%s10] sm:$0x1]
    %v2513 = vlaneseq
    %v2514 = vshrl.u32 %v2513, 7
    %v2515 = vsub.s32 0, %v2514
    %v2516 = vrot.slane %v2511, %v2515
    %v2518 = vadd.f32 %v2473, %v2516
    %v2519 = vadd.f32 %v2478, %v2516
    %v2520 = vadd.f32 %v2483, %v2516
    %v2521 = vadd.f32 %v2488, %v2516
    %v2522 = vadd.f32 %v2493, %v2516
    %v2523 = vadd.f32 %v2498, %v2516
    %v2524 = vadd.f32 %v2503, %v2516
    %v2525 = vadd.f32 %v2508, %v2516
    %2526 = vst [vmem:[#allocation2] sm:$0xff] %v2518
    %2527 = vst [vmem:[#allocation2 + $0x8] sm:$0xff] %v2519
    %2528 = vst [vmem:[#allocation2 + $0x10] sm:$0xff] %v2520
    %2529 = vst [vmem:[#allocation2 + $0x18] sm:$0xff] %v2521
    %2530 = vst [vmem:[#allocation2 + $0x20] sm:$0xff] %v2522
    %2531 = vst [vmem:[#allocation2 + $0x28] sm:$0xff] %v2523
    %2532 = vst [vmem:[#allocation2 + $0x30] sm:$0xff] %v2524
    %2533 = vst [vmem:[#allocation2 + $0x38] sm:$0xff] %v2525
    %v2534 = vld [vmem:[#allocation14] sm:$0xff]
    %v2535 = vld [vmem:[#allocation14 + $0x8] sm:$0xff]
    %v2536 = vld [vmem:[#allocation14 + $0x10] sm:$0xff]
    %v2537 = vld [vmem:[#allocation14 + $0x18] sm:$0xff]
    %v2538 = vld [vmem:[#allocation2] sm:$0xff]
    %2539 = vmatprep.subr.mxu0 0.0
    %2540 = vmatpush1.msra.mxu0 %v2534
    %2541 = vmatprep.subr.mxu0 0.0
    %2542 = vmatpush1.msra.mxu0 %v2535
    %2543 = vmatprep.subr.mxu0 0.0
    %2544 = vmatpush1.msra.mxu0 %v2536
    %2545 = vmatprep.subr.mxu0 0.0
    %2546 = vmatpush1.msra.mxu0 %v2537
    %2547 = vmatprep.subr.mxu0 0.0
    %2548 = vmatpush1.msra.mxu0 0.0
    %2549 = vmatprep.subr.mxu0 0.0
    %2550 = vmatpush1.msra.mxu0 0.0
    %2551 = vmatprep.subr.mxu0 0.0
    %2552 = vmatpush1.msra.mxu0 0.0
    %2553 = vmatprep.subr.mxu0 0.0
    %2554 = vmatpush1.msra.mxu0 0.0
    %2555 = vmatprep.subr.mxu0 0.0
    %2556 = vmatpush1.msra.mxu0 0.0
    %2557 = vmatprep.subr.mxu0 0.0
    %2558 = vmatpush1.msra.mxu0 0.0
    %2559 = vmatprep.subr.mxu0 0.0
    %2560 = vmatpush1.msra.mxu0 0.0
    %2561 = vmatprep.subr.mxu0 0.0
    %2562 = vmatpush1.msra.mxu0 0.0
    %2563 = vmatprep.subr.mxu0 0.0
    %2564 = vmatpush1.msra.mxu0 0.0
    %2565 = vmatprep.subr.mxu0 0.0
    %2566 = vmatpush1.msra.mxu0 0.0
    %2567 = vmatprep.subr.mxu0 0.0
    %2568 = vmatpush1.msra.mxu0 0.0
    %2569 = vmatprep.subr.mxu0 0.0
    %2570 = vmatpush1.msra.mxu0 0.0
    %2571 = vmatprep.subr.mxu0 0.0
    %2572 = vmatpush1.msra.mxu0 0.0
    %2573 = vmatprep.subr.mxu0 0.0
    %2574 = vmatpush1.msra.mxu0 0.0
    %2575 = vmatprep.subr.mxu0 0.0
    %2576 = vmatpush1.msra.mxu0 0.0
    %2577 = vmatprep.subr.mxu0 0.0
    %2578 = vmatpush1.msra.mxu0 0.0
    %2579 = vmatprep.subr.mxu0 0.0
    %2580 = vmatpush1.msra.mxu0 0.0
    %2581 = vmatprep.subr.mxu0 0.0
    %2582 = vmatpush1.msra.mxu0 0.0
    %2583 = vmatprep.subr.mxu0 0.0
    %2584 = vmatpush1.msra.mxu0 0.0
    %2585 = vmatprep.subr.mxu0 0.0
    %2586 = vmatpush1.msra.mxu0 0.0
    %2587 = vmatprep.subr.mxu0 0.0
    %2588 = vmatpush1.msra.mxu0 0.0
    %2589 = vmatprep.subr.mxu0 0.0
    %2590 = vmatpush1.msra.mxu0 0.0
    %2591 = vmatprep.subr.mxu0 0.0
    %2592 = vmatpush1.msra.mxu0 0.0
    %2593 = vmatprep.subr.mxu0 0.0
    %2594 = vmatpush1.msra.mxu0 0.0
    %2595 = vmatprep.subr.mxu0 0.0
    %2596 = vmatpush1.msra.mxu0 0.0
    %2597 = vmatprep.subr.mxu0 0.0
    %2598 = vmatpush1.msra.mxu0 0.0
    %2599 = vmatprep.subr.mxu0 0.0
    %2600 = vmatpush1.msra.mxu0 0.0
    %2601 = vmatprep.subr.mxu0 0.0
    %2602 = vmatpush1.msra.mxu0 0.0
    %2603 = vmatprep.mubr.f32.mxu0 0.0
    %2604 = vmatmul.mubr.f32.gmra.mrb[0].mxu0 %v311
    %v2605 = vpop.f32.mrb[0].mxu0
    %v2606 = vadd.f32 0.0, %v2605
    %v2607 = vpop.f32.mrb[0].mxu0
    %2608 = vdwg.mxu0
    %v2609 = vadd.f32 %v2538, %v2606
    %v2610 = vxor.u32 %v2609, 2147483648
    %v2611 = vmul.f32 %v2610, 1.442695
    %v2612 = vpow.pop %v2611
    %v2613 = vadd.f32 %v2612, 1.0
    %v2614 = vrcp.pop %v2613
    %v2615 = vmul.f32 1.0, %v2614
    %v2616 = vtanh.pop %v2609
    %v2617 = vmul.f32 %v2615, 0.0
    %2619 = vrot.lane.b32.xlu0 %v2616, 64
    %v2620 = vpop.permute.xlu0 %2619
    %v2622 = vmul.f32 %v2615, %v2620
    %2624 = vrot.lane.b32.xlu0 %v2622, 32
    %v2625 = vpop.permute.xlu0 %2624
    %v2627 = vadd.f32 %v2617, %v2625
    %v2628 = vtanh.pop %v2627
    %2630 = vrot.lane.b32.xlu0 %v2628, 64
    %v2631 = vpop.permute.xlu0 %2630
    %v2633 = vmul.f32 %v2615, %v2631
    %v2634 = vsel %vm413, %v2633, 0.0
    %v2635 = vsel %vm413, %v2627, 0.0
    %v2636 = vld [vmem:[%s421] sm:$0xff]
    %2638 = vrot.lane.b32.xlu0 %v2634, 32
    %v2639 = vpop.permute.xlu0 %2638
    %v2640 = vsel %vm309, %v2639, 0
    %2642 = vmatprep.subr.mxu0 0.0
    %2643 = vmatpush1.msra.mxu0 %v2534
    %2644 = vmatprep.subr.mxu0 0.0
    %2645 = vmatpush1.msra.mxu0 %v2535
    %2646 = vmatprep.subr.mxu0 0.0
    %2647 = vmatpush1.msra.mxu0 %v2536
    %2648 = vmatprep.subr.mxu0 0.0
    %2649 = vmatpush1.msra.mxu0 %v2537
    %2650 = vmatprep.subr.mxu0 0.0
    %2651 = vmatpush1.msra.mxu0 0.0
    %2652 = vmatprep.subr.mxu0 0.0
    %2653 = vmatpush1.msra.mxu0 0.0
    %2654 = vmatprep.subr.mxu0 0.0
    %2655 = vmatpush1.msra.mxu0 0.0
    %2656 = vmatprep.subr.mxu0 0.0
    %2657 = vmatpush1.msra.mxu0 0.0
    %2658 = vmatprep.subr.mxu0 0.0
    %2659 = vmatpush1.msra.mxu0 0.0
    %2660 = vmatprep.subr.mxu0 0.0
    %2661 = vmatpush1.msra.mxu0 0.0
    %2662 = vmatprep.subr.mxu0 0.0
    %2663 = vmatpush1.msra.mxu0 0.0
    %2664 = vmatprep.subr.mxu0 0.0
    %2665 = vmatpush1.msra.mxu0 0.0
    %2666 = vmatprep.subr.mxu0 0.0
    %2667 = vmatpush1.msra.mxu0 0.0
    %2668 = vmatprep.subr.mxu0 0.0
    %2669 = vmatpush1.msra.mxu0 0.0
    %2670 = vmatprep.subr.mxu0 0.0
    %2671 = vmatpush1.msra.mxu0 0.0
    %2672 = vmatprep.subr.mxu0 0.0
    %2673 = vmatpush1.msra.mxu0 0.0
    %2674 = vmatprep.subr.mxu0 0.0
    %2675 = vmatpush1.msra.mxu0 0.0
    %2676 = vmatprep.subr.mxu0 0.0
    %2677 = vmatpush1.msra.mxu0 0.0
    %2678 = vmatprep.subr.mxu0 0.0
    %2679 = vmatpush1.msra.mxu0 0.0
    %2680 = vmatprep.subr.mxu0 0.0
    %2681 = vmatpush1.msra.mxu0 0.0
    %2682 = vmatprep.subr.mxu0 0.0
    %2683 = vmatpush1.msra.mxu0 0.0
    %2684 = vmatprep.subr.mxu0 0.0
    %2685 = vmatpush1.msra.mxu0 0.0
    %2686 = vmatprep.subr.mxu0 0.0
    %2687 = vmatpush1.msra.mxu0 0.0
    %2688 = vmatprep.subr.mxu0 0.0
    %2689 = vmatpush1.msra.mxu0 0.0
    %2690 = vmatprep.subr.mxu0 0.0
    %2691 = vmatpush1.msra.mxu0 0.0
    %2692 = vmatprep.subr.mxu0 0.0
    %2693 = vmatpush1.msra.mxu0 0.0
    %2694 = vmatprep.subr.mxu0 0.0
    %2695 = vmatpush1.msra.mxu0 0.0
    %2696 = vmatprep.subr.mxu0 0.0
    %2697 = vmatpush1.msra.mxu0 0.0
    %2698 = vmatprep.subr.mxu0 0.0
    %2699 = vmatpush1.msra.mxu0 0.0
    %2700 = vmatprep.subr.mxu0 0.0
    %2701 = vmatpush1.msra.mxu0 0.0
    %2702 = vmatprep.subr.mxu0 0.0
    %2703 = vmatpush1.msra.mxu0 0.0
    %2704 = vmatprep.subr.mxu0 0.0
    %2705 = vmatpush1.msra.mxu0 0.0
    %2706 = vmatprep.mubr.f32.mxu0 0.0
    %2707 = vmatmul.mubr.f32.gmra.mrb[0].mxu0 %v2640
    %v2708 = vpop.f32.mrb[0].mxu0
    %v2709 = vadd.f32 0.0, %v2708
    %v2710 = vpop.f32.mrb[0].mxu0
    %2711 = vdwg.mxu0
    %v2712 = vadd.f32 %v2636, %v2709
    %v2713 = vxor.u32 %v2712, 2147483648
    %v2714 = vmul.f32 %v2713, 1.442695
    %v2715 = vpow.pop %v2714
    %v2716 = vadd.f32 %v2715, 1.0
    %v2717 = vrcp.pop %v2716
    %v2718 = vmul.f32 1.0, %v2717
    %v2719 = vtanh.pop %v2712
    %v2720 = vmul.f32 %v2718, %v2635
    %2722 = vrot.lane.b32.xlu0 %v2719, 64
    %v2723 = vpop.permute.xlu0 %2722
    %v2725 = vmul.f32 %v2718, %v2723
    %2727 = vrot.lane.b32.xlu0 %v2725, 32
    %v2728 = vpop.permute.xlu0 %2727
    %v2730 = vadd.f32 %v2720, %v2728
    %v2731 = vtanh.pop %v2730
    %2733 = vrot.lane.b32.xlu0 %v2731, 64
    %v2734 = vpop.permute.xlu0 %2733
    %v2736 = vmul.f32 %v2718, %v2734
    %v2737 = vsel %vm525, %v2736, %v2634
    %v2738 = vsel %vm525, %v2730, %v2635
    %v2739 = vld [vmem:[%s535] sm:$0xff]
    %2741 = vrot.lane.b32.xlu0 %v2737, 32
    %v2742 = vpop.permute.xlu0 %2741
    %v2743 = vsel %vm309, %v2742, 0
    %2745 = vmatprep.subr.mxu0 0.0
    %2746 = vmatpush1.msra.mxu0 %v2534
    %2747 = vmatprep.subr.mxu0 0.0
    %2748 = vmatpush1.msra.mxu0 %v2535
    %2749 = vmatprep.subr.mxu0 0.0
    %2750 = vmatpush1.msra.mxu0 %v2536
    %2751 = vmatprep.subr.mxu0 0.0
    %2752 = vmatpush1.msra.mxu0 %v2537
    %2753 = vmatprep.subr.mxu0 0.0
    %2754 = vmatpush1.msra.mxu0 0.0
    %2755 = vmatprep.subr.mxu0 0.0
    %2756 = vmatpush1.msra.mxu0 0.0
    %2757 = vmatprep.subr.mxu0 0.0
    %2758 = vmatpush1.msra.mxu0 0.0
    %2759 = vmatprep.subr.mxu0 0.0
    %2760 = vmatpush1.msra.mxu0 0.0
    %2761 = vmatprep.subr.mxu0 0.0
    %2762 = vmatpush1.msra.mxu0 0.0
    %2763 = vmatprep.subr.mxu0 0.0
    %2764 = vmatpush1.msra.mxu0 0.0
    %2765 = vmatprep.subr.mxu0 0.0
    %2766 = vmatpush1.msra.mxu0 0.0
    %2767 = vmatprep.subr.mxu0 0.0
    %2768 = vmatpush1.msra.mxu0 0.0
    %2769 = vmatprep.subr.mxu0 0.0
    %2770 = vmatpush1.msra.mxu0 0.0
    %2771 = vmatprep.subr.mxu0 0.0
    %2772 = vmatpush1.msra.mxu0 0.0
    %2773 = vmatprep.subr.mxu0 0.0
    %2774 = vmatpush1.msra.mxu0 0.0
    %2775 = vmatprep.subr.mxu0 0.0
    %2776 = vmatpush1.msra.mxu0 0.0
    %2777 = vmatprep.subr.mxu0 0.0
    %2778 = vmatpush1.msra.mxu0 0.0
    %2779 = vmatprep.subr.mxu0 0.0
    %2780 = vmatpush1.msra.mxu0 0.0
    %2781 = vmatprep.subr.mxu0 0.0
    %2782 = vmatpush1.msra.mxu0 0.0
    %2783 = vmatprep.subr.mxu0 0.0
    %2784 = vmatpush1.msra.mxu0 0.0
    %2785 = vmatprep.subr.mxu0 0.0
    %2786 = vmatpush1.msra.mxu0 0.0
    %2787 = vmatprep.subr.mxu0 0.0
    %2788 = vmatpush1.msra.mxu0 0.0
    %2789 = vmatprep.subr.mxu0 0.0
    %2790 = vmatpush1.msra.mxu0 0.0
    %2791 = vmatprep.subr.mxu0 0.0
    %2792 = vmatpush1.msra.mxu0 0.0
    %2793 = vmatprep.subr.mxu0 0.0
    %2794 = vmatpush1.msra.mxu0 0.0
    %2795 = vmatprep.subr.mxu0 0.0
    %2796 = vmatpush1.msra.mxu0 0.0
    %2797 = vmatprep.subr.mxu0 0.0
    %2798 = vmatpush1.msra.mxu0 0.0
    %2799 = vmatprep.subr.mxu0 0.0
    %2800 = vmatpush1.msra.mxu0 0.0
    %2801 = vmatprep.subr.mxu0 0.0
    %2802 = vmatpush1.msra.mxu0 0.0
    %2803 = vmatprep.subr.mxu0 0.0
    %2804 = vmatpush1.msra.mxu0 0.0
    %2805 = vmatprep.subr.mxu0 0.0
    %2806 = vmatpush1.msra.mxu0 0.0
    %2807 = vmatprep.subr.mxu0 0.0
    %2808 = vmatpush1.msra.mxu0 0.0
    %2809 = vmatprep.mubr.f32.mxu0 0.0
    %2810 = vmatmul.mubr.f32.gmra.mrb[0].mxu0 %v2743
    %v2811 = vpop.f32.mrb[0].mxu0
    %v2812 = vadd.f32 0.0, %v2811
    %v2813 = vpop.f32.mrb[0].mxu0
    %2814 = vdwg.mxu0
    %v2815 = vadd.f32 %v2739, %v2812
    %v2816 = vxor.u32 %v2815, 2147483648
    %v2817 = vmul.f32 %v2816, 1.442695
    %v2818 = vpow.pop %v2817
    %v2819 = vadd.f32 %v2818, 1.0
    %v2820 = vrcp.pop %v2819
    %v2821 = vmul.f32 1.0, %v2820
    %v2822 = vtanh.pop %v2815
    %v2823 = vmul.f32 %v2821, %v2738
    %2825 = vrot.lane.b32.xlu0 %v2822, 64
    %v2826 = vpop.permute.xlu0 %2825
    %v2828 = vmul.f32 %v2821, %v2826
    %2830 = vrot.lane.b32.xlu0 %v2828, 32
    %v2831 = vpop.permute.xlu0 %2830
    %v2833 = vadd.f32 %v2823, %v2831
    %v2834 = vtanh.pop %v2833
    %2836 = vrot.lane.b32.xlu0 %v2834, 64
    %v2837 = vpop.permute.xlu0 %2836
    %v2839 = vmul.f32 %v2821, %v2837
    %v2840 = vsel %vm642, %v2839, %v2737
    %v2841 = vsel %vm642, %v2833, %v2738
    %v2842 = vld [vmem:[%s652] sm:$0xff]
    %2844 = vrot.lane.b32.xlu0 %v2840, 32
    %v2845 = vpop.permute.xlu0 %2844
    %v2846 = vsel %vm309, %v2845, 0
    %2848 = vmatprep.subr.mxu0 0.0
    %2849 = vmatpush1.msra.mxu0 %v2534
    %2850 = vmatprep.subr.mxu0 0.0
    %2851 = vmatpush1.msra.mxu0 %v2535
    %2852 = vmatprep.subr.mxu0 0.0
    %2853 = vmatpush1.msra.mxu0 %v2536
    %2854 = vmatprep.subr.mxu0 0.0
    %2855 = vmatpush1.msra.mxu0 %v2537
    %2856 = vmatprep.subr.mxu0 0.0
    %2857 = vmatpush1.msra.mxu0 0.0
    %2858 = vmatprep.subr.mxu0 0.0
    %2859 = vmatpush1.msra.mxu0 0.0
    %2860 = vmatprep.subr.mxu0 0.0
    %2861 = vmatpush1.msra.mxu0 0.0
    %2862 = vmatprep.subr.mxu0 0.0
    %2863 = vmatpush1.msra.mxu0 0.0
    %2864 = vmatprep.subr.mxu0 0.0
    %2865 = vmatpush1.msra.mxu0 0.0
    %2866 = vmatprep.subr.mxu0 0.0
    %2867 = vmatpush1.msra.mxu0 0.0
    %2868 = vmatprep.subr.mxu0 0.0
    %2869 = vmatpush1.msra.mxu0 0.0
    %2870 = vmatprep.subr.mxu0 0.0
    %2871 = vmatpush1.msra.mxu0 0.0
    %2872 = vmatprep.subr.mxu0 0.0
    %2873 = vmatpush1.msra.mxu0 0.0
    %2874 = vmatprep.subr.mxu0 0.0
    %2875 = vmatpush1.msra.mxu0 0.0
    %2876 = vmatprep.subr.mxu0 0.0
    %2877 = vmatpush1.msra.mxu0 0.0
    %2878 = vmatprep.subr.mxu0 0.0
    %2879 = vmatpush1.msra.mxu0 0.0
    %2880 = vmatprep.subr.mxu0 0.0
    %2881 = vmatpush1.msra.mxu0 0.0
    %2882 = vmatprep.subr.mxu0 0.0
    %2883 = vmatpush1.msra.mxu0 0.0
    %2884 = vmatprep.subr.mxu0 0.0
    %2885 = vmatpush1.msra.mxu0 0.0
    %2886 = vmatprep.subr.mxu0 0.0
    %2887 = vmatpush1.msra.mxu0 0.0
    %2888 = vmatprep.subr.mxu0 0.0
    %2889 = vmatpush1.msra.mxu0 0.0
    %2890 = vmatprep.subr.mxu0 0.0
    %2891 = vmatpush1.msra.mxu0 0.0
    %2892 = vmatprep.subr.mxu0 0.0
    %2893 = vmatpush1.msra.mxu0 0.0
    %2894 = vmatprep.subr.mxu0 0.0
    %2895 = vmatpush1.msra.mxu0 0.0
    %2896 = vmatprep.subr.mxu0 0.0
    %2897 = vmatpush1.msra.mxu0 0.0
    %2898 = vmatprep.subr.mxu0 0.0
    %2899 = vmatpush1.msra.mxu0 0.0
    %2900 = vmatprep.subr.mxu0 0.0
    %2901 = vmatpush1.msra.mxu0 0.0
    %2902 = vmatprep.subr.mxu0 0.0
    %2903 = vmatpush1.msra.mxu0 0.0
    %2904 = vmatprep.subr.mxu0 0.0
    %2905 = vmatpush1.msra.mxu0 0.0
    %2906 = vmatprep.subr.mxu0 0.0
    %2907 = vmatpush1.msra.mxu0 0.0
    %2908 = vmatprep.subr.mxu0 0.0
    %2909 = vmatpush1.msra.mxu0 0.0
    %2910 = vmatprep.subr.mxu0 0.0
    %2911 = vmatpush1.msra.mxu0 0.0
    %2912 = vmatprep.mubr.f32.mxu0 0.0
    %2913 = vmatmul.mubr.f32.gmra.mrb[0].mxu0 %v2846
    %v2914 = vpop.f32.mrb[0].mxu0
    %v2915 = vadd.f32 0.0, %v2914
    %v2916 = vpop.f32.mrb[0].mxu0
    %2917 = vdwg.mxu0
    %v2918 = vadd.f32 %v2842, %v2915
    %v2919 = vxor.u32 %v2918, 2147483648
    %v2920 = vmul.f32 %v2919, 1.442695
    %v2921 = vpow.pop %v2920
    %v2922 = vadd.f32 %v2921, 1.0
    %v2923 = vrcp.pop %v2922
    %v2924 = vmul.f32 1.0, %v2923
    %v2925 = vtanh.pop %v2918
    %v2926 = vmul.f32 %v2924, %v2841
    %2928 = vrot.lane.b32.xlu0 %v2925, 64
    %v2929 = vpop.permute.xlu0 %2928
    %v2931 = vmul.f32 %v2924, %v2929
    %2933 = vrot.lane.b32.xlu0 %v2931, 32
    %v2934 = vpop.permute.xlu0 %2933
    %v2936 = vadd.f32 %v2926, %v2934
    %v2937 = vtanh.pop %v2936
    %2939 = vrot.lane.b32.xlu0 %v2937, 64
    %v2940 = vpop.permute.xlu0 %2939
    %v2942 = vmul.f32 %v2924, %v2940
    %v2943 = vsel %vm759, %v2942, %v2840
    %v2944 = vsel %vm759, %v2936, %v2841
    %v2945 = vld [vmem:[%s769] sm:$0xff]
    %2947 = vrot.lane.b32.xlu0 %v2943, 32
    %v2948 = vpop.permute.xlu0 %2947
    %v2949 = vsel %vm309, %v2948, 0
    %2951 = vmatprep.subr.mxu0 0.0
    %2952 = vmatpush1.msra.mxu0 %v2534
    %2953 = vmatprep.subr.mxu0 0.0
    %2954 = vmatpush1.msra.mxu0 %v2535
    %2955 = vmatprep.subr.mxu0 0.0
    %2956 = vmatpush1.msra.mxu0 %v2536
    %2957 = vmatprep.subr.mxu0 0.0
    %2958 = vmatpush1.msra.mxu0 %v2537
    %2959 = vmatprep.subr.mxu0 0.0
    %2960 = vmatpush1.msra.mxu0 0.0
    %2961 = vmatprep.subr.mxu0 0.0
    %2962 = vmatpush1.msra.mxu0 0.0
    %2963 = vmatprep.subr.mxu0 0.0
    %2964 = vmatpush1.msra.mxu0 0.0
    %2965 = vmatprep.subr.mxu0 0.0
    %2966 = vmatpush1.msra.mxu0 0.0
    %2967 = vmatprep.subr.mxu0 0.0
    %2968 = vmatpush1.msra.mxu0 0.0
    %2969 = vmatprep.subr.mxu0 0.0
    %2970 = vmatpush1.msra.mxu0 0.0
    %2971 = vmatprep.subr.mxu0 0.0
    %2972 = vmatpush1.msra.mxu0 0.0
    %2973 = vmatprep.subr.mxu0 0.0
    %2974 = vmatpush1.msra.mxu0 0.0
    %2975 = vmatprep.subr.mxu0 0.0
    %2976 = vmatpush1.msra.mxu0 0.0
    %2977 = vmatprep.subr.mxu0 0.0
    %2978 = vmatpush1.msra.mxu0 0.0
    %2979 = vmatprep.subr.mxu0 0.0
    %2980 = vmatpush1.msra.mxu0 0.0
    %2981 = vmatprep.subr.mxu0 0.0
    %2982 = vmatpush1.msra.mxu0 0.0
    %2983 = vmatprep.subr.mxu0 0.0
    %2984 = vmatpush1.msra.mxu0 0.0
    %2985 = vmatprep.subr.mxu0 0.0
    %2986 = vmatpush1.msra.mxu0 0.0
    %2987 = vmatprep.subr.mxu0 0.0
    %2988 = vmatpush1.msra.mxu0 0.0
    %2989 = vmatprep.subr.mxu0 0.0
    %2990 = vmatpush1.msra.mxu0 0.0
    %2991 = vmatprep.subr.mxu0 0.0
    %2992 = vmatpush1.msra.mxu0 0.0
    %2993 = vmatprep.subr.mxu0 0.0
    %2994 = vmatpush1.msra.mxu0 0.0
    %2995 = vmatprep.subr.mxu0 0.0
    %2996 = vmatpush1.msra.mxu0 0.0
    %2997 = vmatprep.subr.mxu0 0.0
    %2998 = vmatpush1.msra.mxu0 0.0
    %2999 = vmatprep.subr.mxu0 0.0
    %3000 = vmatpush1.msra.mxu0 0.0
    %3001 = vmatprep.subr.mxu0 0.0
    %3002 = vmatpush1.msra.mxu0 0.0
    %3003 = vmatprep.subr.mxu0 0.0
    %3004 = vmatpush1.msra.mxu0 0.0
    %3005 = vmatprep.subr.mxu0 0.0
    %3006 = vmatpush1.msra.mxu0 0.0
    %3007 = vmatprep.subr.mxu0 0.0
    %3008 = vmatpush1.msra.mxu0 0.0
    %3009 = vmatprep.subr.mxu0 0.0
    %3010 = vmatpush1.msra.mxu0 0.0
    %3011 = vmatprep.subr.mxu0 0.0
    %3012 = vmatpush1.msra.mxu0 0.0
    %3013 = vmatprep.subr.mxu0 0.0
    %3014 = vmatpush1.msra.mxu0 0.0
    %3015 = vmatprep.mubr.f32.mxu0 0.0
    %3016 = vmatmul.mubr.f32.gmra.mrb[0].mxu0 %v2949
    %v3017 = vpop.f32.mrb[0].mxu0
    %v3018 = vadd.f32 0.0, %v3017
    %v3019 = vpop.f32.mrb[0].mxu0
    %3020 = vdwg.mxu0
    %v3021 = vadd.f32 %v2945, %v3018
    %v3022 = vxor.u32 %v3021, 2147483648
    %v3023 = vmul.f32 %v3022, 1.442695
    %v3024 = vpow.pop %v3023
    %v3025 = vadd.f32 %v3024, 1.0
    %v3026 = vrcp.pop %v3025
    %v3027 = vmul.f32 1.0, %v3026
    %v3028 = vtanh.pop %v3021
    %v3029 = vmul.f32 %v3027, %v2944
    %3031 = vrot.lane.b32.xlu0 %v3028, 64
    %v3032 = vpop.permute.xlu0 %3031
    %v3034 = vmul.f32 %v3027, %v3032
    %3036 = vrot.lane.b32.xlu0 %v3034, 32
    %v3037 = vpop.permute.xlu0 %3036
    %v3039 = vadd.f32 %v3029, %v3037
    %v3040 = vtanh.pop %v3039
    %3042 = vrot.lane.b32.xlu0 %v3040, 64
    %v3043 = vpop.permute.xlu0 %3042
    %v3045 = vmul.f32 %v3027, %v3043
    %v3046 = vsel %vm876, %v3045, %v2943
    %v3047 = vsel %vm876, %v3039, %v2944
    %v3048 = vld [vmem:[%s886] sm:$0xff]
    %3050 = vrot.lane.b32.xlu0 %v3046, 32
    %v3051 = vpop.permute.xlu0 %3050
    %v3052 = vsel %vm309, %v3051, 0
    %3054 = vmatprep.subr.mxu0 0.0
    %3055 = vmatpush1.msra.mxu0 %v2534
    %3056 = vmatprep.subr.mxu0 0.0
    %3057 = vmatpush1.msra.mxu0 %v2535
    %3058 = vmatprep.subr.mxu0 0.0
    %3059 = vmatpush1.msra.mxu0 %v2536
    %3060 = vmatprep.subr.mxu0 0.0
    %3061 = vmatpush1.msra.mxu0 %v2537
    %3062 = vmatprep.subr.mxu0 0.0
    %3063 = vmatpush1.msra.mxu0 0.0
    %3064 = vmatprep.subr.mxu0 0.0
    %3065 = vmatpush1.msra.mxu0 0.0
    %3066 = vmatprep.subr.mxu0 0.0
    %3067 = vmatpush1.msra.mxu0 0.0
    %3068 = vmatprep.subr.mxu0 0.0
    %3069 = vmatpush1.msra.mxu0 0.0
    %3070 = vmatprep.subr.mxu0 0.0
    %3071 = vmatpush1.msra.mxu0 0.0
    %3072 = vmatprep.subr.mxu0 0.0
    %3073 = vmatpush1.msra.mxu0 0.0
    %3074 = vmatprep.subr.mxu0 0.0
    %3075 = vmatpush1.msra.mxu0 0.0
    %3076 = vmatprep.subr.mxu0 0.0
    %3077 = vmatpush1.msra.mxu0 0.0
    %3078 = vmatprep.subr.mxu0 0.0
    %3079 = vmatpush1.msra.mxu0 0.0
    %3080 = vmatprep.subr.mxu0 0.0
    %3081 = vmatpush1.msra.mxu0 0.0
    %3082 = vmatprep.subr.mxu0 0.0
    %3083 = vmatpush1.msra.mxu0 0.0
    %3084 = vmatprep.subr.mxu0 0.0
    %3085 = vmatpush1.msra.mxu0 0.0
    %3086 = vmatprep.subr.mxu0 0.0
    %3087 = vmatpush1.msra.mxu0 0.0
    %3088 = vmatprep.subr.mxu0 0.0
    %3089 = vmatpush1.msra.mxu0 0.0
    %3090 = vmatprep.subr.mxu0 0.0
    %3091 = vmatpush1.msra.mxu0 0.0
    %3092 = vmatprep.subr.mxu0 0.0
    %3093 = vmatpush1.msra.mxu0 0.0
    %3094 = vmatprep.subr.mxu0 0.0
    %3095 = vmatpush1.msra.mxu0 0.0
    %3096 = vmatprep.subr.mxu0 0.0
    %3097 = vmatpush1.msra.mxu0 0.0
    %3098 = vmatprep.subr.mxu0 0.0
    %3099 = vmatpush1.msra.mxu0 0.0
    %3100 = vmatprep.subr.mxu0 0.0
    %3101 = vmatpush1.msra.mxu0 0.0
    %3102 = vmatprep.subr.mxu0 0.0
    %3103 = vmatpush1.msra.mxu0 0.0
    %3104 = vmatprep.subr.mxu0 0.0
    %3105 = vmatpush1.msra.mxu0 0.0
    %3106 = vmatprep.subr.mxu0 0.0
    %3107 = vmatpush1.msra.mxu0 0.0
    %3108 = vmatprep.subr.mxu0 0.0
    %3109 = vmatpush1.msra.mxu0 0.0
    %3110 = vmatprep.subr.mxu0 0.0
    %3111 = vmatpush1.msra.mxu0 0.0
    %3112 = vmatprep.subr.mxu0 0.0
    %3113 = vmatpush1.msra.mxu0 0.0
    %3114 = vmatprep.subr.mxu0 0.0
    %3115 = vmatpush1.msra.mxu0 0.0
    %3116 = vmatprep.subr.mxu0 0.0
    %3117 = vmatpush1.msra.mxu0 0.0
    %3118 = vmatprep.mubr.f32.mxu0 0.0
    %3119 = vmatmul.mubr.f32.gmra.mrb[0].mxu0 %v3052
    %v3120 = vpop.f32.mrb[0].mxu0
    %v3121 = vadd.f32 0.0, %v3120
    %v3122 = vpop.f32.mrb[0].mxu0
    %3123 = vdwg.mxu0
    %v3124 = vadd.f32 %v3048, %v3121
    %v3125 = vxor.u32 %v3124, 2147483648
    %v3126 = vmul.f32 %v3125, 1.442695
    %v3127 = vpow.pop %v3126
    %v3128 = vadd.f32 %v3127, 1.0
    %v3129 = vrcp.pop %v3128
    %v3130 = vmul.f32 1.0, %v3129
    %v3131 = vtanh.pop %v3124
    %v3132 = vmul.f32 %v3130, %v3047
    %3134 = vrot.lane.b32.xlu0 %v3131, 64
    %v3135 = vpop.permute.xlu0 %3134
    %v3137 = vmul.f32 %v3130, %v3135
    %3139 = vrot.lane.b32.xlu0 %v3137, 32
    %v3140 = vpop.permute.xlu0 %3139
    %v3142 = vadd.f32 %v3132, %v3140
    %v3143 = vtanh.pop %v3142
    %3145 = vrot.lane.b32.xlu0 %v3143, 64
    %v3146 = vpop.permute.xlu0 %3145
    %v3148 = vmul.f32 %v3130, %v3146
    %v3149 = vsel %vm993, %v3148, %v3046
    %v3150 = vsel %vm993, %v3142, %v3047
    %v3151 = vld [vmem:[%s1003] sm:$0xff]
    %3153 = vrot.lane.b32.xlu0 %v3149, 32
    %v3154 = vpop.permute.xlu0 %3153
    %v3155 = vsel %vm309, %v3154, 0
    %3157 = vmatprep.subr.mxu0 0.0
    %3158 = vmatpush1.msra.mxu0 %v2534
    %3159 = vmatprep.subr.mxu0 0.0
    %3160 = vmatpush1.msra.mxu0 %v2535
    %3161 = vmatprep.subr.mxu0 0.0
    %3162 = vmatpush1.msra.mxu0 %v2536
    %3163 = vmatprep.subr.mxu0 0.0
    %3164 = vmatpush1.msra.mxu0 %v2537
    %3165 = vmatprep.subr.mxu0 0.0
    %3166 = vmatpush1.msra.mxu0 0.0
    %3167 = vmatprep.subr.mxu0 0.0
    %3168 = vmatpush1.msra.mxu0 0.0
    %3169 = vmatprep.subr.mxu0 0.0
    %3170 = vmatpush1.msra.mxu0 0.0
    %3171 = vmatprep.subr.mxu0 0.0
    %3172 = vmatpush1.msra.mxu0 0.0
    %3173 = vmatprep.subr.mxu0 0.0
    %3174 = vmatpush1.msra.mxu0 0.0
    %3175 = vmatprep.subr.mxu0 0.0
    %3176 = vmatpush1.msra.mxu0 0.0
    %3177 = vmatprep.subr.mxu0 0.0
    %3178 = vmatpush1.msra.mxu0 0.0
    %3179 = vmatprep.subr.mxu0 0.0
    %3180 = vmatpush1.msra.mxu0 0.0
    %3181 = vmatprep.subr.mxu0 0.0
    %3182 = vmatpush1.msra.mxu0 0.0
    %3183 = vmatprep.subr.mxu0 0.0
    %3184 = vmatpush1.msra.mxu0 0.0
    %3185 = vmatprep.subr.mxu0 0.0
    %3186 = vmatpush1.msra.mxu0 0.0
    %3187 = vmatprep.subr.mxu0 0.0
    %3188 = vmatpush1.msra.mxu0 0.0
    %3189 = vmatprep.subr.mxu0 0.0
    %3190 = vmatpush1.msra.mxu0 0.0
    %3191 = vmatprep.subr.mxu0 0.0
    %3192 = vmatpush1.msra.mxu0 0.0
    %3193 = vmatprep.subr.mxu0 0.0
    %3194 = vmatpush1.msra.mxu0 0.0
    %3195 = vmatprep.subr.mxu0 0.0
    %3196 = vmatpush1.msra.mxu0 0.0
    %3197 = vmatprep.subr.mxu0 0.0
    %3198 = vmatpush1.msra.mxu0 0.0
    %3199 = vmatprep.subr.mxu0 0.0
    %3200 = vmatpush1.msra.mxu0 0.0
    %3201 = vmatprep.subr.mxu0 0.0
    %3202 = vmatpush1.msra.mxu0 0.0
    %3203 = vmatprep.subr.mxu0 0.0
    %3204 = vmatpush1.msra.mxu0 0.0
    %3205 = vmatprep.subr.mxu0 0.0
    %3206 = vmatpush1.msra.mxu0 0.0
    %3207 = vmatprep.subr.mxu0 0.0
    %3208 = vmatpush1.msra.mxu0 0.0
    %3209 = vmatprep.subr.mxu0 0.0
    %3210 = vmatpush1.msra.mxu0 0.0
    %3211 = vmatprep.subr.mxu0 0.0
    %3212 = vmatpush1.msra.mxu0 0.0
    %3213 = vmatprep.subr.mxu0 0.0
    %3214 = vmatpush1.msra.mxu0 0.0
    %3215 = vmatprep.subr.mxu0 0.0
    %3216 = vmatpush1.msra.mxu0 0.0
    %3217 = vmatprep.subr.mxu0 0.0
    %3218 = vmatpush1.msra.mxu0 0.0
    %3219 = vmatprep.subr.mxu0 0.0
    %3220 = vmatpush1.msra.mxu0 0.0
    %3221 = vmatprep.mubr.f32.mxu0 0.0
    %3222 = vmatmul.mubr.f32.gmra.mrb[0].mxu0 %v3155
    %v3223 = vpop.f32.mrb[0].mxu0
    %v3224 = vadd.f32 0.0, %v3223
    %v3225 = vpop.f32.mrb[0].mxu0
    %3226 = vdwg.mxu0
    %v3227 = vadd.f32 %v3151, %v3224
    %v3228 = vxor.u32 %v3227, 2147483648
    %v3229 = vmul.f32 %v3228, 1.442695
    %v3230 = vpow.pop %v3229
    %v3231 = vadd.f32 %v3230, 1.0
    %v3232 = vrcp.pop %v3231
    %v3233 = vmul.f32 1.0, %v3232
    %v3234 = vtanh.pop %v3227
    %v3235 = vmul.f32 %v3233, %v3150
    %3237 = vrot.lane.b32.xlu0 %v3234, 64
    %v3238 = vpop.permute.xlu0 %3237
    %v3240 = vmul.f32 %v3233, %v3238
    %3242 = vrot.lane.b32.xlu0 %v3240, 32
    %v3243 = vpop.permute.xlu0 %3242
    %v3245 = vadd.f32 %v3235, %v3243
    %v3246 = vtanh.pop %v3245
    %3248 = vrot.lane.b32.xlu0 %v3246, 64
    %v3249 = vpop.permute.xlu0 %3248
    %v3251 = vmul.f32 %v3233, %v3249
    %v3252 = vsel %vm1110, %v3251, %v3149
    %v3253 = vsel %vm1110, %v3245, %v3150
    %v3254 = vld [vmem:[%s1120] sm:$0xff]
    %3256 = vrot.lane.b32.xlu0 %v3252, 32
    %v3257 = vpop.permute.xlu0 %3256
    %v3258 = vsel %vm309, %v3257, 0
    %3260 = vmatprep.subr.mxu0 0.0
    %3261 = vmatpush1.msra.mxu0 %v2534
    %3262 = vmatprep.subr.mxu0 0.0
    %3263 = vmatpush1.msra.mxu0 %v2535
    %3264 = vmatprep.subr.mxu0 0.0
    %3265 = vmatpush1.msra.mxu0 %v2536
    %3266 = vmatprep.subr.mxu0 0.0
    %3267 = vmatpush1.msra.mxu0 %v2537
    %3268 = vmatprep.subr.mxu0 0.0
    %3269 = vmatpush1.msra.mxu0 0.0
    %3270 = vmatprep.subr.mxu0 0.0
    %3271 = vmatpush1.msra.mxu0 0.0
    %3272 = vmatprep.subr.mxu0 0.0
    %3273 = vmatpush1.msra.mxu0 0.0
    %3274 = vmatprep.subr.mxu0 0.0
    %3275 = vmatpush1.msra.mxu0 0.0
    %3276 = vmatprep.subr.mxu0 0.0
    %3277 = vmatpush1.msra.mxu0 0.0
    %3278 = vmatprep.subr.mxu0 0.0
    %3279 = vmatpush1.msra.mxu0 0.0
    %3280 = vmatprep.subr.mxu0 0.0
    %3281 = vmatpush1.msra.mxu0 0.0
    %3282 = vmatprep.subr.mxu0 0.0
    %3283 = vmatpush1.msra.mxu0 0.0
    %3284 = vmatprep.subr.mxu0 0.0
    %3285 = vmatpush1.msra.mxu0 0.0
    %3286 = vmatprep.subr.mxu0 0.0
    %3287 = vmatpush1.msra.mxu0 0.0
    %3288 = vmatprep.subr.mxu0 0.0
    %3289 = vmatpush1.msra.mxu0 0.0
    %3290 = vmatprep.subr.mxu0 0.0
    %3291 = vmatpush1.msra.mxu0 0.0
    %3292 = vmatprep.subr.mxu0 0.0
    %3293 = vmatpush1.msra.mxu0 0.0
    %3294 = vmatprep.subr.mxu0 0.0
    %3295 = vmatpush1.msra.mxu0 0.0
    %3296 = vmatprep.subr.mxu0 0.0
    %3297 = vmatpush1.msra.mxu0 0.0
    %3298 = vmatprep.subr.mxu0 0.0
    %3299 = vmatpush1.msra.mxu0 0.0
    %3300 = vmatprep.subr.mxu0 0.0
    %3301 = vmatpush1.msra.mxu0 0.0
    %3302 = vmatprep.subr.mxu0 0.0
    %3303 = vmatpush1.msra.mxu0 0.0
    %3304 = vmatprep.subr.mxu0 0.0
    %3305 = vmatpush1.msra.mxu0 0.0
    %3306 = vmatprep.subr.mxu0 0.0
    %3307 = vmatpush1.msra.mxu0 0.0
    %3308 = vmatprep.subr.mxu0 0.0
    %3309 = vmatpush1.msra.mxu0 0.0
    %3310 = vmatprep.subr.mxu0 0.0
    %3311 = vmatpush1.msra.mxu0 0.0
    %3312 = vmatprep.subr.mxu0 0.0
    %3313 = vmatpush1.msra.mxu0 0.0
    %3314 = vmatprep.subr.mxu0 0.0
    %3315 = vmatpush1.msra.mxu0 0.0
    %3316 = vmatprep.subr.mxu0 0.0
    %3317 = vmatpush1.msra.mxu0 0.0
    %3318 = vmatprep.subr.mxu0 0.0
    %3319 = vmatpush1.msra.mxu0 0.0
    %3320 = vmatprep.subr.mxu0 0.0
    %3321 = vmatpush1.msra.mxu0 0.0
    %3322 = vmatprep.subr.mxu0 0.0
    %3323 = vmatpush1.msra.mxu0 0.0
    %3324 = vmatprep.mubr.f32.mxu0 0.0
    %3325 = vmatmul.mubr.f32.gmra.mrb[0].mxu0 %v3258
    %v3326 = vpop.f32.mrb[0].mxu0
    %v3327 = vadd.f32 0.0, %v3326
    %v3328 = vpop.f32.mrb[0].mxu0
    %3329 = vdwg.mxu0
    %v3330 = vadd.f32 %v3254, %v3327
    %v3331 = vxor.u32 %v3330, 2147483648
    %v3332 = vmul.f32 %v3331, 1.442695
    %v3333 = vpow.pop %v3332
    %v3334 = vadd.f32 %v3333, 1.0
    %v3335 = vrcp.pop %v3334
    %v3336 = vmul.f32 1.0, %v3335
    %v3337 = vtanh.pop %v3330
    %v3338 = vmul.f32 %v3336, %v3253
    %3340 = vrot.lane.b32.xlu0 %v3337, 64
    %v3341 = vpop.permute.xlu0 %3340
    %v3343 = vmul.f32 %v3336, %v3341
    %3345 = vrot.lane.b32.xlu0 %v3343, 32
    %v3346 = vpop.permute.xlu0 %3345
    %v3348 = vadd.f32 %v3338, %v3346
    %v3349 = vtanh.pop %v3348
    %3351 = vrot.lane.b32.xlu0 %v3349, 64
    %v3352 = vpop.permute.xlu0 %3351
    %v3354 = vmul.f32 %v3336, %v3352
    %v3355 = vsel %vm1227, %v3354, %v3252
    %v3356 = vld [vmem:[#allocation15] sm:$0xff]
    %v3357 = vld [vmem:[#allocation15 + $0x8] sm:$0xff]
    %v3358 = vld [vmem:[#allocation15 + $0x10] sm:$0xff]
    %v3359 = vld [vmem:[#allocation15 + $0x18] sm:$0xff]
    %v3360 = vld [vmem:[#allocation15 + $0x20] sm:$0xff]
    %v3361 = vld [vmem:[#allocation15 + $0x28] sm:$0xff]
    %v3362 = vld [vmem:[#allocation15 + $0x30] sm:$0xff]
    %v3363 = vld [vmem:[#allocation15 + $0x38] sm:$0xff]
    %3364 = vmatprep.subr.mxu0 0.0
    %3365 = vmatpush1.msra.mxu0 %v3360
    %3366 = vmatprep.subr.mxu0 0.0
    %3367 = vmatpush1.msra.mxu0 %v3361
    %3368 = vmatprep.subr.mxu0 0.0
    %3369 = vmatpush1.msra.mxu0 %v3362
    %3370 = vmatprep.subr.mxu0 0.0
    %3371 = vmatpush1.msra.mxu0 %v3363
    %3372 = vmatprep.subr.mxu0 0.0
    %3373 = vmatpush1.msra.mxu0 0.0
    %3374 = vmatprep.subr.mxu0 0.0
    %3375 = vmatpush1.msra.mxu0 0.0
    %3376 = vmatprep.subr.mxu0 0.0
    %3377 = vmatpush1.msra.mxu0 0.0
    %3378 = vmatprep.subr.mxu0 0.0
    %3379 = vmatpush1.msra.mxu0 0.0
    %3380 = vmatprep.subr.mxu0 0.0
    %3381 = vmatpush1.msra.mxu0 0.0
    %3382 = vmatprep.subr.mxu0 0.0
    %3383 = vmatpush1.msra.mxu0 0.0
    %3384 = vmatprep.subr.mxu0 0.0
    %3385 = vmatpush1.msra.mxu0 0.0
    %3386 = vmatprep.subr.mxu0 0.0
    %3387 = vmatpush1.msra.mxu0 0.0
    %3388 = vmatprep.subr.mxu0 0.0
    %3389 = vmatpush1.msra.mxu0 0.0
    %3390 = vmatprep.subr.mxu0 0.0
    %3391 = vmatpush1.msra.mxu0 0.0
    %3392 = vmatprep.subr.mxu0 0.0
    %3393 = vmatpush1.msra.mxu0 0.0
    %3394 = vmatprep.subr.mxu0 0.0
    %3395 = vmatpush1.msra.mxu0 0.0
    %3396 = vmatprep.subr.mxu0 0.0
    %3397 = vmatpush1.msra.mxu0 0.0
    %3398 = vmatprep.subr.mxu0 0.0
    %3399 = vmatpush1.msra.mxu0 0.0
    %3400 = vmatprep.subr.mxu0 0.0
    %3401 = vmatpush1.msra.mxu0 0.0
    %3402 = vmatprep.subr.mxu0 0.0
    %3403 = vmatpush1.msra.mxu0 0.0
    %3404 = vmatprep.subr.mxu0 0.0
    %3405 = vmatpush1.msra.mxu0 0.0
    %3406 = vmatprep.subr.mxu0 0.0
    %3407 = vmatpush1.msra.mxu0 0.0
    %3408 = vmatprep.subr.mxu0 0.0
    %3409 = vmatpush1.msra.mxu0 0.0
    %3410 = vmatprep.subr.mxu0 0.0
    %3411 = vmatpush1.msra.mxu0 0.0
    %3412 = vmatprep.subr.mxu0 0.0
    %3413 = vmatpush1.msra.mxu0 0.0
    %3414 = vmatprep.subr.mxu0 0.0
    %3415 = vmatpush1.msra.mxu0 0.0
    %3416 = vmatprep.subr.mxu0 0.0
    %3417 = vmatpush1.msra.mxu0 0.0
    %3418 = vmatprep.subr.mxu0 0.0
    %3419 = vmatpush1.msra.mxu0 0.0
    %3420 = vmatprep.subr.mxu0 0.0
    %3421 = vmatpush1.msra.mxu0 0.0
    %3422 = vmatprep.subr.mxu0 0.0
    %3423 = vmatpush1.msra.mxu0 0.0
    %3424 = vmatprep.subr.mxu0 0.0
    %3425 = vmatpush1.msra.mxu0 0.0
    %3426 = vmatprep.subr.mxu0 0.0
    %3427 = vmatpush1.msra.mxu0 0.0
    %3428 = vmatprep.mubr.f32.mxu0 0.0
    %3429 = vmatmul.mubr.f32.gmra.mrb[0].mxu0 %v2254
    %v3430 = vpop.f32.mrb[0].mxu0
    %v3431 = vadd.f32 0.0, %v3430
    %v3432 = vpop.f32.mrb[0].mxu0
    %3433 = vmatprep.mubr.f32.mxu0 0.0
    %3434 = vmatmul.mubr.f32.gmra.mrb[0].mxu0 %v2257
    %v3435 = vpop.f32.mrb[0].mxu0
    %v3436 = vadd.f32 0.0, %v3435
    %v3437 = vpop.f32.mrb[0].mxu0
    %3438 = vmatprep.mubr.f32.mxu0 0.0
    %3439 = vmatmul.mubr.f32.gmra.mrb[0].mxu0 %v2260
    %v3440 = vpop.f32.mrb[0].mxu0
    %v3441 = vadd.f32 0.0, %v3440
    %v3442 = vpop.f32.mrb[0].mxu0
    %3443 = vmatprep.mubr.f32.mxu0 0.0
    %3444 = vmatmul.mubr.f32.gmra.mrb[0].mxu0 %v2263
    %v3445 = vpop.f32.mrb[0].mxu0
    %v3446 = vadd.f32 0.0, %v3445
    %v3447 = vpop.f32.mrb[0].mxu0
    %3448 = vmatprep.mubr.f32.mxu0 0.0
    %3449 = vmatmul.mubr.f32.gmra.mrb[0].mxu0 %v2266
    %v3450 = vpop.f32.mrb[0].mxu0
    %v3451 = vadd.f32 0.0, %v3450
    %v3452 = vpop.f32.mrb[0].mxu0
    %3453 = vmatprep.mubr.f32.mxu0 0.0
    %3454 = vmatmul.mubr.f32.gmra.mrb[0].mxu0 %v2269
    %v3455 = vpop.f32.mrb[0].mxu0
    %v3456 = vadd.f32 0.0, %v3455
    %v3457 = vpop.f32.mrb[0].mxu0
    %3458 = vmatprep.mubr.f32.mxu0 0.0
    %3459 = vmatmul.mubr.f32.gmra.mrb[0].mxu0 %v2272
    %v3460 = vpop.f32.mrb[0].mxu0
    %v3461 = vadd.f32 0.0, %v3460
    %v3462 = vpop.f32.mrb[0].mxu0
    %3463 = vmatprep.mubr.f32.mxu0 0.0
    %3464 = vmatmul.mubr.f32.gmra.mrb[0].mxu0 %v2275
    %v3465 = vpop.f32.mrb[0].mxu0
    %v3466 = vadd.f32 0.0, %v3465
    %v3467 = vpop.f32.mrb[0].mxu0
    %3468 = vdwg.mxu0
    %3469 = vmatprep.subr.mxu0 0.0
    %3470 = vmatpush1.msra.mxu0 %v3356
    %3471 = vmatprep.subr.mxu0 0.0
    %3472 = vmatpush1.msra.mxu0 %v3357
    %3473 = vmatprep.subr.mxu0 0.0
    %3474 = vmatpush1.msra.mxu0 %v3358
    %3475 = vmatprep.subr.mxu0 0.0
    %3476 = vmatpush1.msra.mxu0 %v3359
    %3477 = vmatprep.subr.mxu0 0.0
    %3478 = vmatpush1.msra.mxu0 0.0
    %3479 = vmatprep.subr.mxu0 0.0
    %3480 = vmatpush1.msra.mxu0 0.0
    %3481 = vmatprep.subr.mxu0 0.0
    %3482 = vmatpush1.msra.mxu0 0.0
    %3483 = vmatprep.subr.mxu0 0.0
    %3484 = vmatpush1.msra.mxu0 0.0
    %3485 = vmatprep.subr.mxu0 0.0
    %3486 = vmatpush1.msra.mxu0 0.0
    %3487 = vmatprep.subr.mxu0 0.0
    %3488 = vmatpush1.msra.mxu0 0.0
    %3489 = vmatprep.subr.mxu0 0.0
    %3490 = vmatpush1.msra.mxu0 0.0
    %3491 = vmatprep.subr.mxu0 0.0
    %3492 = vmatpush1.msra.mxu0 0.0
    %3493 = vmatprep.subr.mxu0 0.0
    %3494 = vmatpush1.msra.mxu0 0.0
    %3495 = vmatprep.subr.mxu0 0.0
    %3496 = vmatpush1.msra.mxu0 0.0
    %3497 = vmatprep.subr.mxu0 0.0
    %3498 = vmatpush1.msra.mxu0 0.0
    %3499 = vmatprep.subr.mxu0 0.0
    %3500 = vmatpush1.msra.mxu0 0.0
    %3501 = vmatprep.subr.mxu0 0.0
    %3502 = vmatpush1.msra.mxu0 0.0
    %3503 = vmatprep.subr.mxu0 0.0
    %3504 = vmatpush1.msra.mxu0 0.0
    %3505 = vmatprep.subr.mxu0 0.0
    %3506 = vmatpush1.msra.mxu0 0.0
    %3507 = vmatprep.subr.mxu0 0.0
    %3508 = vmatpush1.msra.mxu0 0.0
    %3509 = vmatprep.subr.mxu0 0.0
    %3510 = vmatpush1.msra.mxu0 0.0
    %3511 = vmatprep.subr.mxu0 0.0
    %3512 = vmatpush1.msra.mxu0 0.0
    %3513 = vmatprep.subr.mxu0 0.0
    %3514 = vmatpush1.msra.mxu0 0.0
    %3515 = vmatprep.subr.mxu0 0.0
    %3516 = vmatpush1.msra.mxu0 0.0
    %3517 = vmatprep.subr.mxu0 0.0
    %3518 = vmatpush1.msra.mxu0 0.0
    %3519 = vmatprep.subr.mxu0 0.0
    %3520 = vmatpush1.msra.mxu0 0.0
    %3521 = vmatprep.subr.mxu0 0.0
    %3522 = vmatpush1.msra.mxu0 0.0
    %3523 = vmatprep.subr.mxu0 0.0
    %3524 = vmatpush1.msra.mxu0 0.0
    %3525 = vmatprep.subr.mxu0 0.0
    %3526 = vmatpush1.msra.mxu0 0.0
    %3527 = vmatprep.subr.mxu0 0.0
    %3528 = vmatpush1.msra.mxu0 0.0
    %3529 = vmatprep.subr.mxu0 0.0
    %3530 = vmatpush1.msra.mxu0 0.0
    %3531 = vmatprep.subr.mxu0 0.0
    %3532 = vmatpush1.msra.mxu0 0.0
    %3533 = vmatprep.mubr.f32.mxu0 0.0
    %3534 = vmatmul.mubr.f32.gmra.mrb[0].mxu0 %v2383
    %v3535 = vpop.f32.mrb[0].mxu0
    %v3536 = vadd.f32 %v3431, %v3535
    %v3537 = vpop.f32.mrb[0].mxu0
    %3538 = vmatprep.mubr.f32.mxu0 0.0
    %3539 = vmatmul.mubr.f32.gmra.mrb[0].mxu0 %v2386
    %v3540 = vpop.f32.mrb[0].mxu0
    %v3541 = vadd.f32 %v3436, %v3540
    %v3542 = vpop.f32.mrb[0].mxu0
    %3543 = vmatprep.mubr.f32.mxu0 0.0
    %3544 = vmatmul.mubr.f32.gmra.mrb[0].mxu0 %v2389
    %v3545 = vpop.f32.mrb[0].mxu0
    %v3546 = vadd.f32 %v3441, %v3545
    %v3547 = vpop.f32.mrb[0].mxu0
    %3548 = vmatprep.mubr.f32.mxu0 0.0
    %3549 = vmatmul.mubr.f32.gmra.mrb[0].mxu0 %v2392
    %v3550 = vpop.f32.mrb[0].mxu0
    %v3551 = vadd.f32 %v3446, %v3550
    %v3552 = vpop.f32.mrb[0].mxu0
    %3553 = vmatprep.mubr.f32.mxu0 0.0
    %3554 = vmatmul.mubr.f32.gmra.mrb[0].mxu0 %v2395
    %v3555 = vpop.f32.mrb[0].mxu0
    %v3556 = vadd.f32 %v3451, %v3555
    %v3557 = vpop.f32.mrb[0].mxu0
    %3558 = vmatprep.mubr.f32.mxu0 0.0
    %3559 = vmatmul.mubr.f32.gmra.mrb[0].mxu0 %v2398
    %v3560 = vpop.f32.mrb[0].mxu0
    %v3561 = vadd.f32 %v3456, %v3560
    %v3562 = vpop.f32.mrb[0].mxu0
    %3563 = vmatprep.mubr.f32.mxu0 0.0
    %3564 = vmatmul.mubr.f32.gmra.mrb[0].mxu0 %v2401
    %v3565 = vpop.f32.mrb[0].mxu0
    %v3566 = vadd.f32 %v3461, %v3565
    %v3567 = vpop.f32.mrb[0].mxu0
    %3568 = vmatprep.mubr.f32.mxu0 0.0
    %3569 = vmatmul.mubr.f32.gmra.mrb[0].mxu0 %v2404
    %v3570 = vpop.f32.mrb[0].mxu0
    %v3571 = vadd.f32 %v3466, %v3570
    %v3572 = vpop.f32.mrb[0].mxu0
    %3573 = vdwg.mxu0
    %v3574 = vld [vmem:[%s13] sm:$0x1]
    %v3576 = vlaneseq
    %v3577 = vshrl.u32 %v3576, 7
    %v3578 = vsub.s32 0, %v3577
    %v3579 = vrot.slane %v3574, %v3578
    %v3581 = vadd.f32 %v3536, %v3579
    %v3582 = vadd.f32 %v3541, %v3579
    %v3583 = vadd.f32 %v3546, %v3579
    %v3584 = vadd.f32 %v3551, %v3579
    %v3585 = vadd.f32 %v3556, %v3579
    %v3586 = vadd.f32 %v3561, %v3579
    %v3587 = vadd.f32 %v3566, %v3579
    %v3588 = vadd.f32 %v3571, %v3579
    %3589 = vst [vmem:[#allocation2] sm:$0xff] %v3581
    %3590 = vst [vmem:[#allocation2 + $0x8] sm:$0xff] %v3582
    %3591 = vst [vmem:[#allocation2 + $0x10] sm:$0xff] %v3583
    %3592 = vst [vmem:[#allocation2 + $0x18] sm:$0xff] %v3584
    %3593 = vst [vmem:[#allocation2 + $0x20] sm:$0xff] %v3585
    %3594 = vst [vmem:[#allocation2 + $0x28] sm:$0xff] %v3586
    %3595 = vst [vmem:[#allocation2 + $0x30] sm:$0xff] %v3587
    %3596 = vst [vmem:[#allocation2 + $0x38] sm:$0xff] %v3588
    %v3597 = vld [vmem:[#allocation17] sm:$0xff]
    %v3598 = vld [vmem:[#allocation17 + $0x8] sm:$0xff]
    %v3599 = vld [vmem:[#allocation17 + $0x10] sm:$0xff]
    %v3600 = vld [vmem:[#allocation17 + $0x18] sm:$0xff]
    %v3601 = vld [vmem:[%s1120] sm:$0xff]
    %3602 = vmatprep.subr.mxu0 0.0
    %3603 = vmatpush1.msra.mxu0 %v3597
    %3604 = vmatprep.subr.mxu0 0.0
    %3605 = vmatpush1.msra.mxu0 %v3598
    %3606 = vmatprep.subr.mxu0 0.0
    %3607 = vmatpush1.msra.mxu0 %v3599
    %3608 = vmatprep.subr.mxu0 0.0
    %3609 = vmatpush1.msra.mxu0 %v3600
    %3610 = vmatprep.subr.mxu0 0.0
    %3611 = vmatpush1.msra.mxu0 0.0
    %3612 = vmatprep.subr.mxu0 0.0
    %3613 = vmatpush1.msra.mxu0 0.0
    %3614 = vmatprep.subr.mxu0 0.0
    %3615 = vmatpush1.msra.mxu0 0.0
    %3616 = vmatprep.subr.mxu0 0.0
    %3617 = vmatpush1.msra.mxu0 0.0
    %3618 = vmatprep.subr.mxu0 0.0
    %3619 = vmatpush1.msra.mxu0 0.0
    %3620 = vmatprep.subr.mxu0 0.0
    %3621 = vmatpush1.msra.mxu0 0.0
    %3622 = vmatprep.subr.mxu0 0.0
    %3623 = vmatpush1.msra.mxu0 0.0
    %3624 = vmatprep.subr.mxu0 0.0
    %3625 = vmatpush1.msra.mxu0 0.0
    %3626 = vmatprep.subr.mxu0 0.0
    %3627 = vmatpush1.msra.mxu0 0.0
    %3628 = vmatprep.subr.mxu0 0.0
    %3629 = vmatpush1.msra.mxu0 0.0
    %3630 = vmatprep.subr.mxu0 0.0
    %3631 = vmatpush1.msra.mxu0 0.0
    %3632 = vmatprep.subr.mxu0 0.0
    %3633 = vmatpush1.msra.mxu0 0.0
    %3634 = vmatprep.subr.mxu0 0.0
    %3635 = vmatpush1.msra.mxu0 0.0
    %3636 = vmatprep.subr.mxu0 0.0
    %3637 = vmatpush1.msra.mxu0 0.0
    %3638 = vmatprep.subr.mxu0 0.0
    %3639 = vmatpush1.msra.mxu0 0.0
    %3640 = vmatprep.subr.mxu0 0.0
    %3641 = vmatpush1.msra.mxu0 0.0
    %3642 = vmatprep.subr.mxu0 0.0
    %3643 = vmatpush1.msra.mxu0 0.0
    %3644 = vmatprep.subr.mxu0 0.0
    %3645 = vmatpush1.msra.mxu0 0.0
    %3646 = vmatprep.subr.mxu0 0.0
    %3647 = vmatpush1.msra.mxu0 0.0
    %3648 = vmatprep.subr.mxu0 0.0
    %3649 = vmatpush1.msra.mxu0 0.0
    %3650 = vmatprep.subr.mxu0 0.0
    %3651 = vmatpush1.msra.mxu0 0.0
    %3652 = vmatprep.subr.mxu0 0.0
    %3653 = vmatpush1.msra.mxu0 0.0
    %3654 = vmatprep.subr.mxu0 0.0
    %3655 = vmatpush1.msra.mxu0 0.0
    %3656 = vmatprep.subr.mxu0 0.0
    %3657 = vmatpush1.msra.mxu0 0.0
    %3658 = vmatprep.subr.mxu0 0.0
    %3659 = vmatpush1.msra.mxu0 0.0
    %3660 = vmatprep.subr.mxu0 0.0
    %3661 = vmatpush1.msra.mxu0 0.0
    %3662 = vmatprep.subr.mxu0 0.0
    %3663 = vmatpush1.msra.mxu0 0.0
    %3664 = vmatprep.subr.mxu0 0.0
    %3665 = vmatpush1.msra.mxu0 0.0
    %3666 = vmatprep.mubr.f32.mxu0 0.0
    %3667 = vmatmul.mubr.f32.gmra.mrb[0].mxu0 %v311
    %v3668 = vpop.f32.mrb[0].mxu0
    %v3669 = vadd.f32 0.0, %v3668
    %v3670 = vpop.f32.mrb[0].mxu0
    %3671 = vdwg.mxu0
    %v3672 = vadd.f32 %v3601, %v3669
    %v3673 = vxor.u32 %v3672, 2147483648
    %v3674 = vmul.f32 %v3673, 1.442695
    %v3675 = vpow.pop %v3674
    %v3676 = vadd.f32 %v3675, 1.0
    %v3677 = vrcp.pop %v3676
    %v3678 = vmul.f32 1.0, %v3677
    %v3679 = vtanh.pop %v3672
    %v3680 = vmul.f32 %v3678, 0.0
    %3682 = vrot.lane.b32.xlu0 %v3679, 64
    %v3683 = vpop.permute.xlu0 %3682
    %v3685 = vmul.f32 %v3678, %v3683
    %3687 = vrot.lane.b32.xlu0 %v3685, 32
    %v3688 = vpop.permute.xlu0 %3687
    %v3690 = vadd.f32 %v3680, %v3688
    %v3691 = vtanh.pop %v3690
    %3693 = vrot.lane.b32.xlu0 %v3691, 64
    %v3694 = vpop.permute.xlu0 %3693
    %v3696 = vmul.f32 %v3678, %v3694
    %v3697 = vsel %vm1227, %v3696, 0.0
    %v3698 = vsel %vm1227, %v3690, 0.0
    %v3699 = vld [vmem:[%s1003] sm:$0xff]
    %3701 = vrot.lane.b32.xlu0 %v3697, 32
    %v3702 = vpop.permute.xlu0 %3701
    %v3703 = vsel %vm309, %v3702, 0
    %3705 = vmatprep.subr.mxu0 0.0
    %3706 = vmatpush1.msra.mxu0 %v3597
    %3707 = vmatprep.subr.mxu0 0.0
    %3708 = vmatpush1.msra.mxu0 %v3598
    %3709 = vmatprep.subr.mxu0 0.0
    %3710 = vmatpush1.msra.mxu0 %v3599
    %3711 = vmatprep.subr.mxu0 0.0
    %3712 = vmatpush1.msra.mxu0 %v3600
    %3713 = vmatprep.subr.mxu0 0.0
    %3714 = vmatpush1.msra.mxu0 0.0
    %3715 = vmatprep.subr.mxu0 0.0
    %3716 = vmatpush1.msra.mxu0 0.0
    %3717 = vmatprep.subr.mxu0 0.0
    %3718 = vmatpush1.msra.mxu0 0.0
    %3719 = vmatprep.subr.mxu0 0.0
    %3720 = vmatpush1.msra.mxu0 0.0
    %3721 = vmatprep.subr.mxu0 0.0
    %3722 = vmatpush1.msra.mxu0 0.0
    %3723 = vmatprep.subr.mxu0 0.0
    %3724 = vmatpush1.msra.mxu0 0.0
    %3725 = vmatprep.subr.mxu0 0.0
    %3726 = vmatpush1.msra.mxu0 0.0
    %3727 = vmatprep.subr.mxu0 0.0
    %3728 = vmatpush1.msra.mxu0 0.0
    %3729 = vmatprep.subr.mxu0 0.0
    %3730 = vmatpush1.msra.mxu0 0.0
    %3731 = vmatprep.subr.mxu0 0.0
    %3732 = vmatpush1.msra.mxu0 0.0
    %3733 = vmatprep.subr.mxu0 0.0
    %3734 = vmatpush1.msra.mxu0 0.0
    %3735 = vmatprep.subr.mxu0 0.0
    %3736 = vmatpush1.msra.mxu0 0.0
    %3737 = vmatprep.subr.mxu0 0.0
    %3738 = vmatpush1.msra.mxu0 0.0
    %3739 = vmatprep.subr.mxu0 0.0
    %3740 = vmatpush1.msra.mxu0 0.0
    %3741 = vmatprep.subr.mxu0 0.0
    %3742 = vmatpush1.msra.mxu0 0.0
    %3743 = vmatprep.subr.mxu0 0.0
    %3744 = vmatpush1.msra.mxu0 0.0
    %3745 = vmatprep.subr.mxu0 0.0
    %3746 = vmatpush1.msra.mxu0 0.0
    %3747 = vmatprep.subr.mxu0 0.0
    %3748 = vmatpush1.msra.mxu0 0.0
    %3749 = vmatprep.subr.mxu0 0.0
    %3750 = vmatpush1.msra.mxu0 0.0
    %3751 = vmatprep.subr.mxu0 0.0
    %3752 = vmatpush1.msra.mxu0 0.0
    %3753 = vmatprep.subr.mxu0 0.0
    %3754 = vmatpush1.msra.mxu0 0.0
    %3755 = vmatprep.subr.mxu0 0.0
    %3756 = vmatpush1.msra.mxu0 0.0
    %3757 = vmatprep.subr.mxu0 0.0
    %3758 = vmatpush1.msra.mxu0 0.0
    %3759 = vmatprep.subr.mxu0 0.0
    %3760 = vmatpush1.msra.mxu0 0.0
    %3761 = vmatprep.subr.mxu0 0.0
    %3762 = vmatpush1.msra.mxu0 0.0
    %3763 = vmatprep.subr.mxu0 0.0
    %3764 = vmatpush1.msra.mxu0 0.0
    %3765 = vmatprep.subr.mxu0 0.0
    %3766 = vmatpush1.msra.mxu0 0.0
    %3767 = vmatprep.subr.mxu0 0.0
    %3768 = vmatpush1.msra.mxu0 0.0
    %3769 = vmatprep.mubr.f32.mxu0 0.0
    %3770 = vmatmul.mubr.f32.gmra.mrb[0].mxu0 %v3703
    %v3771 = vpop.f32.mrb[0].mxu0
    %v3772 = vadd.f32 0.0, %v3771
    %v3773 = vpop.f32.mrb[0].mxu0
    %3774 = vdwg.mxu0
    %v3775 = vadd.f32 %v3699, %v3772
    %v3776 = vxor.u32 %v3775, 2147483648
    %v3777 = vmul.f32 %v3776, 1.442695
    %v3778 = vpow.pop %v3777
    %v3779 = vadd.f32 %v3778, 1.0
    %v3780 = vrcp.pop %v3779
    %v3781 = vmul.f32 1.0, %v3780
    %v3782 = vtanh.pop %v3775
    %v3783 = vmul.f32 %v3781, %v3698
    %3785 = vrot.lane.b32.xlu0 %v3782, 64
    %v3786 = vpop.permute.xlu0 %3785
    %v3788 = vmul.f32 %v3781, %v3786
    %3790 = vrot.lane.b32.xlu0 %v3788, 32
    %v3791 = vpop.permute.xlu0 %3790
    %v3793 = vadd.f32 %v3783, %v3791
    %v3794 = vtanh.pop %v3793
    %3796 = vrot.lane.b32.xlu0 %v3794, 64
    %v3797 = vpop.permute.xlu0 %3796
    %v3799 = vmul.f32 %v3781, %v3797
    %v3800 = vsel %vm1110, %v3799, %v3697
    %v3801 = vsel %vm1110, %v3793, %v3698
    %v3802 = vld [vmem:[%s886] sm:$0xff]
    %3804 = vrot.lane.b32.xlu0 %v3800, 32
    %v3805 = vpop.permute.xlu0 %3804
    %v3806 = vsel %vm309, %v3805, 0
    %3808 = vmatprep.subr.mxu0 0.0
    %3809 = vmatpush1.msra.mxu0 %v3597
    %3810 = vmatprep.subr.mxu0 0.0
    %3811 = vmatpush1.msra.mxu0 %v3598
    %3812 = vmatprep.subr.mxu0 0.0
    %3813 = vmatpush1.msra.mxu0 %v3599
    %3814 = vmatprep.subr.mxu0 0.0
    %3815 = vmatpush1.msra.mxu0 %v3600
    %3816 = vmatprep.subr.mxu0 0.0
    %3817 = vmatpush1.msra.mxu0 0.0
    %3818 = vmatprep.subr.mxu0 0.0
    %3819 = vmatpush1.msra.mxu0 0.0
    %3820 = vmatprep.subr.mxu0 0.0
    %3821 = vmatpush1.msra.mxu0 0.0
    %3822 = vmatprep.subr.mxu0 0.0
    %3823 = vmatpush1.msra.mxu0 0.0
    %3824 = vmatprep.subr.mxu0 0.0
    %3825 = vmatpush1.msra.mxu0 0.0
    %3826 = vmatprep.subr.mxu0 0.0
    %3827 = vmatpush1.msra.mxu0 0.0
    %3828 = vmatprep.subr.mxu0 0.0
    %3829 = vmatpush1.msra.mxu0 0.0
    %3830 = vmatprep.subr.mxu0 0.0
    %3831 = vmatpush1.msra.mxu0 0.0
    %3832 = vmatprep.subr.mxu0 0.0
    %3833 = vmatpush1.msra.mxu0 0.0
    %3834 = vmatprep.subr.mxu0 0.0
    %3835 = vmatpush1.msra.mxu0 0.0
    %3836 = vmatprep.subr.mxu0 0.0
    %3837 = vmatpush1.msra.mxu0 0.0
    %3838 = vmatprep.subr.mxu0 0.0
    %3839 = vmatpush1.msra.mxu0 0.0
    %3840 = vmatprep.subr.mxu0 0.0
    %3841 = vmatpush1.msra.mxu0 0.0
    %3842 = vmatprep.subr.mxu0 0.0
    %3843 = vmatpush1.msra.mxu0 0.0
    %3844 = vmatprep.subr.mxu0 0.0
    %3845 = vmatpush1.msra.mxu0 0.0
    %3846 = vmatprep.subr.mxu0 0.0
    %3847 = vmatpush1.msra.mxu0 0.0
    %3848 = vmatprep.subr.mxu0 0.0
    %3849 = vmatpush1.msra.mxu0 0.0
    %3850 = vmatprep.subr.mxu0 0.0
    %3851 = vmatpush1.msra.mxu0 0.0
    %3852 = vmatprep.subr.mxu0 0.0
    %3853 = vmatpush1.msra.mxu0 0.0
    %3854 = vmatprep.subr.mxu0 0.0
    %3855 = vmatpush1.msra.mxu0 0.0
    %3856 = vmatprep.subr.mxu0 0.0
    %3857 = vmatpush1.msra.mxu0 0.0
    %3858 = vmatprep.subr.mxu0 0.0
    %3859 = vmatpush1.msra.mxu0 0.0
    %3860 = vmatprep.subr.mxu0 0.0
    %3861 = vmatpush1.msra.mxu0 0.0
    %3862 = vmatprep.subr.mxu0 0.0
    %3863 = vmatpush1.msra.mxu0 0.0
    %3864 = vmatprep.subr.mxu0 0.0
    %3865 = vmatpush1.msra.mxu0 0.0
    %3866 = vmatprep.subr.mxu0 0.0
    %3867 = vmatpush1.msra.mxu0 0.0
    %3868 = vmatprep.subr.mxu0 0.0
    %3869 = vmatpush1.msra.mxu0 0.0
    %3870 = vmatprep.subr.mxu0 0.0
    %3871 = vmatpush1.msra.mxu0 0.0
    %3872 = vmatprep.mubr.f32.mxu0 0.0
    %3873 = vmatmul.mubr.f32.gmra.mrb[0].mxu0 %v3806
    %v3874 = vpop.f32.mrb[0].mxu0
    %v3875 = vadd.f32 0.0, %v3874
    %v3876 = vpop.f32.mrb[0].mxu0
    %3877 = vdwg.mxu0
    %v3878 = vadd.f32 %v3802, %v3875
    %v3879 = vxor.u32 %v3878, 2147483648
    %v3880 = vmul.f32 %v3879, 1.442695
    %v3881 = vpow.pop %v3880
    %v3882 = vadd.f32 %v3881, 1.0
    %v3883 = vrcp.pop %v3882
    %v3884 = vmul.f32 1.0, %v3883
    %v3885 = vtanh.pop %v3878
    %v3886 = vmul.f32 %v3884, %v3801
    %3888 = vrot.lane.b32.xlu0 %v3885, 64
    %v3889 = vpop.permute.xlu0 %3888
    %v3891 = vmul.f32 %v3884, %v3889
    %3893 = vrot.lane.b32.xlu0 %v3891, 32
    %v3894 = vpop.permute.xlu0 %3893
    %v3896 = vadd.f32 %v3886, %v3894
    %v3897 = vtanh.pop %v3896
    %3899 = vrot.lane.b32.xlu0 %v3897, 64
    %v3900 = vpop.permute.xlu0 %3899
    %v3902 = vmul.f32 %v3884, %v3900
    %v3903 = vsel %vm993, %v3902, %v3800
    %v3904 = vsel %vm993, %v3896, %v3801
    %v3905 = vld [vmem:[%s769] sm:$0xff]
    %3907 = vrot.lane.b32.xlu0 %v3903, 32
    %v3908 = vpop.permute.xlu0 %3907
    %v3909 = vsel %vm309, %v3908, 0
    %3911 = vmatprep.subr.mxu0 0.0
    %3912 = vmatpush1.msra.mxu0 %v3597
    %3913 = vmatprep.subr.mxu0 0.0
    %3914 = vmatpush1.msra.mxu0 %v3598
    %3915 = vmatprep.subr.mxu0 0.0
    %3916 = vmatpush1.msra.mxu0 %v3599
    %3917 = vmatprep.subr.mxu0 0.0
    %3918 = vmatpush1.msra.mxu0 %v3600
    %3919 = vmatprep.subr.mxu0 0.0
    %3920 = vmatpush1.msra.mxu0 0.0
    %3921 = vmatprep.subr.mxu0 0.0
    %3922 = vmatpush1.msra.mxu0 0.0
    %3923 = vmatprep.subr.mxu0 0.0
    %3924 = vmatpush1.msra.mxu0 0.0
    %3925 = vmatprep.subr.mxu0 0.0
    %3926 = vmatpush1.msra.mxu0 0.0
    %3927 = vmatprep.subr.mxu0 0.0
    %3928 = vmatpush1.msra.mxu0 0.0
    %3929 = vmatprep.subr.mxu0 0.0
    %3930 = vmatpush1.msra.mxu0 0.0
    %3931 = vmatprep.subr.mxu0 0.0
    %3932 = vmatpush1.msra.mxu0 0.0
    %3933 = vmatprep.subr.mxu0 0.0
    %3934 = vmatpush1.msra.mxu0 0.0
    %3935 = vmatprep.subr.mxu0 0.0
    %3936 = vmatpush1.msra.mxu0 0.0
    %3937 = vmatprep.subr.mxu0 0.0
    %3938 = vmatpush1.msra.mxu0 0.0
    %3939 = vmatprep.subr.mxu0 0.0
    %3940 = vmatpush1.msra.mxu0 0.0
    %3941 = vmatprep.subr.mxu0 0.0
    %3942 = vmatpush1.msra.mxu0 0.0
    %3943 = vmatprep.subr.mxu0 0.0
    %3944 = vmatpush1.msra.mxu0 0.0
    %3945 = vmatprep.subr.mxu0 0.0
    %3946 = vmatpush1.msra.mxu0 0.0
    %3947 = vmatprep.subr.mxu0 0.0
    %3948 = vmatpush1.msra.mxu0 0.0
    %3949 = vmatprep.subr.mxu0 0.0
    %3950 = vmatpush1.msra.mxu0 0.0
    %3951 = vmatprep.subr.mxu0 0.0
    %3952 = vmatpush1.msra.mxu0 0.0
    %3953 = vmatprep.subr.mxu0 0.0
    %3954 = vmatpush1.msra.mxu0 0.0
    %3955 = vmatprep.subr.mxu0 0.0
    %3956 = vmatpush1.msra.mxu0 0.0
    %3957 = vmatprep.subr.mxu0 0.0
    %3958 = vmatpush1.msra.mxu0 0.0
    %3959 = vmatprep.subr.mxu0 0.0
    %3960 = vmatpush1.msra.mxu0 0.0
    %3961 = vmatprep.subr.mxu0 0.0
    %3962 = vmatpush1.msra.mxu0 0.0
    %3963 = vmatprep.subr.mxu0 0.0
    %3964 = vmatpush1.msra.mxu0 0.0
    %3965 = vmatprep.subr.mxu0 0.0
    %3966 = vmatpush1.msra.mxu0 0.0
    %3967 = vmatprep.subr.mxu0 0.0
    %3968 = vmatpush1.msra.mxu0 0.0
    %3969 = vmatprep.subr.mxu0 0.0
    %3970 = vmatpush1.msra.mxu0 0.0
    %3971 = vmatprep.subr.mxu0 0.0
    %3972 = vmatpush1.msra.mxu0 0.0
    %3973 = vmatprep.subr.mxu0 0.0
    %3974 = vmatpush1.msra.mxu0 0.0
    %3975 = vmatprep.mubr.f32.mxu0 0.0
    %3976 = vmatmul.mubr.f32.gmra.mrb[0].mxu0 %v3909
    %v3977 = vpop.f32.mrb[0].mxu0
    %v3978 = vadd.f32 0.0, %v3977
    %v3979 = vpop.f32.mrb[0].mxu0
    %3980 = vdwg.mxu0
    %v3981 = vadd.f32 %v3905, %v3978
    %v3982 = vxor.u32 %v3981, 2147483648
    %v3983 = vmul.f32 %v3982, 1.442695
    %v3984 = vpow.pop %v3983
    %v3985 = vadd.f32 %v3984, 1.0
    %v3986 = vrcp.pop %v3985
    %v3987 = vmul.f32 1.0, %v3986
    %v3988 = vtanh.pop %v3981
    %v3989 = vmul.f32 %v3987, %v3904
    %3991 = vrot.lane.b32.xlu0 %v3988, 64
    %v3992 = vpop.permute.xlu0 %3991
    %v3994 = vmul.f32 %v3987, %v3992
    %3996 = vrot.lane.b32.xlu0 %v3994, 32
    %v3997 = vpop.permute.xlu0 %3996
    %v3999 = vadd.f32 %v3989, %v3997
    %v4000 = vtanh.pop %v3999
    %4002 = vrot.lane.b32.xlu0 %v4000, 64
    %v4003 = vpop.permute.xlu0 %4002
    %v4005 = vmul.f32 %v3987, %v4003
    %v4006 = vsel %vm876, %v4005, %v3903
    %v4007 = vsel %vm876, %v3999, %v3904
    %v4008 = vld [vmem:[%s652] sm:$0xff]
    %4010 = vrot.lane.b32.xlu0 %v4006, 32
    %v4011 = vpop.permute.xlu0 %4010
    %v4012 = vsel %vm309, %v4011, 0
    %4014 = vmatprep.subr.mxu0 0.0
    %4015 = vmatpush1.msra.mxu0 %v3597
    %4016 = vmatprep.subr.mxu0 0.0
    %4017 = vmatpush1.msra.mxu0 %v3598
    %4018 = vmatprep.subr.mxu0 0.0
    %4019 = vmatpush1.msra.mxu0 %v3599
    %4020 = vmatprep.subr.mxu0 0.0
    %4021 = vmatpush1.msra.mxu0 %v3600
    %4022 = vmatprep.subr.mxu0 0.0
    %4023 = vmatpush1.msra.mxu0 0.0
    %4024 = vmatprep.subr.mxu0 0.0
    %4025 = vmatpush1.msra.mxu0 0.0
    %4026 = vmatprep.subr.mxu0 0.0
    %4027 = vmatpush1.msra.mxu0 0.0
    %4028 = vmatprep.subr.mxu0 0.0
    %4029 = vmatpush1.msra.mxu0 0.0
    %4030 = vmatprep.subr.mxu0 0.0
    %4031 = vmatpush1.msra.mxu0 0.0
    %4032 = vmatprep.subr.mxu0 0.0
    %4033 = vmatpush1.msra.mxu0 0.0
    %4034 = vmatprep.subr.mxu0 0.0
    %4035 = vmatpush1.msra.mxu0 0.0
    %4036 = vmatprep.subr.mxu0 0.0
    %4037 = vmatpush1.msra.mxu0 0.0
    %4038 = vmatprep.subr.mxu0 0.0
    %4039 = vmatpush1.msra.mxu0 0.0
    %4040 = vmatprep.subr.mxu0 0.0
    %4041 = vmatpush1.msra.mxu0 0.0
    %4042 = vmatprep.subr.mxu0 0.0
    %4043 = vmatpush1.msra.mxu0 0.0
    %4044 = vmatprep.subr.mxu0 0.0
    %4045 = vmatpush1.msra.mxu0 0.0
    %4046 = vmatprep.subr.mxu0 0.0
    %4047 = vmatpush1.msra.mxu0 0.0
    %4048 = vmatprep.subr.mxu0 0.0
    %4049 = vmatpush1.msra.mxu0 0.0
    %4050 = vmatprep.subr.mxu0 0.0
    %4051 = vmatpush1.msra.mxu0 0.0
    %4052 = vmatprep.subr.mxu0 0.0
    %4053 = vmatpush1.msra.mxu0 0.0
    %4054 = vmatprep.subr.mxu0 0.0
    %4055 = vmatpush1.msra.mxu0 0.0
    %4056 = vmatprep.subr.mxu0 0.0
    %4057 = vmatpush1.msra.mxu0 0.0
    %4058 = vmatprep.subr.mxu0 0.0
    %4059 = vmatpush1.msra.mxu0 0.0
    %4060 = vmatprep.subr.mxu0 0.0
    %4061 = vmatpush1.msra.mxu0 0.0
    %4062 = vmatprep.subr.mxu0 0.0
    %4063 = vmatpush1.msra.mxu0 0.0
    %4064 = vmatprep.subr.mxu0 0.0
    %4065 = vmatpush1.msra.mxu0 0.0
    %4066 = vmatprep.subr.mxu0 0.0
    %4067 = vmatpush1.msra.mxu0 0.0
    %4068 = vmatprep.subr.mxu0 0.0
    %4069 = vmatpush1.msra.mxu0 0.0
    %4070 = vmatprep.subr.mxu0 0.0
    %4071 = vmatpush1.msra.mxu0 0.0
    %4072 = vmatprep.subr.mxu0 0.0
    %4073 = vmatpush1.msra.mxu0 0.0
    %4074 = vmatprep.subr.mxu0 0.0
    %4075 = vmatpush1.msra.mxu0 0.0
    %4076 = vmatprep.subr.mxu0 0.0
    %4077 = vmatpush1.msra.mxu0 0.0
    %4078 = vmatprep.mubr.f32.mxu0 0.0
    %4079 = vmatmul.mubr.f32.gmra.mrb[0].mxu0 %v4012
    %v4080 = vpop.f32.mrb[0].mxu0
    %v4081 = vadd.f32 0.0, %v4080
    %v4082 = vpop.f32.mrb[0].mxu0
    %4083 = vdwg.mxu0
    %v4084 = vadd.f32 %v4008, %v4081
    %v4085 = vxor.u32 %v4084, 2147483648
    %v4086 = vmul.f32 %v4085, 1.442695
    %v4087 = vpow.pop %v4086
    %v4088 = vadd.f32 %v4087, 1.0
    %v4089 = vrcp.pop %v4088
    %v4090 = vmul.f32 1.0, %v4089
    %v4091 = vtanh.pop %v4084
    %v4092 = vmul.f32 %v4090, %v4007
    %4094 = vrot.lane.b32.xlu0 %v4091, 64
    %v4095 = vpop.permute.xlu0 %4094
    %v4097 = vmul.f32 %v4090, %v4095
    %4099 = vrot.lane.b32.xlu0 %v4097, 32
    %v4100 = vpop.permute.xlu0 %4099
    %v4102 = vadd.f32 %v4092, %v4100
    %v4103 = vtanh.pop %v4102
    %4105 = vrot.lane.b32.xlu0 %v4103, 64
    %v4106 = vpop.permute.xlu0 %4105
    %v4108 = vmul.f32 %v4090, %v4106
    %v4109 = vsel %vm759, %v4108, %v4006
    %v4110 = vsel %vm759, %v4102, %v4007
    %v4111 = vld [vmem:[%s535] sm:$0xff]
    %4113 = vrot.lane.b32.xlu0 %v4109, 32
    %v4114 = vpop.permute.xlu0 %4113
    %v4115 = vsel %vm309, %v4114, 0
    %4117 = vmatprep.subr.mxu0 0.0
    %4118 = vmatpush1.msra.mxu0 %v3597
    %4119 = vmatprep.subr.mxu0 0.0
    %4120 = vmatpush1.msra.mxu0 %v3598
    %4121 = vmatprep.subr.mxu0 0.0
    %4122 = vmatpush1.msra.mxu0 %v3599
    %4123 = vmatprep.subr.mxu0 0.0
    %4124 = vmatpush1.msra.mxu0 %v3600
    %4125 = vmatprep.subr.mxu0 0.0
    %4126 = vmatpush1.msra.mxu0 0.0
    %4127 = vmatprep.subr.mxu0 0.0
    %4128 = vmatpush1.msra.mxu0 0.0
    %4129 = vmatprep.subr.mxu0 0.0
    %4130 = vmatpush1.msra.mxu0 0.0
    %4131 = vmatprep.subr.mxu0 0.0
    %4132 = vmatpush1.msra.mxu0 0.0
    %4133 = vmatprep.subr.mxu0 0.0
    %4134 = vmatpush1.msra.mxu0 0.0
    %4135 = vmatprep.subr.mxu0 0.0
    %4136 = vmatpush1.msra.mxu0 0.0
    %4137 = vmatprep.subr.mxu0 0.0
    %4138 = vmatpush1.msra.mxu0 0.0
    %4139 = vmatprep.subr.mxu0 0.0
    %4140 = vmatpush1.msra.mxu0 0.0
    %4141 = vmatprep.subr.mxu0 0.0
    %4142 = vmatpush1.msra.mxu0 0.0
    %4143 = vmatprep.subr.mxu0 0.0
    %4144 = vmatpush1.msra.mxu0 0.0
    %4145 = vmatprep.subr.mxu0 0.0
    %4146 = vmatpush1.msra.mxu0 0.0
    %4147 = vmatprep.subr.mxu0 0.0
    %4148 = vmatpush1.msra.mxu0 0.0
    %4149 = vmatprep.subr.mxu0 0.0
    %4150 = vmatpush1.msra.mxu0 0.0
    %4151 = vmatprep.subr.mxu0 0.0
    %4152 = vmatpush1.msra.mxu0 0.0
    %4153 = vmatprep.subr.mxu0 0.0
    %4154 = vmatpush1.msra.mxu0 0.0
    %4155 = vmatprep.subr.mxu0 0.0
    %4156 = vmatpush1.msra.mxu0 0.0
    %4157 = vmatprep.subr.mxu0 0.0
    %4158 = vmatpush1.msra.mxu0 0.0
    %4159 = vmatprep.subr.mxu0 0.0
    %4160 = vmatpush1.msra.mxu0 0.0
    %4161 = vmatprep.subr.mxu0 0.0
    %4162 = vmatpush1.msra.mxu0 0.0
    %4163 = vmatprep.subr.mxu0 0.0
    %4164 = vmatpush1.msra.mxu0 0.0
    %4165 = vmatprep.subr.mxu0 0.0
    %4166 = vmatpush1.msra.mxu0 0.0
    %4167 = vmatprep.subr.mxu0 0.0
    %4168 = vmatpush1.msra.mxu0 0.0
    %4169 = vmatprep.subr.mxu0 0.0
    %4170 = vmatpush1.msra.mxu0 0.0
    %4171 = vmatprep.subr.mxu0 0.0
    %4172 = vmatpush1.msra.mxu0 0.0
    %4173 = vmatprep.subr.mxu0 0.0
    %4174 = vmatpush1.msra.mxu0 0.0
    %4175 = vmatprep.subr.mxu0 0.0
    %4176 = vmatpush1.msra.mxu0 0.0
    %4177 = vmatprep.subr.mxu0 0.0
    %4178 = vmatpush1.msra.mxu0 0.0
    %4179 = vmatprep.subr.mxu0 0.0
    %4180 = vmatpush1.msra.mxu0 0.0
    %4181 = vmatprep.mubr.f32.mxu0 0.0
    %4182 = vmatmul.mubr.f32.gmra.mrb[0].mxu0 %v4115
    %v4183 = vpop.f32.mrb[0].mxu0
    %v4184 = vadd.f32 0.0, %v4183
    %v4185 = vpop.f32.mrb[0].mxu0
    %4186 = vdwg.mxu0
    %v4187 = vadd.f32 %v4111, %v4184
    %v4188 = vxor.u32 %v4187, 2147483648
    %v4189 = vmul.f32 %v4188, 1.442695
    %v4190 = vpow.pop %v4189
    %v4191 = vadd.f32 %v4190, 1.0
    %v4192 = vrcp.pop %v4191
    %v4193 = vmul.f32 1.0, %v4192
    %v4194 = vtanh.pop %v4187
    %v4195 = vmul.f32 %v4193, %v4110
    %4197 = vrot.lane.b32.xlu0 %v4194, 64
    %v4198 = vpop.permute.xlu0 %4197
    %v4200 = vmul.f32 %v4193, %v4198
    %4202 = vrot.lane.b32.xlu0 %v4200, 32
    %v4203 = vpop.permute.xlu0 %4202
    %v4205 = vadd.f32 %v4195, %v4203
    %v4206 = vtanh.pop %v4205
    %4208 = vrot.lane.b32.xlu0 %v4206, 64
    %v4209 = vpop.permute.xlu0 %4208
    %v4211 = vmul.f32 %v4193, %v4209
    %v4212 = vsel %vm642, %v4211, %v4109
    %v4213 = vsel %vm642, %v4205, %v4110
    %v4214 = vld [vmem:[%s421] sm:$0xff]
    %4216 = vrot.lane.b32.xlu0 %v4212, 32
    %v4217 = vpop.permute.xlu0 %4216
    %v4218 = vsel %vm309, %v4217, 0
    %4220 = vmatprep.subr.mxu0 0.0
    %4221 = vmatpush1.msra.mxu0 %v3597
    %4222 = vmatprep.subr.mxu0 0.0
    %4223 = vmatpush1.msra.mxu0 %v3598
    %4224 = vmatprep.subr.mxu0 0.0
    %4225 = vmatpush1.msra.mxu0 %v3599
    %4226 = vmatprep.subr.mxu0 0.0
    %4227 = vmatpush1.msra.mxu0 %v3600
    %4228 = vmatprep.subr.mxu0 0.0
    %4229 = vmatpush1.msra.mxu0 0.0
    %4230 = vmatprep.subr.mxu0 0.0
    %4231 = vmatpush1.msra.mxu0 0.0
    %4232 = vmatprep.subr.mxu0 0.0
    %4233 = vmatpush1.msra.mxu0 0.0
    %4234 = vmatprep.subr.mxu0 0.0
    %4235 = vmatpush1.msra.mxu0 0.0
    %4236 = vmatprep.subr.mxu0 0.0
    %4237 = vmatpush1.msra.mxu0 0.0
    %4238 = vmatprep.subr.mxu0 0.0
    %4239 = vmatpush1.msra.mxu0 0.0
    %4240 = vmatprep.subr.mxu0 0.0
    %4241 = vmatpush1.msra.mxu0 0.0
    %4242 = vmatprep.subr.mxu0 0.0
    %4243 = vmatpush1.msra.mxu0 0.0
    %4244 = vmatprep.subr.mxu0 0.0
    %4245 = vmatpush1.msra.mxu0 0.0
    %4246 = vmatprep.subr.mxu0 0.0
    %4247 = vmatpush1.msra.mxu0 0.0
    %4248 = vmatprep.subr.mxu0 0.0
    %4249 = vmatpush1.msra.mxu0 0.0
    %4250 = vmatprep.subr.mxu0 0.0
    %4251 = vmatpush1.msra.mxu0 0.0
    %4252 = vmatprep.subr.mxu0 0.0
    %4253 = vmatpush1.msra.mxu0 0.0
    %4254 = vmatprep.subr.mxu0 0.0
    %4255 = vmatpush1.msra.mxu0 0.0
    %4256 = vmatprep.subr.mxu0 0.0
    %4257 = vmatpush1.msra.mxu0 0.0
    %4258 = vmatprep.subr.mxu0 0.0
    %4259 = vmatpush1.msra.mxu0 0.0
    %4260 = vmatprep.subr.mxu0 0.0
    %4261 = vmatpush1.msra.mxu0 0.0
    %4262 = vmatprep.subr.mxu0 0.0
    %4263 = vmatpush1.msra.mxu0 0.0
    %4264 = vmatprep.subr.mxu0 0.0
    %4265 = vmatpush1.msra.mxu0 0.0
    %4266 = vmatprep.subr.mxu0 0.0
    %4267 = vmatpush1.msra.mxu0 0.0
    %4268 = vmatprep.subr.mxu0 0.0
    %4269 = vmatpush1.msra.mxu0 0.0
    %4270 = vmatprep.subr.mxu0 0.0
    %4271 = vmatpush1.msra.mxu0 0.0
    %4272 = vmatprep.subr.mxu0 0.0
    %4273 = vmatpush1.msra.mxu0 0.0
    %4274 = vmatprep.subr.mxu0 0.0
    %4275 = vmatpush1.msra.mxu0 0.0
    %4276 = vmatprep.subr.mxu0 0.0
    %4277 = vmatpush1.msra.mxu0 0.0
    %4278 = vmatprep.subr.mxu0 0.0
    %4279 = vmatpush1.msra.mxu0 0.0
    %4280 = vmatprep.subr.mxu0 0.0
    %4281 = vmatpush1.msra.mxu0 0.0
    %4282 = vmatprep.subr.mxu0 0.0
    %4283 = vmatpush1.msra.mxu0 0.0
    %4284 = vmatprep.mubr.f32.mxu0 0.0
    %4285 = vmatmul.mubr.f32.gmra.mrb[0].mxu0 %v4218
    %v4286 = vpop.f32.mrb[0].mxu0
    %v4287 = vadd.f32 0.0, %v4286
    %v4288 = vpop.f32.mrb[0].mxu0
    %4289 = vdwg.mxu0
    %v4290 = vadd.f32 %v4214, %v4287
    %v4291 = vxor.u32 %v4290, 2147483648
    %v4292 = vmul.f32 %v4291, 1.442695
    %v4293 = vpow.pop %v4292
    %v4294 = vadd.f32 %v4293, 1.0
    %v4295 = vrcp.pop %v4294
    %v4296 = vmul.f32 1.0, %v4295
    %v4297 = vtanh.pop %v4290
    %v4298 = vmul.f32 %v4296, %v4213
    %4300 = vrot.lane.b32.xlu0 %v4297, 64
    %v4301 = vpop.permute.xlu0 %4300
    %v4303 = vmul.f32 %v4296, %v4301
    %4305 = vrot.lane.b32.xlu0 %v4303, 32
    %v4306 = vpop.permute.xlu0 %4305
    %v4308 = vadd.f32 %v4298, %v4306
    %v4309 = vtanh.pop %v4308
    %4311 = vrot.lane.b32.xlu0 %v4309, 64
    %v4312 = vpop.permute.xlu0 %4311
    %v4314 = vmul.f32 %v4296, %v4312
    %v4315 = vsel %vm525, %v4314, %v4212
    %v4316 = vsel %vm525, %v4308, %v4213
    %v4317 = vld [vmem:[#allocation2] sm:$0xff]
    %4319 = vrot.lane.b32.xlu0 %v4315, 32
    %v4320 = vpop.permute.xlu0 %4319
    %v4321 = vsel %vm309, %v4320, 0
    %4323 = vmatprep.subr.mxu0 0.0
    %4324 = vmatpush1.msra.mxu0 %v3597
    %4325 = vmatprep.subr.mxu0 0.0
    %4326 = vmatpush1.msra.mxu0 %v3598
    %4327 = vmatprep.subr.mxu0 0.0
    %4328 = vmatpush1.msra.mxu0 %v3599
    %4329 = vmatprep.subr.mxu0 0.0
    %4330 = vmatpush1.msra.mxu0 %v3600
    %4331 = vmatprep.subr.mxu0 0.0
    %4332 = vmatpush1.msra.mxu0 0.0
    %4333 = vmatprep.subr.mxu0 0.0
    %4334 = vmatpush1.msra.mxu0 0.0
    %4335 = vmatprep.subr.mxu0 0.0
    %4336 = vmatpush1.msra.mxu0 0.0
    %4337 = vmatprep.subr.mxu0 0.0
    %4338 = vmatpush1.msra.mxu0 0.0
    %4339 = vmatprep.subr.mxu0 0.0
    %4340 = vmatpush1.msra.mxu0 0.0
    %4341 = vmatprep.subr.mxu0 0.0
    %4342 = vmatpush1.msra.mxu0 0.0
    %4343 = vmatprep.subr.mxu0 0.0
    %4344 = vmatpush1.msra.mxu0 0.0
    %4345 = vmatprep.subr.mxu0 0.0
    %4346 = vmatpush1.msra.mxu0 0.0
    %4347 = vmatprep.subr.mxu0 0.0
    %4348 = vmatpush1.msra.mxu0 0.0
    %4349 = vmatprep.subr.mxu0 0.0
    %4350 = vmatpush1.msra.mxu0 0.0
    %4351 = vmatprep.subr.mxu0 0.0
    %4352 = vmatpush1.msra.mxu0 0.0
    %4353 = vmatprep.subr.mxu0 0.0
    %4354 = vmatpush1.msra.mxu0 0.0
    %4355 = vmatprep.subr.mxu0 0.0
    %4356 = vmatpush1.msra.mxu0 0.0
    %4357 = vmatprep.subr.mxu0 0.0
    %4358 = vmatpush1.msra.mxu0 0.0
    %4359 = vmatprep.subr.mxu0 0.0
    %4360 = vmatpush1.msra.mxu0 0.0
    %4361 = vmatprep.subr.mxu0 0.0
    %4362 = vmatpush1.msra.mxu0 0.0
    %4363 = vmatprep.subr.mxu0 0.0
    %4364 = vmatpush1.msra.mxu0 0.0
    %4365 = vmatprep.subr.mxu0 0.0
    %4366 = vmatpush1.msra.mxu0 0.0
    %4367 = vmatprep.subr.mxu0 0.0
    %4368 = vmatpush1.msra.mxu0 0.0
    %4369 = vmatprep.subr.mxu0 0.0
    %4370 = vmatpush1.msra.mxu0 0.0
    %4371 = vmatprep.subr.mxu0 0.0
    %4372 = vmatpush1.msra.mxu0 0.0
    %4373 = vmatprep.subr.mxu0 0.0
    %4374 = vmatpush1.msra.mxu0 0.0
    %4375 = vmatprep.subr.mxu0 0.0
    %4376 = vmatpush1.msra.mxu0 0.0
    %4377 = vmatprep.subr.mxu0 0.0
    %4378 = vmatpush1.msra.mxu0 0.0
    %4379 = vmatprep.subr.mxu0 0.0
    %4380 = vmatpush1.msra.mxu0 0.0
    %4381 = vmatprep.subr.mxu0 0.0
    %4382 = vmatpush1.msra.mxu0 0.0
    %4383 = vmatprep.subr.mxu0 0.0
    %4384 = vmatpush1.msra.mxu0 0.0
    %4385 = vmatprep.subr.mxu0 0.0
    %4386 = vmatpush1.msra.mxu0 0.0
    %4387 = vmatprep.mubr.f32.mxu0 0.0
    %4388 = vmatmul.mubr.f32.gmra.mrb[0].mxu0 %v4321
    %v4389 = vpop.f32.mrb[0].mxu0
    %v4390 = vadd.f32 0.0, %v4389
    %v4391 = vpop.f32.mrb[0].mxu0
    %4392 = vdwg.mxu0
    %v4393 = vadd.f32 %v4317, %v4390
    %v4394 = vxor.u32 %v4393, 2147483648
    %v4395 = vmul.f32 %v4394, 1.442695
    %v4396 = vpow.pop %v4395
    %v4397 = vadd.f32 %v4396, 1.0
    %v4398 = vrcp.pop %v4397
    %v4399 = vmul.f32 1.0, %v4398
    %v4400 = vtanh.pop %v4393
    %v4401 = vmul.f32 %v4399, %v4316
    %4403 = vrot.lane.b32.xlu0 %v4400, 64
    %v4404 = vpop.permute.xlu0 %4403
    %v4406 = vmul.f32 %v4399, %v4404
    %4408 = vrot.lane.b32.xlu0 %v4406, 32
    %v4409 = vpop.permute.xlu0 %4408
    %v4411 = vadd.f32 %v4401, %v4409
    %v4412 = vtanh.pop %v4411
    %4414 = vrot.lane.b32.xlu0 %v4412, 64
    %v4415 = vpop.permute.xlu0 %4414
    %v4417 = vmul.f32 %v4399, %v4415
    %v4418 = vsel %vm413, %v4417, %v4315
    %v4419 = vld [vmem:[%s14] sm:$0xff]
    %v4420 = vld [vmem:[%s14 + $0x8] sm:$0xff]
    %v4421 = vld [vmem:[%s14 + $0x10] sm:$0xff]
    %v4422 = vld [vmem:[%s14 + $0x18] sm:$0xff]
    %v4423 = vld [vmem:[%s14 + $0x20] sm:$0xff]
    %v4424 = vld [vmem:[%s14 + $0x28] sm:$0xff]
    %v4425 = vld [vmem:[%s14 + $0x30] sm:$0xff]
    %v4426 = vld [vmem:[%s14 + $0x38] sm:$0xff]
    %4428 = vrot.lane.b32.xlu0 %v3355, 32
    %v4429 = vpop.permute.xlu0 %4428
    %v4430 = vsel %vm309, %v4429, 0
    %4432 = vmatprep.subr.mxu0 0.0
    %4433 = vmatpush1.msra.mxu0 %v4423
    %4434 = vmatprep.subr.mxu0 0.0
    %4435 = vmatpush1.msra.mxu0 %v4424
    %4436 = vmatprep.subr.mxu0 0.0
    %4437 = vmatpush1.msra.mxu0 %v4425
    %4438 = vmatprep.subr.mxu0 0.0
    %4439 = vmatpush1.msra.mxu0 %v4426
    %4440 = vmatprep.subr.mxu0 0.0
    %4441 = vmatpush1.msra.mxu0 0.0
    %4442 = vmatprep.subr.mxu0 0.0
    %4443 = vmatpush1.msra.mxu0 0.0
    %4444 = vmatprep.subr.mxu0 0.0
    %4445 = vmatpush1.msra.mxu0 0.0
    %4446 = vmatprep.subr.mxu0 0.0
    %4447 = vmatpush1.msra.mxu0 0.0
    %4448 = vmatprep.subr.mxu0 0.0
    %4449 = vmatpush1.msra.mxu0 0.0
    %4450 = vmatprep.subr.mxu0 0.0
    %4451 = vmatpush1.msra.mxu0 0.0
    %4452 = vmatprep.subr.mxu0 0.0
    %4453 = vmatpush1.msra.mxu0 0.0
    %4454 = vmatprep.subr.mxu0 0.0
    %4455 = vmatpush1.msra.mxu0 0.0
    %4456 = vmatprep.subr.mxu0 0.0
    %4457 = vmatpush1.msra.mxu0 0.0
    %4458 = vmatprep.subr.mxu0 0.0
    %4459 = vmatpush1.msra.mxu0 0.0
    %4460 = vmatprep.subr.mxu0 0.0
    %4461 = vmatpush1.msra.mxu0 0.0
    %4462 = vmatprep.subr.mxu0 0.0
    %4463 = vmatpush1.msra.mxu0 0.0
    %4464 = vmatprep.subr.mxu0 0.0
    %4465 = vmatpush1.msra.mxu0 0.0
    %4466 = vmatprep.subr.mxu0 0.0
    %4467 = vmatpush1.msra.mxu0 0.0
    %4468 = vmatprep.subr.mxu0 0.0
    %4469 = vmatpush1.msra.mxu0 0.0
    %4470 = vmatprep.subr.mxu0 0.0
    %4471 = vmatpush1.msra.mxu0 0.0
    %4472 = vmatprep.subr.mxu0 0.0
    %4473 = vmatpush1.msra.mxu0 0.0
    %4474 = vmatprep.subr.mxu0 0.0
    %4475 = vmatpush1.msra.mxu0 0.0
    %4476 = vmatprep.subr.mxu0 0.0
    %4477 = vmatpush1.msra.mxu0 0.0
    %4478 = vmatprep.subr.mxu0 0.0
    %4479 = vmatpush1.msra.mxu0 0.0
    %4480 = vmatprep.subr.mxu0 0.0
    %4481 = vmatpush1.msra.mxu0 0.0
    %4482 = vmatprep.subr.mxu0 0.0
    %4483 = vmatpush1.msra.mxu0 0.0
    %4484 = vmatprep.subr.mxu0 0.0
    %4485 = vmatpush1.msra.mxu0 0.0
    %4486 = vmatprep.subr.mxu0 0.0
    %4487 = vmatpush1.msra.mxu0 0.0
    %4488 = vmatprep.subr.mxu0 0.0
    %4489 = vmatpush1.msra.mxu0 0.0
    %4490 = vmatprep.subr.mxu0 0.0
    %4491 = vmatpush1.msra.mxu0 0.0
    %4492 = vmatprep.subr.mxu0 0.0
    %4493 = vmatpush1.msra.mxu0 0.0
    %4494 = vmatprep.subr.mxu0 0.0
    %4495 = vmatpush1.msra.mxu0 0.0
    %4496 = vmatprep.mubr.f32.mxu0 0.0
    %4497 = vmatmul.mubr.f32.gmra.mrb[0].mxu0 %v4430
    %v4498 = vpop.f32.mrb[0].mxu0
    %v4499 = vadd.f32 0.0, %v4498
    %v4500 = vpop.f32.mrb[0].mxu0
    %4501 = vdwg.mxu0
    %4503 = vrot.lane.b32.xlu0 %v4418, 32
    %v4504 = vpop.permute.xlu0 %4503
    %v4505 = vsel %vm309, %v4504, 0
    %4507 = vmatprep.subr.mxu0 0.0
    %4508 = vmatpush1.msra.mxu0 %v4419
    %4509 = vmatprep.subr.mxu0 0.0
    %4510 = vmatpush1.msra.mxu0 %v4420
    %4511 = vmatprep.subr.mxu0 0.0
    %4512 = vmatpush1.msra.mxu0 %v4421
    %4513 = vmatprep.subr.mxu0 0.0
    %4514 = vmatpush1.msra.mxu0 %v4422
    %4515 = vmatprep.subr.mxu0 0.0
    %4516 = vmatpush1.msra.mxu0 0.0
    %4517 = vmatprep.subr.mxu0 0.0
    %4518 = vmatpush1.msra.mxu0 0.0
    %4519 = vmatprep.subr.mxu0 0.0
    %4520 = vmatpush1.msra.mxu0 0.0
    %4521 = vmatprep.subr.mxu0 0.0
    %4522 = vmatpush1.msra.mxu0 0.0
    %4523 = vmatprep.subr.mxu0 0.0
    %4524 = vmatpush1.msra.mxu0 0.0
    %4525 = vmatprep.subr.mxu0 0.0
    %4526 = vmatpush1.msra.mxu0 0.0
    %4527 = vmatprep.subr.mxu0 0.0
    %4528 = vmatpush1.msra.mxu0 0.0
    %4529 = vmatprep.subr.mxu0 0.0
    %4530 = vmatpush1.msra.mxu0 0.0
    %4531 = vmatprep.subr.mxu0 0.0
    %4532 = vmatpush1.msra.mxu0 0.0
    %4533 = vmatprep.subr.mxu0 0.0
    %4534 = vmatpush1.msra.mxu0 0.0
    %4535 = vmatprep.subr.mxu0 0.0
    %4536 = vmatpush1.msra.mxu0 0.0
    %4537 = vmatprep.subr.mxu0 0.0
    %4538 = vmatpush1.msra.mxu0 0.0
    %4539 = vmatprep.subr.mxu0 0.0
    %4540 = vmatpush1.msra.mxu0 0.0
    %4541 = vmatprep.subr.mxu0 0.0
    %4542 = vmatpush1.msra.mxu0 0.0
    %4543 = vmatprep.subr.mxu0 0.0
    %4544 = vmatpush1.msra.mxu0 0.0
    %4545 = vmatprep.subr.mxu0 0.0
    %4546 = vmatpush1.msra.mxu0 0.0
    %4547 = vmatprep.subr.mxu0 0.0
    %4548 = vmatpush1.msra.mxu0 0.0
    %4549 = vmatprep.subr.mxu0 0.0
    %4550 = vmatpush1.msra.mxu0 0.0
    %4551 = vmatprep.subr.mxu0 0.0
    %4552 = vmatpush1.msra.mxu0 0.0
    %4553 = vmatprep.subr.mxu0 0.0
    %4554 = vmatpush1.msra.mxu0 0.0
    %4555 = vmatprep.subr.mxu0 0.0
    %4556 = vmatpush1.msra.mxu0 0.0
    %4557 = vmatprep.subr.mxu0 0.0
    %4558 = vmatpush1.msra.mxu0 0.0
    %4559 = vmatprep.subr.mxu0 0.0
    %4560 = vmatpush1.msra.mxu0 0.0
    %4561 = vmatprep.subr.mxu0 0.0
    %4562 = vmatpush1.msra.mxu0 0.0
    %4563 = vmatprep.subr.mxu0 0.0
    %4564 = vmatpush1.msra.mxu0 0.0
    %4565 = vmatprep.subr.mxu0 0.0
    %4566 = vmatpush1.msra.mxu0 0.0
    %4567 = vmatprep.subr.mxu0 0.0
    %4568 = vmatpush1.msra.mxu0 0.0
    %4569 = vmatprep.subr.mxu0 0.0
    %4570 = vmatpush1.msra.mxu0 0.0
    %4571 = vmatprep.mubr.f32.mxu0 0.0
    %4572 = vmatmul.mubr.f32.gmra.mrb[0].mxu0 %v4505
    %v4573 = vpop.f32.mrb[0].mxu0
    %v4574 = vadd.f32 %v4499, %v4573
    %v4575 = vpop.f32.mrb[0].mxu0
    %4576 = vdwg.mxu0
    %v4577 = vld [vmem:[%s15] sm:$0x1]
    %v4579 = vlaneseq
    %v4580 = vshrl.u32 %v4579, 7
    %v4581 = vsub.s32 0, %v4580
    %v4582 = vrot.slane %v4577, %v4581
    %v4584 = vadd.f32 %v4574, %v4582
    %vm4585 = vcmask 23552
    %4586 = vst.msk [vmem:[%s16] sm:$0xff] %vm4585, %v4584
    // Predicated region
    $region94: #{tpu_custom_call.1} parent=1 // pred_check
      _
    $region95: #{tpu_custom_call.1} parent=1 // pred_check_branch
      %4588 = sbr.rel (0) target = $region97
    $region96: #{tpu_custom_call.1} parent=1 // pred_region
      _
    $region97: #{tpu_custom_call.1} parent=1 // pred_fallthru
      _
    // Predicated region
    $region98: #{tpu_custom_call.1} parent=1 // pred_check
      _
    $region99: #{tpu_custom_call.1} parent=1 // pred_check_branch
      %4590 = sbr.rel (0) target = $region101
    $region100: #{tpu_custom_call.1} parent=1 // pred_region
      _
    $region101: #{tpu_custom_call.1} parent=1 // pred_fallthru
      _
    %4591 = vsyncpa [#allocation8], 1
    %4592 = vsyncpa [#allocation10], 1
    %4593 = vsyncpa [#allocation13], 1
    %4594 = vsyncpa [#allocation16], 1

</llo_original>
